<compile_context>
chip_gen: v5e
topology: v5e:2x2
jax: 0.10.0
libtpu: 0.0.40
codegen_flags: <defaults>
</compile_context>

<pallas_src>
import jax
import jax.numpy as jnp
import numpy as np
from jax import lax
from jax.experimental import pallas as pl
from jax.experimental.pallas import tpu as pltpu

EPS = 1e-5
LANE = 128


def _round_up(x, m):
    return (x + m - 1) // m * m


def _vmem_limit_bytes():
    # Budget against the real chip (128 MiB v5e/v6e, 64 MiB v7x), not the
    # 16/32 MiB default scoped limit; keep ~15% headroom for the compiler.
    try:
        cap = pltpu.get_tpu_info().vmem_capacity_bytes
    except Exception:
        cap = 64 * 1024 * 1024
    return min(int(cap * 0.85), 100 * 1024 * 1024)


def _reflect_pad1(x):
    # (H, W, C) -> (H+2, W+2, C); PyTorch 'reflect' (edge row/col not repeated).
    x = jnp.concatenate([x[1:2], x, x[-2:-1]], axis=0)
    x = jnp.concatenate([x[:, 1:2], x, x[:, -2:-1]], axis=1)
    return x


def _inorm_relu(y, inv_hw):
    # InstanceNorm2d (eps=1e-5, affine-free, biased var) + ReLU on an
    # (H*W, C) f32 pre-norm conv output.  Sums stay f32 (the max(.,0) clamp
    # guards the single-pass variance); rsqrt runs on the EUP slot; the
    # normalize + ReLU epilogue is one fused elementwise pass.
    s = jnp.sum(y, axis=0, keepdims=True)
    ss = jnp.sum(y * y, axis=0, keepdims=True)
    mean = s * inv_hw
    var = jnp.maximum(ss * inv_hw - mean * mean, 0.0)
    scale = lax.rsqrt(var + EPS)
    shift = mean * scale
    return jnp.maximum(y * scale - shift, 0.0)


_TAPS = tuple((kh, kw) for kh in range(3) for kw in range(3))
# conv2 tap pairs: K = 2*Cp = 256 per matmul (full v6e/v7x MXU occupancy).
_TAP_PAIRS = ((0, 1), (2, 3), (4, 5), (6, 7), (8,))


def _make_kernel(H, W, Cin, Cout, Cp, has_sc):
    HW = H * W
    inv_hw = 1.0 / HW

    def kernel(*refs):
        if has_sc:
            x_ref, w1_ref, w2_ref, bs_ref, o_ref = refs
        else:
            x_ref, w1_ref, w2_ref, o_ref = refs

        x = x_ref[0]                                        # (H, W, Cin) f32
        xb = x.astype(jnp.bfloat16)                         # MXU operand dtype

        # ---- conv1 (+ folded 1x1 shortcut): ONE im2col matmul ---------------
        # LHS (HW, 9*Cin) is cheap here (K = 9*Cin is small); the widened
        # weight's extra Cp columns compute the 1x1 shortcut from the
        # center-tap rows, making the matmul 2*Cp (=256) wide.
        xp = _reflect_pad1(xb)                              # (H+2, W+2, Cin)
        cols = [xp[kh:kh + H, kw:kw + W, :] for (kh, kw) in _TAPS]
        lhs1 = jnp.concatenate(cols, axis=-1).reshape(HW, 9 * Cin)
        y1 = lax.dot_general(lhs1, w1_ref[...], (((1,), (0,)), ((), ())),
                             preferred_element_type=jnp.float32)
        if has_sc:
            sc = y1[:, Cp:]                                 # (HW, Cp) shortcut
            y1 = y1[:, :Cp]
        # conv bias omitted on purpose: cancelled exactly by InstanceNorm.
        y1 = _inorm_relu(y1, inv_hw).astype(jnp.bfloat16)   # (HW, Cp) bf16

        # ---- conv2: per-tap-pair accumulating matmuls -----------------------
        # No (HW, 9*Cp) im2col is ever materialized: only one (HW, 2*Cp)
        # shifted slab is live at a time, accumulating into an f32 buffer.
        yp = _reflect_pad1(y1.reshape(H, W, Cp))            # (H+2, W+2, Cp)
        acc = None
        for pair in _TAP_PAIRS:
            slabs = [yp[_TAPS[t][0]:_TAPS[t][0] + H,
                        _TAPS[t][1]:_TAPS[t][1] + W, :].reshape(HW, Cp)
                     for t in pair]
            slab = slabs[0] if len(slabs) == 1 else jnp.concatenate(slabs, -1)
            wrows = w2_ref[pair[0] * Cp:(pair[-1] + 1) * Cp, :]
            part = lax.dot_general(slab, wrows, (((1,), (0,)), ((), ())),
                                   preferred_element_type=jnp.float32)
            acc = part if acc is None else acc + part
        y2 = _inorm_relu(acc, inv_hw)                       # (HW, Cp) f32

        # ---- residual add; store only the real Cout channels ----------------
        if has_sc:
            out = y2[:, :Cout] + sc[:, :Cout] + bs_ref[...]
        else:
            out = y2[:, :Cout] + x.reshape(HW, Cin)         # identity shortcut
        o_ref[0] = out.reshape(H, W, Cout).astype(o_ref.dtype)

    return kernel


def _r_k_block_nhwc_impl(x_nhwc, w1, w2, w_sc, b_sc, weight_buffer_count):
    N, H, W, Cin = x_nhwc.shape
    Cout = w1.shape[0]
    assert H >= 2 and W >= 2, "reflect padding (1) requires H >= 2 and W >= 2"
    Cp = _round_up(Cout, LANE)
    has_sc = w_sc is not None
    if not has_sc:
        assert Cin == Cout, "identity shortcut requires C_in == C_out"

    x = x_nhwc.astype(jnp.float32)

    # conv1 weight: OIHW -> (kh, kw, i, o) -> (9*Cin, Cout), pad Cout -> Cp.
    w1_f = jnp.transpose(w1, (2, 3, 1, 0)).reshape(9 * Cin, Cout)
    w1_f = jnp.pad(w1_f.astype(jnp.float32), ((0, 0), (0, Cp - Cout)))
    if has_sc:
        # Fold the 1x1 shortcut into conv1: extra Cp output columns that are
        # non-zero only on the center-tap (kh = kw = 1) input rows.
        ws = w_sc[:, :, 0, 0].T.astype(jnp.float32)          # (Cin, Cout)
        sc_cols = jnp.zeros((9 * Cin, Cp), jnp.float32)
        sc_cols = sc_cols.at[4 * Cin:5 * Cin, :Cout].set(ws)
        w1_f = jnp.concatenate([w1_f, sc_cols], axis=1)      # (9*Cin, 2*Cp)
    w1_f = w1_f.astype(jnp.bfloat16)
    Wc = w1_f.shape[1]

    # conv2 weight: OIHW -> (kh, kw, i, o), pad both channel dims to Cp and
    # fold to (9*Cp, Cp) so tap t occupies rows [t*Cp, (t+1)*Cp).
    w2_hwio = jnp.transpose(w2, (2, 3, 1, 0)).astype(jnp.float32)
    w2_hwio = jnp.pad(w2_hwio, ((0, 0), (0, 0), (0, Cp - Cout), (0, Cp - Cout)))
    w2_f = w2_hwio.reshape(9 * Cp, Cp).astype(jnp.bfloat16)

    kernel = _make_kernel(H, W, Cin, Cout, Cp, has_sc)

    def weight_spec(shape):
        # Grid-invariant operands: single-buffer them (double-buffering a
        # constant block only wastes VMEM — w2 alone is ~0.3 MiB here).
        if weight_buffer_count is None:
            return pl.BlockSpec(shape, lambda n: (0,) * len(shape))
        return pl.BlockSpec(shape, lambda n: (0,) * len(shape),
                            pipeline_mode=pl.Buffered(weight_buffer_count))

    in_specs = [pl.BlockSpec((1, H, W, Cin), lambda n: (n, 0, 0, 0)),
                weight_spec((9 * Cin, Wc)),
                weight_spec((9 * Cp, Cp))]
    args = [x, w1_f, w2_f]
    if has_sc:
        bias = (jnp.zeros((Cout,), jnp.float32) if b_sc is None
                else b_sc.astype(jnp.float32)).reshape(1, Cout)
        in_specs.append(weight_spec((1, Cout)))
        args.append(bias)

    return pl.pallas_call(
        kernel,
        out_shape=jax.ShapeDtypeStruct((N, H, W, Cout), jnp.float32),
        grid_spec=pltpu.PrefetchScalarGridSpec(
            num_scalar_prefetch=0,
            grid=(N,),
            in_specs=in_specs,
            out_specs=pl.BlockSpec((1, H, W, Cout), lambda n: (n, 0, 0, 0)),
        ),
        compiler_params=pltpu.CompilerParams(
            dimension_semantics=("parallel",),
            vmem_limit_bytes=_vmem_limit_bytes()),
    )(*args)


def r_k_block_nhwc(x_nhwc, w1, w2, w_sc=None, b_sc=None):
    """Fused R_K_Block forward on NHWC input (recommended entry point: zero
    wrapper-side layout work).

    x_nhwc: (N, H, W, C_in) float32
    w1, w2: (C_out, C_in, 3, 3) / (C_out, C_out, 3, 3) PyTorch OIHW weights
    w_sc, b_sc: optional (C_out, C_in, 1, 1) / (C_out,) 1x1-shortcut params.
    The 3x3 conv biases are intentionally not taken: the affine-free
    InstanceNorm2d that immediately follows each conv cancels them exactly.
    """
    try:
        return jax.block_until_ready(
            _r_k_block_nhwc_impl(x_nhwc, w1, w2, w_sc, b_sc, 1))
    except Exception:
        # pl.Buffered(1) on grid-invariant weights is an optimization only;
        # fall back to default double-buffered weight blocks if this JAX
        # build rejects pipeline_mode.
        return jax.block_until_ready(
            _r_k_block_nhwc_impl(x_nhwc, w1, w2, w_sc, b_sc, None))


def r_k_block(x_nchw, w1, w2, w_sc=None, b_sc=None):
    """PyTorch-layout (NCHW) convenience wrapper.  The two transposes below are
    each an extra HBM pass; prefer r_k_block_nhwc inside an NHWC model."""
    out = r_k_block_nhwc(jnp.transpose(x_nchw, (0, 2, 3, 1)), w1, w2, w_sc, b_sc)
    return jnp.transpose(out, (0, 3, 1, 2))


def _reference(x, w1, b1, w2, b2, w_sc, b_sc):
    """Pure-JAX f32 reference (includes the conv biases that IN cancels)."""
    def conv3x3(x, w, b):
        xp = jnp.pad(x, ((0, 0), (0, 0), (1, 1), (1, 1)), mode="reflect")
        y = lax.conv_general_dilated(
            xp, w, window_strides=(1, 1), padding="VALID",
            dimension_numbers=("NCHW", "OIHW", "NCHW"))
        return y + b.reshape(1, -1, 1, 1)

    def inorm_relu(y):
        mean = jnp.mean(y, axis=(2, 3), keepdims=True)
        var = jnp.mean((y - mean) ** 2, axis=(2, 3), keepdims=True)
        return jnp.maximum((y - mean) * lax.rsqrt(var + EPS), 0.0)

    y = inorm_relu(conv3x3(x, w1, b1))
    y = inorm_relu(conv3x3(y, w2, b2))
    if w_sc is None:
        sc = x
    else:
        sc = lax.conv_general_dilated(
            x, w_sc, window_strides=(1, 1), padding="VALID",
            dimension_numbers=("NCHW", "OIHW", "NCHW")) + b_sc.reshape(1, -1, 1, 1)
    return sc + y


if __name__ == "__main__":
    key = jax.random.PRNGKey(0)
    ks = jax.random.split(key, 8)

    def uinit(k, shape, fan_in):
        bound = 1.0 / np.sqrt(fan_in)
        return jax.random.uniform(k, shape, minval=-bound, maxval=bound,
                                  dtype=jnp.float32)

    # Case A: C_in != C_out -> learned 1x1 shortcut (folded into conv1 matmul).
    N, C_in, C_out, H, W = 2, 4, 8, 16, 16
    x = jax.random.normal(ks[0], (N, C_in, H, W), dtype=jnp.float32)
    w1 = uinit(ks[1], (C_out, C_in, 3, 3), C_in * 9)
    b1 = uinit(ks[2], (C_out,), C_in * 9)       # cancelled by InstanceNorm
    w2 = uinit(ks[3], (C_out, C_out, 3, 3), C_out * 9)
    b2 = uinit(ks[4], (C_out,), C_out * 9)      # cancelled by InstanceNorm
    w_sc = uinit(ks[5], (C_out, C_in, 1, 1), C_in)
    b_sc = uinit(ks[6], (C_out,), C_in)

    out = jax.block_until_ready(r_k_block(x, w1, w2, w_sc, b_sc))
    ref = jax.block_until_ready(_reference(x, w1, b1, w2, b2, w_sc, b_sc))
    # bf16 MXU operands with f32 accumulation: expect ~1e-2-level agreement.
    np.testing.assert_allclose(np.asarray(out), np.asarray(ref),
                               rtol=5e-2, atol=5e-2)

    # Case B: C_in == C_out -> identity shortcut (no shortcut matmul at all).
    C = 8
    x2 = jax.random.normal(ks[7], (N, C, H, W), dtype=jnp.float32)
    w1b = uinit(ks[1], (C, C, 3, 3), C * 9)
    b1b = uinit(ks[2], (C,), C * 9)
    w2b = uinit(ks[3], (C, C, 3, 3), C * 9)
    b2b = uinit(ks[4], (C,), C * 9)

    out2 = jax.block_until_ready(r_k_block(x2, w1b, w2b))
    ref2 = jax.block_until_ready(_reference(x2, w1b, b1b, w2b, b2b, None, None))
    np.testing.assert_allclose(np.asarray(out2), np.asarray(ref2),
                               rtol=5e-2, atol=5e-2)

    print("KERNEL_OK")
</pallas_src>

<mosaic_0001>
module attributes {stable_mosaic.version = 11 : i64} {
  func.func @kernel(%arg0: i32, %arg1: memref<1x16x16x4xf32, #tpu.memory_space<vmem>>, %arg2: memref<36x256xbf16, #tpu.memory_space<vmem>>, %arg3: memref<1152x128xbf16, #tpu.memory_space<vmem>>, %arg4: memref<1x8xf32, #tpu.memory_space<vmem>>, %arg5: memref<1x16x16x8xf32, #tpu.memory_space<vmem>>) attributes {dimension_semantics = [#tpu.dimension_semantics<parallel>], iteration_bounds = array<i64: 2>, scalar_prefetch = 0 : i64, scratch_operands = 0 : i64, tpu.core_type = #tpu.core_type<tc>, window_params = [{transform_indices = @transform_0, window_bounds = array<i64: 1, 16, 16, 4>}, {pipeline_mode = #tpu.pipeline_mode<synchronous>, transform_indices = @transform_1, window_bounds = array<i64: 36, 256>}, {pipeline_mode = #tpu.pipeline_mode<synchronous>, transform_indices = @transform_2, window_bounds = array<i64: 1152, 128>}, {pipeline_mode = #tpu.pipeline_mode<synchronous>, transform_indices = @transform_3, window_bounds = array<i64: 1, 8>}, {transform_indices = @transform_4, window_bounds = array<i64: 1, 16, 16, 8>}]} {
    %c0 = arith.constant 0 : index
    %c0_0 = arith.constant 0 : index
    %c0_1 = arith.constant 0 : index
    %c0_2 = arith.constant 0 : index
    %0 = vector.load %arg1[%c0, %c0_0, %c0_1, %c0_2] : memref<1x16x16x4xf32, #tpu.memory_space<vmem>>, vector<1x16x16x4xf32>
    %1 = vector.shape_cast %0 : vector<1x16x16x4xf32> to vector<16x16x4xf32>
    %2 = arith.truncf %1 : vector<16x16x4xf32> to vector<16x16x4xbf16>
    %3 = vector.extract_strided_slice %2 {offsets = [1, 0, 0], sizes = [1, 16, 4], strides = [1, 1, 1]} : vector<16x16x4xbf16> to vector<1x16x4xbf16>
    %4 = vector.extract_strided_slice %2 {offsets = [14, 0, 0], sizes = [1, 16, 4], strides = [1, 1, 1]} : vector<16x16x4xbf16> to vector<1x16x4xbf16>
    %5 = tpu.concatenate %3, %2, %4 in 0 : vector<1x16x4xbf16>, vector<16x16x4xbf16>, vector<1x16x4xbf16> -> vector<18x16x4xbf16>
    %6 = vector.extract_strided_slice %5 {offsets = [0, 1, 0], sizes = [18, 1, 4], strides = [1, 1, 1]} : vector<18x16x4xbf16> to vector<18x1x4xbf16>
    %7 = vector.extract_strided_slice %5 {offsets = [0, 14, 0], sizes = [18, 1, 4], strides = [1, 1, 1]} : vector<18x16x4xbf16> to vector<18x1x4xbf16>
    %8 = tpu.concatenate %6, %5, %7 in 1 : vector<18x1x4xbf16>, vector<18x16x4xbf16>, vector<18x1x4xbf16> -> vector<18x18x4xbf16>
    %9 = vector.extract_strided_slice %8 {offsets = [0, 0, 0], sizes = [16, 16, 4], strides = [1, 1, 1]} : vector<18x18x4xbf16> to vector<16x16x4xbf16>
    %10 = vector.extract_strided_slice %8 {offsets = [0, 1, 0], sizes = [16, 16, 4], strides = [1, 1, 1]} : vector<18x18x4xbf16> to vector<16x16x4xbf16>
    %11 = vector.extract_strided_slice %8 {offsets = [0, 2, 0], sizes = [16, 16, 4], strides = [1, 1, 1]} : vector<18x18x4xbf16> to vector<16x16x4xbf16>
    %12 = vector.extract_strided_slice %8 {offsets = [1, 0, 0], sizes = [16, 16, 4], strides = [1, 1, 1]} : vector<18x18x4xbf16> to vector<16x16x4xbf16>
    %13 = vector.extract_strided_slice %8 {offsets = [1, 1, 0], sizes = [16, 16, 4], strides = [1, 1, 1]} : vector<18x18x4xbf16> to vector<16x16x4xbf16>
    %14 = vector.extract_strided_slice %8 {offsets = [1, 2, 0], sizes = [16, 16, 4], strides = [1, 1, 1]} : vector<18x18x4xbf16> to vector<16x16x4xbf16>
    %15 = vector.extract_strided_slice %8 {offsets = [2, 0, 0], sizes = [16, 16, 4], strides = [1, 1, 1]} : vector<18x18x4xbf16> to vector<16x16x4xbf16>
    %16 = vector.extract_strided_slice %8 {offsets = [2, 1, 0], sizes = [16, 16, 4], strides = [1, 1, 1]} : vector<18x18x4xbf16> to vector<16x16x4xbf16>
    %17 = vector.extract_strided_slice %8 {offsets = [2, 2, 0], sizes = [16, 16, 4], strides = [1, 1, 1]} : vector<18x18x4xbf16> to vector<16x16x4xbf16>
    %18 = tpu.concatenate %9, %10, %11, %12, %13, %14, %15, %16, %17 in 2 : vector<16x16x4xbf16>, vector<16x16x4xbf16>, vector<16x16x4xbf16>, vector<16x16x4xbf16>, vector<16x16x4xbf16>, vector<16x16x4xbf16>, vector<16x16x4xbf16>, vector<16x16x4xbf16>, vector<16x16x4xbf16> -> vector<16x16x36xbf16>
    %19 = vector.shape_cast %18 : vector<16x16x36xbf16> to vector<256x36xbf16>
    %c0_3 = arith.constant 0 : index
    %c0_4 = arith.constant 0 : index
    %20 = vector.load %arg2[%c0_3, %c0_4] : memref<36x256xbf16, #tpu.memory_space<vmem>>, vector<36x256xbf16>
    %cst = arith.constant dense<0.000000e+00> : vector<256x256xf32>
    %21 = tpu.matmul %19, %20, %cst {dimension_numbers = #tpu.dot_dimension_numbers<[1], [0], [0], [1], [0, 0, 1, 1], [], []>} : vector<256x36xbf16>, vector<36x256xbf16>, vector<256x256xf32> -> vector<256x256xf32>
    %22 = vector.extract_strided_slice %21 {offsets = [0, 128], sizes = [256, 128], strides = [1, 1]} : vector<256x256xf32> to vector<256x128xf32>
    %23 = vector.extract_strided_slice %21 {offsets = [0, 0], sizes = [256, 128], strides = [1, 1]} : vector<256x256xf32> to vector<256x128xf32>
    %cst_5 = arith.constant dense<0.000000e+00> : vector<128xf32>
    %24 = vector.multi_reduction <add>, %23, %cst_5 [0] : vector<256x128xf32> to vector<128xf32>
    %25 = vector.shape_cast %24 : vector<128xf32> to vector<1x128xf32>
    %26 = arith.mulf %23, %23 : vector<256x128xf32>
    %cst_6 = arith.constant dense<0.000000e+00> : vector<128xf32>
    %27 = vector.multi_reduction <add>, %26, %cst_6 [0] : vector<256x128xf32> to vector<128xf32>
    %28 = vector.shape_cast %27 : vector<128xf32> to vector<1x128xf32>
    %cst_7 = arith.constant 3.906250e-03 : f32
    %29 = vector.broadcast %cst_7 : f32 to vector<1x128xf32>
    %30 = arith.mulf %25, %29 : vector<1x128xf32>
    %cst_8 = arith.constant 3.906250e-03 : f32
    %31 = vector.broadcast %cst_8 : f32 to vector<1x128xf32>
    %32 = arith.mulf %28, %31 : vector<1x128xf32>
    %33 = arith.mulf %30, %30 : vector<1x128xf32>
    %34 = arith.subf %32, %33 : vector<1x128xf32>
    %cst_9 = arith.constant 0.000000e+00 : f32
    %35 = vector.broadcast %cst_9 : f32 to vector<1x128xf32>
    %36 = arith.maximumf %34, %35 : vector<1x128xf32>
    %cst_10 = arith.constant 9.99999974E-6 : f32
    %37 = vector.broadcast %cst_10 : f32 to vector<1x128xf32>
    %38 = arith.addf %36, %37 : vector<1x128xf32>
    %39 = math.rsqrt %38 : vector<1x128xf32>
    %40 = arith.mulf %30, %39 : vector<1x128xf32>
    %41 = vector.broadcast %39 : vector<1x128xf32> to vector<256x128xf32>
    %42 = arith.mulf %23, %41 : vector<256x128xf32>
    %43 = vector.broadcast %40 : vector<1x128xf32> to vector<256x128xf32>
    %44 = arith.subf %42, %43 : vector<256x128xf32>
    %cst_11 = arith.constant 0.000000e+00 : f32
    %45 = vector.broadcast %cst_11 : f32 to vector<256x128xf32>
    %46 = arith.maximumf %44, %45 : vector<256x128xf32>
    %47 = arith.truncf %46 : vector<256x128xf32> to vector<256x128xbf16>
    %48 = vector.shape_cast %47 : vector<256x128xbf16> to vector<16x16x128xbf16>
    %49 = vector.extract_strided_slice %48 {offsets = [1, 0, 0], sizes = [1, 16, 128], strides = [1, 1, 1]} : vector<16x16x128xbf16> to vector<1x16x128xbf16>
    %50 = vector.extract_strided_slice %48 {offsets = [14, 0, 0], sizes = [1, 16, 128], strides = [1, 1, 1]} : vector<16x16x128xbf16> to vector<1x16x128xbf16>
    %51 = tpu.concatenate %49, %48, %50 in 0 : vector<1x16x128xbf16>, vector<16x16x128xbf16>, vector<1x16x128xbf16> -> vector<18x16x128xbf16>
    %52 = vector.extract_strided_slice %51 {offsets = [0, 1, 0], sizes = [18, 1, 128], strides = [1, 1, 1]} : vector<18x16x128xbf16> to vector<18x1x128xbf16>
    %53 = vector.extract_strided_slice %51 {offsets = [0, 14, 0], sizes = [18, 1, 128], strides = [1, 1, 1]} : vector<18x16x128xbf16> to vector<18x1x128xbf16>
    %54 = tpu.concatenate %52, %51, %53 in 1 : vector<18x1x128xbf16>, vector<18x16x128xbf16>, vector<18x1x128xbf16> -> vector<18x18x128xbf16>
    %55 = vector.extract_strided_slice %54 {offsets = [0, 0, 0], sizes = [16, 16, 128], strides = [1, 1, 1]} : vector<18x18x128xbf16> to vector<16x16x128xbf16>
    %56 = vector.shape_cast %55 : vector<16x16x128xbf16> to vector<256x128xbf16>
    %57 = vector.extract_strided_slice %54 {offsets = [0, 1, 0], sizes = [16, 16, 128], strides = [1, 1, 1]} : vector<18x18x128xbf16> to vector<16x16x128xbf16>
    %58 = vector.shape_cast %57 : vector<16x16x128xbf16> to vector<256x128xbf16>
    %59 = tpu.concatenate %56, %58 in 1 : vector<256x128xbf16>, vector<256x128xbf16> -> vector<256x256xbf16>
    %c0_12 = arith.constant 0 : index
    %c0_13 = arith.constant 0 : index
    %60 = vector.load %arg3[%c0_12, %c0_13] : memref<1152x128xbf16, #tpu.memory_space<vmem>>, vector<256x128xbf16>
    %cst_14 = arith.constant dense<0.000000e+00> : vector<256x128xf32>
    %61 = tpu.matmul %59, %60, %cst_14 {dimension_numbers = #tpu.dot_dimension_numbers<[1], [0], [0], [1], [0, 0, 1, 1], [], []>} : vector<256x256xbf16>, vector<256x128xbf16>, vector<256x128xf32> -> vector<256x128xf32>
    %62 = vector.extract_strided_slice %54 {offsets = [0, 2, 0], sizes = [16, 16, 128], strides = [1, 1, 1]} : vector<18x18x128xbf16> to vector<16x16x128xbf16>
    %63 = vector.shape_cast %62 : vector<16x16x128xbf16> to vector<256x128xbf16>
    %64 = vector.extract_strided_slice %54 {offsets = [1, 0, 0], sizes = [16, 16, 128], strides = [1, 1, 1]} : vector<18x18x128xbf16> to vector<16x16x128xbf16>
    %65 = vector.shape_cast %64 : vector<16x16x128xbf16> to vector<256x128xbf16>
    %66 = tpu.concatenate %63, %65 in 1 : vector<256x128xbf16>, vector<256x128xbf16> -> vector<256x256xbf16>
    %c256 = arith.constant 256 : index
    %c0_15 = arith.constant 0 : index
    %67 = vector.load %arg3[%c256, %c0_15] : memref<1152x128xbf16, #tpu.memory_space<vmem>>, vector<256x128xbf16>
    %cst_16 = arith.constant dense<0.000000e+00> : vector<256x128xf32>
    %68 = tpu.matmul %66, %67, %cst_16 {dimension_numbers = #tpu.dot_dimension_numbers<[1], [0], [0], [1], [0, 0, 1, 1], [], []>} : vector<256x256xbf16>, vector<256x128xbf16>, vector<256x128xf32> -> vector<256x128xf32>
    %69 = arith.addf %61, %68 : vector<256x128xf32>
    %70 = vector.extract_strided_slice %54 {offsets = [1, 1, 0], sizes = [16, 16, 128], strides = [1, 1, 1]} : vector<18x18x128xbf16> to vector<16x16x128xbf16>
    %71 = vector.shape_cast %70 : vector<16x16x128xbf16> to vector<256x128xbf16>
    %72 = vector.extract_strided_slice %54 {offsets = [1, 2, 0], sizes = [16, 16, 128], strides = [1, 1, 1]} : vector<18x18x128xbf16> to vector<16x16x128xbf16>
    %73 = vector.shape_cast %72 : vector<16x16x128xbf16> to vector<256x128xbf16>
    %74 = tpu.concatenate %71, %73 in 1 : vector<256x128xbf16>, vector<256x128xbf16> -> vector<256x256xbf16>
    %c512 = arith.constant 512 : index
    %c0_17 = arith.constant 0 : index
    %75 = vector.load %arg3[%c512, %c0_17] : memref<1152x128xbf16, #tpu.memory_space<vmem>>, vector<256x128xbf16>
    %cst_18 = arith.constant dense<0.000000e+00> : vector<256x128xf32>
    %76 = tpu.matmul %74, %75, %cst_18 {dimension_numbers = #tpu.dot_dimension_numbers<[1], [0], [0], [1], [0, 0, 1, 1], [], []>} : vector<256x256xbf16>, vector<256x128xbf16>, vector<256x128xf32> -> vector<256x128xf32>
    %77 = arith.addf %69, %76 : vector<256x128xf32>
    %78 = vector.extract_strided_slice %54 {offsets = [2, 0, 0], sizes = [16, 16, 128], strides = [1, 1, 1]} : vector<18x18x128xbf16> to vector<16x16x128xbf16>
    %79 = vector.shape_cast %78 : vector<16x16x128xbf16> to vector<256x128xbf16>
    %80 = vector.extract_strided_slice %54 {offsets = [2, 1, 0], sizes = [16, 16, 128], strides = [1, 1, 1]} : vector<18x18x128xbf16> to vector<16x16x128xbf16>
    %81 = vector.shape_cast %80 : vector<16x16x128xbf16> to vector<256x128xbf16>
    %82 = tpu.concatenate %79, %81 in 1 : vector<256x128xbf16>, vector<256x128xbf16> -> vector<256x256xbf16>
    %c768 = arith.constant 768 : index
    %c0_19 = arith.constant 0 : index
    %83 = vector.load %arg3[%c768, %c0_19] : memref<1152x128xbf16, #tpu.memory_space<vmem>>, vector<256x128xbf16>
    %cst_20 = arith.constant dense<0.000000e+00> : vector<256x128xf32>
    %84 = tpu.matmul %82, %83, %cst_20 {dimension_numbers = #tpu.dot_dimension_numbers<[1], [0], [0], [1], [0, 0, 1, 1], [], []>} : vector<256x256xbf16>, vector<256x128xbf16>, vector<256x128xf32> -> vector<256x128xf32>
    %85 = arith.addf %77, %84 : vector<256x128xf32>
    %86 = vector.extract_strided_slice %54 {offsets = [2, 2, 0], sizes = [16, 16, 128], strides = [1, 1, 1]} : vector<18x18x128xbf16> to vector<16x16x128xbf16>
    %87 = vector.shape_cast %86 : vector<16x16x128xbf16> to vector<256x128xbf16>
    %c1024 = arith.constant 1024 : index
    %c0_21 = arith.constant 0 : index
    %88 = vector.load %arg3[%c1024, %c0_21] : memref<1152x128xbf16, #tpu.memory_space<vmem>>, vector<128x128xbf16>
    %cst_22 = arith.constant dense<0.000000e+00> : vector<256x128xf32>
    %89 = tpu.matmul %87, %88, %cst_22 {dimension_numbers = #tpu.dot_dimension_numbers<[1], [0], [0], [1], [0, 0, 1, 1], [], []>} : vector<256x128xbf16>, vector<128x128xbf16>, vector<256x128xf32> -> vector<256x128xf32>
    %90 = arith.addf %85, %89 : vector<256x128xf32>
    %cst_23 = arith.constant dense<0.000000e+00> : vector<128xf32>
    %91 = vector.multi_reduction <add>, %90, %cst_23 [0] : vector<256x128xf32> to vector<128xf32>
    %92 = vector.shape_cast %91 : vector<128xf32> to vector<1x128xf32>
    %93 = arith.mulf %90, %90 : vector<256x128xf32>
    %cst_24 = arith.constant dense<0.000000e+00> : vector<128xf32>
    %94 = vector.multi_reduction <add>, %93, %cst_24 [0] : vector<256x128xf32> to vector<128xf32>
    %95 = vector.shape_cast %94 : vector<128xf32> to vector<1x128xf32>
    %cst_25 = arith.constant 3.906250e-03 : f32
    %96 = vector.broadcast %cst_25 : f32 to vector<1x128xf32>
    %97 = arith.mulf %92, %96 : vector<1x128xf32>
    %cst_26 = arith.constant 3.906250e-03 : f32
    %98 = vector.broadcast %cst_26 : f32 to vector<1x128xf32>
    %99 = arith.mulf %95, %98 : vector<1x128xf32>
    %100 = arith.mulf %97, %97 : vector<1x128xf32>
    %101 = arith.subf %99, %100 : vector<1x128xf32>
    %cst_27 = arith.constant 0.000000e+00 : f32
    %102 = vector.broadcast %cst_27 : f32 to vector<1x128xf32>
    %103 = arith.maximumf %101, %102 : vector<1x128xf32>
    %cst_28 = arith.constant 9.99999974E-6 : f32
    %104 = vector.broadcast %cst_28 : f32 to vector<1x128xf32>
    %105 = arith.addf %103, %104 : vector<1x128xf32>
    %106 = math.rsqrt %105 : vector<1x128xf32>
    %107 = arith.mulf %97, %106 : vector<1x128xf32>
    %108 = vector.broadcast %106 : vector<1x128xf32> to vector<256x128xf32>
    %109 = arith.mulf %90, %108 : vector<256x128xf32>
    %110 = vector.broadcast %107 : vector<1x128xf32> to vector<256x128xf32>
    %111 = arith.subf %109, %110 : vector<256x128xf32>
    %cst_29 = arith.constant 0.000000e+00 : f32
    %112 = vector.broadcast %cst_29 : f32 to vector<256x128xf32>
    %113 = arith.maximumf %111, %112 : vector<256x128xf32>
    %114 = vector.extract_strided_slice %113 {offsets = [0, 0], sizes = [256, 8], strides = [1, 1]} : vector<256x128xf32> to vector<256x8xf32>
    %115 = vector.extract_strided_slice %22 {offsets = [0, 0], sizes = [256, 8], strides = [1, 1]} : vector<256x128xf32> to vector<256x8xf32>
    %116 = arith.addf %114, %115 : vector<256x8xf32>
    %c0_30 = arith.constant 0 : index
    %c0_31 = arith.constant 0 : index
    %117 = vector.load %arg4[%c0_30, %c0_31] : memref<1x8xf32, #tpu.memory_space<vmem>>, vector<1x8xf32>
    %118 = vector.broadcast %117 : vector<1x8xf32> to vector<256x8xf32>
    %119 = arith.addf %116, %118 : vector<256x8xf32>
    %120 = vector.shape_cast %119 : vector<256x8xf32> to vector<16x16x8xf32>
    %c0_32 = arith.constant 0 : index
    %c0_33 = arith.constant 0 : index
    %c0_34 = arith.constant 0 : index
    %c0_35 = arith.constant 0 : index
    %121 = vector.load %arg5[%c0_32, %c0_33, %c0_34, %c0_35] : memref<1x16x16x8xf32, #tpu.memory_space<vmem>>, vector<1x16x16x8xf32>
    %122 = vector.shape_cast %121 : vector<1x16x16x8xf32> to vector<16x16x8xf32>
    %123 = vector.shape_cast %120 : vector<16x16x8xf32> to vector<1x16x16x8xf32>
    tpu.vector_store %arg5[%c0_32, %c0_33, %c0_34, %c0_35], %123 {strides = array<i32>} : memref<1x16x16x8xf32, #tpu.memory_space<vmem>>, vector<1x16x16x8xf32>,
    return
  }
  func.func @transform_0(%arg0: i32) -> (i32, i32, i32, i32) {
    %c0_i32 = arith.constant 0 : i32
    %c0_i32_0 = arith.constant 0 : i32
    %c0_i32_1 = arith.constant 0 : i32
    %c0_i32_2 = arith.constant 0 : i32
    return %arg0, %c0_i32, %c0_i32_0, %c0_i32_1 : i32, i32, i32, i32
  }
  func.func @transform_1(%arg0: i32) -> (i32, i32) {
    %c0_i32 = arith.constant 0 : i32
    %c0_i32_0 = arith.constant 0 : i32
    %c0_i32_1 = arith.constant 0 : i32
    return %c0_i32, %c0_i32_0 : i32, i32
  }
  func.func @transform_2(%arg0: i32) -> (i32, i32) {
    %c0_i32 = arith.constant 0 : i32
    %c0_i32_0 = arith.constant 0 : i32
    %c0_i32_1 = arith.constant 0 : i32
    return %c0_i32, %c0_i32_0 : i32, i32
  }
  func.func @transform_3(%arg0: i32) -> (i32, i32) {
    %c0_i32 = arith.constant 0 : i32
    %c0_i32_0 = arith.constant 0 : i32
    %c0_i32_1 = arith.constant 0 : i32
    return %c0_i32, %c0_i32_0 : i32, i32
  }
  func.func @transform_4(%arg0: i32) -> (i32, i32, i32, i32) {
    %c0_i32 = arith.constant 0 : i32
    %c0_i32_0 = arith.constant 0 : i32
    %c0_i32_1 = arith.constant 0 : i32
    %c0_i32_2 = arith.constant 0 : i32
    return %arg0, %c0_i32, %c0_i32_0, %c0_i32_1 : i32, i32, i32, i32
  }
}

module attributes {stable_mosaic.version = 11 : i64} {
  func.func @kernel(%arg0: i32, %arg1: memref<1x16x16x4xf32, #tpu.memory_space<vmem>>, %arg2: memref<36x256xbf16, #tpu.memory_space<vmem>>, %arg3: memref<1152x128xbf16, #tpu.memory_space<vmem>>, %arg4: memref<1x8xf32, #tpu.memory_space<vmem>>, %arg5: memref<1x16x16x8xf32, #tpu.memory_space<vmem>>) attributes {dimension_semantics = [#tpu.dimension_semantics<parallel>], iteration_bounds = array<i64: 2>, scalar_prefetch = 0 : i64, scratch_operands = 0 : i64, tpu.core_type = #tpu.core_type<tc>, window_params = [{transform_indices = @transform_0, window_bounds = array<i64: 1, 16, 16, 4>}, {pipeline_mode = #tpu.pipeline_mode<synchronous>, transform_indices = @transform_1, window_bounds = array<i64: 36, 256>}, {pipeline_mode = #tpu.pipeline_mode<synchronous>, transform_indices = @transform_2, window_bounds = array<i64: 1152, 128>}, {pipeline_mode = #tpu.pipeline_mode<synchronous>, transform_indices = @transform_3, window_bounds = array<i64: 1, 8>}, {transform_indices = @transform_4, window_bounds = array<i64: 1, 16, 16, 8>}]} {
    %c0 = arith.constant 0 : index
    %c0_0 = arith.constant 0 : index
    %c0_1 = arith.constant 0 : index
    %c0_2 = arith.constant 0 : index
    %0 = vector.load %arg1[%c0, %c0_0, %c0_1, %c0_2] : memref<1x16x16x4xf32, #tpu.memory_space<vmem>>, vector<1x16x16x4xf32>
    %1 = vector.shape_cast %0 : vector<1x16x16x4xf32> to vector<16x16x4xf32>
    %2 = arith.truncf %1 : vector<16x16x4xf32> to vector<16x16x4xbf16>
    %3 = vector.extract_strided_slice %2 {offsets = [1, 0, 0], sizes = [1, 16, 4], strides = [1, 1, 1]} : vector<16x16x4xbf16> to vector<1x16x4xbf16>
    %4 = vector.extract_strided_slice %2 {offsets = [14, 0, 0], sizes = [1, 16, 4], strides = [1, 1, 1]} : vector<16x16x4xbf16> to vector<1x16x4xbf16>
    %5 = tpu.concatenate %3, %2, %4 in 0 : vector<1x16x4xbf16>, vector<16x16x4xbf16>, vector<1x16x4xbf16> -> vector<18x16x4xbf16>
    %6 = vector.extract_strided_slice %5 {offsets = [0, 1, 0], sizes = [18, 1, 4], strides = [1, 1, 1]} : vector<18x16x4xbf16> to vector<18x1x4xbf16>
    %7 = vector.extract_strided_slice %5 {offsets = [0, 14, 0], sizes = [18, 1, 4], strides = [1, 1, 1]} : vector<18x16x4xbf16> to vector<18x1x4xbf16>
    %8 = tpu.concatenate %6, %5, %7 in 1 : vector<18x1x4xbf16>, vector<18x16x4xbf16>, vector<18x1x4xbf16> -> vector<18x18x4xbf16>
    %9 = vector.extract_strided_slice %8 {offsets = [0, 0, 0], sizes = [16, 16, 4], strides = [1, 1, 1]} : vector<18x18x4xbf16> to vector<16x16x4xbf16>
    %10 = vector.extract_strided_slice %8 {offsets = [0, 1, 0], sizes = [16, 16, 4], strides = [1, 1, 1]} : vector<18x18x4xbf16> to vector<16x16x4xbf16>
    %11 = vector.extract_strided_slice %8 {offsets = [0, 2, 0], sizes = [16, 16, 4], strides = [1, 1, 1]} : vector<18x18x4xbf16> to vector<16x16x4xbf16>
    %12 = vector.extract_strided_slice %8 {offsets = [1, 0, 0], sizes = [16, 16, 4], strides = [1, 1, 1]} : vector<18x18x4xbf16> to vector<16x16x4xbf16>
    %13 = vector.extract_strided_slice %8 {offsets = [1, 1, 0], sizes = [16, 16, 4], strides = [1, 1, 1]} : vector<18x18x4xbf16> to vector<16x16x4xbf16>
    %14 = vector.extract_strided_slice %8 {offsets = [1, 2, 0], sizes = [16, 16, 4], strides = [1, 1, 1]} : vector<18x18x4xbf16> to vector<16x16x4xbf16>
    %15 = vector.extract_strided_slice %8 {offsets = [2, 0, 0], sizes = [16, 16, 4], strides = [1, 1, 1]} : vector<18x18x4xbf16> to vector<16x16x4xbf16>
    %16 = vector.extract_strided_slice %8 {offsets = [2, 1, 0], sizes = [16, 16, 4], strides = [1, 1, 1]} : vector<18x18x4xbf16> to vector<16x16x4xbf16>
    %17 = vector.extract_strided_slice %8 {offsets = [2, 2, 0], sizes = [16, 16, 4], strides = [1, 1, 1]} : vector<18x18x4xbf16> to vector<16x16x4xbf16>
    %18 = tpu.concatenate %9, %10, %11, %12, %13, %14, %15, %16, %17 in 2 : vector<16x16x4xbf16>, vector<16x16x4xbf16>, vector<16x16x4xbf16>, vector<16x16x4xbf16>, vector<16x16x4xbf16>, vector<16x16x4xbf16>, vector<16x16x4xbf16>, vector<16x16x4xbf16>, vector<16x16x4xbf16> -> vector<16x16x36xbf16>
    %19 = vector.shape_cast %18 : vector<16x16x36xbf16> to vector<256x36xbf16>
    %c0_3 = arith.constant 0 : index
    %c0_4 = arith.constant 0 : index
    %20 = vector.load %arg2[%c0_3, %c0_4] : memref<36x256xbf16, #tpu.memory_space<vmem>>, vector<36x256xbf16>
    %cst = arith.constant dense<0.000000e+00> : vector<256x256xf32>
    %21 = tpu.matmul %19, %20, %cst {dimension_numbers = #tpu.dot_dimension_numbers<[1], [0], [0], [1], [0, 0, 1, 1], [], []>} : vector<256x36xbf16>, vector<36x256xbf16>, vector<256x256xf32> -> vector<256x256xf32>
    %22 = vector.extract_strided_slice %21 {offsets = [0, 128], sizes = [256, 128], strides = [1, 1]} : vector<256x256xf32> to vector<256x128xf32>
    %23 = vector.extract_strided_slice %21 {offsets = [0, 0], sizes = [256, 128], strides = [1, 1]} : vector<256x256xf32> to vector<256x128xf32>
    %cst_5 = arith.constant dense<0.000000e+00> : vector<128xf32>
    %24 = vector.multi_reduction <add>, %23, %cst_5 [0] : vector<256x128xf32> to vector<128xf32>
    %25 = vector.shape_cast %24 : vector<128xf32> to vector<1x128xf32>
    %26 = arith.mulf %23, %23 : vector<256x128xf32>
    %cst_6 = arith.constant dense<0.000000e+00> : vector<128xf32>
    %27 = vector.multi_reduction <add>, %26, %cst_6 [0] : vector<256x128xf32> to vector<128xf32>
    %28 = vector.shape_cast %27 : vector<128xf32> to vector<1x128xf32>
    %cst_7 = arith.constant 3.906250e-03 : f32
    %29 = vector.broadcast %cst_7 : f32 to vector<1x128xf32>
    %30 = arith.mulf %25, %29 : vector<1x128xf32>
    %cst_8 = arith.constant 3.906250e-03 : f32
    %31 = vector.broadcast %cst_8 : f32 to vector<1x128xf32>
    %32 = arith.mulf %28, %31 : vector<1x128xf32>
    %33 = arith.mulf %30, %30 : vector<1x128xf32>
    %34 = arith.subf %32, %33 : vector<1x128xf32>
    %cst_9 = arith.constant 0.000000e+00 : f32
    %35 = vector.broadcast %cst_9 : f32 to vector<1x128xf32>
    %36 = arith.maximumf %34, %35 : vector<1x128xf32>
    %cst_10 = arith.constant 9.99999974E-6 : f32
    %37 = vector.broadcast %cst_10 : f32 to vector<1x128xf32>
    %38 = arith.addf %36, %37 : vector<1x128xf32>
    %39 = math.rsqrt %38 : vector<1x128xf32>
    %40 = arith.mulf %30, %39 : vector<1x128xf32>
    %41 = vector.broadcast %39 : vector<1x128xf32> to vector<256x128xf32>
    %42 = arith.mulf %23, %41 : vector<256x128xf32>
    %43 = vector.broadcast %40 : vector<1x128xf32> to vector<256x128xf32>
    %44 = arith.subf %42, %43 : vector<256x128xf32>
    %cst_11 = arith.constant 0.000000e+00 : f32
    %45 = vector.broadcast %cst_11 : f32 to vector<256x128xf32>
    %46 = arith.maximumf %44, %45 : vector<256x128xf32>
    %47 = arith.truncf %46 : vector<256x128xf32> to vector<256x128xbf16>
    %48 = vector.shape_cast %47 : vector<256x128xbf16> to vector<16x16x128xbf16>
    %49 = vector.extract_strided_slice %48 {offsets = [1, 0, 0], sizes = [1, 16, 128], strides = [1, 1, 1]} : vector<16x16x128xbf16> to vector<1x16x128xbf16>
    %50 = vector.extract_strided_slice %48 {offsets = [14, 0, 0], sizes = [1, 16, 128], strides = [1, 1, 1]} : vector<16x16x128xbf16> to vector<1x16x128xbf16>
    %51 = tpu.concatenate %49, %48, %50 in 0 : vector<1x16x128xbf16>, vector<16x16x128xbf16>, vector<1x16x128xbf16> -> vector<18x16x128xbf16>
    %52 = vector.extract_strided_slice %51 {offsets = [0, 1, 0], sizes = [18, 1, 128], strides = [1, 1, 1]} : vector<18x16x128xbf16> to vector<18x1x128xbf16>
    %53 = vector.extract_strided_slice %51 {offsets = [0, 14, 0], sizes = [18, 1, 128], strides = [1, 1, 1]} : vector<18x16x128xbf16> to vector<18x1x128xbf16>
    %54 = tpu.concatenate %52, %51, %53 in 1 : vector<18x1x128xbf16>, vector<18x16x128xbf16>, vector<18x1x128xbf16> -> vector<18x18x128xbf16>
    %55 = vector.extract_strided_slice %54 {offsets = [0, 0, 0], sizes = [16, 16, 128], strides = [1, 1, 1]} : vector<18x18x128xbf16> to vector<16x16x128xbf16>
    %56 = vector.shape_cast %55 : vector<16x16x128xbf16> to vector<256x128xbf16>
    %57 = vector.extract_strided_slice %54 {offsets = [0, 1, 0], sizes = [16, 16, 128], strides = [1, 1, 1]} : vector<18x18x128xbf16> to vector<16x16x128xbf16>
    %58 = vector.shape_cast %57 : vector<16x16x128xbf16> to vector<256x128xbf16>
    %59 = tpu.concatenate %56, %58 in 1 : vector<256x128xbf16>, vector<256x128xbf16> -> vector<256x256xbf16>
    %c0_12 = arith.constant 0 : index
    %c0_13 = arith.constant 0 : index
    %60 = vector.load %arg3[%c0_12, %c0_13] : memref<1152x128xbf16, #tpu.memory_space<vmem>>, vector<256x128xbf16>
    %cst_14 = arith.constant dense<0.000000e+00> : vector<256x128xf32>
    %61 = tpu.matmul %59, %60, %cst_14 {dimension_numbers = #tpu.dot_dimension_numbers<[1], [0], [0], [1], [0, 0, 1, 1], [], []>} : vector<256x256xbf16>, vector<256x128xbf16>, vector<256x128xf32> -> vector<256x128xf32>
    %62 = vector.extract_strided_slice %54 {offsets = [0, 2, 0], sizes = [16, 16, 128], strides = [1, 1, 1]} : vector<18x18x128xbf16> to vector<16x16x128xbf16>
    %63 = vector.shape_cast %62 : vector<16x16x128xbf16> to vector<256x128xbf16>
    %64 = vector.extract_strided_slice %54 {offsets = [1, 0, 0], sizes = [16, 16, 128], strides = [1, 1, 1]} : vector<18x18x128xbf16> to vector<16x16x128xbf16>
    %65 = vector.shape_cast %64 : vector<16x16x128xbf16> to vector<256x128xbf16>
    %66 = tpu.concatenate %63, %65 in 1 : vector<256x128xbf16>, vector<256x128xbf16> -> vector<256x256xbf16>
    %c256 = arith.constant 256 : index
    %c0_15 = arith.constant 0 : index
    %67 = vector.load %arg3[%c256, %c0_15] : memref<1152x128xbf16, #tpu.memory_space<vmem>>, vector<256x128xbf16>
    %cst_16 = arith.constant dense<0.000000e+00> : vector<256x128xf32>
    %68 = tpu.matmul %66, %67, %cst_16 {dimension_numbers = #tpu.dot_dimension_numbers<[1], [0], [0], [1], [0, 0, 1, 1], [], []>} : vector<256x256xbf16>, vector<256x128xbf16>, vector<256x128xf32> -> vector<256x128xf32>
    %69 = arith.addf %61, %68 : vector<256x128xf32>
    %70 = vector.extract_strided_slice %54 {offsets = [1, 1, 0], sizes = [16, 16, 128], strides = [1, 1, 1]} : vector<18x18x128xbf16> to vector<16x16x128xbf16>
    %71 = vector.shape_cast %70 : vector<16x16x128xbf16> to vector<256x128xbf16>
    %72 = vector.extract_strided_slice %54 {offsets = [1, 2, 0], sizes = [16, 16, 128], strides = [1, 1, 1]} : vector<18x18x128xbf16> to vector<16x16x128xbf16>
    %73 = vector.shape_cast %72 : vector<16x16x128xbf16> to vector<256x128xbf16>
    %74 = tpu.concatenate %71, %73 in 1 : vector<256x128xbf16>, vector<256x128xbf16> -> vector<256x256xbf16>
    %c512 = arith.constant 512 : index
    %c0_17 = arith.constant 0 : index
    %75 = vector.load %arg3[%c512, %c0_17] : memref<1152x128xbf16, #tpu.memory_space<vmem>>, vector<256x128xbf16>
    %cst_18 = arith.constant dense<0.000000e+00> : vector<256x128xf32>
    %76 = tpu.matmul %74, %75, %cst_18 {dimension_numbers = #tpu.dot_dimension_numbers<[1], [0], [0], [1], [0, 0, 1, 1], [], []>} : vector<256x256xbf16>, vector<256x128xbf16>, vector<256x128xf32> -> vector<256x128xf32>
    %77 = arith.addf %69, %76 : vector<256x128xf32>
    %78 = vector.extract_strided_slice %54 {offsets = [2, 0, 0], sizes = [16, 16, 128], strides = [1, 1, 1]} : vector<18x18x128xbf16> to vector<16x16x128xbf16>
    %79 = vector.shape_cast %78 : vector<16x16x128xbf16> to vector<256x128xbf16>
    %80 = vector.extract_strided_slice %54 {offsets = [2, 1, 0], sizes = [16, 16, 128], strides = [1, 1, 1]} : vector<18x18x128xbf16> to vector<16x16x128xbf16>
    %81 = vector.shape_cast %80 : vector<16x16x128xbf16> to vector<256x128xbf16>
    %82 = tpu.concatenate %79, %81 in 1 : vector<256x128xbf16>, vector<256x128xbf16> -> vector<256x256xbf16>
    %c768 = arith.constant 768 : index
    %c0_19 = arith.constant 0 : index
    %83 = vector.load %arg3[%c768, %c0_19] : memref<1152x128xbf16, #tpu.memory_space<vmem>>, vector<256x128xbf16>
    %cst_20 = arith.constant dense<0.000000e+00> : vector<256x128xf32>
    %84 = tpu.matmul %82, %83, %cst_20 {dimension_numbers = #tpu.dot_dimension_numbers<[1], [0], [0], [1], [0, 0, 1, 1], [], []>} : vector<256x256xbf16>, vector<256x128xbf16>, vector<256x128xf32> -> vector<256x128xf32>
    %85 = arith.addf %77, %84 : vector<256x128xf32>
    %86 = vector.extract_strided_slice %54 {offsets = [2, 2, 0], sizes = [16, 16, 128], strides = [1, 1, 1]} : vector<18x18x128xbf16> to vector<16x16x128xbf16>
    %87 = vector.shape_cast %86 : vector<16x16x128xbf16> to vector<256x128xbf16>
    %c1024 = arith.constant 1024 : index
    %c0_21 = arith.constant 0 : index
    %88 = vector.load %arg3[%c1024, %c0_21] : memref<1152x128xbf16, #tpu.memory_space<vmem>>, vector<128x128xbf16>
    %cst_22 = arith.constant dense<0.000000e+00> : vector<256x128xf32>
    %89 = tpu.matmul %87, %88, %cst_22 {dimension_numbers = #tpu.dot_dimension_numbers<[1], [0], [0], [1], [0, 0, 1, 1], [], []>} : vector<256x128xbf16>, vector<128x128xbf16>, vector<256x128xf32> -> vector<256x128xf32>
    %90 = arith.addf %85, %89 : vector<256x128xf32>
    %cst_23 = arith.constant dense<0.000000e+00> : vector<128xf32>
    %91 = vector.multi_reduction <add>, %90, %cst_23 [0] : vector<256x128xf32> to vector<128xf32>
    %92 = vector.shape_cast %91 : vector<128xf32> to vector<1x128xf32>
    %93 = arith.mulf %90, %90 : vector<256x128xf32>
    %cst_24 = arith.constant dense<0.000000e+00> : vector<128xf32>
    %94 = vector.multi_reduction <add>, %93, %cst_24 [0] : vector<256x128xf32> to vector<128xf32>
    %95 = vector.shape_cast %94 : vector<128xf32> to vector<1x128xf32>
    %cst_25 = arith.constant 3.906250e-03 : f32
    %96 = vector.broadcast %cst_25 : f32 to vector<1x128xf32>
    %97 = arith.mulf %92, %96 : vector<1x128xf32>
    %cst_26 = arith.constant 3.906250e-03 : f32
    %98 = vector.broadcast %cst_26 : f32 to vector<1x128xf32>
    %99 = arith.mulf %95, %98 : vector<1x128xf32>
    %100 = arith.mulf %97, %97 : vector<1x128xf32>
    %101 = arith.subf %99, %100 : vector<1x128xf32>
    %cst_27 = arith.constant 0.000000e+00 : f32
    %102 = vector.broadcast %cst_27 : f32 to vector<1x128xf32>
    %103 = arith.maximumf %101, %102 : vector<1x128xf32>
    %cst_28 = arith.constant 9.99999974E-6 : f32
    %104 = vector.broadcast %cst_28 : f32 to vector<1x128xf32>
    %105 = arith.addf %103, %104 : vector<1x128xf32>
    %106 = math.rsqrt %105 : vector<1x128xf32>
    %107 = arith.mulf %97, %106 : vector<1x128xf32>
    %108 = vector.broadcast %106 : vector<1x128xf32> to vector<256x128xf32>
    %109 = arith.mulf %90, %108 : vector<256x128xf32>
    %110 = vector.broadcast %107 : vector<1x128xf32> to vector<256x128xf32>
    %111 = arith.subf %109, %110 : vector<256x128xf32>
    %cst_29 = arith.constant 0.000000e+00 : f32
    %112 = vector.broadcast %cst_29 : f32 to vector<256x128xf32>
    %113 = arith.maximumf %111, %112 : vector<256x128xf32>
    %114 = vector.extract_strided_slice %113 {offsets = [0, 0], sizes = [256, 8], strides = [1, 1]} : vector<256x128xf32> to vector<256x8xf32>
    %115 = vector.extract_strided_slice %22 {offsets = [0, 0], sizes = [256, 8], strides = [1, 1]} : vector<256x128xf32> to vector<256x8xf32>
    %116 = arith.addf %114, %115 : vector<256x8xf32>
    %c0_30 = arith.constant 0 : index
    %c0_31 = arith.constant 0 : index
    %117 = vector.load %arg4[%c0_30, %c0_31] : memref<1x8xf32, #tpu.memory_space<vmem>>, vector<1x8xf32>
    %118 = vector.broadcast %117 : vector<1x8xf32> to vector<256x8xf32>
    %119 = arith.addf %116, %118 : vector<256x8xf32>
    %120 = vector.shape_cast %119 : vector<256x8xf32> to vector<16x16x8xf32>
    %c0_32 = arith.constant 0 : index
    %c0_33 = arith.constant 0 : index
    %c0_34 = arith.constant 0 : index
    %c0_35 = arith.constant 0 : index
    %121 = vector.load %arg5[%c0_32, %c0_33, %c0_34, %c0_35] : memref<1x16x16x8xf32, #tpu.memory_space<vmem>>, vector<1x16x16x8xf32>
    %122 = vector.shape_cast %121 : vector<1x16x16x8xf32> to vector<16x16x8xf32>
    %123 = vector.shape_cast %120 : vector<16x16x8xf32> to vector<1x16x16x8xf32>
    tpu.vector_store %arg5[%c0_32, %c0_33, %c0_34, %c0_35], %123 {strides = array<i32>} : memref<1x16x16x8xf32, #tpu.memory_space<vmem>>, vector<1x16x16x8xf32>,
    return
  }
  func.func @transform_0(%arg0: i32) -> (i32, i32, i32, i32) {
    %c0_i32 = arith.constant 0 : i32
    %c0_i32_0 = arith.constant 0 : i32
    %c0_i32_1 = arith.constant 0 : i32
    %c0_i32_2 = arith.constant 0 : i32
    return %arg0, %c0_i32, %c0_i32_0, %c0_i32_1 : i32, i32, i32, i32
  }
  func.func @transform_1(%arg0: i32) -> (i32, i32) {
    %c0_i32 = arith.constant 0 : i32
    %c0_i32_0 = arith.constant 0 : i32
    %c0_i32_1 = arith.constant 0 : i32
    return %c0_i32, %c0_i32_0 : i32, i32
  }
  func.func @transform_2(%arg0: i32) -> (i32, i32) {
    %c0_i32 = arith.constant 0 : i32
    %c0_i32_0 = arith.constant 0 : i32
    %c0_i32_1 = arith.constant 0 : i32
    return %c0_i32, %c0_i32_0 : i32, i32
  }
  func.func @transform_3(%arg0: i32) -> (i32, i32) {
    %c0_i32 = arith.constant 0 : i32
    %c0_i32_0 = arith.constant 0 : i32
    %c0_i32_1 = arith.constant 0 : i32
    return %c0_i32, %c0_i32_0 : i32, i32
  }
  func.func @transform_4(%arg0: i32) -> (i32, i32, i32, i32) {
    %c0_i32 = arith.constant 0 : i32
    %c0_i32_0 = arith.constant 0 : i32
    %c0_i32_1 = arith.constant 0 : i32
    %c0_i32_2 = arith.constant 0 : i32
    return %arg0, %c0_i32, %c0_i32_0, %c0_i32_1 : i32, i32, i32, i32
  }
}

</mosaic_0001>

<llo_original>
// kernel: tpu_custom_call.1
$region0: #{tpu_custom_call.1}
  #allocation0 [shape = 'u32[]', space=smem, size = 0x4, offset = 0x4, fixed_abs, tag = 'smem constant byte address 0x4 - core index']
  #allocation1 [shape = 'u32[72,128]{1,0:T(1,128)}', space=vmem, size = 0x9000, scoped, tag = 'internal scratch']
  %s0 = inlined_call_operand.vmem [shape: f32[2,16,16,4], index: 0, kind: input, shape index: {}]
  %s1 = inlined_call_operand.vmem [shape: bf16[36,256], index: 1, kind: input, shape index: {}]
  %s2 = inlined_call_operand.vmem [shape: bf16[1152,128], index: 2, kind: input, shape index: {}]
  %s3 = inlined_call_operand.vmem [shape: f32[1,8], index: 3, kind: input, shape index: {}]
  %s4 = inlined_call_operand.vmem [shape: f32[2,16,16,8], index: 4, kind: output, shape index: {}]
  %s5 = sld [smem:[#allocation0]]
  $region49: #{tpu_custom_call.1} parent=0
    _
  %s7 = ssub.s32 1, %s5
  %s8 = scalar_select 0, %s7, %s5
  loop: start=0, step=1, limit=4
  $region2: #{tpu_custom_call.1} parent=0 // loop_pre_header
    _
  $region3: #{tpu_custom_call.1} parent=0 // loop_header
    %s10 = sphi 0, %s14
    %p11 = scmp.ge.s32.totalorder %s10, 4
    %s20 = sphi 0, %s22
    %s23 = sphi 0, %s20
    %s24 = sphi 0, %s23
    %s40 = sphi 0, %s24
    %s44 = sphi 0, %s44
    %s46 = sphi 0, %s44
    %s47 = sphi 0, %s46
    %s61 = sphi 0, %s47
    %s65 = sphi 0, %s65
    %s67 = sphi 0, %s65
    %s68 = sphi 0, %s67
    %s82 = sphi 0, %s68
    %s86 = sphi 0, %s86
    %s88 = sphi 0, %s86
    %s89 = sphi 0, %s88
    %s103 = sphi 0, %s89
    %s109 = sphi 0, %s111
    %s112 = sphi 0, %s109
    %s113 = sphi 0, %s112
    %s129 = sphi 0, %s113
  $region4: #{tpu_custom_call.1} parent=0 // loop_header_branch
    %13 = sbr.rel (%p11) target = $region8
  $region5: #{tpu_custom_call.1} parent=0 // loop_body
    %s15 = ssub.s32 %s10, 1
    %s16 = ssub.s32 %s10, 2
    %s17 = sadd.s32 %s10, 1
    %s18 = ssub.s32 %s10, %s17
    %p19 = scmp.eq.s32.totalorder %s18, 0
    %s21 = sadd.s32 %s20, 1
    %s22 = scalar_select %p19, %s20, %s21
    %p25 = pneg %p19
    %p26 = scmp.eq.s32.totalorder %s10, 1
    %p27 = por %p25, %p26
    %p28 = scmp.ne.s32.totalorder %s20, %s23
    %p29 = scmp.eq.s32.totalorder %s10, 0
    %p30 = por %p28, %p29
    %p31 = scmp.ne.s32.totalorder %s20, %s23
    %p32 = scmp.eq.s32.totalorder %s15, 1
    %p33 = por %p31, %p32
    %p34 = scmp.ne.s32.totalorder %s23, %s24
    %p35 = scmp.eq.s32.totalorder %s15, 0
    %p36 = por %p34, %p35
    %p37 = scmp.ne.s32.totalorder %s23, %s24
    %p38 = scmp.eq.s32.totalorder %s16, 1
    %p39 = por %p37, %p38
    %p41 = scmp.ne.s32.totalorder %s24, %s40
    %p42 = scmp.eq.s32.totalorder %s16, 0
    %p43 = por %p41, %p42
    %s45 = sadd.s32 %s44, 1
    %p48 = scmp.eq.s32.totalorder %s10, 1
    %p49 = scmp.ne.s32.totalorder %s44, %s46
    %p50 = scmp.eq.s32.totalorder %s10, 0
    %p51 = por %p49, %p50
    %p52 = scmp.ne.s32.totalorder %s44, %s46
    %p53 = scmp.eq.s32.totalorder %s15, 1
    %p54 = por %p52, %p53
    %p55 = scmp.ne.s32.totalorder %s46, %s47
    %p56 = scmp.eq.s32.totalorder %s15, 0
    %p57 = por %p55, %p56
    %p58 = scmp.ne.s32.totalorder %s46, %s47
    %p59 = scmp.eq.s32.totalorder %s16, 1
    %p60 = por %p58, %p59
    %p62 = scmp.ne.s32.totalorder %s47, %s61
    %p63 = scmp.eq.s32.totalorder %s16, 0
    %p64 = por %p62, %p63
    %s66 = sadd.s32 %s65, 1
    %p69 = scmp.eq.s32.totalorder %s10, 1
    %p70 = scmp.ne.s32.totalorder %s65, %s67
    %p71 = scmp.eq.s32.totalorder %s10, 0
    %p72 = por %p70, %p71
    %p73 = scmp.ne.s32.totalorder %s65, %s67
    %p74 = scmp.eq.s32.totalorder %s15, 1
    %p75 = por %p73, %p74
    %p76 = scmp.ne.s32.totalorder %s67, %s68
    %p77 = scmp.eq.s32.totalorder %s15, 0
    %p78 = por %p76, %p77
    %p79 = scmp.ne.s32.totalorder %s67, %s68
    %p80 = scmp.eq.s32.totalorder %s16, 1
    %p81 = por %p79, %p80
    %p83 = scmp.ne.s32.totalorder %s68, %s82
    %p84 = scmp.eq.s32.totalorder %s16, 0
    %p85 = por %p83, %p84
    %s87 = sadd.s32 %s86, 1
    %p90 = scmp.eq.s32.totalorder %s10, 1
    %p91 = scmp.ne.s32.totalorder %s86, %s88
    %p92 = scmp.eq.s32.totalorder %s10, 0
    %p93 = por %p91, %p92
    %p94 = scmp.ne.s32.totalorder %s86, %s88
    %p95 = scmp.eq.s32.totalorder %s15, 1
    %p96 = por %p94, %p95
    %p97 = scmp.ne.s32.totalorder %s88, %s89
    %p98 = scmp.eq.s32.totalorder %s15, 0
    %p99 = por %p97, %p98
    %p100 = scmp.ne.s32.totalorder %s88, %s89
    %p101 = scmp.eq.s32.totalorder %s16, 1
    %p102 = por %p100, %p101
    %p104 = scmp.ne.s32.totalorder %s89, %s103
    %p105 = scmp.eq.s32.totalorder %s16, 0
    %p106 = por %p104, %p105
    %s107 = ssub.s32 %s10, %s17
    %p108 = scmp.eq.s32.totalorder %s107, 0
    %s110 = sadd.s32 %s109, 1
    %s111 = scalar_select %p108, %s109, %s110
    %p114 = pneg %p108
    %p115 = scmp.eq.s32.totalorder %s10, 1
    %p116 = por %p114, %p115
    %p117 = scmp.ne.s32.totalorder %s109, %s112
    %p118 = scmp.eq.s32.totalorder %s10, 0
    %p119 = por %p117, %p118
    %p120 = scmp.ne.s32.totalorder %s109, %s112
    %p121 = scmp.eq.s32.totalorder %s15, 1
    %p122 = por %p120, %p121
    %p123 = scmp.ne.s32.totalorder %s112, %s113
    %p124 = scmp.eq.s32.totalorder %s15, 0
    %p125 = por %p123, %p124
    %p126 = scmp.ne.s32.totalorder %s112, %s113
    %p127 = scmp.eq.s32.totalorder %s16, 1
    %p128 = por %p126, %p127
    %p130 = scmp.ne.s32.totalorder %s113, %s129
    %p131 = scmp.eq.s32.totalorder %s16, 0
    %p132 = por %p130, %p131
    %p133 = scmp.le.s32.totalorder 1, %s10
    %p134 = scmp.lt.s32.totalorder %s10, 3
    %p135 = pnand %p133, %p134
    %p136 = pneg %p135
    // Predicated region
    $region9: #{tpu_custom_call.1} parent=5 // pred_check
      _
    $region10: #{tpu_custom_call.1} parent=5 // pred_check_branch
      %138 = sbr.rel (%p135) target = $region12
    $region11: #{tpu_custom_call.1} parent=5 // pred_region
      %s139 = ssub.s32 %s10, 1
      // Predicated region
      $region13: #{tpu_custom_call.1} parent=11 // pred_check
        %p140 = pneg %p57
      $region14: #{tpu_custom_call.1} parent=11 // pred_check_branch
        %142 = sbr.rel (%p140) target = $region16
      $region15: #{tpu_custom_call.1} parent=11 // pred_region
        _
      $region16: #{tpu_custom_call.1} parent=11 // pred_fallthru
        _
      // Predicated region
      $region17: #{tpu_custom_call.1} parent=11 // pred_check
        %p143 = pneg %p78
      $region18: #{tpu_custom_call.1} parent=11 // pred_check_branch
        %145 = sbr.rel (%p143) target = $region20
      $region19: #{tpu_custom_call.1} parent=11 // pred_region
        _
      $region20: #{tpu_custom_call.1} parent=11 // pred_fallthru
        _
      // Predicated region
      $region21: #{tpu_custom_call.1} parent=11 // pred_check
        %p146 = pneg %p99
      $region22: #{tpu_custom_call.1} parent=11 // pred_check_branch
        %148 = sbr.rel (%p146) target = $region24
      $region23: #{tpu_custom_call.1} parent=11 // pred_region
        _
      $region24: #{tpu_custom_call.1} parent=11 // pred_fallthru
        _
    $region12: #{tpu_custom_call.1} parent=5 // pred_fallthru
      _
    %p149 = scmp.lt.s32.totalorder %s10, 2
    // Predicated region
    $region25: #{tpu_custom_call.1} parent=5 // pred_check
      %p150 = pneg %p149
    $region26: #{tpu_custom_call.1} parent=5 // pred_check_branch
      %152 = sbr.rel (%p150) target = $region28
    $region27: #{tpu_custom_call.1} parent=5 // pred_region
      // Predicated region
      $region29: #{tpu_custom_call.1} parent=27 // pred_check
        %p153 = pneg %p30
      $region30: #{tpu_custom_call.1} parent=27 // pred_check_branch
        %155 = sbr.rel (%p153) target = $region32
      $region31: #{tpu_custom_call.1} parent=27 // pred_region
        %p156 = scmp.lt.s32.totalorder %s10, 1
        %s157 = scalar_select %p156, %s10, 1
        %s158 = smul.addr %s157, 32
        %s159 = smul.addr %s158, 8
        %s160 = scalar_lea.vmem %s0, %s159
      $region32: #{tpu_custom_call.1} parent=27 // pred_fallthru
        _
    $region28: #{tpu_custom_call.1} parent=5 // pred_fallthru
      _
    %p161 = scmp.le.s32.totalorder 1, %s10
    %p162 = scmp.lt.s32.totalorder %s10, 3
    %p163 = pnand %p161, %p162
    %p164 = pneg %p163
    // Predicated region
    $region33: #{tpu_custom_call.1} parent=5 // pred_check
      _
    $region34: #{tpu_custom_call.1} parent=5 // pred_check_branch
      %166 = sbr.rel (%p163) target = $region36
    $region35: #{tpu_custom_call.1} parent=5 // pred_region
      %s167 = ssub.s32 %s10, 1
      %p168 = scmp.lt.s32.totalorder %s15, 1
      %s169 = scalar_select %p168, %s15, 1
      %s170 = smul.addr %s169, 32
      %s171 = smul.addr %s170, 8
      %s172 = scalar_lea.vmem %s0, %s171
      %p173 = pneg %p36
      %p174 = pneg %p33
      %p175 = pneg %p57
      %p176 = pneg %p54
      %p177 = pneg %p78
      %p178 = pneg %p75
      %p179 = pneg %p99
      %p180 = pneg %p96
      %p181 = pneg %p125
      %p182 = pneg %p122
      %p183 = scmp.lt.s32.totalorder %s15, 1
      %s184 = scalar_select %p183, %s15, 1
      %s185 = smul.addr %s184, 32
      %s186 = smul.addr %s185, 8
      %s187 = scalar_lea.vmem %s4, %s186
      %p188 = scmp.lt.s32.totalorder %s15, 1
      %s189 = scalar_select %p188, %s15, 1
      %s190 = smul.addr %s189, 32
      %s191 = smul.addr %s190, 8
      %s192 = scalar_lea.vmem %s0, %s191
      %p193 = scmp.lt.s32.totalorder %s15, 1
      %s194 = scalar_select %p193, %s15, 1
      %s195 = smul.addr %s194, 32
      %s196 = smul.addr %s195, 8
      %s197 = scalar_lea.vmem %s4, %s196
      %v199 = vld [vmem:[%s192] sm:$0xff]
      %v200 = vld [vmem:[%s192 + $0x8] sm:$0xff]
      %v201 = vld [vmem:[%s192 + $0x10] sm:$0xff]
      %v202 = vld [vmem:[%s192 + $0x18] sm:$0xff]
      %v203 = vld [vmem:[%s192 + $0x20] sm:$0xff]
      %v204 = vld [vmem:[%s192 + $0x28] sm:$0xff]
      %v205 = vld [vmem:[%s192 + $0x30] sm:$0xff]
      %v206 = vld [vmem:[%s192 + $0x38] sm:$0xff]
      %v207 = vld [vmem:[%s192 + $0x40] sm:$0xff]
      %v208 = vld [vmem:[%s192 + $0x48] sm:$0xff]
      %v209 = vld [vmem:[%s192 + $0x50] sm:$0xff]
      %v210 = vld [vmem:[%s192 + $0x58] sm:$0xff]
      %v211 = vld [vmem:[%s192 + $0x60] sm:$0xff]
      %v212 = vld [vmem:[%s192 + $0x68] sm:$0xff]
      %v213 = vld [vmem:[%s192 + $0x70] sm:$0xff]
      %v214 = vld [vmem:[%s192 + $0x78] sm:$0xff]
      %v215 = vld [vmem:[%s192 + $0x80] sm:$0xff]
      %v216 = vld [vmem:[%s192 + $0x88] sm:$0xff]
      %v217 = vld [vmem:[%s192 + $0x90] sm:$0xff]
      %v218 = vld [vmem:[%s192 + $0x98] sm:$0xff]
      %v219 = vld [vmem:[%s192 + $0xa0] sm:$0xff]
      %v220 = vld [vmem:[%s192 + $0xa8] sm:$0xff]
      %v221 = vld [vmem:[%s192 + $0xb0] sm:$0xff]
      %v222 = vld [vmem:[%s192 + $0xb8] sm:$0xff]
      %v223 = vld [vmem:[%s192 + $0xc0] sm:$0xff]
      %v224 = vld [vmem:[%s192 + $0xc8] sm:$0xff]
      %v225 = vld [vmem:[%s192 + $0xd0] sm:$0xff]
      %v226 = vld [vmem:[%s192 + $0xd8] sm:$0xff]
      %v227 = vld [vmem:[%s192 + $0xe0] sm:$0xff]
      %v228 = vld [vmem:[%s192 + $0xe8] sm:$0xff]
      %v229 = vld [vmem:[%s192 + $0xf0] sm:$0xff]
      %v230 = vld [vmem:[%s192 + $0xf8] sm:$0xff]
      %v231 = vpack.c.bf16 %v199, %v199
      %v232 = vpack.c.bf16 %v200, %v200
      %v233 = vpack.c.bf16 %v201, %v201
      %v234 = vpack.c.bf16 %v202, %v202
      %v235 = vpack.c.bf16 %v203, %v203
      %v236 = vpack.c.bf16 %v204, %v204
      %v237 = vpack.c.bf16 %v205, %v205
      %v238 = vpack.c.bf16 %v206, %v206
      %v239 = vpack.c.bf16 %v207, %v207
      %v240 = vpack.c.bf16 %v208, %v208
      %v241 = vpack.c.bf16 %v209, %v209
      %v242 = vpack.c.bf16 %v210, %v210
      %v243 = vpack.c.bf16 %v211, %v211
      %v244 = vpack.c.bf16 %v212, %v212
      %v245 = vpack.c.bf16 %v213, %v213
      %v246 = vpack.c.bf16 %v214, %v214
      %v247 = vpack.c.bf16 %v215, %v215
      %v248 = vpack.c.bf16 %v216, %v216
      %v249 = vpack.c.bf16 %v217, %v217
      %v250 = vpack.c.bf16 %v218, %v218
      %v251 = vpack.c.bf16 %v219, %v219
      %v252 = vpack.c.bf16 %v220, %v220
      %v253 = vpack.c.bf16 %v221, %v221
      %v254 = vpack.c.bf16 %v222, %v222
      %v255 = vpack.c.bf16 %v223, %v223
      %v256 = vpack.c.bf16 %v224, %v224
      %v257 = vpack.c.bf16 %v225, %v225
      %v258 = vpack.c.bf16 %v226, %v226
      %v259 = vpack.c.bf16 %v227, %v227
      %v260 = vpack.c.bf16 %v228, %v228
      %v261 = vpack.c.bf16 %v229, %v229
      %v262 = vpack.c.bf16 %v230, %v230
      %v279 = vunpack.c.l.b16 %v233
      %v280 = vunpack.c.l.b16 %v231
      %v281 = vunpack.c.l.b16 %v235
      %v282 = vunpack.c.l.b16 %v237
      %v283 = vunpack.c.l.b16 %v239
      %v284 = vunpack.c.l.b16 %v241
      %v285 = vunpack.c.l.b16 %v243
      %v286 = vunpack.c.l.b16 %v245
      %v287 = vunpack.c.l.b16 %v247
      %v288 = vunpack.c.l.b16 %v249
      %v289 = vunpack.c.l.b16 %v251
      %v290 = vunpack.c.l.b16 %v253
      %v291 = vunpack.c.l.b16 %v255
      %v292 = vunpack.c.l.b16 %v257
      %v293 = vunpack.c.l.b16 %v259
      %v294 = vunpack.c.l.b16 %v261
      %v295 = vpack.c.b16 %v279, %v279
      %v296 = vpack.c.b16 %v280, %v280
      %v297 = vpack.c.b16 %v281, %v281
      %v298 = vpack.c.b16 %v282, %v282
      %v299 = vpack.c.b16 %v283, %v283
      %v300 = vpack.c.b16 %v284, %v284
      %v301 = vpack.c.b16 %v285, %v285
      %v302 = vpack.c.b16 %v286, %v286
      %v303 = vpack.c.b16 %v287, %v287
      %v304 = vpack.c.b16 %v288, %v288
      %v305 = vpack.c.b16 %v289, %v289
      %v306 = vpack.c.b16 %v290, %v290
      %v307 = vpack.c.b16 %v291, %v291
      %v308 = vpack.c.b16 %v292, %v292
      %v309 = vpack.c.b16 %v293, %v293
      %v310 = vpack.c.b16 %v294, %v294
      %v312 = vshrl.u32 %v295, 16
      %v315 = vshrl.u32 %v296, 16
      %v318 = vshrl.u32 %v297, 16
      %v321 = vshrl.u32 %v298, 16
      %v324 = vshrl.u32 %v299, 16
      %v327 = vshrl.u32 %v300, 16
      %v330 = vshrl.u32 %v301, 16
      %v333 = vshrl.u32 %v302, 16
      %v336 = vshrl.u32 %v303, 16
      %v339 = vshrl.u32 %v304, 16
      %v342 = vshrl.u32 %v305, 16
      %v345 = vshrl.u32 %v306, 16
      %v348 = vshrl.u32 %v307, 16
      %v351 = vshrl.u32 %v308, 16
      %v354 = vshrl.u32 %v309, 16
      %v357 = vshrl.u32 %v310, 16
      %v391 = vunpack.c.l.b16 %v234
      %v392 = vunpack.c.l.b16 %v232
      %v393 = vunpack.c.l.b16 %v236
      %v394 = vunpack.c.l.b16 %v238
      %v395 = vunpack.c.l.b16 %v240
      %v396 = vunpack.c.l.b16 %v242
      %v397 = vunpack.c.l.b16 %v244
      %v398 = vunpack.c.l.b16 %v246
      %v399 = vunpack.c.l.b16 %v248
      %v400 = vunpack.c.l.b16 %v250
      %v401 = vunpack.c.l.b16 %v252
      %v402 = vunpack.c.l.b16 %v254
      %v403 = vunpack.c.l.b16 %v256
      %v404 = vunpack.c.l.b16 %v258
      %v405 = vunpack.c.l.b16 %v260
      %v406 = vunpack.c.l.b16 %v262
      %v407 = vpack.c.b16 %v391, %v279
      %v408 = vpack.c.b16 %v392, %v280
      %v409 = vpack.c.b16 %v393, %v281
      %v410 = vpack.c.b16 %v394, %v282
      %v411 = vpack.c.b16 %v395, %v283
      %v412 = vpack.c.b16 %v396, %v284
      %v413 = vpack.c.b16 %v397, %v285
      %v414 = vpack.c.b16 %v398, %v286
      %v415 = vpack.c.b16 %v399, %v287
      %v416 = vpack.c.b16 %v400, %v288
      %v417 = vpack.c.b16 %v401, %v289
      %v418 = vpack.c.b16 %v402, %v290
      %v419 = vpack.c.b16 %v403, %v291
      %v420 = vpack.c.b16 %v404, %v292
      %v421 = vpack.c.b16 %v405, %v293
      %v422 = vpack.c.b16 %v406, %v294
      %v424 = vshrl.u32 %v407, 16
      %v426 = vrot.slane %v424, 7
      %v427 = vshll.u32 %v407, 16
      %v429 = vor.u32 %v426, %v427
      %v431 = vshrl.u32 %v408, 16
      %v433 = vrot.slane %v431, 7
      %v434 = vshll.u32 %v408, 16
      %v436 = vor.u32 %v433, %v434
      %v438 = vshrl.u32 %v409, 16
      %v440 = vrot.slane %v438, 7
      %v441 = vshll.u32 %v409, 16
      %v443 = vor.u32 %v440, %v441
      %v445 = vshrl.u32 %v410, 16
      %v447 = vrot.slane %v445, 7
      %v448 = vshll.u32 %v410, 16
      %v450 = vor.u32 %v447, %v448
      %v452 = vshrl.u32 %v411, 16
      %v454 = vrot.slane %v452, 7
      %v455 = vshll.u32 %v411, 16
      %v457 = vor.u32 %v454, %v455
      %v459 = vshrl.u32 %v412, 16
      %v461 = vrot.slane %v459, 7
      %v462 = vshll.u32 %v412, 16
      %v464 = vor.u32 %v461, %v462
      %v466 = vshrl.u32 %v413, 16
      %v468 = vrot.slane %v466, 7
      %v469 = vshll.u32 %v413, 16
      %v471 = vor.u32 %v468, %v469
      %v473 = vshrl.u32 %v414, 16
      %v475 = vrot.slane %v473, 7
      %v476 = vshll.u32 %v414, 16
      %v478 = vor.u32 %v475, %v476
      %v480 = vshrl.u32 %v415, 16
      %v482 = vrot.slane %v480, 7
      %v483 = vshll.u32 %v415, 16
      %v485 = vor.u32 %v482, %v483
      %v487 = vshrl.u32 %v416, 16
      %v489 = vrot.slane %v487, 7
      %v490 = vshll.u32 %v416, 16
      %v492 = vor.u32 %v489, %v490
      %v494 = vshrl.u32 %v417, 16
      %v496 = vrot.slane %v494, 7
      %v497 = vshll.u32 %v417, 16
      %v499 = vor.u32 %v496, %v497
      %v501 = vshrl.u32 %v418, 16
      %v503 = vrot.slane %v501, 7
      %v504 = vshll.u32 %v418, 16
      %v506 = vor.u32 %v503, %v504
      %v508 = vshrl.u32 %v419, 16
      %v510 = vrot.slane %v508, 7
      %v511 = vshll.u32 %v419, 16
      %v513 = vor.u32 %v510, %v511
      %v515 = vshrl.u32 %v420, 16
      %v517 = vrot.slane %v515, 7
      %v518 = vshll.u32 %v420, 16
      %v520 = vor.u32 %v517, %v518
      %v522 = vshrl.u32 %v421, 16
      %v524 = vrot.slane %v522, 7
      %v525 = vshll.u32 %v421, 16
      %v527 = vor.u32 %v524, %v525
      %v529 = vshrl.u32 %v422, 16
      %v531 = vrot.slane %v529, 7
      %v532 = vshll.u32 %v422, 16
      %v534 = vor.u32 %v531, %v532
      %v567 = vpack.c.b16 %v391, %v391
      %v568 = vpack.c.b16 %v392, %v392
      %v569 = vpack.c.b16 %v393, %v393
      %v570 = vpack.c.b16 %v394, %v394
      %v571 = vpack.c.b16 %v395, %v395
      %v572 = vpack.c.b16 %v396, %v396
      %v573 = vpack.c.b16 %v397, %v397
      %v574 = vpack.c.b16 %v398, %v398
      %v575 = vpack.c.b16 %v399, %v399
      %v576 = vpack.c.b16 %v400, %v400
      %v577 = vpack.c.b16 %v401, %v401
      %v578 = vpack.c.b16 %v402, %v402
      %v579 = vpack.c.b16 %v403, %v403
      %v580 = vpack.c.b16 %v404, %v404
      %v581 = vpack.c.b16 %v405, %v405
      %v582 = vpack.c.b16 %v406, %v406
      %v584 = vshll.u32 %v567, 16
      %v586 = vrot.slane %v584, 3
      %v588 = vshll.u32 %v568, 16
      %v590 = vrot.slane %v588, 3
      %v592 = vshll.u32 %v569, 16
      %v594 = vrot.slane %v592, 3
      %v596 = vshll.u32 %v570, 16
      %v598 = vrot.slane %v596, 3
      %v600 = vshll.u32 %v571, 16
      %v602 = vrot.slane %v600, 3
      %v604 = vshll.u32 %v572, 16
      %v606 = vrot.slane %v604, 3
      %v608 = vshll.u32 %v573, 16
      %v610 = vrot.slane %v608, 3
      %v612 = vshll.u32 %v574, 16
      %v614 = vrot.slane %v612, 3
      %v616 = vshll.u32 %v575, 16
      %v618 = vrot.slane %v616, 3
      %v620 = vshll.u32 %v576, 16
      %v622 = vrot.slane %v620, 3
      %v624 = vshll.u32 %v577, 16
      %v626 = vrot.slane %v624, 3
      %v628 = vshll.u32 %v578, 16
      %v630 = vrot.slane %v628, 3
      %v632 = vshll.u32 %v579, 16
      %v634 = vrot.slane %v632, 3
      %v636 = vshll.u32 %v580, 16
      %v638 = vrot.slane %v636, 3
      %v640 = vshll.u32 %v581, 16
      %v642 = vrot.slane %v640, 3
      %v644 = vshll.u32 %v582, 16
      %v646 = vrot.slane %v644, 3
      %vm663 = vcmask 1040384
      %vm664 = vsmask.f32 256
      %vm665 = vmand %vm663, %vm664
      %v666 = vsel %vm665, %v312, %v429
      %v667 = vsel %vm665, %v315, %v436
      %v668 = vsel %vm665, %v318, %v443
      %v669 = vsel %vm665, %v321, %v450
      %v670 = vsel %vm665, %v324, %v457
      %v671 = vsel %vm665, %v327, %v464
      %v672 = vsel %vm665, %v330, %v471
      %v673 = vsel %vm665, %v333, %v478
      %v674 = vsel %vm665, %v336, %v485
      %v675 = vsel %vm665, %v339, %v492
      %v676 = vsel %vm665, %v342, %v499
      %v677 = vsel %vm665, %v345, %v506
      %v678 = vsel %vm665, %v348, %v513
      %v679 = vsel %vm665, %v351, %v520
      %v680 = vsel %vm665, %v354, %v527
      %v681 = vsel %vm665, %v357, %v534
      %v682 = vsel %vm665, %v426, %v586
      %v683 = vsel %vm665, %v433, %v590
      %v684 = vsel %vm665, %v440, %v594
      %v685 = vsel %vm665, %v447, %v598
      %v686 = vsel %vm665, %v454, %v602
      %v687 = vsel %vm665, %v461, %v606
      %v688 = vsel %vm665, %v468, %v610
      %v689 = vsel %vm665, %v475, %v614
      %v690 = vsel %vm665, %v482, %v618
      %v691 = vsel %vm665, %v489, %v622
      %v692 = vsel %vm665, %v496, %v626
      %v693 = vsel %vm665, %v503, %v630
      %v694 = vsel %vm665, %v510, %v634
      %v695 = vsel %vm665, %v517, %v638
      %v696 = vsel %vm665, %v524, %v642
      %v697 = vsel %vm665, %v531, %v646
      %vm698 = vsmask.f32 7424
      %v700 = vshrl.u32 %v666, 16
      %v702 = vshll.u32 %v666, 16
      %v704 = vrot.slane %v702, 1
      %v705 = vor.u32 %v700, %v704
      %v707 = vshll.u32 %v682, 16
      %v709 = vrot.slane %v707, 1
      %v710 = vsel %vm698, %v705, %v709
      %v712 = vshrl.u32 %v667, 16
      %v714 = vshll.u32 %v667, 16
      %v716 = vrot.slane %v714, 1
      %v717 = vor.u32 %v712, %v716
      %v719 = vshll.u32 %v683, 16
      %v721 = vrot.slane %v719, 1
      %v722 = vsel %vm698, %v717, %v721
      %v724 = vshrl.u32 %v668, 16
      %v726 = vshll.u32 %v668, 16
      %v728 = vrot.slane %v726, 1
      %v729 = vor.u32 %v724, %v728
      %v731 = vshll.u32 %v684, 16
      %v733 = vrot.slane %v731, 1
      %v734 = vsel %vm698, %v729, %v733
      %v736 = vshrl.u32 %v669, 16
      %v738 = vshll.u32 %v669, 16
      %v740 = vrot.slane %v738, 1
      %v741 = vor.u32 %v736, %v740
      %v743 = vshll.u32 %v685, 16
      %v745 = vrot.slane %v743, 1
      %v746 = vsel %vm698, %v741, %v745
      %v748 = vshrl.u32 %v670, 16
      %v750 = vshll.u32 %v670, 16
      %v752 = vrot.slane %v750, 1
      %v753 = vor.u32 %v748, %v752
      %v755 = vshll.u32 %v686, 16
      %v757 = vrot.slane %v755, 1
      %v758 = vsel %vm698, %v753, %v757
      %v760 = vshrl.u32 %v671, 16
      %v762 = vshll.u32 %v671, 16
      %v764 = vrot.slane %v762, 1
      %v765 = vor.u32 %v760, %v764
      %v767 = vshll.u32 %v687, 16
      %v769 = vrot.slane %v767, 1
      %v770 = vsel %vm698, %v765, %v769
      %v772 = vshrl.u32 %v672, 16
      %v774 = vshll.u32 %v672, 16
      %v776 = vrot.slane %v774, 1
      %v777 = vor.u32 %v772, %v776
      %v779 = vshll.u32 %v688, 16
      %v781 = vrot.slane %v779, 1
      %v782 = vsel %vm698, %v777, %v781
      %v784 = vshrl.u32 %v673, 16
      %v786 = vshll.u32 %v673, 16
      %v788 = vrot.slane %v786, 1
      %v789 = vor.u32 %v784, %v788
      %v791 = vshll.u32 %v689, 16
      %v793 = vrot.slane %v791, 1
      %v794 = vsel %vm698, %v789, %v793
      %v796 = vshrl.u32 %v674, 16
      %v798 = vshll.u32 %v674, 16
      %v800 = vrot.slane %v798, 1
      %v801 = vor.u32 %v796, %v800
      %v803 = vshll.u32 %v690, 16
      %v805 = vrot.slane %v803, 1
      %v806 = vsel %vm698, %v801, %v805
      %v808 = vshrl.u32 %v675, 16
      %v810 = vshll.u32 %v675, 16
      %v812 = vrot.slane %v810, 1
      %v813 = vor.u32 %v808, %v812
      %v815 = vshll.u32 %v691, 16
      %v817 = vrot.slane %v815, 1
      %v818 = vsel %vm698, %v813, %v817
      %v820 = vshrl.u32 %v676, 16
      %v822 = vshll.u32 %v676, 16
      %v824 = vrot.slane %v822, 1
      %v825 = vor.u32 %v820, %v824
      %v827 = vshll.u32 %v692, 16
      %v829 = vrot.slane %v827, 1
      %v830 = vsel %vm698, %v825, %v829
      %v832 = vshrl.u32 %v677, 16
      %v834 = vshll.u32 %v677, 16
      %v836 = vrot.slane %v834, 1
      %v837 = vor.u32 %v832, %v836
      %v839 = vshll.u32 %v693, 16
      %v841 = vrot.slane %v839, 1
      %v842 = vsel %vm698, %v837, %v841
      %v844 = vshrl.u32 %v678, 16
      %v846 = vshll.u32 %v678, 16
      %v848 = vrot.slane %v846, 1
      %v849 = vor.u32 %v844, %v848
      %v851 = vshll.u32 %v694, 16
      %v853 = vrot.slane %v851, 1
      %v854 = vsel %vm698, %v849, %v853
      %v856 = vshrl.u32 %v679, 16
      %v858 = vshll.u32 %v679, 16
      %v860 = vrot.slane %v858, 1
      %v861 = vor.u32 %v856, %v860
      %v863 = vshll.u32 %v695, 16
      %v865 = vrot.slane %v863, 1
      %v866 = vsel %vm698, %v861, %v865
      %v868 = vshrl.u32 %v680, 16
      %v870 = vshll.u32 %v680, 16
      %v872 = vrot.slane %v870, 1
      %v873 = vor.u32 %v868, %v872
      %v875 = vshll.u32 %v696, 16
      %v877 = vrot.slane %v875, 1
      %v878 = vsel %vm698, %v873, %v877
      %879 = vrot.lane.b32.xlu0 %v710, 4
      %v880 = vpop.permute.xlu0 %879
      %881 = vrot.lane.b32.xlu0 %v722, 4
      %v882 = vpop.permute.xlu0 %881
      %883 = vrot.lane.b32.xlu0 %v734, 4
      %v884 = vpop.permute.xlu0 %883
      %885 = vrot.lane.b32.xlu0 %v746, 4
      %v886 = vpop.permute.xlu0 %885
      %887 = vrot.lane.b32.xlu0 %v758, 4
      %v888 = vpop.permute.xlu0 %887
      %889 = vrot.lane.b32.xlu0 %v770, 4
      %v890 = vpop.permute.xlu0 %889
      %891 = vrot.lane.b32.xlu0 %v782, 4
      %v892 = vpop.permute.xlu0 %891
      %893 = vrot.lane.b32.xlu0 %v794, 4
      %v894 = vpop.permute.xlu0 %893
      %895 = vrot.lane.b32.xlu0 %v806, 4
      %v896 = vpop.permute.xlu0 %895
      %897 = vrot.lane.b32.xlu0 %v818, 4
      %v898 = vpop.permute.xlu0 %897
      %899 = vrot.lane.b32.xlu0 %v830, 4
      %v900 = vpop.permute.xlu0 %899
      %901 = vrot.lane.b32.xlu0 %v842, 4
      %v902 = vpop.permute.xlu0 %901
      %903 = vrot.lane.b32.xlu0 %v854, 4
      %v904 = vpop.permute.xlu0 %903
      %905 = vrot.lane.b32.xlu0 %v866, 4
      %v906 = vpop.permute.xlu0 %905
      %907 = vrot.lane.b32.xlu0 %v878, 4
      %v908 = vpop.permute.xlu0 %907
      %vm939 = vcmask 1046528
      %v940 = vrot.slane %v666, 1
      %v941 = vrot.slane %v682, 1
      %v942 = vsel %vm939, %v940, %v941
      %v943 = vrot.slane %v667, 1
      %v944 = vrot.slane %v683, 1
      %v945 = vsel %vm939, %v943, %v944
      %v946 = vrot.slane %v668, 1
      %v947 = vrot.slane %v684, 1
      %v948 = vsel %vm939, %v946, %v947
      %v949 = vrot.slane %v669, 1
      %v950 = vrot.slane %v685, 1
      %v951 = vsel %vm939, %v949, %v950
      %v952 = vrot.slane %v670, 1
      %v953 = vrot.slane %v686, 1
      %v954 = vsel %vm939, %v952, %v953
      %v955 = vrot.slane %v671, 1
      %v956 = vrot.slane %v687, 1
      %v957 = vsel %vm939, %v955, %v956
      %v958 = vrot.slane %v672, 1
      %v959 = vrot.slane %v688, 1
      %v960 = vsel %vm939, %v958, %v959
      %v961 = vrot.slane %v673, 1
      %v962 = vrot.slane %v689, 1
      %v963 = vsel %vm939, %v961, %v962
      %v964 = vrot.slane %v674, 1
      %v965 = vrot.slane %v690, 1
      %v966 = vsel %vm939, %v964, %v965
      %v967 = vrot.slane %v675, 1
      %v968 = vrot.slane %v691, 1
      %v969 = vsel %vm939, %v967, %v968
      %v970 = vrot.slane %v676, 1
      %v971 = vrot.slane %v692, 1
      %v972 = vsel %vm939, %v970, %v971
      %v973 = vrot.slane %v677, 1
      %v974 = vrot.slane %v693, 1
      %v975 = vsel %vm939, %v973, %v974
      %v976 = vrot.slane %v678, 1
      %v977 = vrot.slane %v694, 1
      %v978 = vsel %vm939, %v976, %v977
      %v979 = vrot.slane %v679, 1
      %v980 = vrot.slane %v695, 1
      %v981 = vsel %vm939, %v979, %v980
      %v982 = vrot.slane %v680, 1
      %v983 = vrot.slane %v696, 1
      %v984 = vsel %vm939, %v982, %v983
      %985 = vrot.lane.b32.xlu0 %v942, 8
      %v986 = vpop.permute.xlu0 %985
      %987 = vrot.lane.b32.xlu0 %v945, 8
      %v988 = vpop.permute.xlu0 %987
      %989 = vrot.lane.b32.xlu0 %v948, 8
      %v990 = vpop.permute.xlu0 %989
      %991 = vrot.lane.b32.xlu0 %v951, 8
      %v992 = vpop.permute.xlu0 %991
      %993 = vrot.lane.b32.xlu0 %v954, 8
      %v994 = vpop.permute.xlu0 %993
      %995 = vrot.lane.b32.xlu0 %v957, 8
      %v996 = vpop.permute.xlu0 %995
      %997 = vrot.lane.b32.xlu0 %v960, 8
      %v998 = vpop.permute.xlu0 %997
      %999 = vrot.lane.b32.xlu0 %v963, 8
      %v1000 = vpop.permute.xlu0 %999
      %1001 = vrot.lane.b32.xlu0 %v966, 8
      %v1002 = vpop.permute.xlu0 %1001
      %1003 = vrot.lane.b32.xlu0 %v969, 8
      %v1004 = vpop.permute.xlu0 %1003
      %1005 = vrot.lane.b32.xlu0 %v972, 8
      %v1006 = vpop.permute.xlu0 %1005
      %1007 = vrot.lane.b32.xlu0 %v975, 8
      %v1008 = vpop.permute.xlu0 %1007
      %1009 = vrot.lane.b32.xlu0 %v978, 8
      %v1010 = vpop.permute.xlu0 %1009
      %1011 = vrot.lane.b32.xlu0 %v981, 8
      %v1012 = vpop.permute.xlu0 %1011
      %1013 = vrot.lane.b32.xlu0 %v984, 8
      %v1014 = vpop.permute.xlu0 %1013
      %1016 = vrot.lane.b32.xlu0 %v667, 12
      %v1017 = vpop.permute.xlu0 %1016
      %1018 = vrot.lane.b32.xlu0 %v666, 12
      %v1019 = vpop.permute.xlu0 %1018
      %1020 = vrot.lane.b32.xlu0 %v668, 12
      %v1021 = vpop.permute.xlu0 %1020
      %1022 = vrot.lane.b32.xlu0 %v669, 12
      %v1023 = vpop.permute.xlu0 %1022
      %1024 = vrot.lane.b32.xlu0 %v670, 12
      %v1025 = vpop.permute.xlu0 %1024
      %1026 = vrot.lane.b32.xlu0 %v671, 12
      %v1027 = vpop.permute.xlu0 %1026
      %1028 = vrot.lane.b32.xlu0 %v672, 12
      %v1029 = vpop.permute.xlu0 %1028
      %1030 = vrot.lane.b32.xlu0 %v673, 12
      %v1031 = vpop.permute.xlu0 %1030
      %1032 = vrot.lane.b32.xlu0 %v674, 12
      %v1033 = vpop.permute.xlu0 %1032
      %1034 = vrot.lane.b32.xlu0 %v675, 12
      %v1035 = vpop.permute.xlu0 %1034
      %1036 = vrot.lane.b32.xlu0 %v676, 12
      %v1037 = vpop.permute.xlu0 %1036
      %1038 = vrot.lane.b32.xlu0 %v677, 12
      %v1039 = vpop.permute.xlu0 %1038
      %1040 = vrot.lane.b32.xlu0 %v678, 12
      %v1041 = vpop.permute.xlu0 %1040
      %1042 = vrot.lane.b32.xlu0 %v679, 12
      %v1043 = vpop.permute.xlu0 %1042
      %1044 = vrot.lane.b32.xlu0 %v680, 12
      %v1045 = vpop.permute.xlu0 %1044
      %1046 = vrot.lane.b32.xlu0 %v681, 12
      %v1047 = vpop.permute.xlu0 %1046
      %v1049 = vshrl.u32 %v681, 16
      %v1051 = vshll.u32 %v681, 16
      %v1053 = vrot.slane %v1051, 1
      %v1054 = vor.u32 %v1049, %v1053
      %v1056 = vshll.u32 %v697, 16
      %v1058 = vrot.slane %v1056, 1
      %v1059 = vsel %vm698, %v1054, %v1058
      %1060 = vrot.lane.b32.xlu0 %v722, 16
      %v1061 = vpop.permute.xlu0 %1060
      %1062 = vrot.lane.b32.xlu0 %v710, 16
      %v1063 = vpop.permute.xlu0 %1062
      %1064 = vrot.lane.b32.xlu0 %v734, 16
      %v1065 = vpop.permute.xlu0 %1064
      %1066 = vrot.lane.b32.xlu0 %v746, 16
      %v1067 = vpop.permute.xlu0 %1066
      %1068 = vrot.lane.b32.xlu0 %v758, 16
      %v1069 = vpop.permute.xlu0 %1068
      %1070 = vrot.lane.b32.xlu0 %v770, 16
      %v1071 = vpop.permute.xlu0 %1070
      %1072 = vrot.lane.b32.xlu0 %v782, 16
      %v1073 = vpop.permute.xlu0 %1072
      %1074 = vrot.lane.b32.xlu0 %v794, 16
      %v1075 = vpop.permute.xlu0 %1074
      %1076 = vrot.lane.b32.xlu0 %v806, 16
      %v1077 = vpop.permute.xlu0 %1076
      %1078 = vrot.lane.b32.xlu0 %v818, 16
      %v1079 = vpop.permute.xlu0 %1078
      %1080 = vrot.lane.b32.xlu0 %v830, 16
      %v1081 = vpop.permute.xlu0 %1080
      %1082 = vrot.lane.b32.xlu0 %v842, 16
      %v1083 = vpop.permute.xlu0 %1082
      %1084 = vrot.lane.b32.xlu0 %v854, 16
      %v1085 = vpop.permute.xlu0 %1084
      %1086 = vrot.lane.b32.xlu0 %v866, 16
      %v1087 = vpop.permute.xlu0 %1086
      %1088 = vrot.lane.b32.xlu0 %v878, 16
      %v1089 = vpop.permute.xlu0 %1088
      %1090 = vrot.lane.b32.xlu0 %v1059, 16
      %v1091 = vpop.permute.xlu0 %1090
      %v1093 = vrot.slane %v681, 1
      %v1094 = vrot.slane %v697, 1
      %v1095 = vsel %vm939, %v1093, %v1094
      %1096 = vrot.lane.b32.xlu0 %v945, 20
      %v1097 = vpop.permute.xlu0 %1096
      %1098 = vrot.lane.b32.xlu0 %v942, 20
      %v1099 = vpop.permute.xlu0 %1098
      %1100 = vrot.lane.b32.xlu0 %v948, 20
      %v1101 = vpop.permute.xlu0 %1100
      %1102 = vrot.lane.b32.xlu0 %v951, 20
      %v1103 = vpop.permute.xlu0 %1102
      %1104 = vrot.lane.b32.xlu0 %v954, 20
      %v1105 = vpop.permute.xlu0 %1104
      %1106 = vrot.lane.b32.xlu0 %v957, 20
      %v1107 = vpop.permute.xlu0 %1106
      %1108 = vrot.lane.b32.xlu0 %v960, 20
      %v1109 = vpop.permute.xlu0 %1108
      %1110 = vrot.lane.b32.xlu0 %v963, 20
      %v1111 = vpop.permute.xlu0 %1110
      %1112 = vrot.lane.b32.xlu0 %v966, 20
      %v1113 = vpop.permute.xlu0 %1112
      %1114 = vrot.lane.b32.xlu0 %v969, 20
      %v1115 = vpop.permute.xlu0 %1114
      %1116 = vrot.lane.b32.xlu0 %v972, 20
      %v1117 = vpop.permute.xlu0 %1116
      %1118 = vrot.lane.b32.xlu0 %v975, 20
      %v1119 = vpop.permute.xlu0 %1118
      %1120 = vrot.lane.b32.xlu0 %v978, 20
      %v1121 = vpop.permute.xlu0 %1120
      %1122 = vrot.lane.b32.xlu0 %v981, 20
      %v1123 = vpop.permute.xlu0 %1122
      %1124 = vrot.lane.b32.xlu0 %v984, 20
      %v1125 = vpop.permute.xlu0 %1124
      %1126 = vrot.lane.b32.xlu0 %v1095, 20
      %v1127 = vpop.permute.xlu0 %1126
      %1128 = vrot.lane.b32.xlu0 %v666, 24
      %v1129 = vpop.permute.xlu0 %1128
      %1130 = vrot.lane.b32.xlu0 %v668, 24
      %v1131 = vpop.permute.xlu0 %1130
      %1132 = vrot.lane.b32.xlu0 %v669, 24
      %v1133 = vpop.permute.xlu0 %1132
      %1134 = vrot.lane.b32.xlu0 %v670, 24
      %v1135 = vpop.permute.xlu0 %1134
      %1136 = vrot.lane.b32.xlu0 %v671, 24
      %v1137 = vpop.permute.xlu0 %1136
      %1138 = vrot.lane.b32.xlu0 %v672, 24
      %v1139 = vpop.permute.xlu0 %1138
      %1140 = vrot.lane.b32.xlu0 %v673, 24
      %v1141 = vpop.permute.xlu0 %1140
      %1142 = vrot.lane.b32.xlu0 %v674, 24
      %v1143 = vpop.permute.xlu0 %1142
      %1144 = vrot.lane.b32.xlu0 %v675, 24
      %v1145 = vpop.permute.xlu0 %1144
      %1146 = vrot.lane.b32.xlu0 %v676, 24
      %v1147 = vpop.permute.xlu0 %1146
      %1148 = vrot.lane.b32.xlu0 %v677, 24
      %v1149 = vpop.permute.xlu0 %1148
      %1150 = vrot.lane.b32.xlu0 %v678, 24
      %v1151 = vpop.permute.xlu0 %1150
      %1152 = vrot.lane.b32.xlu0 %v679, 24
      %v1153 = vpop.permute.xlu0 %1152
      %1154 = vrot.lane.b32.xlu0 %v680, 24
      %v1155 = vpop.permute.xlu0 %1154
      %1156 = vrot.lane.b32.xlu0 %v681, 24
      %v1157 = vpop.permute.xlu0 %1156
      %1158 = vrot.lane.b32.xlu0 %v710, 28
      %v1159 = vpop.permute.xlu0 %1158
      %1160 = vrot.lane.b32.xlu0 %v734, 28
      %v1161 = vpop.permute.xlu0 %1160
      %1162 = vrot.lane.b32.xlu0 %v746, 28
      %v1163 = vpop.permute.xlu0 %1162
      %1164 = vrot.lane.b32.xlu0 %v758, 28
      %v1165 = vpop.permute.xlu0 %1164
      %1166 = vrot.lane.b32.xlu0 %v770, 28
      %v1167 = vpop.permute.xlu0 %1166
      %1168 = vrot.lane.b32.xlu0 %v782, 28
      %v1169 = vpop.permute.xlu0 %1168
      %1170 = vrot.lane.b32.xlu0 %v794, 28
      %v1171 = vpop.permute.xlu0 %1170
      %1172 = vrot.lane.b32.xlu0 %v806, 28
      %v1173 = vpop.permute.xlu0 %1172
      %1174 = vrot.lane.b32.xlu0 %v818, 28
      %v1175 = vpop.permute.xlu0 %1174
      %1176 = vrot.lane.b32.xlu0 %v830, 28
      %v1177 = vpop.permute.xlu0 %1176
      %1178 = vrot.lane.b32.xlu0 %v842, 28
      %v1179 = vpop.permute.xlu0 %1178
      %1180 = vrot.lane.b32.xlu0 %v854, 28
      %v1181 = vpop.permute.xlu0 %1180
      %1182 = vrot.lane.b32.xlu0 %v866, 28
      %v1183 = vpop.permute.xlu0 %1182
      %1184 = vrot.lane.b32.xlu0 %v878, 28
      %v1185 = vpop.permute.xlu0 %1184
      %1186 = vrot.lane.b32.xlu0 %v1059, 28
      %v1187 = vpop.permute.xlu0 %1186
      %1188 = vrot.lane.b32.xlu0 %v942, 32
      %v1189 = vpop.permute.xlu0 %1188
      %1190 = vrot.lane.b32.xlu0 %v948, 32
      %v1191 = vpop.permute.xlu0 %1190
      %1192 = vrot.lane.b32.xlu0 %v951, 32
      %v1193 = vpop.permute.xlu0 %1192
      %1194 = vrot.lane.b32.xlu0 %v954, 32
      %v1195 = vpop.permute.xlu0 %1194
      %1196 = vrot.lane.b32.xlu0 %v957, 32
      %v1197 = vpop.permute.xlu0 %1196
      %1198 = vrot.lane.b32.xlu0 %v960, 32
      %v1199 = vpop.permute.xlu0 %1198
      %1200 = vrot.lane.b32.xlu0 %v963, 32
      %v1201 = vpop.permute.xlu0 %1200
      %1202 = vrot.lane.b32.xlu0 %v966, 32
      %v1203 = vpop.permute.xlu0 %1202
      %1204 = vrot.lane.b32.xlu0 %v969, 32
      %v1205 = vpop.permute.xlu0 %1204
      %1206 = vrot.lane.b32.xlu0 %v972, 32
      %v1207 = vpop.permute.xlu0 %1206
      %1208 = vrot.lane.b32.xlu0 %v975, 32
      %v1209 = vpop.permute.xlu0 %1208
      %1210 = vrot.lane.b32.xlu0 %v978, 32
      %v1211 = vpop.permute.xlu0 %1210
      %1212 = vrot.lane.b32.xlu0 %v981, 32
      %v1213 = vpop.permute.xlu0 %1212
      %1214 = vrot.lane.b32.xlu0 %v984, 32
      %v1215 = vpop.permute.xlu0 %1214
      %1216 = vrot.lane.b32.xlu0 %v1095, 32
      %v1217 = vpop.permute.xlu0 %1216
      %vm1218 = vcmask 31744
      %v1220 = vsel %vm1218, %v666, %v880
      %v1222 = vsel %vm1218, %v667, %v882
      %v1224 = vsel %vm1218, %v668, %v884
      %v1226 = vsel %vm1218, %v669, %v886
      %v1228 = vsel %vm1218, %v670, %v888
      %v1230 = vsel %vm1218, %v671, %v890
      %v1232 = vsel %vm1218, %v672, %v892
      %v1234 = vsel %vm1218, %v673, %v894
      %v1236 = vsel %vm1218, %v674, %v896
      %v1238 = vsel %vm1218, %v675, %v898
      %v1240 = vsel %vm1218, %v676, %v900
      %v1242 = vsel %vm1218, %v677, %v902
      %v1244 = vsel %vm1218, %v678, %v904
      %v1246 = vsel %vm1218, %v679, %v906
      %v1248 = vsel %vm1218, %v680, %v908
      %vm1249 = vcmask 64512
      %v1251 = vsel %vm1249, %v1220, %v986
      %v1253 = vsel %vm1249, %v1222, %v988
      %v1255 = vsel %vm1249, %v1224, %v990
      %v1257 = vsel %vm1249, %v1226, %v992
      %v1259 = vsel %vm1249, %v1228, %v994
      %v1261 = vsel %vm1249, %v1230, %v996
      %v1263 = vsel %vm1249, %v1232, %v998
      %v1265 = vsel %vm1249, %v1234, %v1000
      %v1267 = vsel %vm1249, %v1236, %v1002
      %v1269 = vsel %vm1249, %v1238, %v1004
      %v1271 = vsel %vm1249, %v1240, %v1006
      %v1273 = vsel %vm1249, %v1242, %v1008
      %v1275 = vsel %vm1249, %v1244, %v1010
      %v1277 = vsel %vm1249, %v1246, %v1012
      %v1279 = vsel %vm1249, %v1248, %v1014
      %vm1280 = vcmask 97280
      %v1282 = vsel %vm1280, %v1251, %v1017
      %v1284 = vsel %vm1280, %v1253, %v1019
      %v1286 = vsel %vm1280, %v1251, %v1021
      %v1288 = vsel %vm1280, %v1255, %v1023
      %v1290 = vsel %vm1280, %v1257, %v1025
      %v1292 = vsel %vm1280, %v1259, %v1027
      %v1294 = vsel %vm1280, %v1261, %v1029
      %v1296 = vsel %vm1280, %v1263, %v1031
      %v1298 = vsel %vm1280, %v1265, %v1033
      %v1300 = vsel %vm1280, %v1267, %v1035
      %v1302 = vsel %vm1280, %v1269, %v1037
      %v1304 = vsel %vm1280, %v1271, %v1039
      %v1306 = vsel %vm1280, %v1273, %v1041
      %v1308 = vsel %vm1280, %v1275, %v1043
      %v1310 = vsel %vm1280, %v1277, %v1045
      %v1312 = vsel %vm1280, %v1279, %v1047
      %vm1313 = vcmask 130048
      %v1315 = vsel %vm1313, %v1282, %v1061
      %v1317 = vsel %vm1313, %v1284, %v1063
      %v1319 = vsel %vm1313, %v1286, %v1065
      %v1321 = vsel %vm1313, %v1288, %v1067
      %v1323 = vsel %vm1313, %v1290, %v1069
      %v1325 = vsel %vm1313, %v1292, %v1071
      %v1327 = vsel %vm1313, %v1294, %v1073
      %v1329 = vsel %vm1313, %v1296, %v1075
      %v1331 = vsel %vm1313, %v1298, %v1077
      %v1333 = vsel %vm1313, %v1300, %v1079
      %v1335 = vsel %vm1313, %v1302, %v1081
      %v1337 = vsel %vm1313, %v1304, %v1083
      %v1339 = vsel %vm1313, %v1306, %v1085
      %v1341 = vsel %vm1313, %v1308, %v1087
      %v1343 = vsel %vm1313, %v1310, %v1089
      %v1345 = vsel %vm1313, %v1312, %v1091
      %vm1346 = vcmask 162816
      %v1348 = vsel %vm1346, %v1315, %v1097
      %v1350 = vsel %vm1346, %v1317, %v1099
      %v1352 = vsel %vm1346, %v1319, %v1101
      %v1354 = vsel %vm1346, %v1321, %v1103
      %v1356 = vsel %vm1346, %v1323, %v1105
      %v1358 = vsel %vm1346, %v1325, %v1107
      %v1360 = vsel %vm1346, %v1327, %v1109
      %v1362 = vsel %vm1346, %v1329, %v1111
      %v1364 = vsel %vm1346, %v1331, %v1113
      %v1366 = vsel %vm1346, %v1333, %v1115
      %v1368 = vsel %vm1346, %v1335, %v1117
      %v1370 = vsel %vm1346, %v1337, %v1119
      %v1372 = vsel %vm1346, %v1339, %v1121
      %v1374 = vsel %vm1346, %v1341, %v1123
      %v1376 = vsel %vm1346, %v1343, %v1125
      %v1378 = vsel %vm1346, %v1345, %v1127
      %vm1379 = vcmask 195584
      %v1381 = vsel %vm1379, %v1348, %v1129
      %v1383 = vsel %vm1379, %v1350, %v1131
      %v1385 = vsel %vm1379, %v1352, %v1133
      %v1387 = vsel %vm1379, %v1354, %v1135
      %v1389 = vsel %vm1379, %v1356, %v1137
      %v1391 = vsel %vm1379, %v1358, %v1139
      %v1393 = vsel %vm1379, %v1360, %v1141
      %v1395 = vsel %vm1379, %v1362, %v1143
      %v1397 = vsel %vm1379, %v1364, %v1145
      %v1399 = vsel %vm1379, %v1366, %v1147
      %v1401 = vsel %vm1379, %v1368, %v1149
      %v1403 = vsel %vm1379, %v1370, %v1151
      %v1405 = vsel %vm1379, %v1372, %v1153
      %v1407 = vsel %vm1379, %v1374, %v1155
      %v1409 = vsel %vm1379, %v1376, %v1157
      %v1410 = vsel %vm1379, %v1378, %v1155
      %vm1411 = vcmask 228352
      %v1413 = vsel %vm1411, %v1381, %v1159
      %v1415 = vsel %vm1411, %v1383, %v1161
      %v1417 = vsel %vm1411, %v1385, %v1163
      %v1419 = vsel %vm1411, %v1387, %v1165
      %v1421 = vsel %vm1411, %v1389, %v1167
      %v1423 = vsel %vm1411, %v1391, %v1169
      %v1425 = vsel %vm1411, %v1393, %v1171
      %v1427 = vsel %vm1411, %v1395, %v1173
      %v1429 = vsel %vm1411, %v1397, %v1175
      %v1431 = vsel %vm1411, %v1399, %v1177
      %v1433 = vsel %vm1411, %v1401, %v1179
      %v1435 = vsel %vm1411, %v1403, %v1181
      %v1437 = vsel %vm1411, %v1405, %v1183
      %v1439 = vsel %vm1411, %v1407, %v1185
      %v1441 = vsel %vm1411, %v1409, %v1187
      %v1442 = vsel %vm1411, %v1410, %v1185
      %vm1443 = vcmask 261120
      %v1445 = vsel %vm1443, %v1413, %v1189
      %v1447 = vsel %vm1443, %v1415, %v1191
      %v1449 = vsel %vm1443, %v1417, %v1193
      %v1451 = vsel %vm1443, %v1419, %v1195
      %v1453 = vsel %vm1443, %v1421, %v1197
      %v1455 = vsel %vm1443, %v1423, %v1199
      %v1457 = vsel %vm1443, %v1425, %v1201
      %v1459 = vsel %vm1443, %v1427, %v1203
      %v1461 = vsel %vm1443, %v1429, %v1205
      %v1463 = vsel %vm1443, %v1431, %v1207
      %v1465 = vsel %vm1443, %v1433, %v1209
      %v1467 = vsel %vm1443, %v1435, %v1211
      %v1469 = vsel %vm1443, %v1437, %v1213
      %v1471 = vsel %vm1443, %v1439, %v1215
      %v1473 = vsel %vm1443, %v1441, %v1217
      %v1474 = vsel %vm1443, %v1442, %v1215
      %v1475 = vld [vmem:[%s1] sm:$0xff]
      %v1476 = vld [vmem:[%s1 + $0x8] sm:$0xff]
      %v1477 = vld [vmem:[%s1 + $0x10] sm:$0xff]
      %v1478 = vld [vmem:[%s1 + $0x18] sm:$0xff]
      %v1479 = vld [vmem:[%s1 + $0x20] sm:$0x33]
      %v1485 = vunpack.c.l.b16 %v1475
      %v1486 = vunpack.c.h.b16 %v1475
      %v1487 = vunpack.c.l.b16 %v1476
      %v1488 = vunpack.c.h.b16 %v1476
      %v1489 = vunpack.c.l.b16 %v1477
      %v1490 = vunpack.c.h.b16 %v1477
      %v1491 = vunpack.c.l.b16 %v1478
      %v1492 = vunpack.c.h.b16 %v1478
      %v1493 = vunpack.c.l.b16 %v1479
      %v1494 = vunpack.c.h.b16 %v1479
      %v1495 = vpack.c.b16 %v1487, %v1485
      %v1496 = vpack.c.b16 %v1488, %v1486
      %v1497 = vpack.c.b16 %v1491, %v1489
      %v1498 = vpack.c.b16 %v1492, %v1490
      %v1499 = vpack.c.b16 %v1493, %v1493
      %v1500 = vpack.c.b16 %v1494, %v1494
      %vm1505 = vcmask 293888
      %v1506 = vsel %vm1505, %v1445, 0
      %v1508 = vsel %vm1505, %v1447, 0
      %v1510 = vsel %vm1505, %v1449, 0
      %v1512 = vsel %vm1505, %v1451, 0
      %v1514 = vsel %vm1505, %v1453, 0
      %v1516 = vsel %vm1505, %v1455, 0
      %v1518 = vsel %vm1505, %v1457, 0
      %v1520 = vsel %vm1505, %v1459, 0
      %v1522 = vsel %vm1505, %v1461, 0
      %v1524 = vsel %vm1505, %v1463, 0
      %v1526 = vsel %vm1505, %v1465, 0
      %v1528 = vsel %vm1505, %v1467, 0
      %v1530 = vsel %vm1505, %v1469, 0
      %v1532 = vsel %vm1505, %v1471, 0
      %v1534 = vsel %vm1505, %v1473, 0
      %v1536 = vsel %vm1505, %v1474, 0
      %vm1538 = vcmask 1041408
      %v1540 = vsel %vm1538, %v1499, 0
      %v1543 = vsel %vm1538, %v1500, 0
      %1545 = vmatpush.bf16.msra.mxu0 0
      %1546 = vmatpush.bf16.msra.mxu0 0
      %1547 = vmatpush.bf16.msra.mxu0 0
      %1548 = vmatpush.bf16.msra.mxu0 0
      %1549 = vmatpush.bf16.msra.mxu0 0
      %1550 = vmatpush.bf16.msra.mxu0 %v1540
      %1551 = vmatpush.bf16.msra.mxu0 %v1497
      %1552 = vmatpush.bf16.msra.mxu0 %v1495
      %1553 = vmatmul.bf16.gmra.mxu0 %v1506
      %v1554 = vpop.f32.mrf.mxu0
      %v1555 = vadd.f32 0.0, %v1554
      %v1556 = vpop.f32.mrf.mxu0
      %v1557 = vadd.f32 0.0, %v1556
      %1558 = vmatmul.bf16.gmra.mxu0 %v1508
      %v1559 = vpop.f32.mrf.mxu0
      %v1560 = vadd.f32 0.0, %v1559
      %v1561 = vpop.f32.mrf.mxu0
      %v1562 = vadd.f32 0.0, %v1561
      %1563 = vmatmul.bf16.gmra.mxu0 %v1510
      %v1564 = vpop.f32.mrf.mxu0
      %v1565 = vadd.f32 0.0, %v1564
      %v1566 = vpop.f32.mrf.mxu0
      %v1567 = vadd.f32 0.0, %v1566
      %1568 = vmatmul.bf16.gmra.mxu0 %v1512
      %v1569 = vpop.f32.mrf.mxu0
      %v1570 = vadd.f32 0.0, %v1569
      %v1571 = vpop.f32.mrf.mxu0
      %v1572 = vadd.f32 0.0, %v1571
      %1573 = vmatmul.bf16.gmra.mxu0 %v1514
      %v1574 = vpop.f32.mrf.mxu0
      %v1575 = vadd.f32 0.0, %v1574
      %v1576 = vpop.f32.mrf.mxu0
      %v1577 = vadd.f32 0.0, %v1576
      %1578 = vmatmul.bf16.gmra.mxu0 %v1516
      %v1579 = vpop.f32.mrf.mxu0
      %v1580 = vadd.f32 0.0, %v1579
      %v1581 = vpop.f32.mrf.mxu0
      %v1582 = vadd.f32 0.0, %v1581
      %1583 = vmatmul.bf16.gmra.mxu0 %v1518
      %v1584 = vpop.f32.mrf.mxu0
      %v1585 = vadd.f32 0.0, %v1584
      %v1586 = vpop.f32.mrf.mxu0
      %v1587 = vadd.f32 0.0, %v1586
      %1588 = vmatmul.bf16.gmra.mxu0 %v1520
      %v1589 = vpop.f32.mrf.mxu0
      %v1590 = vadd.f32 0.0, %v1589
      %v1591 = vpop.f32.mrf.mxu0
      %v1592 = vadd.f32 0.0, %v1591
      %1593 = vmatmul.bf16.gmra.mxu0 %v1522
      %v1594 = vpop.f32.mrf.mxu0
      %v1595 = vadd.f32 0.0, %v1594
      %v1596 = vpop.f32.mrf.mxu0
      %v1597 = vadd.f32 0.0, %v1596
      %1598 = vmatmul.bf16.gmra.mxu0 %v1524
      %v1599 = vpop.f32.mrf.mxu0
      %v1600 = vadd.f32 0.0, %v1599
      %v1601 = vpop.f32.mrf.mxu0
      %v1602 = vadd.f32 0.0, %v1601
      %1603 = vmatmul.bf16.gmra.mxu0 %v1526
      %v1604 = vpop.f32.mrf.mxu0
      %v1605 = vadd.f32 0.0, %v1604
      %v1606 = vpop.f32.mrf.mxu0
      %v1607 = vadd.f32 0.0, %v1606
      %1608 = vmatmul.bf16.gmra.mxu0 %v1528
      %v1609 = vpop.f32.mrf.mxu0
      %v1610 = vadd.f32 0.0, %v1609
      %v1611 = vpop.f32.mrf.mxu0
      %v1612 = vadd.f32 0.0, %v1611
      %1613 = vmatmul.bf16.gmra.mxu0 %v1530
      %v1614 = vpop.f32.mrf.mxu0
      %v1615 = vadd.f32 0.0, %v1614
      %v1616 = vpop.f32.mrf.mxu0
      %v1617 = vadd.f32 0.0, %v1616
      %1618 = vmatmul.bf16.gmra.mxu0 %v1532
      %v1619 = vpop.f32.mrf.mxu0
      %v1620 = vadd.f32 0.0, %v1619
      %v1621 = vpop.f32.mrf.mxu0
      %v1622 = vadd.f32 0.0, %v1621
      %1623 = vmatmul.bf16.gmra.mxu0 %v1534
      %v1624 = vpop.f32.mrf.mxu0
      %v1625 = vadd.f32 0.0, %v1624
      %v1626 = vpop.f32.mrf.mxu0
      %v1627 = vadd.f32 0.0, %v1626
      %1628 = vmatmul.bf16.gmra.mxu0 %v1536
      %v1629 = vpop.f32.mrf.mxu0
      %v1630 = vadd.f32 0.0, %v1629
      %v1631 = vpop.f32.mrf.mxu0
      %v1632 = vadd.f32 0.0, %v1631
      %1633 = vdwg.mxu0
      %1634 = vmatpush.bf16.msra.mxu0 0
      %1635 = vmatpush.bf16.msra.mxu0 0
      %1636 = vmatpush.bf16.msra.mxu0 0
      %1637 = vmatpush.bf16.msra.mxu0 0
      %1638 = vmatpush.bf16.msra.mxu0 0
      %1639 = vmatpush.bf16.msra.mxu0 %v1543
      %1640 = vmatpush.bf16.msra.mxu0 %v1498
      %1641 = vmatpush.bf16.msra.mxu0 %v1496
      %1642 = vmatmul.bf16.gmra.mxu0 %v1506
      %v1643 = vpop.f32.mrf.mxu0
      %v1644 = vadd.f32 0.0, %v1643
      %v1645 = vpop.f32.mrf.mxu0
      %v1646 = vadd.f32 0.0, %v1645
      %1647 = vmatmul.bf16.gmra.mxu0 %v1508
      %v1648 = vpop.f32.mrf.mxu0
      %v1649 = vadd.f32 0.0, %v1648
      %v1650 = vpop.f32.mrf.mxu0
      %v1651 = vadd.f32 0.0, %v1650
      %1652 = vmatmul.bf16.gmra.mxu0 %v1510
      %v1653 = vpop.f32.mrf.mxu0
      %v1654 = vadd.f32 0.0, %v1653
      %v1655 = vpop.f32.mrf.mxu0
      %v1656 = vadd.f32 0.0, %v1655
      %1657 = vmatmul.bf16.gmra.mxu0 %v1512
      %v1658 = vpop.f32.mrf.mxu0
      %v1659 = vadd.f32 0.0, %v1658
      %v1660 = vpop.f32.mrf.mxu0
      %v1661 = vadd.f32 0.0, %v1660
      %1662 = vmatmul.bf16.gmra.mxu0 %v1514
      %v1663 = vpop.f32.mrf.mxu0
      %v1664 = vadd.f32 0.0, %v1663
      %v1665 = vpop.f32.mrf.mxu0
      %v1666 = vadd.f32 0.0, %v1665
      %1667 = vmatmul.bf16.gmra.mxu0 %v1516
      %v1668 = vpop.f32.mrf.mxu0
      %v1669 = vadd.f32 0.0, %v1668
      %v1670 = vpop.f32.mrf.mxu0
      %v1671 = vadd.f32 0.0, %v1670
      %1672 = vmatmul.bf16.gmra.mxu0 %v1518
      %v1673 = vpop.f32.mrf.mxu0
      %v1674 = vadd.f32 0.0, %v1673
      %v1675 = vpop.f32.mrf.mxu0
      %v1676 = vadd.f32 0.0, %v1675
      %1677 = vmatmul.bf16.gmra.mxu0 %v1520
      %v1678 = vpop.f32.mrf.mxu0
      %v1679 = vadd.f32 0.0, %v1678
      %v1680 = vpop.f32.mrf.mxu0
      %v1681 = vadd.f32 0.0, %v1680
      %1682 = vmatmul.bf16.gmra.mxu0 %v1522
      %v1683 = vpop.f32.mrf.mxu0
      %v1684 = vadd.f32 0.0, %v1683
      %v1685 = vpop.f32.mrf.mxu0
      %v1686 = vadd.f32 0.0, %v1685
      %1687 = vmatmul.bf16.gmra.mxu0 %v1524
      %v1688 = vpop.f32.mrf.mxu0
      %v1689 = vadd.f32 0.0, %v1688
      %v1690 = vpop.f32.mrf.mxu0
      %v1691 = vadd.f32 0.0, %v1690
      %1692 = vmatmul.bf16.gmra.mxu0 %v1526
      %v1693 = vpop.f32.mrf.mxu0
      %v1694 = vadd.f32 0.0, %v1693
      %v1695 = vpop.f32.mrf.mxu0
      %v1696 = vadd.f32 0.0, %v1695
      %1697 = vmatmul.bf16.gmra.mxu0 %v1528
      %v1698 = vpop.f32.mrf.mxu0
      %v1699 = vadd.f32 0.0, %v1698
      %v1700 = vpop.f32.mrf.mxu0
      %v1701 = vadd.f32 0.0, %v1700
      %1702 = vmatmul.bf16.gmra.mxu0 %v1530
      %v1703 = vpop.f32.mrf.mxu0
      %v1704 = vadd.f32 0.0, %v1703
      %v1705 = vpop.f32.mrf.mxu0
      %v1706 = vadd.f32 0.0, %v1705
      %1707 = vmatmul.bf16.gmra.mxu0 %v1532
      %v1708 = vpop.f32.mrf.mxu0
      %v1709 = vadd.f32 0.0, %v1708
      %v1710 = vpop.f32.mrf.mxu0
      %v1711 = vadd.f32 0.0, %v1710
      %1712 = vmatmul.bf16.gmra.mxu0 %v1534
      %v1713 = vpop.f32.mrf.mxu0
      %v1714 = vadd.f32 0.0, %v1713
      %v1715 = vpop.f32.mrf.mxu0
      %v1716 = vadd.f32 0.0, %v1715
      %1717 = vmatmul.bf16.gmra.mxu0 %v1536
      %v1718 = vpop.f32.mrf.mxu0
      %v1719 = vadd.f32 0.0, %v1718
      %v1720 = vpop.f32.mrf.mxu0
      %v1721 = vadd.f32 0.0, %v1720
      %1722 = vdwg.mxu0
      %v1723 = vadd.f32 %v1555, %v1557
      %v1724 = vadd.f32 %v1723, %v1560
      %v1725 = vadd.f32 %v1724, %v1562
      %v1726 = vadd.f32 %v1725, %v1565
      %v1727 = vadd.f32 %v1726, %v1567
      %v1728 = vadd.f32 %v1727, %v1570
      %v1729 = vadd.f32 %v1728, %v1572
      %v1730 = vadd.f32 %v1729, %v1575
      %v1731 = vadd.f32 %v1730, %v1577
      %v1732 = vadd.f32 %v1731, %v1580
      %v1733 = vadd.f32 %v1732, %v1582
      %v1734 = vadd.f32 %v1733, %v1585
      %v1735 = vadd.f32 %v1734, %v1587
      %v1736 = vadd.f32 %v1735, %v1590
      %v1737 = vadd.f32 %v1736, %v1592
      %v1738 = vadd.f32 %v1737, %v1595
      %v1739 = vadd.f32 %v1738, %v1597
      %v1740 = vadd.f32 %v1739, %v1600
      %v1741 = vadd.f32 %v1740, %v1602
      %v1742 = vadd.f32 %v1741, %v1605
      %v1743 = vadd.f32 %v1742, %v1607
      %v1744 = vadd.f32 %v1743, %v1610
      %v1745 = vadd.f32 %v1744, %v1612
      %v1746 = vadd.f32 %v1745, %v1615
      %v1747 = vadd.f32 %v1746, %v1617
      %v1748 = vadd.f32 %v1747, %v1620
      %v1749 = vadd.f32 %v1748, %v1622
      %v1750 = vadd.f32 %v1749, %v1625
      %v1751 = vadd.f32 %v1750, %v1627
      %v1752 = vadd.f32 %v1751, %v1630
      %v1753 = vadd.f32 %v1752, %v1632
      %v1754 = vrot.slane %v1753, 4
      %v1755 = vadd.f32 %v1753, %v1754
      %v1756 = vrot.slane %v1755, 2
      %v1757 = vadd.f32 %v1755, %v1756
      %v1758 = vrot.slane %v1757, 1
      %v1759 = vadd.f32 %v1757, %v1758
      %v1760 = vmul.f32 %v1555, %v1555
      %v1761 = vmul.f32 %v1557, %v1557
      %v1762 = vmul.f32 %v1560, %v1560
      %v1763 = vmul.f32 %v1562, %v1562
      %v1764 = vmul.f32 %v1565, %v1565
      %v1765 = vmul.f32 %v1567, %v1567
      %v1766 = vmul.f32 %v1570, %v1570
      %v1767 = vmul.f32 %v1572, %v1572
      %v1768 = vmul.f32 %v1575, %v1575
      %v1769 = vmul.f32 %v1577, %v1577
      %v1770 = vmul.f32 %v1580, %v1580
      %v1771 = vmul.f32 %v1582, %v1582
      %v1772 = vmul.f32 %v1585, %v1585
      %v1773 = vmul.f32 %v1587, %v1587
      %v1774 = vmul.f32 %v1590, %v1590
      %v1775 = vmul.f32 %v1592, %v1592
      %v1776 = vmul.f32 %v1595, %v1595
      %v1777 = vmul.f32 %v1597, %v1597
      %v1778 = vmul.f32 %v1600, %v1600
      %v1779 = vmul.f32 %v1602, %v1602
      %v1780 = vmul.f32 %v1605, %v1605
      %v1781 = vmul.f32 %v1607, %v1607
      %v1782 = vmul.f32 %v1610, %v1610
      %v1783 = vmul.f32 %v1612, %v1612
      %v1784 = vmul.f32 %v1615, %v1615
      %v1785 = vmul.f32 %v1617, %v1617
      %v1786 = vmul.f32 %v1620, %v1620
      %v1787 = vmul.f32 %v1622, %v1622
      %v1788 = vmul.f32 %v1625, %v1625
      %v1789 = vmul.f32 %v1627, %v1627
      %v1790 = vmul.f32 %v1630, %v1630
      %v1791 = vmul.f32 %v1632, %v1632
      %v1792 = vadd.f32 %v1760, %v1761
      %v1793 = vadd.f32 %v1792, %v1762
      %v1794 = vadd.f32 %v1793, %v1763
      %v1795 = vadd.f32 %v1794, %v1764
      %v1796 = vadd.f32 %v1795, %v1765
      %v1797 = vadd.f32 %v1796, %v1766
      %v1798 = vadd.f32 %v1797, %v1767
      %v1799 = vadd.f32 %v1798, %v1768
      %v1800 = vadd.f32 %v1799, %v1769
      %v1801 = vadd.f32 %v1800, %v1770
      %v1802 = vadd.f32 %v1801, %v1771
      %v1803 = vadd.f32 %v1802, %v1772
      %v1804 = vadd.f32 %v1803, %v1773
      %v1805 = vadd.f32 %v1804, %v1774
      %v1806 = vadd.f32 %v1805, %v1775
      %v1807 = vadd.f32 %v1806, %v1776
      %v1808 = vadd.f32 %v1807, %v1777
      %v1809 = vadd.f32 %v1808, %v1778
      %v1810 = vadd.f32 %v1809, %v1779
      %v1811 = vadd.f32 %v1810, %v1780
      %v1812 = vadd.f32 %v1811, %v1781
      %v1813 = vadd.f32 %v1812, %v1782
      %v1814 = vadd.f32 %v1813, %v1783
      %v1815 = vadd.f32 %v1814, %v1784
      %v1816 = vadd.f32 %v1815, %v1785
      %v1817 = vadd.f32 %v1816, %v1786
      %v1818 = vadd.f32 %v1817, %v1787
      %v1819 = vadd.f32 %v1818, %v1788
      %v1820 = vadd.f32 %v1819, %v1789
      %v1821 = vadd.f32 %v1820, %v1790
      %v1822 = vadd.f32 %v1821, %v1791
      %v1823 = vrot.slane %v1822, 4
      %v1824 = vadd.f32 %v1822, %v1823
      %v1825 = vrot.slane %v1824, 2
      %v1826 = vadd.f32 %v1824, %v1825
      %v1827 = vrot.slane %v1826, 1
      %v1828 = vadd.f32 %v1826, %v1827
      %v1829 = vmul.f32 %v1759, 0.00390625
      %v1830 = vmul.f32 %v1828, 0.00390625
      %v1831 = vmul.f32 %v1829, %v1829
      %v1832 = vsub.f32 %v1830, %v1831
      %v1833 = vmax.f32 %v1832, 0.0
      %v1834 = vadd.f32 %v1833, 1e-05
      %v1835 = vrsqrt.pop %v1834
      %v1836 = vmul.f32 %v1835, %v1834
      %v1837 = vmul.f32 %v1836, %v1835
      %v1838 = vmul.f32 0.5, %v1837
      %v1839 = vsub.f32 1.5, %v1838
      %v1840 = vmul.f32 %v1835, %v1839
      %vm1841 = vweird.f32 %v1834
      %vm1842 = vweird.f32 %v1835
      %vm1843 = vmor %vm1841, %vm1842
      %v1844 = vsel %vm1843, %v1835, %v1840
      %v1845 = vmul.f32 %v1829, %v1844
      %v1846 = vmul.f32 %v1555, %v1844
      %v1847 = vmul.f32 %v1557, %v1844
      %v1848 = vmul.f32 %v1560, %v1844
      %v1849 = vmul.f32 %v1562, %v1844
      %v1850 = vmul.f32 %v1565, %v1844
      %v1851 = vmul.f32 %v1567, %v1844
      %v1852 = vmul.f32 %v1570, %v1844
      %v1853 = vmul.f32 %v1572, %v1844
      %v1854 = vmul.f32 %v1575, %v1844
      %v1855 = vmul.f32 %v1577, %v1844
      %v1856 = vmul.f32 %v1580, %v1844
      %v1857 = vmul.f32 %v1582, %v1844
      %v1858 = vmul.f32 %v1585, %v1844
      %v1859 = vmul.f32 %v1587, %v1844
      %v1860 = vmul.f32 %v1590, %v1844
      %v1861 = vmul.f32 %v1592, %v1844
      %v1862 = vmul.f32 %v1595, %v1844
      %v1863 = vmul.f32 %v1597, %v1844
      %v1864 = vmul.f32 %v1600, %v1844
      %v1865 = vmul.f32 %v1602, %v1844
      %v1866 = vmul.f32 %v1605, %v1844
      %v1867 = vmul.f32 %v1607, %v1844
      %v1868 = vmul.f32 %v1610, %v1844
      %v1869 = vmul.f32 %v1612, %v1844
      %v1870 = vmul.f32 %v1615, %v1844
      %v1871 = vmul.f32 %v1617, %v1844
      %v1872 = vmul.f32 %v1620, %v1844
      %v1873 = vmul.f32 %v1622, %v1844
      %v1874 = vmul.f32 %v1625, %v1844
      %v1875 = vmul.f32 %v1627, %v1844
      %v1876 = vmul.f32 %v1630, %v1844
      %v1877 = vmul.f32 %v1632, %v1844
      %v1878 = vsub.f32 %v1846, %v1845
      %v1879 = vsub.f32 %v1847, %v1845
      %v1880 = vsub.f32 %v1848, %v1845
      %v1881 = vsub.f32 %v1849, %v1845
      %v1882 = vsub.f32 %v1850, %v1845
      %v1883 = vsub.f32 %v1851, %v1845
      %v1884 = vsub.f32 %v1852, %v1845
      %v1885 = vsub.f32 %v1853, %v1845
      %v1886 = vsub.f32 %v1854, %v1845
      %v1887 = vsub.f32 %v1855, %v1845
      %v1888 = vsub.f32 %v1856, %v1845
      %v1889 = vsub.f32 %v1857, %v1845
      %v1890 = vsub.f32 %v1858, %v1845
      %v1891 = vsub.f32 %v1859, %v1845
      %v1892 = vsub.f32 %v1860, %v1845
      %v1893 = vsub.f32 %v1861, %v1845
      %v1894 = vsub.f32 %v1862, %v1845
      %v1895 = vsub.f32 %v1863, %v1845
      %v1896 = vsub.f32 %v1864, %v1845
      %v1897 = vsub.f32 %v1865, %v1845
      %v1898 = vsub.f32 %v1866, %v1845
      %v1899 = vsub.f32 %v1867, %v1845
      %v1900 = vsub.f32 %v1868, %v1845
      %v1901 = vsub.f32 %v1869, %v1845
      %v1902 = vsub.f32 %v1870, %v1845
      %v1903 = vsub.f32 %v1871, %v1845
      %v1904 = vsub.f32 %v1872, %v1845
      %v1905 = vsub.f32 %v1873, %v1845
      %v1906 = vsub.f32 %v1874, %v1845
      %v1907 = vsub.f32 %v1875, %v1845
      %v1908 = vsub.f32 %v1876, %v1845
      %v1909 = vsub.f32 %v1877, %v1845
      %v1910 = vmax.f32 %v1878, 0.0
      %v1911 = vmax.f32 %v1879, 0.0
      %v1912 = vmax.f32 %v1880, 0.0
      %v1913 = vmax.f32 %v1881, 0.0
      %v1914 = vmax.f32 %v1882, 0.0
      %v1915 = vmax.f32 %v1883, 0.0
      %v1916 = vmax.f32 %v1884, 0.0
      %v1917 = vmax.f32 %v1885, 0.0
      %v1918 = vmax.f32 %v1886, 0.0
      %v1919 = vmax.f32 %v1887, 0.0
      %v1920 = vmax.f32 %v1888, 0.0
      %v1921 = vmax.f32 %v1889, 0.0
      %v1922 = vmax.f32 %v1890, 0.0
      %v1923 = vmax.f32 %v1891, 0.0
      %v1924 = vmax.f32 %v1892, 0.0
      %v1925 = vmax.f32 %v1893, 0.0
      %v1926 = vmax.f32 %v1894, 0.0
      %v1927 = vmax.f32 %v1895, 0.0
      %v1928 = vmax.f32 %v1896, 0.0
      %v1929 = vmax.f32 %v1897, 0.0
      %v1930 = vmax.f32 %v1898, 0.0
      %v1931 = vmax.f32 %v1899, 0.0
      %v1932 = vmax.f32 %v1900, 0.0
      %v1933 = vmax.f32 %v1901, 0.0
      %v1934 = vmax.f32 %v1902, 0.0
      %v1935 = vmax.f32 %v1903, 0.0
      %v1936 = vmax.f32 %v1904, 0.0
      %v1937 = vmax.f32 %v1905, 0.0
      %v1938 = vmax.f32 %v1906, 0.0
      %v1939 = vmax.f32 %v1907, 0.0
      %v1940 = vmax.f32 %v1908, 0.0
      %v1941 = vmax.f32 %v1909, 0.0
      %v1942 = vpack.c.bf16 %v1910, %v1910
      %v1943 = vpack.c.bf16 %v1911, %v1911
      %v1944 = vpack.c.bf16 %v1912, %v1912
      %v1945 = vpack.c.bf16 %v1913, %v1913
      %v1946 = vpack.c.bf16 %v1914, %v1914
      %v1947 = vpack.c.bf16 %v1915, %v1915
      %v1948 = vpack.c.bf16 %v1916, %v1916
      %v1949 = vpack.c.bf16 %v1917, %v1917
      %v1950 = vpack.c.bf16 %v1918, %v1918
      %v1951 = vpack.c.bf16 %v1919, %v1919
      %v1952 = vpack.c.bf16 %v1920, %v1920
      %v1953 = vpack.c.bf16 %v1921, %v1921
      %v1954 = vpack.c.bf16 %v1922, %v1922
      %v1955 = vpack.c.bf16 %v1923, %v1923
      %v1956 = vpack.c.bf16 %v1924, %v1924
      %v1957 = vpack.c.bf16 %v1925, %v1925
      %v1958 = vpack.c.bf16 %v1926, %v1926
      %v1959 = vpack.c.bf16 %v1927, %v1927
      %v1960 = vpack.c.bf16 %v1928, %v1928
      %v1961 = vpack.c.bf16 %v1929, %v1929
      %v1962 = vpack.c.bf16 %v1930, %v1930
      %v1963 = vpack.c.bf16 %v1931, %v1931
      %v1964 = vpack.c.bf16 %v1932, %v1932
      %v1965 = vpack.c.bf16 %v1933, %v1933
      %v1966 = vpack.c.bf16 %v1934, %v1934
      %v1967 = vpack.c.bf16 %v1935, %v1935
      %v1968 = vpack.c.bf16 %v1936, %v1936
      %v1969 = vpack.c.bf16 %v1937, %v1937
      %v1970 = vpack.c.bf16 %v1938, %v1938
      %v1971 = vpack.c.bf16 %v1939, %v1939
      %v1972 = vpack.c.bf16 %v1940, %v1940
      %v1973 = vpack.c.bf16 %v1941, %v1941
      %v1990 = vunpack.c.l.b16 %v1944
      %v1991 = vunpack.c.l.b16 %v1942
      %v1992 = vunpack.c.l.b16 %v1946
      %v1993 = vunpack.c.l.b16 %v1948
      %v1994 = vunpack.c.l.b16 %v1950
      %v1995 = vunpack.c.l.b16 %v1952
      %v1996 = vunpack.c.l.b16 %v1954
      %v1997 = vunpack.c.l.b16 %v1956
      %v1998 = vunpack.c.l.b16 %v1958
      %v1999 = vunpack.c.l.b16 %v1960
      %v2000 = vunpack.c.l.b16 %v1962
      %v2001 = vunpack.c.l.b16 %v1964
      %v2002 = vunpack.c.l.b16 %v1966
      %v2003 = vunpack.c.l.b16 %v1968
      %v2004 = vunpack.c.l.b16 %v1970
      %v2005 = vunpack.c.l.b16 %v1972
      %v2006 = vpack.c.b16 %v1990, %v1990
      %v2007 = vpack.c.b16 %v1991, %v1991
      %v2008 = vpack.c.b16 %v1992, %v1992
      %v2009 = vpack.c.b16 %v1993, %v1993
      %v2010 = vpack.c.b16 %v1994, %v1994
      %v2011 = vpack.c.b16 %v1995, %v1995
      %v2012 = vpack.c.b16 %v1996, %v1996
      %v2013 = vpack.c.b16 %v1997, %v1997
      %v2014 = vpack.c.b16 %v1998, %v1998
      %v2015 = vpack.c.b16 %v1999, %v1999
      %v2016 = vpack.c.b16 %v2000, %v2000
      %v2017 = vpack.c.b16 %v2001, %v2001
      %v2018 = vpack.c.b16 %v2002, %v2002
      %v2019 = vpack.c.b16 %v2003, %v2003
      %v2020 = vpack.c.b16 %v2004, %v2004
      %v2021 = vpack.c.b16 %v2005, %v2005
      %v2023 = vshrl.u32 %v2006, 16
      %v2026 = vshrl.u32 %v2007, 16
      %v2029 = vshrl.u32 %v2008, 16
      %v2032 = vshrl.u32 %v2009, 16
      %v2035 = vshrl.u32 %v2010, 16
      %v2038 = vshrl.u32 %v2011, 16
      %v2041 = vshrl.u32 %v2012, 16
      %v2044 = vshrl.u32 %v2013, 16
      %v2047 = vshrl.u32 %v2014, 16
      %v2050 = vshrl.u32 %v2015, 16
      %v2053 = vshrl.u32 %v2016, 16
      %v2056 = vshrl.u32 %v2017, 16
      %v2059 = vshrl.u32 %v2018, 16
      %v2062 = vshrl.u32 %v2019, 16
      %v2065 = vshrl.u32 %v2020, 16
      %v2068 = vshrl.u32 %v2021, 16
      %v2102 = vunpack.c.l.b16 %v1945
      %v2103 = vunpack.c.l.b16 %v1943
      %v2104 = vunpack.c.l.b16 %v1947
      %v2105 = vunpack.c.l.b16 %v1949
      %v2106 = vunpack.c.l.b16 %v1951
      %v2107 = vunpack.c.l.b16 %v1953
      %v2108 = vunpack.c.l.b16 %v1955
      %v2109 = vunpack.c.l.b16 %v1957
      %v2110 = vunpack.c.l.b16 %v1959
      %v2111 = vunpack.c.l.b16 %v1961
      %v2112 = vunpack.c.l.b16 %v1963
      %v2113 = vunpack.c.l.b16 %v1965
      %v2114 = vunpack.c.l.b16 %v1967
      %v2115 = vunpack.c.l.b16 %v1969
      %v2116 = vunpack.c.l.b16 %v1971
      %v2117 = vunpack.c.l.b16 %v1973
      %v2118 = vpack.c.b16 %v2102, %v1990
      %v2119 = vpack.c.b16 %v2103, %v1991
      %v2120 = vpack.c.b16 %v2104, %v1992
      %v2121 = vpack.c.b16 %v2105, %v1993
      %v2122 = vpack.c.b16 %v2106, %v1994
      %v2123 = vpack.c.b16 %v2107, %v1995
      %v2124 = vpack.c.b16 %v2108, %v1996
      %v2125 = vpack.c.b16 %v2109, %v1997
      %v2126 = vpack.c.b16 %v2110, %v1998
      %v2127 = vpack.c.b16 %v2111, %v1999
      %v2128 = vpack.c.b16 %v2112, %v2000
      %v2129 = vpack.c.b16 %v2113, %v2001
      %v2130 = vpack.c.b16 %v2114, %v2002
      %v2131 = vpack.c.b16 %v2115, %v2003
      %v2132 = vpack.c.b16 %v2116, %v2004
      %v2133 = vpack.c.b16 %v2117, %v2005
      %v2135 = vshrl.u32 %v2118, 16
      %v2137 = vrot.slane %v2135, 7
      %v2138 = vshll.u32 %v2118, 16
      %v2140 = vor.u32 %v2137, %v2138
      %v2142 = vshrl.u32 %v2119, 16
      %v2144 = vrot.slane %v2142, 7
      %v2145 = vshll.u32 %v2119, 16
      %v2147 = vor.u32 %v2144, %v2145
      %v2149 = vshrl.u32 %v2120, 16
      %v2151 = vrot.slane %v2149, 7
      %v2152 = vshll.u32 %v2120, 16
      %v2154 = vor.u32 %v2151, %v2152
      %v2156 = vshrl.u32 %v2121, 16
      %v2158 = vrot.slane %v2156, 7
      %v2159 = vshll.u32 %v2121, 16
      %v2161 = vor.u32 %v2158, %v2159
      %v2163 = vshrl.u32 %v2122, 16
      %v2165 = vrot.slane %v2163, 7
      %v2166 = vshll.u32 %v2122, 16
      %v2168 = vor.u32 %v2165, %v2166
      %v2170 = vshrl.u32 %v2123, 16
      %v2172 = vrot.slane %v2170, 7
      %v2173 = vshll.u32 %v2123, 16
      %v2175 = vor.u32 %v2172, %v2173
      %v2177 = vshrl.u32 %v2124, 16
      %v2179 = vrot.slane %v2177, 7
      %v2180 = vshll.u32 %v2124, 16
      %v2182 = vor.u32 %v2179, %v2180
      %v2184 = vshrl.u32 %v2125, 16
      %v2186 = vrot.slane %v2184, 7
      %v2187 = vshll.u32 %v2125, 16
      %v2189 = vor.u32 %v2186, %v2187
      %v2191 = vshrl.u32 %v2126, 16
      %v2193 = vrot.slane %v2191, 7
      %v2194 = vshll.u32 %v2126, 16
      %v2196 = vor.u32 %v2193, %v2194
      %v2198 = vshrl.u32 %v2127, 16
      %v2200 = vrot.slane %v2198, 7
      %v2201 = vshll.u32 %v2127, 16
      %v2203 = vor.u32 %v2200, %v2201
      %v2205 = vshrl.u32 %v2128, 16
      %v2207 = vrot.slane %v2205, 7
      %v2208 = vshll.u32 %v2128, 16
      %v2210 = vor.u32 %v2207, %v2208
      %v2212 = vshrl.u32 %v2129, 16
      %v2214 = vrot.slane %v2212, 7
      %v2215 = vshll.u32 %v2129, 16
      %v2217 = vor.u32 %v2214, %v2215
      %v2219 = vshrl.u32 %v2130, 16
      %v2221 = vrot.slane %v2219, 7
      %v2222 = vshll.u32 %v2130, 16
      %v2224 = vor.u32 %v2221, %v2222
      %v2226 = vshrl.u32 %v2131, 16
      %v2228 = vrot.slane %v2226, 7
      %v2229 = vshll.u32 %v2131, 16
      %v2231 = vor.u32 %v2228, %v2229
      %v2233 = vshrl.u32 %v2132, 16
      %v2235 = vrot.slane %v2233, 7
      %v2236 = vshll.u32 %v2132, 16
      %v2238 = vor.u32 %v2235, %v2236
      %v2240 = vshrl.u32 %v2133, 16
      %v2242 = vrot.slane %v2240, 7
      %v2243 = vshll.u32 %v2133, 16
      %v2245 = vor.u32 %v2242, %v2243
      %v2278 = vpack.c.b16 %v2102, %v2102
      %v2279 = vpack.c.b16 %v2103, %v2103
      %v2280 = vpack.c.b16 %v2104, %v2104
      %v2281 = vpack.c.b16 %v2105, %v2105
      %v2282 = vpack.c.b16 %v2106, %v2106
      %v2283 = vpack.c.b16 %v2107, %v2107
      %v2284 = vpack.c.b16 %v2108, %v2108
      %v2285 = vpack.c.b16 %v2109, %v2109
      %v2286 = vpack.c.b16 %v2110, %v2110
      %v2287 = vpack.c.b16 %v2111, %v2111
      %v2288 = vpack.c.b16 %v2112, %v2112
      %v2289 = vpack.c.b16 %v2113, %v2113
      %v2290 = vpack.c.b16 %v2114, %v2114
      %v2291 = vpack.c.b16 %v2115, %v2115
      %v2292 = vpack.c.b16 %v2116, %v2116
      %v2293 = vpack.c.b16 %v2117, %v2117
      %v2295 = vshll.u32 %v2278, 16
      %v2297 = vrot.slane %v2295, 3
      %v2299 = vshll.u32 %v2279, 16
      %v2301 = vrot.slane %v2299, 3
      %v2303 = vshll.u32 %v2280, 16
      %v2305 = vrot.slane %v2303, 3
      %v2307 = vshll.u32 %v2281, 16
      %v2309 = vrot.slane %v2307, 3
      %v2311 = vshll.u32 %v2282, 16
      %v2313 = vrot.slane %v2311, 3
      %v2315 = vshll.u32 %v2283, 16
      %v2317 = vrot.slane %v2315, 3
      %v2319 = vshll.u32 %v2284, 16
      %v2321 = vrot.slane %v2319, 3
      %v2323 = vshll.u32 %v2285, 16
      %v2325 = vrot.slane %v2323, 3
      %v2327 = vshll.u32 %v2286, 16
      %v2329 = vrot.slane %v2327, 3
      %v2331 = vshll.u32 %v2287, 16
      %v2333 = vrot.slane %v2331, 3
      %v2335 = vshll.u32 %v2288, 16
      %v2337 = vrot.slane %v2335, 3
      %v2339 = vshll.u32 %v2289, 16
      %v2341 = vrot.slane %v2339, 3
      %v2343 = vshll.u32 %v2290, 16
      %v2345 = vrot.slane %v2343, 3
      %v2347 = vshll.u32 %v2291, 16
      %v2349 = vrot.slane %v2347, 3
      %v2351 = vshll.u32 %v2292, 16
      %v2353 = vrot.slane %v2351, 3
      %v2355 = vshll.u32 %v2293, 16
      %v2357 = vrot.slane %v2355, 3
      %v2374 = vsel %vm665, %v2023, %v2140
      %v2375 = vsel %vm665, %v2026, %v2147
      %v2376 = vsel %vm665, %v2029, %v2154
      %v2377 = vsel %vm665, %v2032, %v2161
      %v2378 = vsel %vm665, %v2035, %v2168
      %v2379 = vsel %vm665, %v2038, %v2175
      %v2380 = vsel %vm665, %v2041, %v2182
      %v2381 = vsel %vm665, %v2044, %v2189
      %v2382 = vsel %vm665, %v2047, %v2196
      %v2383 = vsel %vm665, %v2050, %v2203
      %v2384 = vsel %vm665, %v2053, %v2210
      %v2385 = vsel %vm665, %v2056, %v2217
      %v2386 = vsel %vm665, %v2059, %v2224
      %v2387 = vsel %vm665, %v2062, %v2231
      %v2388 = vsel %vm665, %v2065, %v2238
      %v2389 = vsel %vm665, %v2068, %v2245
      %v2390 = vsel %vm665, %v2137, %v2297
      %v2391 = vsel %vm665, %v2144, %v2301
      %v2392 = vsel %vm665, %v2151, %v2305
      %v2393 = vsel %vm665, %v2158, %v2309
      %v2394 = vsel %vm665, %v2165, %v2313
      %v2395 = vsel %vm665, %v2172, %v2317
      %v2396 = vsel %vm665, %v2179, %v2321
      %v2397 = vsel %vm665, %v2186, %v2325
      %v2398 = vsel %vm665, %v2193, %v2329
      %v2399 = vsel %vm665, %v2200, %v2333
      %v2400 = vsel %vm665, %v2207, %v2337
      %v2401 = vsel %vm665, %v2214, %v2341
      %v2402 = vsel %vm665, %v2221, %v2345
      %v2403 = vsel %vm665, %v2228, %v2349
      %v2404 = vsel %vm665, %v2235, %v2353
      %v2405 = vsel %vm665, %v2242, %v2357
      %v2407 = vshrl.u32 %v2374, 16
      %v2409 = vshll.u32 %v2374, 16
      %v2411 = vrot.slane %v2409, 1
      %v2412 = vor.u32 %v2407, %v2411
      %v2414 = vshll.u32 %v2390, 16
      %v2416 = vrot.slane %v2414, 1
      %v2417 = vsel %vm698, %v2412, %v2416
      %v2419 = vshrl.u32 %v2375, 16
      %v2421 = vshll.u32 %v2375, 16
      %v2423 = vrot.slane %v2421, 1
      %v2424 = vor.u32 %v2419, %v2423
      %v2426 = vshll.u32 %v2391, 16
      %v2428 = vrot.slane %v2426, 1
      %v2429 = vsel %vm698, %v2424, %v2428
      %v2431 = vshrl.u32 %v2376, 16
      %v2433 = vshll.u32 %v2376, 16
      %v2435 = vrot.slane %v2433, 1
      %v2436 = vor.u32 %v2431, %v2435
      %v2438 = vshll.u32 %v2392, 16
      %v2440 = vrot.slane %v2438, 1
      %v2441 = vsel %vm698, %v2436, %v2440
      %v2443 = vshrl.u32 %v2377, 16
      %v2445 = vshll.u32 %v2377, 16
      %v2447 = vrot.slane %v2445, 1
      %v2448 = vor.u32 %v2443, %v2447
      %v2450 = vshll.u32 %v2393, 16
      %v2452 = vrot.slane %v2450, 1
      %v2453 = vsel %vm698, %v2448, %v2452
      %v2455 = vshrl.u32 %v2378, 16
      %v2457 = vshll.u32 %v2378, 16
      %v2459 = vrot.slane %v2457, 1
      %v2460 = vor.u32 %v2455, %v2459
      %v2462 = vshll.u32 %v2394, 16
      %v2464 = vrot.slane %v2462, 1
      %v2465 = vsel %vm698, %v2460, %v2464
      %v2467 = vshrl.u32 %v2379, 16
      %v2469 = vshll.u32 %v2379, 16
      %v2471 = vrot.slane %v2469, 1
      %v2472 = vor.u32 %v2467, %v2471
      %v2474 = vshll.u32 %v2395, 16
      %v2476 = vrot.slane %v2474, 1
      %v2477 = vsel %vm698, %v2472, %v2476
      %v2479 = vshrl.u32 %v2380, 16
      %v2481 = vshll.u32 %v2380, 16
      %v2483 = vrot.slane %v2481, 1
      %v2484 = vor.u32 %v2479, %v2483
      %v2486 = vshll.u32 %v2396, 16
      %v2488 = vrot.slane %v2486, 1
      %v2489 = vsel %vm698, %v2484, %v2488
      %v2491 = vshrl.u32 %v2381, 16
      %v2493 = vshll.u32 %v2381, 16
      %v2495 = vrot.slane %v2493, 1
      %v2496 = vor.u32 %v2491, %v2495
      %v2498 = vshll.u32 %v2397, 16
      %v2500 = vrot.slane %v2498, 1
      %v2501 = vsel %vm698, %v2496, %v2500
      %v2503 = vshrl.u32 %v2382, 16
      %v2505 = vshll.u32 %v2382, 16
      %v2507 = vrot.slane %v2505, 1
      %v2508 = vor.u32 %v2503, %v2507
      %v2510 = vshll.u32 %v2398, 16
      %v2512 = vrot.slane %v2510, 1
      %v2513 = vsel %vm698, %v2508, %v2512
      %v2515 = vshrl.u32 %v2383, 16
      %v2517 = vshll.u32 %v2383, 16
      %v2519 = vrot.slane %v2517, 1
      %v2520 = vor.u32 %v2515, %v2519
      %v2522 = vshll.u32 %v2399, 16
      %v2524 = vrot.slane %v2522, 1
      %v2525 = vsel %vm698, %v2520, %v2524
      %v2527 = vshrl.u32 %v2384, 16
      %v2529 = vshll.u32 %v2384, 16
      %v2531 = vrot.slane %v2529, 1
      %v2532 = vor.u32 %v2527, %v2531
      %v2534 = vshll.u32 %v2400, 16
      %v2536 = vrot.slane %v2534, 1
      %v2537 = vsel %vm698, %v2532, %v2536
      %v2539 = vshrl.u32 %v2385, 16
      %v2541 = vshll.u32 %v2385, 16
      %v2543 = vrot.slane %v2541, 1
      %v2544 = vor.u32 %v2539, %v2543
      %v2546 = vshll.u32 %v2401, 16
      %v2548 = vrot.slane %v2546, 1
      %v2549 = vsel %vm698, %v2544, %v2548
      %v2551 = vshrl.u32 %v2386, 16
      %v2553 = vshll.u32 %v2386, 16
      %v2555 = vrot.slane %v2553, 1
      %v2556 = vor.u32 %v2551, %v2555
      %v2558 = vshll.u32 %v2402, 16
      %v2560 = vrot.slane %v2558, 1
      %v2561 = vsel %vm698, %v2556, %v2560
      %v2563 = vshrl.u32 %v2387, 16
      %v2565 = vshll.u32 %v2387, 16
      %v2567 = vrot.slane %v2565, 1
      %v2568 = vor.u32 %v2563, %v2567
      %v2570 = vshll.u32 %v2403, 16
      %v2572 = vrot.slane %v2570, 1
      %v2573 = vsel %vm698, %v2568, %v2572
      %v2575 = vshrl.u32 %v2388, 16
      %v2577 = vshll.u32 %v2388, 16
      %v2579 = vrot.slane %v2577, 1
      %v2580 = vor.u32 %v2575, %v2579
      %v2582 = vshll.u32 %v2404, 16
      %v2584 = vrot.slane %v2582, 1
      %v2585 = vsel %vm698, %v2580, %v2584
      %v2601 = vld [vmem:[%s2] sm:$0xf]
      %v2602 = vld [vmem:[%s2 + $0x4] sm:$0xf]
      %v2603 = vld [vmem:[%s2 + $0x8] sm:$0xf]
      %v2604 = vld [vmem:[%s2 + $0xc] sm:$0xf]
      %v2605 = vld [vmem:[%s2 + $0x10] sm:$0xf]
      %v2606 = vld [vmem:[%s2 + $0x14] sm:$0xf]
      %v2607 = vld [vmem:[%s2 + $0x18] sm:$0xf]
      %v2608 = vld [vmem:[%s2 + $0x1c] sm:$0xf]
      %v2609 = vld [vmem:[%s2 + $0x20] sm:$0xf]
      %v2610 = vld [vmem:[%s2 + $0x24] sm:$0xf]
      %v2611 = vld [vmem:[%s2 + $0x28] sm:$0xf]
      %v2612 = vld [vmem:[%s2 + $0x2c] sm:$0xf]
      %v2613 = vld [vmem:[%s2 + $0x30] sm:$0xf]
      %v2614 = vld [vmem:[%s2 + $0x34] sm:$0xf]
      %v2615 = vld [vmem:[%s2 + $0x38] sm:$0xf]
      %v2616 = vld [vmem:[%s2 + $0x3c] sm:$0xf]
      %v2617 = vld [vmem:[%s2 + $0x40] sm:$0xf]
      %v2618 = vld [vmem:[%s2 + $0x44] sm:$0xf]
      %v2619 = vld [vmem:[%s2 + $0x48] sm:$0xf]
      %v2620 = vld [vmem:[%s2 + $0x4c] sm:$0xf]
      %v2621 = vld [vmem:[%s2 + $0x50] sm:$0xf]
      %v2622 = vld [vmem:[%s2 + $0x54] sm:$0xf]
      %v2623 = vld [vmem:[%s2 + $0x58] sm:$0xf]
      %v2624 = vld [vmem:[%s2 + $0x5c] sm:$0xf]
      %v2625 = vld [vmem:[%s2 + $0x60] sm:$0xf]
      %v2626 = vld [vmem:[%s2 + $0x64] sm:$0xf]
      %v2627 = vld [vmem:[%s2 + $0x68] sm:$0xf]
      %v2628 = vld [vmem:[%s2 + $0x6c] sm:$0xf]
      %v2629 = vld [vmem:[%s2 + $0x70] sm:$0xf]
      %v2630 = vld [vmem:[%s2 + $0x74] sm:$0xf]
      %v2631 = vld [vmem:[%s2 + $0x78] sm:$0xf]
      %v2632 = vld [vmem:[%s2 + $0x7c] sm:$0xf]
      %v2663 = vrot.slane %v2374, 1
      %v2664 = vrot.slane %v2390, 1
      %v2665 = vsel %vm939, %v2663, %v2664
      %v2666 = vrot.slane %v2375, 1
      %v2667 = vrot.slane %v2391, 1
      %v2668 = vsel %vm939, %v2666, %v2667
      %v2669 = vrot.slane %v2376, 1
      %v2670 = vrot.slane %v2392, 1
      %v2671 = vsel %vm939, %v2669, %v2670
      %v2672 = vrot.slane %v2377, 1
      %v2673 = vrot.slane %v2393, 1
      %v2674 = vsel %vm939, %v2672, %v2673
      %v2675 = vrot.slane %v2378, 1
      %v2676 = vrot.slane %v2394, 1
      %v2677 = vsel %vm939, %v2675, %v2676
      %v2678 = vrot.slane %v2379, 1
      %v2679 = vrot.slane %v2395, 1
      %v2680 = vsel %vm939, %v2678, %v2679
      %v2681 = vrot.slane %v2380, 1
      %v2682 = vrot.slane %v2396, 1
      %v2683 = vsel %vm939, %v2681, %v2682
      %v2684 = vrot.slane %v2381, 1
      %v2685 = vrot.slane %v2397, 1
      %v2686 = vsel %vm939, %v2684, %v2685
      %v2687 = vrot.slane %v2382, 1
      %v2688 = vrot.slane %v2398, 1
      %v2689 = vsel %vm939, %v2687, %v2688
      %v2690 = vrot.slane %v2383, 1
      %v2691 = vrot.slane %v2399, 1
      %v2692 = vsel %vm939, %v2690, %v2691
      %v2693 = vrot.slane %v2384, 1
      %v2694 = vrot.slane %v2400, 1
      %v2695 = vsel %vm939, %v2693, %v2694
      %v2696 = vrot.slane %v2385, 1
      %v2697 = vrot.slane %v2401, 1
      %v2698 = vsel %vm939, %v2696, %v2697
      %v2699 = vrot.slane %v2386, 1
      %v2700 = vrot.slane %v2402, 1
      %v2701 = vsel %vm939, %v2699, %v2700
      %v2702 = vrot.slane %v2387, 1
      %v2703 = vrot.slane %v2403, 1
      %v2704 = vsel %vm939, %v2702, %v2703
      %v2705 = vrot.slane %v2388, 1
      %v2706 = vrot.slane %v2404, 1
      %v2707 = vsel %vm939, %v2705, %v2706
      %v2723 = vld [vmem:[%s2 + $0x80] sm:$0xf]
      %v2724 = vld [vmem:[%s2 + $0x84] sm:$0xf]
      %v2725 = vld [vmem:[%s2 + $0x88] sm:$0xf]
      %v2726 = vld [vmem:[%s2 + $0x8c] sm:$0xf]
      %v2727 = vld [vmem:[%s2 + $0x90] sm:$0xf]
      %v2728 = vld [vmem:[%s2 + $0x94] sm:$0xf]
      %v2729 = vld [vmem:[%s2 + $0x98] sm:$0xf]
      %v2730 = vld [vmem:[%s2 + $0x9c] sm:$0xf]
      %v2731 = vld [vmem:[%s2 + $0xa0] sm:$0xf]
      %v2732 = vld [vmem:[%s2 + $0xa4] sm:$0xf]
      %v2733 = vld [vmem:[%s2 + $0xa8] sm:$0xf]
      %v2734 = vld [vmem:[%s2 + $0xac] sm:$0xf]
      %v2735 = vld [vmem:[%s2 + $0xb0] sm:$0xf]
      %v2736 = vld [vmem:[%s2 + $0xb4] sm:$0xf]
      %v2737 = vld [vmem:[%s2 + $0xb8] sm:$0xf]
      %v2738 = vld [vmem:[%s2 + $0xbc] sm:$0xf]
      %v2739 = vld [vmem:[%s2 + $0xc0] sm:$0xf]
      %v2740 = vld [vmem:[%s2 + $0xc4] sm:$0xf]
      %v2741 = vld [vmem:[%s2 + $0xc8] sm:$0xf]
      %v2742 = vld [vmem:[%s2 + $0xcc] sm:$0xf]
      %v2743 = vld [vmem:[%s2 + $0xd0] sm:$0xf]
      %v2744 = vld [vmem:[%s2 + $0xd4] sm:$0xf]
      %v2745 = vld [vmem:[%s2 + $0xd8] sm:$0xf]
      %v2746 = vld [vmem:[%s2 + $0xdc] sm:$0xf]
      %v2747 = vld [vmem:[%s2 + $0xe0] sm:$0xf]
      %v2748 = vld [vmem:[%s2 + $0xe4] sm:$0xf]
      %v2749 = vld [vmem:[%s2 + $0xe8] sm:$0xf]
      %v2750 = vld [vmem:[%s2 + $0xec] sm:$0xf]
      %v2751 = vld [vmem:[%s2 + $0xf0] sm:$0xf]
      %v2752 = vld [vmem:[%s2 + $0xf4] sm:$0xf]
      %v2753 = vld [vmem:[%s2 + $0xf8] sm:$0xf]
      %v2754 = vld [vmem:[%s2 + $0xfc] sm:$0xf]
      %v2787 = vunpack.c.l.b16 %v2723
      %v2788 = vunpack.c.l.b16 %v2724
      %v2789 = vunpack.c.l.b16 %v2725
      %v2790 = vunpack.c.l.b16 %v2726
      %v2791 = vunpack.c.l.b16 %v2727
      %v2792 = vunpack.c.l.b16 %v2728
      %v2793 = vunpack.c.l.b16 %v2729
      %v2794 = vunpack.c.l.b16 %v2730
      %v2795 = vunpack.c.l.b16 %v2731
      %v2796 = vunpack.c.l.b16 %v2732
      %v2797 = vunpack.c.l.b16 %v2733
      %v2798 = vunpack.c.l.b16 %v2734
      %v2799 = vunpack.c.l.b16 %v2735
      %v2800 = vunpack.c.l.b16 %v2736
      %v2801 = vunpack.c.l.b16 %v2737
      %v2802 = vunpack.c.l.b16 %v2738
      %v2803 = vunpack.c.l.b16 %v2739
      %v2804 = vunpack.c.l.b16 %v2740
      %v2805 = vunpack.c.l.b16 %v2741
      %v2806 = vunpack.c.l.b16 %v2742
      %v2807 = vunpack.c.l.b16 %v2743
      %v2808 = vunpack.c.l.b16 %v2744
      %v2809 = vunpack.c.l.b16 %v2745
      %v2810 = vunpack.c.l.b16 %v2746
      %v2811 = vunpack.c.l.b16 %v2747
      %v2812 = vunpack.c.l.b16 %v2748
      %v2813 = vunpack.c.l.b16 %v2749
      %v2814 = vunpack.c.l.b16 %v2750
      %v2815 = vunpack.c.l.b16 %v2751
      %v2816 = vunpack.c.l.b16 %v2752
      %v2817 = vunpack.c.l.b16 %v2753
      %v2818 = vunpack.c.l.b16 %v2754
      %v2819 = vpack.c.b16 %v2788, %v2787
      %v2820 = vpack.c.b16 %v2790, %v2789
      %v2821 = vpack.c.b16 %v2792, %v2791
      %v2822 = vpack.c.b16 %v2794, %v2793
      %v2823 = vpack.c.b16 %v2796, %v2795
      %v2824 = vpack.c.b16 %v2798, %v2797
      %v2825 = vpack.c.b16 %v2800, %v2799
      %v2826 = vpack.c.b16 %v2802, %v2801
      %v2827 = vpack.c.b16 %v2804, %v2803
      %v2828 = vpack.c.b16 %v2806, %v2805
      %v2829 = vpack.c.b16 %v2808, %v2807
      %v2830 = vpack.c.b16 %v2810, %v2809
      %v2831 = vpack.c.b16 %v2812, %v2811
      %v2832 = vpack.c.b16 %v2814, %v2813
      %v2833 = vpack.c.b16 %v2816, %v2815
      %v2834 = vpack.c.b16 %v2818, %v2817
      %2851 = vmatpush.bf16.msra.mxu0 %v2826
      %2852 = vmatpush.bf16.msra.mxu0 %v2825
      %2853 = vmatpush.bf16.msra.mxu0 %v2824
      %2854 = vmatpush.bf16.msra.mxu0 %v2823
      %2855 = vmatpush.bf16.msra.mxu0 %v2822
      %2856 = vmatpush.bf16.msra.mxu0 %v2821
      %2857 = vmatpush.bf16.msra.mxu0 %v2820
      %2858 = vmatpush.bf16.msra.mxu0 %v2819
      %2859 = vmatmul.bf16.gmra.mxu0 %v2665
      %v2860 = vpop.f32.mrf.mxu0
      %v2861 = vadd.f32 0.0, %v2860
      %v2862 = vpop.f32.mrf.mxu0
      %v2863 = vadd.f32 0.0, %v2862
      %2864 = vmatmul.bf16.gmra.mxu0 %v2668
      %v2865 = vpop.f32.mrf.mxu0
      %v2866 = vadd.f32 0.0, %v2865
      %v2867 = vpop.f32.mrf.mxu0
      %v2868 = vadd.f32 0.0, %v2867
      %2869 = vmatmul.bf16.gmra.mxu0 %v2665
      %v2870 = vpop.f32.mrf.mxu0
      %v2871 = vadd.f32 0.0, %v2870
      %v2872 = vpop.f32.mrf.mxu0
      %v2873 = vadd.f32 0.0, %v2872
      %2874 = vmatmul.bf16.gmra.mxu0 %v2671
      %v2875 = vpop.f32.mrf.mxu0
      %v2876 = vadd.f32 0.0, %v2875
      %v2877 = vpop.f32.mrf.mxu0
      %v2878 = vadd.f32 0.0, %v2877
      %2879 = vmatmul.bf16.gmra.mxu0 %v2674
      %v2880 = vpop.f32.mrf.mxu0
      %v2881 = vadd.f32 0.0, %v2880
      %v2882 = vpop.f32.mrf.mxu0
      %v2883 = vadd.f32 0.0, %v2882
      %2884 = vmatmul.bf16.gmra.mxu0 %v2677
      %v2885 = vpop.f32.mrf.mxu0
      %v2886 = vadd.f32 0.0, %v2885
      %v2887 = vpop.f32.mrf.mxu0
      %v2888 = vadd.f32 0.0, %v2887
      %2889 = vmatmul.bf16.gmra.mxu0 %v2680
      %v2890 = vpop.f32.mrf.mxu0
      %v2891 = vadd.f32 0.0, %v2890
      %v2892 = vpop.f32.mrf.mxu0
      %v2893 = vadd.f32 0.0, %v2892
      %2894 = vmatmul.bf16.gmra.mxu0 %v2683
      %v2895 = vpop.f32.mrf.mxu0
      %v2896 = vadd.f32 0.0, %v2895
      %v2897 = vpop.f32.mrf.mxu0
      %v2898 = vadd.f32 0.0, %v2897
      %2899 = vmatmul.bf16.gmra.mxu0 %v2686
      %v2900 = vpop.f32.mrf.mxu0
      %v2901 = vadd.f32 0.0, %v2900
      %v2902 = vpop.f32.mrf.mxu0
      %v2903 = vadd.f32 0.0, %v2902
      %2904 = vmatmul.bf16.gmra.mxu0 %v2689
      %v2905 = vpop.f32.mrf.mxu0
      %v2906 = vadd.f32 0.0, %v2905
      %v2907 = vpop.f32.mrf.mxu0
      %v2908 = vadd.f32 0.0, %v2907
      %2909 = vmatmul.bf16.gmra.mxu0 %v2692
      %v2910 = vpop.f32.mrf.mxu0
      %v2911 = vadd.f32 0.0, %v2910
      %v2912 = vpop.f32.mrf.mxu0
      %v2913 = vadd.f32 0.0, %v2912
      %2914 = vmatmul.bf16.gmra.mxu0 %v2695
      %v2915 = vpop.f32.mrf.mxu0
      %v2916 = vadd.f32 0.0, %v2915
      %v2917 = vpop.f32.mrf.mxu0
      %v2918 = vadd.f32 0.0, %v2917
      %2919 = vmatmul.bf16.gmra.mxu0 %v2698
      %v2920 = vpop.f32.mrf.mxu0
      %v2921 = vadd.f32 0.0, %v2920
      %v2922 = vpop.f32.mrf.mxu0
      %v2923 = vadd.f32 0.0, %v2922
      %2924 = vmatmul.bf16.gmra.mxu0 %v2701
      %v2925 = vpop.f32.mrf.mxu0
      %v2926 = vadd.f32 0.0, %v2925
      %v2927 = vpop.f32.mrf.mxu0
      %v2928 = vadd.f32 0.0, %v2927
      %2929 = vmatmul.bf16.gmra.mxu0 %v2704
      %v2930 = vpop.f32.mrf.mxu0
      %v2931 = vadd.f32 0.0, %v2930
      %v2932 = vpop.f32.mrf.mxu0
      %v2933 = vadd.f32 0.0, %v2932
      %2934 = vmatmul.bf16.gmra.mxu0 %v2707
      %v2935 = vpop.f32.mrf.mxu0
      %v2936 = vadd.f32 0.0, %v2935
      %v2937 = vpop.f32.mrf.mxu0
      %v2938 = vadd.f32 0.0, %v2937
      %2939 = vdwg.mxu0
      %2940 = vmatpush.bf16.msra.mxu0 %v2834
      %2941 = vmatpush.bf16.msra.mxu0 %v2833
      %2942 = vmatpush.bf16.msra.mxu0 %v2832
      %2943 = vmatpush.bf16.msra.mxu0 %v2831
      %2944 = vmatpush.bf16.msra.mxu0 %v2830
      %2945 = vmatpush.bf16.msra.mxu0 %v2829
      %2946 = vmatpush.bf16.msra.mxu0 %v2828
      %2947 = vmatpush.bf16.msra.mxu0 %v2827
      %2948 = vmatmul.bf16.gmra.mxu0 %v2375
      %v2949 = vpop.f32.mrf.mxu0
      %v2950 = vadd.f32 %v2861, %v2949
      %v2951 = vpop.f32.mrf.mxu0
      %v2952 = vadd.f32 %v2863, %v2951
      %2953 = vmatmul.bf16.gmra.mxu0 %v2374
      %v2954 = vpop.f32.mrf.mxu0
      %v2955 = vadd.f32 %v2866, %v2954
      %v2956 = vpop.f32.mrf.mxu0
      %v2957 = vadd.f32 %v2868, %v2956
      %2958 = vmatmul.bf16.gmra.mxu0 %v2376
      %v2959 = vpop.f32.mrf.mxu0
      %v2960 = vadd.f32 %v2871, %v2959
      %v2961 = vpop.f32.mrf.mxu0
      %v2962 = vadd.f32 %v2873, %v2961
      %2963 = vmatmul.bf16.gmra.mxu0 %v2377
      %v2964 = vpop.f32.mrf.mxu0
      %v2965 = vadd.f32 %v2876, %v2964
      %v2966 = vpop.f32.mrf.mxu0
      %v2967 = vadd.f32 %v2878, %v2966
      %2968 = vmatmul.bf16.gmra.mxu0 %v2378
      %v2969 = vpop.f32.mrf.mxu0
      %v2970 = vadd.f32 %v2881, %v2969
      %v2971 = vpop.f32.mrf.mxu0
      %v2972 = vadd.f32 %v2883, %v2971
      %2973 = vmatmul.bf16.gmra.mxu0 %v2379
      %v2974 = vpop.f32.mrf.mxu0
      %v2975 = vadd.f32 %v2886, %v2974
      %v2976 = vpop.f32.mrf.mxu0
      %v2977 = vadd.f32 %v2888, %v2976
      %2978 = vmatmul.bf16.gmra.mxu0 %v2380
      %v2979 = vpop.f32.mrf.mxu0
      %v2980 = vadd.f32 %v2891, %v2979
      %v2981 = vpop.f32.mrf.mxu0
      %v2982 = vadd.f32 %v2893, %v2981
      %2983 = vmatmul.bf16.gmra.mxu0 %v2381
      %v2984 = vpop.f32.mrf.mxu0
      %v2985 = vadd.f32 %v2896, %v2984
      %v2986 = vpop.f32.mrf.mxu0
      %v2987 = vadd.f32 %v2898, %v2986
      %2988 = vmatmul.bf16.gmra.mxu0 %v2382
      %v2989 = vpop.f32.mrf.mxu0
      %v2990 = vadd.f32 %v2901, %v2989
      %v2991 = vpop.f32.mrf.mxu0
      %v2992 = vadd.f32 %v2903, %v2991
      %2993 = vmatmul.bf16.gmra.mxu0 %v2383
      %v2994 = vpop.f32.mrf.mxu0
      %v2995 = vadd.f32 %v2906, %v2994
      %v2996 = vpop.f32.mrf.mxu0
      %v2997 = vadd.f32 %v2908, %v2996
      %2998 = vmatmul.bf16.gmra.mxu0 %v2384
      %v2999 = vpop.f32.mrf.mxu0
      %v3000 = vadd.f32 %v2911, %v2999
      %v3001 = vpop.f32.mrf.mxu0
      %v3002 = vadd.f32 %v2913, %v3001
      %3003 = vmatmul.bf16.gmra.mxu0 %v2385
      %v3004 = vpop.f32.mrf.mxu0
      %v3005 = vadd.f32 %v2916, %v3004
      %v3006 = vpop.f32.mrf.mxu0
      %v3007 = vadd.f32 %v2918, %v3006
      %3008 = vmatmul.bf16.gmra.mxu0 %v2386
      %v3009 = vpop.f32.mrf.mxu0
      %v3010 = vadd.f32 %v2921, %v3009
      %v3011 = vpop.f32.mrf.mxu0
      %v3012 = vadd.f32 %v2923, %v3011
      %3013 = vmatmul.bf16.gmra.mxu0 %v2387
      %v3014 = vpop.f32.mrf.mxu0
      %v3015 = vadd.f32 %v2926, %v3014
      %v3016 = vpop.f32.mrf.mxu0
      %v3017 = vadd.f32 %v2928, %v3016
      %3018 = vmatmul.bf16.gmra.mxu0 %v2388
      %v3019 = vpop.f32.mrf.mxu0
      %v3020 = vadd.f32 %v2931, %v3019
      %v3021 = vpop.f32.mrf.mxu0
      %v3022 = vadd.f32 %v2933, %v3021
      %3023 = vmatmul.bf16.gmra.mxu0 %v2389
      %v3024 = vpop.f32.mrf.mxu0
      %v3025 = vadd.f32 %v2936, %v3024
      %v3026 = vpop.f32.mrf.mxu0
      %v3027 = vadd.f32 %v2938, %v3026
      %3028 = vdwg.mxu0
      %v3061 = vunpack.c.l.b16 %v2601
      %v3062 = vunpack.c.l.b16 %v2602
      %v3063 = vunpack.c.l.b16 %v2603
      %v3064 = vunpack.c.l.b16 %v2604
      %v3065 = vunpack.c.l.b16 %v2605
      %v3066 = vunpack.c.l.b16 %v2606
      %v3067 = vunpack.c.l.b16 %v2607
      %v3068 = vunpack.c.l.b16 %v2608
      %v3069 = vunpack.c.l.b16 %v2609
      %v3070 = vunpack.c.l.b16 %v2610
      %v3071 = vunpack.c.l.b16 %v2611
      %v3072 = vunpack.c.l.b16 %v2612
      %v3073 = vunpack.c.l.b16 %v2613
      %v3074 = vunpack.c.l.b16 %v2614
      %v3075 = vunpack.c.l.b16 %v2615
      %v3076 = vunpack.c.l.b16 %v2616
      %v3077 = vunpack.c.l.b16 %v2617
      %v3078 = vunpack.c.l.b16 %v2618
      %v3079 = vunpack.c.l.b16 %v2619
      %v3080 = vunpack.c.l.b16 %v2620
      %v3081 = vunpack.c.l.b16 %v2621
      %v3082 = vunpack.c.l.b16 %v2622
      %v3083 = vunpack.c.l.b16 %v2623
      %v3084 = vunpack.c.l.b16 %v2624
      %v3085 = vunpack.c.l.b16 %v2625
      %v3086 = vunpack.c.l.b16 %v2626
      %v3087 = vunpack.c.l.b16 %v2627
      %v3088 = vunpack.c.l.b16 %v2628
      %v3089 = vunpack.c.l.b16 %v2629
      %v3090 = vunpack.c.l.b16 %v2630
      %v3091 = vunpack.c.l.b16 %v2631
      %v3092 = vunpack.c.l.b16 %v2632
      %v3093 = vpack.c.b16 %v3062, %v3061
      %v3094 = vpack.c.b16 %v3064, %v3063
      %v3095 = vpack.c.b16 %v3066, %v3065
      %v3096 = vpack.c.b16 %v3068, %v3067
      %v3097 = vpack.c.b16 %v3070, %v3069
      %v3098 = vpack.c.b16 %v3072, %v3071
      %v3099 = vpack.c.b16 %v3074, %v3073
      %v3100 = vpack.c.b16 %v3076, %v3075
      %v3101 = vpack.c.b16 %v3078, %v3077
      %v3102 = vpack.c.b16 %v3080, %v3079
      %v3103 = vpack.c.b16 %v3082, %v3081
      %v3104 = vpack.c.b16 %v3084, %v3083
      %v3105 = vpack.c.b16 %v3086, %v3085
      %v3106 = vpack.c.b16 %v3088, %v3087
      %v3107 = vpack.c.b16 %v3090, %v3089
      %v3108 = vpack.c.b16 %v3092, %v3091
      %3125 = vmatpush.bf16.msra.mxu0 %v3100
      %3126 = vmatpush.bf16.msra.mxu0 %v3099
      %3127 = vmatpush.bf16.msra.mxu0 %v3098
      %3128 = vmatpush.bf16.msra.mxu0 %v3097
      %3129 = vmatpush.bf16.msra.mxu0 %v3096
      %3130 = vmatpush.bf16.msra.mxu0 %v3095
      %3131 = vmatpush.bf16.msra.mxu0 %v3094
      %3132 = vmatpush.bf16.msra.mxu0 %v3093
      %3133 = vmatmul.bf16.gmra.mxu0 %v2374
      %v3134 = vpop.f32.mrf.mxu0
      %v3135 = vadd.f32 %v2950, %v3134
      %v3136 = vpop.f32.mrf.mxu0
      %v3137 = vadd.f32 %v2952, %v3136
      %3138 = vmatmul.bf16.gmra.mxu0 %v2375
      %v3139 = vpop.f32.mrf.mxu0
      %v3140 = vadd.f32 %v2955, %v3139
      %v3141 = vpop.f32.mrf.mxu0
      %v3142 = vadd.f32 %v2957, %v3141
      %3143 = vmatmul.bf16.gmra.mxu0 %v2374
      %v3144 = vpop.f32.mrf.mxu0
      %v3145 = vadd.f32 %v2960, %v3144
      %v3146 = vpop.f32.mrf.mxu0
      %v3147 = vadd.f32 %v2962, %v3146
      %3148 = vmatmul.bf16.gmra.mxu0 %v2376
      %v3149 = vpop.f32.mrf.mxu0
      %v3150 = vadd.f32 %v2965, %v3149
      %v3151 = vpop.f32.mrf.mxu0
      %v3152 = vadd.f32 %v2967, %v3151
      %3153 = vmatmul.bf16.gmra.mxu0 %v2377
      %v3154 = vpop.f32.mrf.mxu0
      %v3155 = vadd.f32 %v2970, %v3154
      %v3156 = vpop.f32.mrf.mxu0
      %v3157 = vadd.f32 %v2972, %v3156
      %3158 = vmatmul.bf16.gmra.mxu0 %v2378
      %v3159 = vpop.f32.mrf.mxu0
      %v3160 = vadd.f32 %v2975, %v3159
      %v3161 = vpop.f32.mrf.mxu0
      %v3162 = vadd.f32 %v2977, %v3161
      %3163 = vmatmul.bf16.gmra.mxu0 %v2379
      %v3164 = vpop.f32.mrf.mxu0
      %v3165 = vadd.f32 %v2980, %v3164
      %v3166 = vpop.f32.mrf.mxu0
      %v3167 = vadd.f32 %v2982, %v3166
      %3168 = vmatmul.bf16.gmra.mxu0 %v2380
      %v3169 = vpop.f32.mrf.mxu0
      %v3170 = vadd.f32 %v2985, %v3169
      %v3171 = vpop.f32.mrf.mxu0
      %v3172 = vadd.f32 %v2987, %v3171
      %3173 = vmatmul.bf16.gmra.mxu0 %v2381
      %v3174 = vpop.f32.mrf.mxu0
      %v3175 = vadd.f32 %v2990, %v3174
      %v3176 = vpop.f32.mrf.mxu0
      %v3177 = vadd.f32 %v2992, %v3176
      %3178 = vmatmul.bf16.gmra.mxu0 %v2382
      %v3179 = vpop.f32.mrf.mxu0
      %v3180 = vadd.f32 %v2995, %v3179
      %v3181 = vpop.f32.mrf.mxu0
      %v3182 = vadd.f32 %v2997, %v3181
      %3183 = vmatmul.bf16.gmra.mxu0 %v2383
      %v3184 = vpop.f32.mrf.mxu0
      %v3185 = vadd.f32 %v3000, %v3184
      %v3186 = vpop.f32.mrf.mxu0
      %v3187 = vadd.f32 %v3002, %v3186
      %3188 = vmatmul.bf16.gmra.mxu0 %v2384
      %v3189 = vpop.f32.mrf.mxu0
      %v3190 = vadd.f32 %v3005, %v3189
      %v3191 = vpop.f32.mrf.mxu0
      %v3192 = vadd.f32 %v3007, %v3191
      %3193 = vmatmul.bf16.gmra.mxu0 %v2385
      %v3194 = vpop.f32.mrf.mxu0
      %v3195 = vadd.f32 %v3010, %v3194
      %v3196 = vpop.f32.mrf.mxu0
      %v3197 = vadd.f32 %v3012, %v3196
      %3198 = vmatmul.bf16.gmra.mxu0 %v2386
      %v3199 = vpop.f32.mrf.mxu0
      %v3200 = vadd.f32 %v3015, %v3199
      %v3201 = vpop.f32.mrf.mxu0
      %v3202 = vadd.f32 %v3017, %v3201
      %3203 = vmatmul.bf16.gmra.mxu0 %v2387
      %v3204 = vpop.f32.mrf.mxu0
      %v3205 = vadd.f32 %v3020, %v3204
      %v3206 = vpop.f32.mrf.mxu0
      %v3207 = vadd.f32 %v3022, %v3206
      %3208 = vmatmul.bf16.gmra.mxu0 %v2388
      %v3209 = vpop.f32.mrf.mxu0
      %v3210 = vadd.f32 %v3025, %v3209
      %v3211 = vpop.f32.mrf.mxu0
      %v3212 = vadd.f32 %v3027, %v3211
      %3213 = vdwg.mxu0
      %3214 = vmatpush.bf16.msra.mxu0 %v3108
      %3215 = vmatpush.bf16.msra.mxu0 %v3107
      %3216 = vmatpush.bf16.msra.mxu0 %v3106
      %3217 = vmatpush.bf16.msra.mxu0 %v3105
      %3218 = vmatpush.bf16.msra.mxu0 %v3104
      %3219 = vmatpush.bf16.msra.mxu0 %v3103
      %3220 = vmatpush.bf16.msra.mxu0 %v3102
      %3221 = vmatpush.bf16.msra.mxu0 %v3101
      %3222 = vmatmul.bf16.gmra.mxu0 %v2417
      %v3223 = vpop.f32.mrf.mxu0
      %v3224 = vadd.f32 %v3135, %v3223
      %v3225 = vpop.f32.mrf.mxu0
      %v3226 = vadd.f32 %v3137, %v3225
      %3227 = vmatmul.bf16.gmra.mxu0 %v2429
      %v3228 = vpop.f32.mrf.mxu0
      %v3229 = vadd.f32 %v3140, %v3228
      %v3230 = vpop.f32.mrf.mxu0
      %v3231 = vadd.f32 %v3142, %v3230
      %3232 = vmatmul.bf16.gmra.mxu0 %v2417
      %v3233 = vpop.f32.mrf.mxu0
      %v3234 = vadd.f32 %v3145, %v3233
      %v3235 = vpop.f32.mrf.mxu0
      %v3236 = vadd.f32 %v3147, %v3235
      %3237 = vmatmul.bf16.gmra.mxu0 %v2441
      %v3238 = vpop.f32.mrf.mxu0
      %v3239 = vadd.f32 %v3150, %v3238
      %v3240 = vpop.f32.mrf.mxu0
      %v3241 = vadd.f32 %v3152, %v3240
      %3242 = vmatmul.bf16.gmra.mxu0 %v2453
      %v3243 = vpop.f32.mrf.mxu0
      %v3244 = vadd.f32 %v3155, %v3243
      %v3245 = vpop.f32.mrf.mxu0
      %v3246 = vadd.f32 %v3157, %v3245
      %3247 = vmatmul.bf16.gmra.mxu0 %v2465
      %v3248 = vpop.f32.mrf.mxu0
      %v3249 = vadd.f32 %v3160, %v3248
      %v3250 = vpop.f32.mrf.mxu0
      %v3251 = vadd.f32 %v3162, %v3250
      %3252 = vmatmul.bf16.gmra.mxu0 %v2477
      %v3253 = vpop.f32.mrf.mxu0
      %v3254 = vadd.f32 %v3165, %v3253
      %v3255 = vpop.f32.mrf.mxu0
      %v3256 = vadd.f32 %v3167, %v3255
      %3257 = vmatmul.bf16.gmra.mxu0 %v2489
      %v3258 = vpop.f32.mrf.mxu0
      %v3259 = vadd.f32 %v3170, %v3258
      %v3260 = vpop.f32.mrf.mxu0
      %v3261 = vadd.f32 %v3172, %v3260
      %3262 = vmatmul.bf16.gmra.mxu0 %v2501
      %v3263 = vpop.f32.mrf.mxu0
      %v3264 = vadd.f32 %v3175, %v3263
      %v3265 = vpop.f32.mrf.mxu0
      %v3266 = vadd.f32 %v3177, %v3265
      %3267 = vmatmul.bf16.gmra.mxu0 %v2513
      %v3268 = vpop.f32.mrf.mxu0
      %v3269 = vadd.f32 %v3180, %v3268
      %v3270 = vpop.f32.mrf.mxu0
      %v3271 = vadd.f32 %v3182, %v3270
      %3272 = vmatmul.bf16.gmra.mxu0 %v2525
      %v3273 = vpop.f32.mrf.mxu0
      %v3274 = vadd.f32 %v3185, %v3273
      %v3275 = vpop.f32.mrf.mxu0
      %v3276 = vadd.f32 %v3187, %v3275
      %3277 = vmatmul.bf16.gmra.mxu0 %v2537
      %v3278 = vpop.f32.mrf.mxu0
      %v3279 = vadd.f32 %v3190, %v3278
      %v3280 = vpop.f32.mrf.mxu0
      %v3281 = vadd.f32 %v3192, %v3280
      %3282 = vmatmul.bf16.gmra.mxu0 %v2549
      %v3283 = vpop.f32.mrf.mxu0
      %v3284 = vadd.f32 %v3195, %v3283
      %v3285 = vpop.f32.mrf.mxu0
      %v3286 = vadd.f32 %v3197, %v3285
      %3287 = vmatmul.bf16.gmra.mxu0 %v2561
      %v3288 = vpop.f32.mrf.mxu0
      %v3289 = vadd.f32 %v3200, %v3288
      %v3290 = vpop.f32.mrf.mxu0
      %v3291 = vadd.f32 %v3202, %v3290
      %3292 = vmatmul.bf16.gmra.mxu0 %v2573
      %v3293 = vpop.f32.mrf.mxu0
      %v3294 = vadd.f32 %v3205, %v3293
      %v3295 = vpop.f32.mrf.mxu0
      %v3296 = vadd.f32 %v3207, %v3295
      %3297 = vmatmul.bf16.gmra.mxu0 %v2585
      %v3298 = vpop.f32.mrf.mxu0
      %v3299 = vadd.f32 %v3210, %v3298
      %v3300 = vpop.f32.mrf.mxu0
      %v3301 = vadd.f32 %v3212, %v3300
      %3302 = vdwg.mxu0
      %v3304 = vshrl.u32 %v2389, 16
      %v3306 = vshll.u32 %v2389, 16
      %v3308 = vrot.slane %v3306, 1
      %v3309 = vor.u32 %v3304, %v3308
      %v3311 = vshll.u32 %v2405, 16
      %v3313 = vrot.slane %v3311, 1
      %v3314 = vsel %vm698, %v3309, %v3313
      %v3318 = vrot.slane %v2389, 1
      %v3319 = vrot.slane %v2405, 1
      %v3320 = vsel %vm939, %v3318, %v3319
      %v3322 = vld [vmem:[%s2 + $0x100] sm:$0xf]
      %v3323 = vld [vmem:[%s2 + $0x104] sm:$0xf]
      %v3324 = vld [vmem:[%s2 + $0x108] sm:$0xf]
      %v3325 = vld [vmem:[%s2 + $0x10c] sm:$0xf]
      %v3326 = vld [vmem:[%s2 + $0x110] sm:$0xf]
      %v3327 = vld [vmem:[%s2 + $0x114] sm:$0xf]
      %v3328 = vld [vmem:[%s2 + $0x118] sm:$0xf]
      %v3329 = vld [vmem:[%s2 + $0x11c] sm:$0xf]
      %v3330 = vld [vmem:[%s2 + $0x120] sm:$0xf]
      %v3331 = vld [vmem:[%s2 + $0x124] sm:$0xf]
      %v3332 = vld [vmem:[%s2 + $0x128] sm:$0xf]
      %v3333 = vld [vmem:[%s2 + $0x12c] sm:$0xf]
      %v3334 = vld [vmem:[%s2 + $0x130] sm:$0xf]
      %v3335 = vld [vmem:[%s2 + $0x134] sm:$0xf]
      %v3336 = vld [vmem:[%s2 + $0x138] sm:$0xf]
      %v3337 = vld [vmem:[%s2 + $0x13c] sm:$0xf]
      %v3338 = vld [vmem:[%s2 + $0x140] sm:$0xf]
      %v3339 = vld [vmem:[%s2 + $0x144] sm:$0xf]
      %v3340 = vld [vmem:[%s2 + $0x148] sm:$0xf]
      %v3341 = vld [vmem:[%s2 + $0x14c] sm:$0xf]
      %v3342 = vld [vmem:[%s2 + $0x150] sm:$0xf]
      %v3343 = vld [vmem:[%s2 + $0x154] sm:$0xf]
      %v3344 = vld [vmem:[%s2 + $0x158] sm:$0xf]
      %v3345 = vld [vmem:[%s2 + $0x15c] sm:$0xf]
      %v3346 = vld [vmem:[%s2 + $0x160] sm:$0xf]
      %v3347 = vld [vmem:[%s2 + $0x164] sm:$0xf]
      %v3348 = vld [vmem:[%s2 + $0x168] sm:$0xf]
      %v3349 = vld [vmem:[%s2 + $0x16c] sm:$0xf]
      %v3350 = vld [vmem:[%s2 + $0x170] sm:$0xf]
      %v3351 = vld [vmem:[%s2 + $0x174] sm:$0xf]
      %v3352 = vld [vmem:[%s2 + $0x178] sm:$0xf]
      %v3353 = vld [vmem:[%s2 + $0x17c] sm:$0xf]
      %v3386 = vunpack.c.l.b16 %v3322
      %v3387 = vunpack.c.l.b16 %v3323
      %v3388 = vunpack.c.l.b16 %v3324
      %v3389 = vunpack.c.l.b16 %v3325
      %v3390 = vunpack.c.l.b16 %v3326
      %v3391 = vunpack.c.l.b16 %v3327
      %v3392 = vunpack.c.l.b16 %v3328
      %v3393 = vunpack.c.l.b16 %v3329
      %v3394 = vunpack.c.l.b16 %v3330
      %v3395 = vunpack.c.l.b16 %v3331
      %v3396 = vunpack.c.l.b16 %v3332
      %v3397 = vunpack.c.l.b16 %v3333
      %v3398 = vunpack.c.l.b16 %v3334
      %v3399 = vunpack.c.l.b16 %v3335
      %v3400 = vunpack.c.l.b16 %v3336
      %v3401 = vunpack.c.l.b16 %v3337
      %v3402 = vunpack.c.l.b16 %v3338
      %v3403 = vunpack.c.l.b16 %v3339
      %v3404 = vunpack.c.l.b16 %v3340
      %v3405 = vunpack.c.l.b16 %v3341
      %v3406 = vunpack.c.l.b16 %v3342
      %v3407 = vunpack.c.l.b16 %v3343
      %v3408 = vunpack.c.l.b16 %v3344
      %v3409 = vunpack.c.l.b16 %v3345
      %v3410 = vunpack.c.l.b16 %v3346
      %v3411 = vunpack.c.l.b16 %v3347
      %v3412 = vunpack.c.l.b16 %v3348
      %v3413 = vunpack.c.l.b16 %v3349
      %v3414 = vunpack.c.l.b16 %v3350
      %v3415 = vunpack.c.l.b16 %v3351
      %v3416 = vunpack.c.l.b16 %v3352
      %v3417 = vunpack.c.l.b16 %v3353
      %v3418 = vpack.c.b16 %v3387, %v3386
      %v3419 = vpack.c.b16 %v3389, %v3388
      %v3420 = vpack.c.b16 %v3391, %v3390
      %v3421 = vpack.c.b16 %v3393, %v3392
      %v3422 = vpack.c.b16 %v3395, %v3394
      %v3423 = vpack.c.b16 %v3397, %v3396
      %v3424 = vpack.c.b16 %v3399, %v3398
      %v3425 = vpack.c.b16 %v3401, %v3400
      %v3426 = vpack.c.b16 %v3403, %v3402
      %v3427 = vpack.c.b16 %v3405, %v3404
      %v3428 = vpack.c.b16 %v3407, %v3406
      %v3429 = vpack.c.b16 %v3409, %v3408
      %v3430 = vpack.c.b16 %v3411, %v3410
      %v3431 = vpack.c.b16 %v3413, %v3412
      %v3432 = vpack.c.b16 %v3415, %v3414
      %v3433 = vpack.c.b16 %v3417, %v3416
      %3450 = vmatpush.bf16.msra.mxu0 %v3425
      %3451 = vmatpush.bf16.msra.mxu0 %v3424
      %3452 = vmatpush.bf16.msra.mxu0 %v3423
      %3453 = vmatpush.bf16.msra.mxu0 %v3422
      %3454 = vmatpush.bf16.msra.mxu0 %v3421
      %3455 = vmatpush.bf16.msra.mxu0 %v3420
      %3456 = vmatpush.bf16.msra.mxu0 %v3419
      %3457 = vmatpush.bf16.msra.mxu0 %v3418
      %3458 = vmatmul.bf16.gmra.mxu0 %v2429
      %v3459 = vpop.f32.mrf.mxu0
      %v3460 = vadd.f32 0.0, %v3459
      %v3461 = vpop.f32.mrf.mxu0
      %v3462 = vadd.f32 0.0, %v3461
      %3463 = vmatmul.bf16.gmra.mxu0 %v2417
      %v3464 = vpop.f32.mrf.mxu0
      %v3465 = vadd.f32 0.0, %v3464
      %v3466 = vpop.f32.mrf.mxu0
      %v3467 = vadd.f32 0.0, %v3466
      %3468 = vmatmul.bf16.gmra.mxu0 %v2441
      %v3469 = vpop.f32.mrf.mxu0
      %v3470 = vadd.f32 0.0, %v3469
      %v3471 = vpop.f32.mrf.mxu0
      %v3472 = vadd.f32 0.0, %v3471
      %3473 = vmatmul.bf16.gmra.mxu0 %v2453
      %v3474 = vpop.f32.mrf.mxu0
      %v3475 = vadd.f32 0.0, %v3474
      %v3476 = vpop.f32.mrf.mxu0
      %v3477 = vadd.f32 0.0, %v3476
      %3478 = vmatmul.bf16.gmra.mxu0 %v2465
      %v3479 = vpop.f32.mrf.mxu0
      %v3480 = vadd.f32 0.0, %v3479
      %v3481 = vpop.f32.mrf.mxu0
      %v3482 = vadd.f32 0.0, %v3481
      %3483 = vmatmul.bf16.gmra.mxu0 %v2477
      %v3484 = vpop.f32.mrf.mxu0
      %v3485 = vadd.f32 0.0, %v3484
      %v3486 = vpop.f32.mrf.mxu0
      %v3487 = vadd.f32 0.0, %v3486
      %3488 = vmatmul.bf16.gmra.mxu0 %v2489
      %v3489 = vpop.f32.mrf.mxu0
      %v3490 = vadd.f32 0.0, %v3489
      %v3491 = vpop.f32.mrf.mxu0
      %v3492 = vadd.f32 0.0, %v3491
      %3493 = vmatmul.bf16.gmra.mxu0 %v2501
      %v3494 = vpop.f32.mrf.mxu0
      %v3495 = vadd.f32 0.0, %v3494
      %v3496 = vpop.f32.mrf.mxu0
      %v3497 = vadd.f32 0.0, %v3496
      %3498 = vmatmul.bf16.gmra.mxu0 %v2513
      %v3499 = vpop.f32.mrf.mxu0
      %v3500 = vadd.f32 0.0, %v3499
      %v3501 = vpop.f32.mrf.mxu0
      %v3502 = vadd.f32 0.0, %v3501
      %3503 = vmatmul.bf16.gmra.mxu0 %v2525
      %v3504 = vpop.f32.mrf.mxu0
      %v3505 = vadd.f32 0.0, %v3504
      %v3506 = vpop.f32.mrf.mxu0
      %v3507 = vadd.f32 0.0, %v3506
      %3508 = vmatmul.bf16.gmra.mxu0 %v2537
      %v3509 = vpop.f32.mrf.mxu0
      %v3510 = vadd.f32 0.0, %v3509
      %v3511 = vpop.f32.mrf.mxu0
      %v3512 = vadd.f32 0.0, %v3511
      %3513 = vmatmul.bf16.gmra.mxu0 %v2549
      %v3514 = vpop.f32.mrf.mxu0
      %v3515 = vadd.f32 0.0, %v3514
      %v3516 = vpop.f32.mrf.mxu0
      %v3517 = vadd.f32 0.0, %v3516
      %3518 = vmatmul.bf16.gmra.mxu0 %v2561
      %v3519 = vpop.f32.mrf.mxu0
      %v3520 = vadd.f32 0.0, %v3519
      %v3521 = vpop.f32.mrf.mxu0
      %v3522 = vadd.f32 0.0, %v3521
      %3523 = vmatmul.bf16.gmra.mxu0 %v2573
      %v3524 = vpop.f32.mrf.mxu0
      %v3525 = vadd.f32 0.0, %v3524
      %v3526 = vpop.f32.mrf.mxu0
      %v3527 = vadd.f32 0.0, %v3526
      %3528 = vmatmul.bf16.gmra.mxu0 %v2585
      %v3529 = vpop.f32.mrf.mxu0
      %v3530 = vadd.f32 0.0, %v3529
      %v3531 = vpop.f32.mrf.mxu0
      %v3532 = vadd.f32 0.0, %v3531
      %3533 = vmatmul.bf16.gmra.mxu0 %v3314
      %v3534 = vpop.f32.mrf.mxu0
      %v3535 = vadd.f32 0.0, %v3534
      %v3536 = vpop.f32.mrf.mxu0
      %v3537 = vadd.f32 0.0, %v3536
      %3538 = vdwg.mxu0
      %3539 = vmatpush.bf16.msra.mxu0 %v3433
      %3540 = vmatpush.bf16.msra.mxu0 %v3432
      %3541 = vmatpush.bf16.msra.mxu0 %v3431
      %3542 = vmatpush.bf16.msra.mxu0 %v3430
      %3543 = vmatpush.bf16.msra.mxu0 %v3429
      %3544 = vmatpush.bf16.msra.mxu0 %v3428
      %3545 = vmatpush.bf16.msra.mxu0 %v3427
      %3546 = vmatpush.bf16.msra.mxu0 %v3426
      %3547 = vmatmul.bf16.gmra.mxu0 %v2668
      %v3548 = vpop.f32.mrf.mxu0
      %v3549 = vadd.f32 %v3460, %v3548
      %v3550 = vpop.f32.mrf.mxu0
      %v3551 = vadd.f32 %v3462, %v3550
      %3552 = vmatmul.bf16.gmra.mxu0 %v2665
      %v3553 = vpop.f32.mrf.mxu0
      %v3554 = vadd.f32 %v3465, %v3553
      %v3555 = vpop.f32.mrf.mxu0
      %v3556 = vadd.f32 %v3467, %v3555
      %3557 = vmatmul.bf16.gmra.mxu0 %v2671
      %v3558 = vpop.f32.mrf.mxu0
      %v3559 = vadd.f32 %v3470, %v3558
      %v3560 = vpop.f32.mrf.mxu0
      %v3561 = vadd.f32 %v3472, %v3560
      %3562 = vmatmul.bf16.gmra.mxu0 %v2674
      %v3563 = vpop.f32.mrf.mxu0
      %v3564 = vadd.f32 %v3475, %v3563
      %v3565 = vpop.f32.mrf.mxu0
      %v3566 = vadd.f32 %v3477, %v3565
      %3567 = vmatmul.bf16.gmra.mxu0 %v2677
      %v3568 = vpop.f32.mrf.mxu0
      %v3569 = vadd.f32 %v3480, %v3568
      %v3570 = vpop.f32.mrf.mxu0
      %v3571 = vadd.f32 %v3482, %v3570
      %3572 = vmatmul.bf16.gmra.mxu0 %v2680
      %v3573 = vpop.f32.mrf.mxu0
      %v3574 = vadd.f32 %v3485, %v3573
      %v3575 = vpop.f32.mrf.mxu0
      %v3576 = vadd.f32 %v3487, %v3575
      %3577 = vmatmul.bf16.gmra.mxu0 %v2683
      %v3578 = vpop.f32.mrf.mxu0
      %v3579 = vadd.f32 %v3490, %v3578
      %v3580 = vpop.f32.mrf.mxu0
      %v3581 = vadd.f32 %v3492, %v3580
      %3582 = vmatmul.bf16.gmra.mxu0 %v2686
      %v3583 = vpop.f32.mrf.mxu0
      %v3584 = vadd.f32 %v3495, %v3583
      %v3585 = vpop.f32.mrf.mxu0
      %v3586 = vadd.f32 %v3497, %v3585
      %3587 = vmatmul.bf16.gmra.mxu0 %v2689
      %v3588 = vpop.f32.mrf.mxu0
      %v3589 = vadd.f32 %v3500, %v3588
      %v3590 = vpop.f32.mrf.mxu0
      %v3591 = vadd.f32 %v3502, %v3590
      %3592 = vmatmul.bf16.gmra.mxu0 %v2692
      %v3593 = vpop.f32.mrf.mxu0
      %v3594 = vadd.f32 %v3505, %v3593
      %v3595 = vpop.f32.mrf.mxu0
      %v3596 = vadd.f32 %v3507, %v3595
      %3597 = vmatmul.bf16.gmra.mxu0 %v2695
      %v3598 = vpop.f32.mrf.mxu0
      %v3599 = vadd.f32 %v3510, %v3598
      %v3600 = vpop.f32.mrf.mxu0
      %v3601 = vadd.f32 %v3512, %v3600
      %3602 = vmatmul.bf16.gmra.mxu0 %v2698
      %v3603 = vpop.f32.mrf.mxu0
      %v3604 = vadd.f32 %v3515, %v3603
      %v3605 = vpop.f32.mrf.mxu0
      %v3606 = vadd.f32 %v3517, %v3605
      %3607 = vmatmul.bf16.gmra.mxu0 %v2701
      %v3608 = vpop.f32.mrf.mxu0
      %v3609 = vadd.f32 %v3520, %v3608
      %v3610 = vpop.f32.mrf.mxu0
      %v3611 = vadd.f32 %v3522, %v3610
      %3612 = vmatmul.bf16.gmra.mxu0 %v2704
      %v3613 = vpop.f32.mrf.mxu0
      %v3614 = vadd.f32 %v3525, %v3613
      %v3615 = vpop.f32.mrf.mxu0
      %v3616 = vadd.f32 %v3527, %v3615
      %3617 = vmatmul.bf16.gmra.mxu0 %v2707
      %v3618 = vpop.f32.mrf.mxu0
      %v3619 = vadd.f32 %v3530, %v3618
      %v3620 = vpop.f32.mrf.mxu0
      %v3621 = vadd.f32 %v3532, %v3620
      %3622 = vmatmul.bf16.gmra.mxu0 %v3320
      %v3623 = vpop.f32.mrf.mxu0
      %v3624 = vadd.f32 %v3535, %v3623
      %v3625 = vpop.f32.mrf.mxu0
      %v3626 = vadd.f32 %v3537, %v3625
      %3627 = vdwg.mxu0
      %v3628 = vadd.f32 %v3224, %v3549
      %v3629 = vadd.f32 %v3226, %v3551
      %v3630 = vadd.f32 %v3229, %v3554
      %v3631 = vadd.f32 %v3231, %v3556
      %v3632 = vadd.f32 %v3234, %v3559
      %v3633 = vadd.f32 %v3236, %v3561
      %v3634 = vadd.f32 %v3239, %v3564
      %v3635 = vadd.f32 %v3241, %v3566
      %v3636 = vadd.f32 %v3244, %v3569
      %v3637 = vadd.f32 %v3246, %v3571
      %v3638 = vadd.f32 %v3249, %v3574
      %v3639 = vadd.f32 %v3251, %v3576
      %v3640 = vadd.f32 %v3254, %v3579
      %v3641 = vadd.f32 %v3256, %v3581
      %v3642 = vadd.f32 %v3259, %v3584
      %v3643 = vadd.f32 %v3261, %v3586
      %v3644 = vadd.f32 %v3264, %v3589
      %v3645 = vadd.f32 %v3266, %v3591
      %v3646 = vadd.f32 %v3269, %v3594
      %v3647 = vadd.f32 %v3271, %v3596
      %v3648 = vadd.f32 %v3274, %v3599
      %v3649 = vadd.f32 %v3276, %v3601
      %v3650 = vadd.f32 %v3279, %v3604
      %v3651 = vadd.f32 %v3281, %v3606
      %v3652 = vadd.f32 %v3284, %v3609
      %v3653 = vadd.f32 %v3286, %v3611
      %v3654 = vadd.f32 %v3289, %v3614
      %v3655 = vadd.f32 %v3291, %v3616
      %v3656 = vadd.f32 %v3294, %v3619
      %v3657 = vadd.f32 %v3296, %v3621
      %v3658 = vadd.f32 %v3299, %v3624
      %v3659 = vadd.f32 %v3301, %v3626
      %v3660 = vld [vmem:[%s2 + $0x180] sm:$0xf]
      %v3661 = vld [vmem:[%s2 + $0x184] sm:$0xf]
      %v3662 = vld [vmem:[%s2 + $0x188] sm:$0xf]
      %v3663 = vld [vmem:[%s2 + $0x18c] sm:$0xf]
      %v3664 = vld [vmem:[%s2 + $0x190] sm:$0xf]
      %v3665 = vld [vmem:[%s2 + $0x194] sm:$0xf]
      %v3666 = vld [vmem:[%s2 + $0x198] sm:$0xf]
      %v3667 = vld [vmem:[%s2 + $0x19c] sm:$0xf]
      %v3668 = vld [vmem:[%s2 + $0x1a0] sm:$0xf]
      %v3669 = vld [vmem:[%s2 + $0x1a4] sm:$0xf]
      %v3670 = vld [vmem:[%s2 + $0x1a8] sm:$0xf]
      %v3671 = vld [vmem:[%s2 + $0x1ac] sm:$0xf]
      %v3672 = vld [vmem:[%s2 + $0x1b0] sm:$0xf]
      %v3673 = vld [vmem:[%s2 + $0x1b4] sm:$0xf]
      %v3674 = vld [vmem:[%s2 + $0x1b8] sm:$0xf]
      %v3675 = vld [vmem:[%s2 + $0x1bc] sm:$0xf]
      %v3676 = vld [vmem:[%s2 + $0x1c0] sm:$0xf]
      %v3677 = vld [vmem:[%s2 + $0x1c4] sm:$0xf]
      %v3678 = vld [vmem:[%s2 + $0x1c8] sm:$0xf]
      %v3679 = vld [vmem:[%s2 + $0x1cc] sm:$0xf]
      %v3680 = vld [vmem:[%s2 + $0x1d0] sm:$0xf]
      %v3681 = vld [vmem:[%s2 + $0x1d4] sm:$0xf]
      %v3682 = vld [vmem:[%s2 + $0x1d8] sm:$0xf]
      %v3683 = vld [vmem:[%s2 + $0x1dc] sm:$0xf]
      %v3684 = vld [vmem:[%s2 + $0x1e0] sm:$0xf]
      %v3685 = vld [vmem:[%s2 + $0x1e4] sm:$0xf]
      %v3686 = vld [vmem:[%s2 + $0x1e8] sm:$0xf]
      %v3687 = vld [vmem:[%s2 + $0x1ec] sm:$0xf]
      %v3688 = vld [vmem:[%s2 + $0x1f0] sm:$0xf]
      %v3689 = vld [vmem:[%s2 + $0x1f4] sm:$0xf]
      %v3690 = vld [vmem:[%s2 + $0x1f8] sm:$0xf]
      %v3691 = vld [vmem:[%s2 + $0x1fc] sm:$0xf]
      %v3724 = vunpack.c.l.b16 %v3660
      %v3725 = vunpack.c.l.b16 %v3661
      %v3726 = vunpack.c.l.b16 %v3662
      %v3727 = vunpack.c.l.b16 %v3663
      %v3728 = vunpack.c.l.b16 %v3664
      %v3729 = vunpack.c.l.b16 %v3665
      %v3730 = vunpack.c.l.b16 %v3666
      %v3731 = vunpack.c.l.b16 %v3667
      %v3732 = vunpack.c.l.b16 %v3668
      %v3733 = vunpack.c.l.b16 %v3669
      %v3734 = vunpack.c.l.b16 %v3670
      %v3735 = vunpack.c.l.b16 %v3671
      %v3736 = vunpack.c.l.b16 %v3672
      %v3737 = vunpack.c.l.b16 %v3673
      %v3738 = vunpack.c.l.b16 %v3674
      %v3739 = vunpack.c.l.b16 %v3675
      %v3740 = vunpack.c.l.b16 %v3676
      %v3741 = vunpack.c.l.b16 %v3677
      %v3742 = vunpack.c.l.b16 %v3678
      %v3743 = vunpack.c.l.b16 %v3679
      %v3744 = vunpack.c.l.b16 %v3680
      %v3745 = vunpack.c.l.b16 %v3681
      %v3746 = vunpack.c.l.b16 %v3682
      %v3747 = vunpack.c.l.b16 %v3683
      %v3748 = vunpack.c.l.b16 %v3684
      %v3749 = vunpack.c.l.b16 %v3685
      %v3750 = vunpack.c.l.b16 %v3686
      %v3751 = vunpack.c.l.b16 %v3687
      %v3752 = vunpack.c.l.b16 %v3688
      %v3753 = vunpack.c.l.b16 %v3689
      %v3754 = vunpack.c.l.b16 %v3690
      %v3755 = vunpack.c.l.b16 %v3691
      %v3756 = vpack.c.b16 %v3725, %v3724
      %v3757 = vpack.c.b16 %v3727, %v3726
      %v3758 = vpack.c.b16 %v3729, %v3728
      %v3759 = vpack.c.b16 %v3731, %v3730
      %v3760 = vpack.c.b16 %v3733, %v3732
      %v3761 = vpack.c.b16 %v3735, %v3734
      %v3762 = vpack.c.b16 %v3737, %v3736
      %v3763 = vpack.c.b16 %v3739, %v3738
      %v3764 = vpack.c.b16 %v3741, %v3740
      %v3765 = vpack.c.b16 %v3743, %v3742
      %v3766 = vpack.c.b16 %v3745, %v3744
      %v3767 = vpack.c.b16 %v3747, %v3746
      %v3768 = vpack.c.b16 %v3749, %v3748
      %v3769 = vpack.c.b16 %v3751, %v3750
      %v3770 = vpack.c.b16 %v3753, %v3752
      %v3771 = vpack.c.b16 %v3755, %v3754
      %3788 = vmatpush.bf16.msra.mxu0 %v3763
      %3789 = vmatpush.bf16.msra.mxu0 %v3762
      %3790 = vmatpush.bf16.msra.mxu0 %v3761
      %3791 = vmatpush.bf16.msra.mxu0 %v3760
      %3792 = vmatpush.bf16.msra.mxu0 %v3759
      %3793 = vmatpush.bf16.msra.mxu0 %v3758
      %3794 = vmatpush.bf16.msra.mxu0 %v3757
      %3795 = vmatpush.bf16.msra.mxu0 %v3756
      %3796 = vmatmul.bf16.gmra.mxu0 %v2374
      %v3797 = vpop.f32.mrf.mxu0
      %v3798 = vadd.f32 0.0, %v3797
      %v3799 = vpop.f32.mrf.mxu0
      %v3800 = vadd.f32 0.0, %v3799
      %3801 = vmatmul.bf16.gmra.mxu0 %v2376
      %v3802 = vpop.f32.mrf.mxu0
      %v3803 = vadd.f32 0.0, %v3802
      %v3804 = vpop.f32.mrf.mxu0
      %v3805 = vadd.f32 0.0, %v3804
      %3806 = vmatmul.bf16.gmra.mxu0 %v2377
      %v3807 = vpop.f32.mrf.mxu0
      %v3808 = vadd.f32 0.0, %v3807
      %v3809 = vpop.f32.mrf.mxu0
      %v3810 = vadd.f32 0.0, %v3809
      %3811 = vmatmul.bf16.gmra.mxu0 %v2378
      %v3812 = vpop.f32.mrf.mxu0
      %v3813 = vadd.f32 0.0, %v3812
      %v3814 = vpop.f32.mrf.mxu0
      %v3815 = vadd.f32 0.0, %v3814
      %3816 = vmatmul.bf16.gmra.mxu0 %v2379
      %v3817 = vpop.f32.mrf.mxu0
      %v3818 = vadd.f32 0.0, %v3817
      %v3819 = vpop.f32.mrf.mxu0
      %v3820 = vadd.f32 0.0, %v3819
      %3821 = vmatmul.bf16.gmra.mxu0 %v2380
      %v3822 = vpop.f32.mrf.mxu0
      %v3823 = vadd.f32 0.0, %v3822
      %v3824 = vpop.f32.mrf.mxu0
      %v3825 = vadd.f32 0.0, %v3824
      %3826 = vmatmul.bf16.gmra.mxu0 %v2381
      %v3827 = vpop.f32.mrf.mxu0
      %v3828 = vadd.f32 0.0, %v3827
      %v3829 = vpop.f32.mrf.mxu0
      %v3830 = vadd.f32 0.0, %v3829
      %3831 = vmatmul.bf16.gmra.mxu0 %v2382
      %v3832 = vpop.f32.mrf.mxu0
      %v3833 = vadd.f32 0.0, %v3832
      %v3834 = vpop.f32.mrf.mxu0
      %v3835 = vadd.f32 0.0, %v3834
      %3836 = vmatmul.bf16.gmra.mxu0 %v2383
      %v3837 = vpop.f32.mrf.mxu0
      %v3838 = vadd.f32 0.0, %v3837
      %v3839 = vpop.f32.mrf.mxu0
      %v3840 = vadd.f32 0.0, %v3839
      %3841 = vmatmul.bf16.gmra.mxu0 %v2384
      %v3842 = vpop.f32.mrf.mxu0
      %v3843 = vadd.f32 0.0, %v3842
      %v3844 = vpop.f32.mrf.mxu0
      %v3845 = vadd.f32 0.0, %v3844
      %3846 = vmatmul.bf16.gmra.mxu0 %v2385
      %v3847 = vpop.f32.mrf.mxu0
      %v3848 = vadd.f32 0.0, %v3847
      %v3849 = vpop.f32.mrf.mxu0
      %v3850 = vadd.f32 0.0, %v3849
      %3851 = vmatmul.bf16.gmra.mxu0 %v2386
      %v3852 = vpop.f32.mrf.mxu0
      %v3853 = vadd.f32 0.0, %v3852
      %v3854 = vpop.f32.mrf.mxu0
      %v3855 = vadd.f32 0.0, %v3854
      %3856 = vmatmul.bf16.gmra.mxu0 %v2387
      %v3857 = vpop.f32.mrf.mxu0
      %v3858 = vadd.f32 0.0, %v3857
      %v3859 = vpop.f32.mrf.mxu0
      %v3860 = vadd.f32 0.0, %v3859
      %3861 = vmatmul.bf16.gmra.mxu0 %v2388
      %v3862 = vpop.f32.mrf.mxu0
      %v3863 = vadd.f32 0.0, %v3862
      %v3864 = vpop.f32.mrf.mxu0
      %v3865 = vadd.f32 0.0, %v3864
      %3866 = vmatmul.bf16.gmra.mxu0 %v2389
      %v3867 = vpop.f32.mrf.mxu0
      %v3868 = vadd.f32 0.0, %v3867
      %v3869 = vpop.f32.mrf.mxu0
      %v3870 = vadd.f32 0.0, %v3869
      %3871 = vmatmul.bf16.gmra.mxu0 %v2388
      %v3872 = vpop.f32.mrf.mxu0
      %v3873 = vadd.f32 0.0, %v3872
      %v3874 = vpop.f32.mrf.mxu0
      %v3875 = vadd.f32 0.0, %v3874
      %3876 = vdwg.mxu0
      %3877 = vmatpush.bf16.msra.mxu0 %v3771
      %3878 = vmatpush.bf16.msra.mxu0 %v3770
      %3879 = vmatpush.bf16.msra.mxu0 %v3769
      %3880 = vmatpush.bf16.msra.mxu0 %v3768
      %3881 = vmatpush.bf16.msra.mxu0 %v3767
      %3882 = vmatpush.bf16.msra.mxu0 %v3766
      %3883 = vmatpush.bf16.msra.mxu0 %v3765
      %3884 = vmatpush.bf16.msra.mxu0 %v3764
      %3885 = vmatmul.bf16.gmra.mxu0 %v2417
      %v3886 = vpop.f32.mrf.mxu0
      %v3887 = vadd.f32 %v3798, %v3886
      %v3888 = vpop.f32.mrf.mxu0
      %v3889 = vadd.f32 %v3800, %v3888
      %3890 = vmatmul.bf16.gmra.mxu0 %v2441
      %v3891 = vpop.f32.mrf.mxu0
      %v3892 = vadd.f32 %v3803, %v3891
      %v3893 = vpop.f32.mrf.mxu0
      %v3894 = vadd.f32 %v3805, %v3893
      %3895 = vmatmul.bf16.gmra.mxu0 %v2453
      %v3896 = vpop.f32.mrf.mxu0
      %v3897 = vadd.f32 %v3808, %v3896
      %v3898 = vpop.f32.mrf.mxu0
      %v3899 = vadd.f32 %v3810, %v3898
      %3900 = vmatmul.bf16.gmra.mxu0 %v2465
      %v3901 = vpop.f32.mrf.mxu0
      %v3902 = vadd.f32 %v3813, %v3901
      %v3903 = vpop.f32.mrf.mxu0
      %v3904 = vadd.f32 %v3815, %v3903
      %3905 = vmatmul.bf16.gmra.mxu0 %v2477
      %v3906 = vpop.f32.mrf.mxu0
      %v3907 = vadd.f32 %v3818, %v3906
      %v3908 = vpop.f32.mrf.mxu0
      %v3909 = vadd.f32 %v3820, %v3908
      %3910 = vmatmul.bf16.gmra.mxu0 %v2489
      %v3911 = vpop.f32.mrf.mxu0
      %v3912 = vadd.f32 %v3823, %v3911
      %v3913 = vpop.f32.mrf.mxu0
      %v3914 = vadd.f32 %v3825, %v3913
      %3915 = vmatmul.bf16.gmra.mxu0 %v2501
      %v3916 = vpop.f32.mrf.mxu0
      %v3917 = vadd.f32 %v3828, %v3916
      %v3918 = vpop.f32.mrf.mxu0
      %v3919 = vadd.f32 %v3830, %v3918
      %3920 = vmatmul.bf16.gmra.mxu0 %v2513
      %v3921 = vpop.f32.mrf.mxu0
      %v3922 = vadd.f32 %v3833, %v3921
      %v3923 = vpop.f32.mrf.mxu0
      %v3924 = vadd.f32 %v3835, %v3923
      %3925 = vmatmul.bf16.gmra.mxu0 %v2525
      %v3926 = vpop.f32.mrf.mxu0
      %v3927 = vadd.f32 %v3838, %v3926
      %v3928 = vpop.f32.mrf.mxu0
      %v3929 = vadd.f32 %v3840, %v3928
      %3930 = vmatmul.bf16.gmra.mxu0 %v2537
      %v3931 = vpop.f32.mrf.mxu0
      %v3932 = vadd.f32 %v3843, %v3931
      %v3933 = vpop.f32.mrf.mxu0
      %v3934 = vadd.f32 %v3845, %v3933
      %3935 = vmatmul.bf16.gmra.mxu0 %v2549
      %v3936 = vpop.f32.mrf.mxu0
      %v3937 = vadd.f32 %v3848, %v3936
      %v3938 = vpop.f32.mrf.mxu0
      %v3939 = vadd.f32 %v3850, %v3938
      %3940 = vmatmul.bf16.gmra.mxu0 %v2561
      %v3941 = vpop.f32.mrf.mxu0
      %v3942 = vadd.f32 %v3853, %v3941
      %v3943 = vpop.f32.mrf.mxu0
      %v3944 = vadd.f32 %v3855, %v3943
      %3945 = vmatmul.bf16.gmra.mxu0 %v2573
      %v3946 = vpop.f32.mrf.mxu0
      %v3947 = vadd.f32 %v3858, %v3946
      %v3948 = vpop.f32.mrf.mxu0
      %v3949 = vadd.f32 %v3860, %v3948
      %3950 = vmatmul.bf16.gmra.mxu0 %v2585
      %v3951 = vpop.f32.mrf.mxu0
      %v3952 = vadd.f32 %v3863, %v3951
      %v3953 = vpop.f32.mrf.mxu0
      %v3954 = vadd.f32 %v3865, %v3953
      %3955 = vmatmul.bf16.gmra.mxu0 %v3314
      %v3956 = vpop.f32.mrf.mxu0
      %v3957 = vadd.f32 %v3868, %v3956
      %v3958 = vpop.f32.mrf.mxu0
      %v3959 = vadd.f32 %v3870, %v3958
      %3960 = vmatmul.bf16.gmra.mxu0 %v2585
      %v3961 = vpop.f32.mrf.mxu0
      %v3962 = vadd.f32 %v3873, %v3961
      %v3963 = vpop.f32.mrf.mxu0
      %v3964 = vadd.f32 %v3875, %v3963
      %3965 = vdwg.mxu0
      %v3966 = vadd.f32 %v3628, %v3887
      %v3967 = vadd.f32 %v3629, %v3889
      %v3968 = vadd.f32 %v3630, %v3892
      %v3969 = vadd.f32 %v3631, %v3894
      %v3970 = vadd.f32 %v3632, %v3897
      %v3971 = vadd.f32 %v3633, %v3899
      %v3972 = vadd.f32 %v3634, %v3902
      %v3973 = vadd.f32 %v3635, %v3904
      %v3974 = vadd.f32 %v3636, %v3907
      %v3975 = vadd.f32 %v3637, %v3909
      %v3976 = vadd.f32 %v3638, %v3912
      %v3977 = vadd.f32 %v3639, %v3914
      %v3978 = vadd.f32 %v3640, %v3917
      %v3979 = vadd.f32 %v3641, %v3919
      %v3980 = vadd.f32 %v3642, %v3922
      %v3981 = vadd.f32 %v3643, %v3924
      %v3982 = vadd.f32 %v3644, %v3927
      %v3983 = vadd.f32 %v3645, %v3929
      %v3984 = vadd.f32 %v3646, %v3932
      %v3985 = vadd.f32 %v3647, %v3934
      %v3986 = vadd.f32 %v3648, %v3937
      %v3987 = vadd.f32 %v3649, %v3939
      %v3988 = vadd.f32 %v3650, %v3942
      %v3989 = vadd.f32 %v3651, %v3944
      %v3990 = vadd.f32 %v3652, %v3947
      %v3991 = vadd.f32 %v3653, %v3949
      %v3992 = vadd.f32 %v3654, %v3952
      %v3993 = vadd.f32 %v3655, %v3954
      %v3994 = vadd.f32 %v3656, %v3957
      %v3995 = vadd.f32 %v3657, %v3959
      %v3996 = vadd.f32 %v3658, %v3962
      %v3997 = vadd.f32 %v3659, %v3964
      %v3998 = vld [vmem:[%s2 + $0x200] sm:$0xf]
      %v3999 = vld [vmem:[%s2 + $0x204] sm:$0xf]
      %v4000 = vld [vmem:[%s2 + $0x208] sm:$0xf]
      %v4001 = vld [vmem:[%s2 + $0x20c] sm:$0xf]
      %v4002 = vld [vmem:[%s2 + $0x210] sm:$0xf]
      %v4003 = vld [vmem:[%s2 + $0x214] sm:$0xf]
      %v4004 = vld [vmem:[%s2 + $0x218] sm:$0xf]
      %v4005 = vld [vmem:[%s2 + $0x21c] sm:$0xf]
      %v4006 = vld [vmem:[%s2 + $0x220] sm:$0xf]
      %v4007 = vld [vmem:[%s2 + $0x224] sm:$0xf]
      %v4008 = vld [vmem:[%s2 + $0x228] sm:$0xf]
      %v4009 = vld [vmem:[%s2 + $0x22c] sm:$0xf]
      %v4010 = vld [vmem:[%s2 + $0x230] sm:$0xf]
      %v4011 = vld [vmem:[%s2 + $0x234] sm:$0xf]
      %v4012 = vld [vmem:[%s2 + $0x238] sm:$0xf]
      %v4013 = vld [vmem:[%s2 + $0x23c] sm:$0xf]
      %v4030 = vunpack.c.l.b16 %v3998
      %v4031 = vunpack.c.l.b16 %v3999
      %v4032 = vunpack.c.l.b16 %v4000
      %v4033 = vunpack.c.l.b16 %v4001
      %v4034 = vunpack.c.l.b16 %v4002
      %v4035 = vunpack.c.l.b16 %v4003
      %v4036 = vunpack.c.l.b16 %v4004
      %v4037 = vunpack.c.l.b16 %v4005
      %v4038 = vunpack.c.l.b16 %v4006
      %v4039 = vunpack.c.l.b16 %v4007
      %v4040 = vunpack.c.l.b16 %v4008
      %v4041 = vunpack.c.l.b16 %v4009
      %v4042 = vunpack.c.l.b16 %v4010
      %v4043 = vunpack.c.l.b16 %v4011
      %v4044 = vunpack.c.l.b16 %v4012
      %v4045 = vunpack.c.l.b16 %v4013
      %v4046 = vpack.c.b16 %v4031, %v4030
      %v4047 = vpack.c.b16 %v4033, %v4032
      %v4048 = vpack.c.b16 %v4035, %v4034
      %v4049 = vpack.c.b16 %v4037, %v4036
      %v4050 = vpack.c.b16 %v4039, %v4038
      %v4051 = vpack.c.b16 %v4041, %v4040
      %v4052 = vpack.c.b16 %v4043, %v4042
      %v4053 = vpack.c.b16 %v4045, %v4044
      %4062 = vmatpush.bf16.msra.mxu0 %v4053
      %4063 = vmatpush.bf16.msra.mxu0 %v4052
      %4064 = vmatpush.bf16.msra.mxu0 %v4051
      %4065 = vmatpush.bf16.msra.mxu0 %v4050
      %4066 = vmatpush.bf16.msra.mxu0 %v4049
      %4067 = vmatpush.bf16.msra.mxu0 %v4048
      %4068 = vmatpush.bf16.msra.mxu0 %v4047
      %4069 = vmatpush.bf16.msra.mxu0 %v4046
      %4070 = vmatmul.bf16.gmra.mxu0 %v2665
      %v4071 = vpop.f32.mrf.mxu0
      %v4072 = vadd.f32 0.0, %v4071
      %v4073 = vpop.f32.mrf.mxu0
      %v4074 = vadd.f32 0.0, %v4073
      %4075 = vmatmul.bf16.gmra.mxu0 %v2671
      %v4076 = vpop.f32.mrf.mxu0
      %v4077 = vadd.f32 0.0, %v4076
      %v4078 = vpop.f32.mrf.mxu0
      %v4079 = vadd.f32 0.0, %v4078
      %4080 = vmatmul.bf16.gmra.mxu0 %v2674
      %v4081 = vpop.f32.mrf.mxu0
      %v4082 = vadd.f32 0.0, %v4081
      %v4083 = vpop.f32.mrf.mxu0
      %v4084 = vadd.f32 0.0, %v4083
      %4085 = vmatmul.bf16.gmra.mxu0 %v2677
      %v4086 = vpop.f32.mrf.mxu0
      %v4087 = vadd.f32 0.0, %v4086
      %v4088 = vpop.f32.mrf.mxu0
      %v4089 = vadd.f32 0.0, %v4088
      %4090 = vmatmul.bf16.gmra.mxu0 %v2680
      %v4091 = vpop.f32.mrf.mxu0
      %v4092 = vadd.f32 0.0, %v4091
      %v4093 = vpop.f32.mrf.mxu0
      %v4094 = vadd.f32 0.0, %v4093
      %4095 = vmatmul.bf16.gmra.mxu0 %v2683
      %v4096 = vpop.f32.mrf.mxu0
      %v4097 = vadd.f32 0.0, %v4096
      %v4098 = vpop.f32.mrf.mxu0
      %v4099 = vadd.f32 0.0, %v4098
      %4100 = vmatmul.bf16.gmra.mxu0 %v2686
      %v4101 = vpop.f32.mrf.mxu0
      %v4102 = vadd.f32 0.0, %v4101
      %v4103 = vpop.f32.mrf.mxu0
      %v4104 = vadd.f32 0.0, %v4103
      %4105 = vmatmul.bf16.gmra.mxu0 %v2689
      %v4106 = vpop.f32.mrf.mxu0
      %v4107 = vadd.f32 0.0, %v4106
      %v4108 = vpop.f32.mrf.mxu0
      %v4109 = vadd.f32 0.0, %v4108
      %4110 = vmatmul.bf16.gmra.mxu0 %v2692
      %v4111 = vpop.f32.mrf.mxu0
      %v4112 = vadd.f32 0.0, %v4111
      %v4113 = vpop.f32.mrf.mxu0
      %v4114 = vadd.f32 0.0, %v4113
      %4115 = vmatmul.bf16.gmra.mxu0 %v2695
      %v4116 = vpop.f32.mrf.mxu0
      %v4117 = vadd.f32 0.0, %v4116
      %v4118 = vpop.f32.mrf.mxu0
      %v4119 = vadd.f32 0.0, %v4118
      %4120 = vmatmul.bf16.gmra.mxu0 %v2698
      %v4121 = vpop.f32.mrf.mxu0
      %v4122 = vadd.f32 0.0, %v4121
      %v4123 = vpop.f32.mrf.mxu0
      %v4124 = vadd.f32 0.0, %v4123
      %4125 = vmatmul.bf16.gmra.mxu0 %v2701
      %v4126 = vpop.f32.mrf.mxu0
      %v4127 = vadd.f32 0.0, %v4126
      %v4128 = vpop.f32.mrf.mxu0
      %v4129 = vadd.f32 0.0, %v4128
      %4130 = vmatmul.bf16.gmra.mxu0 %v2704
      %v4131 = vpop.f32.mrf.mxu0
      %v4132 = vadd.f32 0.0, %v4131
      %v4133 = vpop.f32.mrf.mxu0
      %v4134 = vadd.f32 0.0, %v4133
      %4135 = vmatmul.bf16.gmra.mxu0 %v2707
      %v4136 = vpop.f32.mrf.mxu0
      %v4137 = vadd.f32 0.0, %v4136
      %v4138 = vpop.f32.mrf.mxu0
      %v4139 = vadd.f32 0.0, %v4138
      %4140 = vmatmul.bf16.gmra.mxu0 %v3320
      %v4141 = vpop.f32.mrf.mxu0
      %v4142 = vadd.f32 0.0, %v4141
      %v4143 = vpop.f32.mrf.mxu0
      %v4144 = vadd.f32 0.0, %v4143
      %4145 = vmatmul.bf16.gmra.mxu0 %v2707
      %v4146 = vpop.f32.mrf.mxu0
      %v4147 = vadd.f32 0.0, %v4146
      %v4148 = vpop.f32.mrf.mxu0
      %v4149 = vadd.f32 0.0, %v4148
      %4150 = vdwg.mxu0
      %v4151 = vadd.f32 %v3966, %v4072
      %v4152 = vadd.f32 %v3967, %v4074
      %v4153 = vadd.f32 %v3968, %v4077
      %v4154 = vadd.f32 %v3969, %v4079
      %v4155 = vadd.f32 %v3970, %v4082
      %v4156 = vadd.f32 %v3971, %v4084
      %v4157 = vadd.f32 %v3972, %v4087
      %v4158 = vadd.f32 %v3973, %v4089
      %v4159 = vadd.f32 %v3974, %v4092
      %v4160 = vadd.f32 %v3975, %v4094
      %v4161 = vadd.f32 %v3976, %v4097
      %v4162 = vadd.f32 %v3977, %v4099
      %v4163 = vadd.f32 %v3978, %v4102
      %v4164 = vadd.f32 %v3979, %v4104
      %v4165 = vadd.f32 %v3980, %v4107
      %v4166 = vadd.f32 %v3981, %v4109
      %v4167 = vadd.f32 %v3982, %v4112
      %v4168 = vadd.f32 %v3983, %v4114
      %v4169 = vadd.f32 %v3984, %v4117
      %v4170 = vadd.f32 %v3985, %v4119
      %v4171 = vadd.f32 %v3986, %v4122
      %v4172 = vadd.f32 %v3987, %v4124
      %v4173 = vadd.f32 %v3988, %v4127
      %v4174 = vadd.f32 %v3989, %v4129
      %v4175 = vadd.f32 %v3990, %v4132
      %v4176 = vadd.f32 %v3991, %v4134
      %v4177 = vadd.f32 %v3992, %v4137
      %v4178 = vadd.f32 %v3993, %v4139
      %v4179 = vadd.f32 %v3994, %v4142
      %v4180 = vadd.f32 %v3995, %v4144
      %v4181 = vadd.f32 %v3996, %v4147
      %v4182 = vadd.f32 %v3997, %v4149
      %v4183 = vadd.f32 %v4151, %v4152
      %v4184 = vadd.f32 %v4183, %v4153
      %v4185 = vadd.f32 %v4184, %v4154
      %v4186 = vadd.f32 %v4185, %v4155
      %v4187 = vadd.f32 %v4186, %v4156
      %v4188 = vadd.f32 %v4187, %v4157
      %v4189 = vadd.f32 %v4188, %v4158
      %v4190 = vadd.f32 %v4189, %v4159
      %v4191 = vadd.f32 %v4190, %v4160
      %v4192 = vadd.f32 %v4191, %v4161
      %v4193 = vadd.f32 %v4192, %v4162
      %v4194 = vadd.f32 %v4193, %v4163
      %v4195 = vadd.f32 %v4194, %v4164
      %v4196 = vadd.f32 %v4195, %v4165
      %v4197 = vadd.f32 %v4196, %v4166
      %v4198 = vadd.f32 %v4197, %v4167
      %v4199 = vadd.f32 %v4198, %v4168
      %v4200 = vadd.f32 %v4199, %v4169
      %v4201 = vadd.f32 %v4200, %v4170
      %v4202 = vadd.f32 %v4201, %v4171
      %v4203 = vadd.f32 %v4202, %v4172
      %v4204 = vadd.f32 %v4203, %v4173
      %v4205 = vadd.f32 %v4204, %v4174
      %v4206 = vadd.f32 %v4205, %v4175
      %v4207 = vadd.f32 %v4206, %v4176
      %v4208 = vadd.f32 %v4207, %v4177
      %v4209 = vadd.f32 %v4208, %v4178
      %v4210 = vadd.f32 %v4209, %v4179
      %v4211 = vadd.f32 %v4210, %v4180
      %v4212 = vadd.f32 %v4211, %v4181
      %v4213 = vadd.f32 %v4212, %v4182
      %v4214 = vrot.slane %v4213, 4
      %v4215 = vadd.f32 %v4213, %v4214
      %v4216 = vrot.slane %v4215, 2
      %v4217 = vadd.f32 %v4215, %v4216
      %v4218 = vrot.slane %v4217, 1
      %v4219 = vadd.f32 %v4217, %v4218
      %v4220 = vmul.f32 %v4151, %v4151
      %v4221 = vmul.f32 %v4152, %v4152
      %v4222 = vmul.f32 %v4153, %v4153
      %v4223 = vmul.f32 %v4154, %v4154
      %v4224 = vmul.f32 %v4155, %v4155
      %v4225 = vmul.f32 %v4156, %v4156
      %v4226 = vmul.f32 %v4157, %v4157
      %v4227 = vmul.f32 %v4158, %v4158
      %v4228 = vmul.f32 %v4159, %v4159
      %v4229 = vmul.f32 %v4160, %v4160
      %v4230 = vmul.f32 %v4161, %v4161
      %v4231 = vmul.f32 %v4162, %v4162
      %v4232 = vmul.f32 %v4163, %v4163
      %v4233 = vmul.f32 %v4164, %v4164
      %v4234 = vmul.f32 %v4165, %v4165
      %v4235 = vmul.f32 %v4166, %v4166
      %v4236 = vmul.f32 %v4167, %v4167
      %v4237 = vmul.f32 %v4168, %v4168
      %v4238 = vmul.f32 %v4169, %v4169
      %v4239 = vmul.f32 %v4170, %v4170
      %v4240 = vmul.f32 %v4171, %v4171
      %v4241 = vmul.f32 %v4172, %v4172
      %v4242 = vmul.f32 %v4173, %v4173
      %v4243 = vmul.f32 %v4174, %v4174
      %v4244 = vmul.f32 %v4175, %v4175
      %v4245 = vmul.f32 %v4176, %v4176
      %v4246 = vmul.f32 %v4177, %v4177
      %v4247 = vmul.f32 %v4178, %v4178
      %v4248 = vmul.f32 %v4179, %v4179
      %v4249 = vmul.f32 %v4180, %v4180
      %v4250 = vmul.f32 %v4181, %v4181
      %v4251 = vmul.f32 %v4182, %v4182
      %v4252 = vadd.f32 %v4220, %v4221
      %v4253 = vadd.f32 %v4252, %v4222
      %v4254 = vadd.f32 %v4253, %v4223
      %v4255 = vadd.f32 %v4254, %v4224
      %v4256 = vadd.f32 %v4255, %v4225
      %v4257 = vadd.f32 %v4256, %v4226
      %v4258 = vadd.f32 %v4257, %v4227
      %v4259 = vadd.f32 %v4258, %v4228
      %v4260 = vadd.f32 %v4259, %v4229
      %v4261 = vadd.f32 %v4260, %v4230
      %v4262 = vadd.f32 %v4261, %v4231
      %v4263 = vadd.f32 %v4262, %v4232
      %v4264 = vadd.f32 %v4263, %v4233
      %v4265 = vadd.f32 %v4264, %v4234
      %v4266 = vadd.f32 %v4265, %v4235
      %v4267 = vadd.f32 %v4266, %v4236
      %v4268 = vadd.f32 %v4267, %v4237
      %v4269 = vadd.f32 %v4268, %v4238
      %v4270 = vadd.f32 %v4269, %v4239
      %v4271 = vadd.f32 %v4270, %v4240
      %v4272 = vadd.f32 %v4271, %v4241
      %v4273 = vadd.f32 %v4272, %v4242
      %v4274 = vadd.f32 %v4273, %v4243
      %v4275 = vadd.f32 %v4274, %v4244
      %v4276 = vadd.f32 %v4275, %v4245
      %v4277 = vadd.f32 %v4276, %v4246
      %v4278 = vadd.f32 %v4277, %v4247
      %v4279 = vadd.f32 %v4278, %v4248
      %v4280 = vadd.f32 %v4279, %v4249
      %v4281 = vadd.f32 %v4280, %v4250
      %v4282 = vadd.f32 %v4281, %v4251
      %v4283 = vrot.slane %v4282, 4
      %v4284 = vadd.f32 %v4282, %v4283
      %v4285 = vrot.slane %v4284, 2
      %v4286 = vadd.f32 %v4284, %v4285
      %v4287 = vrot.slane %v4286, 1
      %v4288 = vadd.f32 %v4286, %v4287
      %v4289 = vmul.f32 %v4219, 0.00390625
      %v4290 = vmul.f32 %v4288, 0.00390625
      %v4291 = vmul.f32 %v4289, %v4289
      %v4292 = vsub.f32 %v4290, %v4291
      %v4293 = vmax.f32 %v4292, 0.0
      %v4294 = vadd.f32 %v4293, 1e-05
      %v4295 = vrsqrt.pop %v4294
      %v4296 = vmul.f32 %v4295, %v4294
      %v4297 = vmul.f32 %v4296, %v4295
      %v4298 = vmul.f32 0.5, %v4297
      %v4299 = vsub.f32 1.5, %v4298
      %v4300 = vmul.f32 %v4295, %v4299
      %vm4301 = vweird.f32 %v4294
      %vm4302 = vweird.f32 %v4295
      %vm4303 = vmor %vm4301, %vm4302
      %v4304 = vsel %vm4303, %v4295, %v4300
      %v4305 = vmul.f32 %v4289, %v4304
      %v4306 = vmul.f32 %v4151, %v4304
      %v4307 = vmul.f32 %v4152, %v4304
      %v4308 = vmul.f32 %v4153, %v4304
      %v4309 = vmul.f32 %v4154, %v4304
      %v4310 = vmul.f32 %v4155, %v4304
      %v4311 = vmul.f32 %v4156, %v4304
      %v4312 = vmul.f32 %v4157, %v4304
      %v4313 = vmul.f32 %v4158, %v4304
      %v4314 = vmul.f32 %v4159, %v4304
      %v4315 = vmul.f32 %v4160, %v4304
      %v4316 = vmul.f32 %v4161, %v4304
      %v4317 = vmul.f32 %v4162, %v4304
      %v4318 = vmul.f32 %v4163, %v4304
      %v4319 = vmul.f32 %v4164, %v4304
      %v4320 = vmul.f32 %v4165, %v4304
      %v4321 = vmul.f32 %v4166, %v4304
      %v4322 = vmul.f32 %v4167, %v4304
      %v4323 = vmul.f32 %v4168, %v4304
      %v4324 = vmul.f32 %v4169, %v4304
      %v4325 = vmul.f32 %v4170, %v4304
      %v4326 = vmul.f32 %v4171, %v4304
      %v4327 = vmul.f32 %v4172, %v4304
      %v4328 = vmul.f32 %v4173, %v4304
      %v4329 = vmul.f32 %v4174, %v4304
      %v4330 = vmul.f32 %v4175, %v4304
      %v4331 = vmul.f32 %v4176, %v4304
      %v4332 = vmul.f32 %v4177, %v4304
      %v4333 = vmul.f32 %v4178, %v4304
      %v4334 = vmul.f32 %v4179, %v4304
      %v4335 = vmul.f32 %v4180, %v4304
      %v4336 = vmul.f32 %v4181, %v4304
      %v4337 = vmul.f32 %v4182, %v4304
      %v4338 = vsub.f32 %v4306, %v4305
      %v4339 = vsub.f32 %v4307, %v4305
      %v4340 = vsub.f32 %v4308, %v4305
      %v4341 = vsub.f32 %v4309, %v4305
      %v4342 = vsub.f32 %v4310, %v4305
      %v4343 = vsub.f32 %v4311, %v4305
      %v4344 = vsub.f32 %v4312, %v4305
      %v4345 = vsub.f32 %v4313, %v4305
      %v4346 = vsub.f32 %v4314, %v4305
      %v4347 = vsub.f32 %v4315, %v4305
      %v4348 = vsub.f32 %v4316, %v4305
      %v4349 = vsub.f32 %v4317, %v4305
      %v4350 = vsub.f32 %v4318, %v4305
      %v4351 = vsub.f32 %v4319, %v4305
      %v4352 = vsub.f32 %v4320, %v4305
      %v4353 = vsub.f32 %v4321, %v4305
      %v4354 = vsub.f32 %v4322, %v4305
      %v4355 = vsub.f32 %v4323, %v4305
      %v4356 = vsub.f32 %v4324, %v4305
      %v4357 = vsub.f32 %v4325, %v4305
      %v4358 = vsub.f32 %v4326, %v4305
      %v4359 = vsub.f32 %v4327, %v4305
      %v4360 = vsub.f32 %v4328, %v4305
      %v4361 = vsub.f32 %v4329, %v4305
      %v4362 = vsub.f32 %v4330, %v4305
      %v4363 = vsub.f32 %v4331, %v4305
      %v4364 = vsub.f32 %v4332, %v4305
      %v4365 = vsub.f32 %v4333, %v4305
      %v4366 = vsub.f32 %v4334, %v4305
      %v4367 = vsub.f32 %v4335, %v4305
      %v4368 = vsub.f32 %v4336, %v4305
      %v4369 = vsub.f32 %v4337, %v4305
      %v4370 = vmax.f32 %v4338, 0.0
      %v4371 = vmax.f32 %v4339, 0.0
      %v4372 = vmax.f32 %v4340, 0.0
      %v4373 = vmax.f32 %v4341, 0.0
      %v4374 = vmax.f32 %v4342, 0.0
      %v4375 = vmax.f32 %v4343, 0.0
      %v4376 = vmax.f32 %v4344, 0.0
      %v4377 = vmax.f32 %v4345, 0.0
      %v4378 = vmax.f32 %v4346, 0.0
      %v4379 = vmax.f32 %v4347, 0.0
      %v4380 = vmax.f32 %v4348, 0.0
      %v4381 = vmax.f32 %v4349, 0.0
      %v4382 = vmax.f32 %v4350, 0.0
      %v4383 = vmax.f32 %v4351, 0.0
      %v4384 = vmax.f32 %v4352, 0.0
      %v4385 = vmax.f32 %v4353, 0.0
      %v4386 = vmax.f32 %v4354, 0.0
      %v4387 = vmax.f32 %v4355, 0.0
      %v4388 = vmax.f32 %v4356, 0.0
      %v4389 = vmax.f32 %v4357, 0.0
      %v4390 = vmax.f32 %v4358, 0.0
      %v4391 = vmax.f32 %v4359, 0.0
      %v4392 = vmax.f32 %v4360, 0.0
      %v4393 = vmax.f32 %v4361, 0.0
      %v4394 = vmax.f32 %v4362, 0.0
      %v4395 = vmax.f32 %v4363, 0.0
      %v4396 = vmax.f32 %v4364, 0.0
      %v4397 = vmax.f32 %v4365, 0.0
      %v4398 = vmax.f32 %v4366, 0.0
      %v4399 = vmax.f32 %v4367, 0.0
      %v4400 = vmax.f32 %v4368, 0.0
      %v4401 = vmax.f32 %v4369, 0.0
      %v4402 = vadd.f32 %v4370, %v1644
      %v4403 = vadd.f32 %v4371, %v1646
      %v4404 = vadd.f32 %v4372, %v1649
      %v4405 = vadd.f32 %v4373, %v1651
      %v4406 = vadd.f32 %v4374, %v1654
      %v4407 = vadd.f32 %v4375, %v1656
      %v4408 = vadd.f32 %v4376, %v1659
      %v4409 = vadd.f32 %v4377, %v1661
      %v4410 = vadd.f32 %v4378, %v1664
      %v4411 = vadd.f32 %v4379, %v1666
      %v4412 = vadd.f32 %v4380, %v1669
      %v4413 = vadd.f32 %v4381, %v1671
      %v4414 = vadd.f32 %v4382, %v1674
      %v4415 = vadd.f32 %v4383, %v1676
      %v4416 = vadd.f32 %v4384, %v1679
      %v4417 = vadd.f32 %v4385, %v1681
      %v4418 = vadd.f32 %v4386, %v1684
      %v4419 = vadd.f32 %v4387, %v1686
      %v4420 = vadd.f32 %v4388, %v1689
      %v4421 = vadd.f32 %v4389, %v1691
      %v4422 = vadd.f32 %v4390, %v1694
      %v4423 = vadd.f32 %v4391, %v1696
      %v4424 = vadd.f32 %v4392, %v1699
      %v4425 = vadd.f32 %v4393, %v1701
      %v4426 = vadd.f32 %v4394, %v1704
      %v4427 = vadd.f32 %v4395, %v1706
      %v4428 = vadd.f32 %v4396, %v1709
      %v4429 = vadd.f32 %v4397, %v1711
      %v4430 = vadd.f32 %v4398, %v1714
      %v4431 = vadd.f32 %v4399, %v1716
      %v4432 = vadd.f32 %v4400, %v1719
      %v4433 = vadd.f32 %v4401, %v1721
      %v4434 = vld [vmem:[%s3] sm:$0x1]
      %v4436 = vperm.slane %v4434, 0
      %v4438 = vadd.f32 %v4402, %v4436
      %v4439 = vadd.f32 %v4403, %v4436
      %v4440 = vadd.f32 %v4404, %v4436
      %v4441 = vadd.f32 %v4405, %v4436
      %v4442 = vadd.f32 %v4406, %v4436
      %v4443 = vadd.f32 %v4407, %v4436
      %v4444 = vadd.f32 %v4408, %v4436
      %v4445 = vadd.f32 %v4409, %v4436
      %v4446 = vadd.f32 %v4410, %v4436
      %v4447 = vadd.f32 %v4411, %v4436
      %v4448 = vadd.f32 %v4412, %v4436
      %v4449 = vadd.f32 %v4413, %v4436
      %v4450 = vadd.f32 %v4414, %v4436
      %v4451 = vadd.f32 %v4415, %v4436
      %v4452 = vadd.f32 %v4416, %v4436
      %v4453 = vadd.f32 %v4417, %v4436
      %v4454 = vadd.f32 %v4418, %v4436
      %v4455 = vadd.f32 %v4419, %v4436
      %v4456 = vadd.f32 %v4420, %v4436
      %v4457 = vadd.f32 %v4421, %v4436
      %v4458 = vadd.f32 %v4422, %v4436
      %v4459 = vadd.f32 %v4423, %v4436
      %v4460 = vadd.f32 %v4424, %v4436
      %v4461 = vadd.f32 %v4425, %v4436
      %v4462 = vadd.f32 %v4426, %v4436
      %v4463 = vadd.f32 %v4427, %v4436
      %v4464 = vadd.f32 %v4428, %v4436
      %v4465 = vadd.f32 %v4429, %v4436
      %v4466 = vadd.f32 %v4430, %v4436
      %v4467 = vadd.f32 %v4431, %v4436
      %v4468 = vadd.f32 %v4432, %v4436
      %v4469 = vadd.f32 %v4433, %v4436
      %4470 = vst.msk [vmem:[%s197] sm:$0xff] %vm1249, %v4438
      %4471 = vst.msk [vmem:[%s197 + $0x8] sm:$0xff] %vm1249, %v4439
      %4472 = vst.msk [vmem:[%s197 + $0x10] sm:$0xff] %vm1249, %v4440
      %4473 = vst.msk [vmem:[%s197 + $0x18] sm:$0xff] %vm1249, %v4441
      %4474 = vst.msk [vmem:[%s197 + $0x20] sm:$0xff] %vm1249, %v4442
      %4475 = vst.msk [vmem:[%s197 + $0x28] sm:$0xff] %vm1249, %v4443
      %4476 = vst.msk [vmem:[%s197 + $0x30] sm:$0xff] %vm1249, %v4444
      %4477 = vst.msk [vmem:[%s197 + $0x38] sm:$0xff] %vm1249, %v4445
      %4478 = vst.msk [vmem:[%s197 + $0x40] sm:$0xff] %vm1249, %v4446
      %4479 = vst.msk [vmem:[%s197 + $0x48] sm:$0xff] %vm1249, %v4447
      %4480 = vst.msk [vmem:[%s197 + $0x50] sm:$0xff] %vm1249, %v4448
      %4481 = vst.msk [vmem:[%s197 + $0x58] sm:$0xff] %vm1249, %v4449
      %4482 = vst.msk [vmem:[%s197 + $0x60] sm:$0xff] %vm1249, %v4450
      %4483 = vst.msk [vmem:[%s197 + $0x68] sm:$0xff] %vm1249, %v4451
      %4484 = vst.msk [vmem:[%s197 + $0x70] sm:$0xff] %vm1249, %v4452
      %4485 = vst.msk [vmem:[%s197 + $0x78] sm:$0xff] %vm1249, %v4453
      %4486 = vst.msk [vmem:[%s197 + $0x80] sm:$0xff] %vm1249, %v4454
      %4487 = vst.msk [vmem:[%s197 + $0x88] sm:$0xff] %vm1249, %v4455
      %4488 = vst.msk [vmem:[%s197 + $0x90] sm:$0xff] %vm1249, %v4456
      %4489 = vst.msk [vmem:[%s197 + $0x98] sm:$0xff] %vm1249, %v4457
      %4490 = vst.msk [vmem:[%s197 + $0xa0] sm:$0xff] %vm1249, %v4458
      %4491 = vst.msk [vmem:[%s197 + $0xa8] sm:$0xff] %vm1249, %v4459
      %4492 = vst.msk [vmem:[%s197 + $0xb0] sm:$0xff] %vm1249, %v4460
      %4493 = vst.msk [vmem:[%s197 + $0xb8] sm:$0xff] %vm1249, %v4461
      %4494 = vst.msk [vmem:[%s197 + $0xc0] sm:$0xff] %vm1249, %v4462
      %4495 = vst.msk [vmem:[%s197 + $0xc8] sm:$0xff] %vm1249, %v4463
      %4496 = vst.msk [vmem:[%s197 + $0xd0] sm:$0xff] %vm1249, %v4464
      %4497 = vst.msk [vmem:[%s197 + $0xd8] sm:$0xff] %vm1249, %v4465
      %4498 = vst.msk [vmem:[%s197 + $0xe0] sm:$0xff] %vm1249, %v4466
      %4499 = vst.msk [vmem:[%s197 + $0xe8] sm:$0xff] %vm1249, %v4467
      %4500 = vst.msk [vmem:[%s197 + $0xf0] sm:$0xff] %vm1249, %v4468
      %4501 = vst.msk [vmem:[%s197 + $0xf8] sm:$0xff] %vm1249, %v4469
      %p4502 = scmp.lt.s32.totalorder %s15, 1
      %s4503 = scalar_select %p4502, %s15, 1
      %s4504 = smul.addr %s4503, 32
      %s4505 = smul.addr %s4504, 8
      %s4506 = scalar_lea.vmem %s4, %s4505
      // Predicated region
      $region37: #{tpu_custom_call.1} parent=35 // pred_check
        %p4507 = pneg %p122
      $region38: #{tpu_custom_call.1} parent=35 // pred_check_branch
        %4509 = sbr.rel (%p4507) target = $region40
      $region39: #{tpu_custom_call.1} parent=35 // pred_region
        _
      $region40: #{tpu_custom_call.1} parent=35 // pred_fallthru
        _
    $region36: #{tpu_custom_call.1} parent=5 // pred_fallthru
      _
    %p4510 = scmp.le.s32.totalorder 2, %s10
    // Predicated region
    $region41: #{tpu_custom_call.1} parent=5 // pred_check
      %p4511 = pneg %p4510
    $region42: #{tpu_custom_call.1} parent=5 // pred_check_branch
      %4513 = sbr.rel (%p4511) target = $region44
    $region43: #{tpu_custom_call.1} parent=5 // pred_region
      %s4514 = ssub.s32 %s10, 2
      // Predicated region
      $region45: #{tpu_custom_call.1} parent=43 // pred_check
        %p4515 = pneg %p128
      $region46: #{tpu_custom_call.1} parent=43 // pred_check_branch
        %4517 = sbr.rel (%p4515) target = $region48
      $region47: #{tpu_custom_call.1} parent=43 // pred_region
        %p4518 = scmp.lt.s32.totalorder %s16, 1
        %s4519 = scalar_select %p4518, %s16, 1
        %s4520 = smul.addr %s4519, 32
        %s4521 = smul.addr %s4520, 8
        %s4522 = scalar_lea.vmem %s4, %s4521
      $region48: #{tpu_custom_call.1} parent=43 // pred_fallthru
        _
    $region44: #{tpu_custom_call.1} parent=5 // pred_fallthru
      _
  $region6: #{tpu_custom_call.1} parent=0 // loop_footer
    %s14 = sadd.s32 1, %s10
  $region7: #{tpu_custom_call.1} parent=0 // loop_footer_branch
    %9 = sbr.rel target = $region3
  $region8: #{tpu_custom_call.1} parent=0 // loop_exit
    _

// kernel: tpu_custom_call.1
$region0: #{tpu_custom_call.1}
  #allocation0 [shape = 'u32[]', space=smem, size = 0x4, offset = 0x4, fixed_abs, tag = 'smem constant byte address 0x4 - core index']
  #allocation1 [shape = 'u32[72,128]{1,0:T(1,128)}', space=vmem, size = 0x9000, scoped, tag = 'internal scratch']
  %s0 = inlined_call_operand.vmem [shape: f32[2,16,16,4], index: 0, kind: input, shape index: {}]
  %s1 = inlined_call_operand.vmem [shape: bf16[36,256], index: 1, kind: input, shape index: {}]
  %s2 = inlined_call_operand.vmem [shape: bf16[1152,128], index: 2, kind: input, shape index: {}]
  %s3 = inlined_call_operand.vmem [shape: f32[1,8], index: 3, kind: input, shape index: {}]
  %s4 = inlined_call_operand.vmem [shape: f32[2,16,16,8], index: 4, kind: output, shape index: {}]
  %s5 = sld [smem:[#allocation0]]
  $region49: #{tpu_custom_call.1} parent=0
    _
  %s7 = ssub.s32 1, %s5
  %s8 = scalar_select 0, %s7, %s5
  loop: start=0, step=1, limit=4
  $region2: #{tpu_custom_call.1} parent=0 // loop_pre_header
    _
  $region3: #{tpu_custom_call.1} parent=0 // loop_header
    %s10 = sphi 0, %s14
    %p11 = scmp.ge.s32.totalorder %s10, 4
    %s20 = sphi 0, %s22
    %s23 = sphi 0, %s20
    %s24 = sphi 0, %s23
    %s40 = sphi 0, %s24
    %s44 = sphi 0, %s44
    %s46 = sphi 0, %s44
    %s47 = sphi 0, %s46
    %s61 = sphi 0, %s47
    %s65 = sphi 0, %s65
    %s67 = sphi 0, %s65
    %s68 = sphi 0, %s67
    %s82 = sphi 0, %s68
    %s86 = sphi 0, %s86
    %s88 = sphi 0, %s86
    %s89 = sphi 0, %s88
    %s103 = sphi 0, %s89
    %s109 = sphi 0, %s111
    %s112 = sphi 0, %s109
    %s113 = sphi 0, %s112
    %s129 = sphi 0, %s113
  $region4: #{tpu_custom_call.1} parent=0 // loop_header_branch
    %13 = sbr.rel (%p11) target = $region8
  $region5: #{tpu_custom_call.1} parent=0 // loop_body
    %s15 = ssub.s32 %s10, 1
    %s16 = ssub.s32 %s10, 2
    %s17 = sadd.s32 %s10, 1
    %s18 = ssub.s32 %s10, %s17
    %p19 = scmp.eq.s32.totalorder %s18, 0
    %s21 = sadd.s32 %s20, 1
    %s22 = scalar_select %p19, %s20, %s21
    %p25 = pneg %p19
    %p26 = scmp.eq.s32.totalorder %s10, 1
    %p27 = por %p25, %p26
    %p28 = scmp.ne.s32.totalorder %s20, %s23
    %p29 = scmp.eq.s32.totalorder %s10, 0
    %p30 = por %p28, %p29
    %p31 = scmp.ne.s32.totalorder %s20, %s23
    %p32 = scmp.eq.s32.totalorder %s15, 1
    %p33 = por %p31, %p32
    %p34 = scmp.ne.s32.totalorder %s23, %s24
    %p35 = scmp.eq.s32.totalorder %s15, 0
    %p36 = por %p34, %p35
    %p37 = scmp.ne.s32.totalorder %s23, %s24
    %p38 = scmp.eq.s32.totalorder %s16, 1
    %p39 = por %p37, %p38
    %p41 = scmp.ne.s32.totalorder %s24, %s40
    %p42 = scmp.eq.s32.totalorder %s16, 0
    %p43 = por %p41, %p42
    %s45 = sadd.s32 %s44, 1
    %p48 = scmp.eq.s32.totalorder %s10, 1
    %p49 = scmp.ne.s32.totalorder %s44, %s46
    %p50 = scmp.eq.s32.totalorder %s10, 0
    %p51 = por %p49, %p50
    %p52 = scmp.ne.s32.totalorder %s44, %s46
    %p53 = scmp.eq.s32.totalorder %s15, 1
    %p54 = por %p52, %p53
    %p55 = scmp.ne.s32.totalorder %s46, %s47
    %p56 = scmp.eq.s32.totalorder %s15, 0
    %p57 = por %p55, %p56
    %p58 = scmp.ne.s32.totalorder %s46, %s47
    %p59 = scmp.eq.s32.totalorder %s16, 1
    %p60 = por %p58, %p59
    %p62 = scmp.ne.s32.totalorder %s47, %s61
    %p63 = scmp.eq.s32.totalorder %s16, 0
    %p64 = por %p62, %p63
    %s66 = sadd.s32 %s65, 1
    %p69 = scmp.eq.s32.totalorder %s10, 1
    %p70 = scmp.ne.s32.totalorder %s65, %s67
    %p71 = scmp.eq.s32.totalorder %s10, 0
    %p72 = por %p70, %p71
    %p73 = scmp.ne.s32.totalorder %s65, %s67
    %p74 = scmp.eq.s32.totalorder %s15, 1
    %p75 = por %p73, %p74
    %p76 = scmp.ne.s32.totalorder %s67, %s68
    %p77 = scmp.eq.s32.totalorder %s15, 0
    %p78 = por %p76, %p77
    %p79 = scmp.ne.s32.totalorder %s67, %s68
    %p80 = scmp.eq.s32.totalorder %s16, 1
    %p81 = por %p79, %p80
    %p83 = scmp.ne.s32.totalorder %s68, %s82
    %p84 = scmp.eq.s32.totalorder %s16, 0
    %p85 = por %p83, %p84
    %s87 = sadd.s32 %s86, 1
    %p90 = scmp.eq.s32.totalorder %s10, 1
    %p91 = scmp.ne.s32.totalorder %s86, %s88
    %p92 = scmp.eq.s32.totalorder %s10, 0
    %p93 = por %p91, %p92
    %p94 = scmp.ne.s32.totalorder %s86, %s88
    %p95 = scmp.eq.s32.totalorder %s15, 1
    %p96 = por %p94, %p95
    %p97 = scmp.ne.s32.totalorder %s88, %s89
    %p98 = scmp.eq.s32.totalorder %s15, 0
    %p99 = por %p97, %p98
    %p100 = scmp.ne.s32.totalorder %s88, %s89
    %p101 = scmp.eq.s32.totalorder %s16, 1
    %p102 = por %p100, %p101
    %p104 = scmp.ne.s32.totalorder %s89, %s103
    %p105 = scmp.eq.s32.totalorder %s16, 0
    %p106 = por %p104, %p105
    %s107 = ssub.s32 %s10, %s17
    %p108 = scmp.eq.s32.totalorder %s107, 0
    %s110 = sadd.s32 %s109, 1
    %s111 = scalar_select %p108, %s109, %s110
    %p114 = pneg %p108
    %p115 = scmp.eq.s32.totalorder %s10, 1
    %p116 = por %p114, %p115
    %p117 = scmp.ne.s32.totalorder %s109, %s112
    %p118 = scmp.eq.s32.totalorder %s10, 0
    %p119 = por %p117, %p118
    %p120 = scmp.ne.s32.totalorder %s109, %s112
    %p121 = scmp.eq.s32.totalorder %s15, 1
    %p122 = por %p120, %p121
    %p123 = scmp.ne.s32.totalorder %s112, %s113
    %p124 = scmp.eq.s32.totalorder %s15, 0
    %p125 = por %p123, %p124
    %p126 = scmp.ne.s32.totalorder %s112, %s113
    %p127 = scmp.eq.s32.totalorder %s16, 1
    %p128 = por %p126, %p127
    %p130 = scmp.ne.s32.totalorder %s113, %s129
    %p131 = scmp.eq.s32.totalorder %s16, 0
    %p132 = por %p130, %p131
    %p133 = scmp.le.s32.totalorder 1, %s10
    %p134 = scmp.lt.s32.totalorder %s10, 3
    %p135 = pnand %p133, %p134
    %p136 = pneg %p135
    // Predicated region
    $region9: #{tpu_custom_call.1} parent=5 // pred_check
      _
    $region10: #{tpu_custom_call.1} parent=5 // pred_check_branch
      %138 = sbr.rel (%p135) target = $region12
    $region11: #{tpu_custom_call.1} parent=5 // pred_region
      %s139 = ssub.s32 %s10, 1
      // Predicated region
      $region13: #{tpu_custom_call.1} parent=11 // pred_check
        %p140 = pneg %p57
      $region14: #{tpu_custom_call.1} parent=11 // pred_check_branch
        %142 = sbr.rel (%p140) target = $region16
      $region15: #{tpu_custom_call.1} parent=11 // pred_region
        _
      $region16: #{tpu_custom_call.1} parent=11 // pred_fallthru
        _
      // Predicated region
      $region17: #{tpu_custom_call.1} parent=11 // pred_check
        %p143 = pneg %p78
      $region18: #{tpu_custom_call.1} parent=11 // pred_check_branch
        %145 = sbr.rel (%p143) target = $region20
      $region19: #{tpu_custom_call.1} parent=11 // pred_region
        _
      $region20: #{tpu_custom_call.1} parent=11 // pred_fallthru
        _
      // Predicated region
      $region21: #{tpu_custom_call.1} parent=11 // pred_check
        %p146 = pneg %p99
      $region22: #{tpu_custom_call.1} parent=11 // pred_check_branch
        %148 = sbr.rel (%p146) target = $region24
      $region23: #{tpu_custom_call.1} parent=11 // pred_region
        _
      $region24: #{tpu_custom_call.1} parent=11 // pred_fallthru
        _
    $region12: #{tpu_custom_call.1} parent=5 // pred_fallthru
      _
    %p149 = scmp.lt.s32.totalorder %s10, 2
    // Predicated region
    $region25: #{tpu_custom_call.1} parent=5 // pred_check
      %p150 = pneg %p149
    $region26: #{tpu_custom_call.1} parent=5 // pred_check_branch
      %152 = sbr.rel (%p150) target = $region28
    $region27: #{tpu_custom_call.1} parent=5 // pred_region
      // Predicated region
      $region29: #{tpu_custom_call.1} parent=27 // pred_check
        %p153 = pneg %p30
      $region30: #{tpu_custom_call.1} parent=27 // pred_check_branch
        %155 = sbr.rel (%p153) target = $region32
      $region31: #{tpu_custom_call.1} parent=27 // pred_region
        %p156 = scmp.lt.s32.totalorder %s10, 1
        %s157 = scalar_select %p156, %s10, 1
        %s158 = smul.addr %s157, 32
        %s159 = smul.addr %s158, 8
        %s160 = scalar_lea.vmem %s0, %s159
      $region32: #{tpu_custom_call.1} parent=27 // pred_fallthru
        _
    $region28: #{tpu_custom_call.1} parent=5 // pred_fallthru
      _
    %p161 = scmp.le.s32.totalorder 1, %s10
    %p162 = scmp.lt.s32.totalorder %s10, 3
    %p163 = pnand %p161, %p162
    %p164 = pneg %p163
    // Predicated region
    $region33: #{tpu_custom_call.1} parent=5 // pred_check
      _
    $region34: #{tpu_custom_call.1} parent=5 // pred_check_branch
      %166 = sbr.rel (%p163) target = $region36
    $region35: #{tpu_custom_call.1} parent=5 // pred_region
      %s167 = ssub.s32 %s10, 1
      %p168 = scmp.lt.s32.totalorder %s15, 1
      %s169 = scalar_select %p168, %s15, 1
      %s170 = smul.addr %s169, 32
      %s171 = smul.addr %s170, 8
      %s172 = scalar_lea.vmem %s0, %s171
      %p173 = pneg %p36
      %p174 = pneg %p33
      %p175 = pneg %p57
      %p176 = pneg %p54
      %p177 = pneg %p78
      %p178 = pneg %p75
      %p179 = pneg %p99
      %p180 = pneg %p96
      %p181 = pneg %p125
      %p182 = pneg %p122
      %p183 = scmp.lt.s32.totalorder %s15, 1
      %s184 = scalar_select %p183, %s15, 1
      %s185 = smul.addr %s184, 32
      %s186 = smul.addr %s185, 8
      %s187 = scalar_lea.vmem %s4, %s186
      %p188 = scmp.lt.s32.totalorder %s15, 1
      %s189 = scalar_select %p188, %s15, 1
      %s190 = smul.addr %s189, 32
      %s191 = smul.addr %s190, 8
      %s192 = scalar_lea.vmem %s0, %s191
      %p193 = scmp.lt.s32.totalorder %s15, 1
      %s194 = scalar_select %p193, %s15, 1
      %s195 = smul.addr %s194, 32
      %s196 = smul.addr %s195, 8
      %s197 = scalar_lea.vmem %s4, %s196
      %v199 = vld [vmem:[%s192] sm:$0xff]
      %v200 = vld [vmem:[%s192 + $0x8] sm:$0xff]
      %v201 = vld [vmem:[%s192 + $0x10] sm:$0xff]
      %v202 = vld [vmem:[%s192 + $0x18] sm:$0xff]
      %v203 = vld [vmem:[%s192 + $0x20] sm:$0xff]
      %v204 = vld [vmem:[%s192 + $0x28] sm:$0xff]
      %v205 = vld [vmem:[%s192 + $0x30] sm:$0xff]
      %v206 = vld [vmem:[%s192 + $0x38] sm:$0xff]
      %v207 = vld [vmem:[%s192 + $0x40] sm:$0xff]
      %v208 = vld [vmem:[%s192 + $0x48] sm:$0xff]
      %v209 = vld [vmem:[%s192 + $0x50] sm:$0xff]
      %v210 = vld [vmem:[%s192 + $0x58] sm:$0xff]
      %v211 = vld [vmem:[%s192 + $0x60] sm:$0xff]
      %v212 = vld [vmem:[%s192 + $0x68] sm:$0xff]
      %v213 = vld [vmem:[%s192 + $0x70] sm:$0xff]
      %v214 = vld [vmem:[%s192 + $0x78] sm:$0xff]
      %v215 = vld [vmem:[%s192 + $0x80] sm:$0xff]
      %v216 = vld [vmem:[%s192 + $0x88] sm:$0xff]
      %v217 = vld [vmem:[%s192 + $0x90] sm:$0xff]
      %v218 = vld [vmem:[%s192 + $0x98] sm:$0xff]
      %v219 = vld [vmem:[%s192 + $0xa0] sm:$0xff]
      %v220 = vld [vmem:[%s192 + $0xa8] sm:$0xff]
      %v221 = vld [vmem:[%s192 + $0xb0] sm:$0xff]
      %v222 = vld [vmem:[%s192 + $0xb8] sm:$0xff]
      %v223 = vld [vmem:[%s192 + $0xc0] sm:$0xff]
      %v224 = vld [vmem:[%s192 + $0xc8] sm:$0xff]
      %v225 = vld [vmem:[%s192 + $0xd0] sm:$0xff]
      %v226 = vld [vmem:[%s192 + $0xd8] sm:$0xff]
      %v227 = vld [vmem:[%s192 + $0xe0] sm:$0xff]
      %v228 = vld [vmem:[%s192 + $0xe8] sm:$0xff]
      %v229 = vld [vmem:[%s192 + $0xf0] sm:$0xff]
      %v230 = vld [vmem:[%s192 + $0xf8] sm:$0xff]
      %v231 = vpack.c.bf16 %v199, %v199
      %v232 = vpack.c.bf16 %v200, %v200
      %v233 = vpack.c.bf16 %v201, %v201
      %v234 = vpack.c.bf16 %v202, %v202
      %v235 = vpack.c.bf16 %v203, %v203
      %v236 = vpack.c.bf16 %v204, %v204
      %v237 = vpack.c.bf16 %v205, %v205
      %v238 = vpack.c.bf16 %v206, %v206
      %v239 = vpack.c.bf16 %v207, %v207
      %v240 = vpack.c.bf16 %v208, %v208
      %v241 = vpack.c.bf16 %v209, %v209
      %v242 = vpack.c.bf16 %v210, %v210
      %v243 = vpack.c.bf16 %v211, %v211
      %v244 = vpack.c.bf16 %v212, %v212
      %v245 = vpack.c.bf16 %v213, %v213
      %v246 = vpack.c.bf16 %v214, %v214
      %v247 = vpack.c.bf16 %v215, %v215
      %v248 = vpack.c.bf16 %v216, %v216
      %v249 = vpack.c.bf16 %v217, %v217
      %v250 = vpack.c.bf16 %v218, %v218
      %v251 = vpack.c.bf16 %v219, %v219
      %v252 = vpack.c.bf16 %v220, %v220
      %v253 = vpack.c.bf16 %v221, %v221
      %v254 = vpack.c.bf16 %v222, %v222
      %v255 = vpack.c.bf16 %v223, %v223
      %v256 = vpack.c.bf16 %v224, %v224
      %v257 = vpack.c.bf16 %v225, %v225
      %v258 = vpack.c.bf16 %v226, %v226
      %v259 = vpack.c.bf16 %v227, %v227
      %v260 = vpack.c.bf16 %v228, %v228
      %v261 = vpack.c.bf16 %v229, %v229
      %v262 = vpack.c.bf16 %v230, %v230
      %v279 = vunpack.c.l.b16 %v233
      %v280 = vunpack.c.l.b16 %v231
      %v281 = vunpack.c.l.b16 %v235
      %v282 = vunpack.c.l.b16 %v237
      %v283 = vunpack.c.l.b16 %v239
      %v284 = vunpack.c.l.b16 %v241
      %v285 = vunpack.c.l.b16 %v243
      %v286 = vunpack.c.l.b16 %v245
      %v287 = vunpack.c.l.b16 %v247
      %v288 = vunpack.c.l.b16 %v249
      %v289 = vunpack.c.l.b16 %v251
      %v290 = vunpack.c.l.b16 %v253
      %v291 = vunpack.c.l.b16 %v255
      %v292 = vunpack.c.l.b16 %v257
      %v293 = vunpack.c.l.b16 %v259
      %v294 = vunpack.c.l.b16 %v261
      %v295 = vpack.c.b16 %v279, %v279
      %v296 = vpack.c.b16 %v280, %v280
      %v297 = vpack.c.b16 %v281, %v281
      %v298 = vpack.c.b16 %v282, %v282
      %v299 = vpack.c.b16 %v283, %v283
      %v300 = vpack.c.b16 %v284, %v284
      %v301 = vpack.c.b16 %v285, %v285
      %v302 = vpack.c.b16 %v286, %v286
      %v303 = vpack.c.b16 %v287, %v287
      %v304 = vpack.c.b16 %v288, %v288
      %v305 = vpack.c.b16 %v289, %v289
      %v306 = vpack.c.b16 %v290, %v290
      %v307 = vpack.c.b16 %v291, %v291
      %v308 = vpack.c.b16 %v292, %v292
      %v309 = vpack.c.b16 %v293, %v293
      %v310 = vpack.c.b16 %v294, %v294
      %v312 = vshrl.u32 %v295, 16
      %v315 = vshrl.u32 %v296, 16
      %v318 = vshrl.u32 %v297, 16
      %v321 = vshrl.u32 %v298, 16
      %v324 = vshrl.u32 %v299, 16
      %v327 = vshrl.u32 %v300, 16
      %v330 = vshrl.u32 %v301, 16
      %v333 = vshrl.u32 %v302, 16
      %v336 = vshrl.u32 %v303, 16
      %v339 = vshrl.u32 %v304, 16
      %v342 = vshrl.u32 %v305, 16
      %v345 = vshrl.u32 %v306, 16
      %v348 = vshrl.u32 %v307, 16
      %v351 = vshrl.u32 %v308, 16
      %v354 = vshrl.u32 %v309, 16
      %v357 = vshrl.u32 %v310, 16
      %v391 = vunpack.c.l.b16 %v234
      %v392 = vunpack.c.l.b16 %v232
      %v393 = vunpack.c.l.b16 %v236
      %v394 = vunpack.c.l.b16 %v238
      %v395 = vunpack.c.l.b16 %v240
      %v396 = vunpack.c.l.b16 %v242
      %v397 = vunpack.c.l.b16 %v244
      %v398 = vunpack.c.l.b16 %v246
      %v399 = vunpack.c.l.b16 %v248
      %v400 = vunpack.c.l.b16 %v250
      %v401 = vunpack.c.l.b16 %v252
      %v402 = vunpack.c.l.b16 %v254
      %v403 = vunpack.c.l.b16 %v256
      %v404 = vunpack.c.l.b16 %v258
      %v405 = vunpack.c.l.b16 %v260
      %v406 = vunpack.c.l.b16 %v262
      %v407 = vpack.c.b16 %v391, %v279
      %v408 = vpack.c.b16 %v392, %v280
      %v409 = vpack.c.b16 %v393, %v281
      %v410 = vpack.c.b16 %v394, %v282
      %v411 = vpack.c.b16 %v395, %v283
      %v412 = vpack.c.b16 %v396, %v284
      %v413 = vpack.c.b16 %v397, %v285
      %v414 = vpack.c.b16 %v398, %v286
      %v415 = vpack.c.b16 %v399, %v287
      %v416 = vpack.c.b16 %v400, %v288
      %v417 = vpack.c.b16 %v401, %v289
      %v418 = vpack.c.b16 %v402, %v290
      %v419 = vpack.c.b16 %v403, %v291
      %v420 = vpack.c.b16 %v404, %v292
      %v421 = vpack.c.b16 %v405, %v293
      %v422 = vpack.c.b16 %v406, %v294
      %v424 = vshrl.u32 %v407, 16
      %v426 = vrot.slane %v424, 7
      %v427 = vshll.u32 %v407, 16
      %v429 = vor.u32 %v426, %v427
      %v431 = vshrl.u32 %v408, 16
      %v433 = vrot.slane %v431, 7
      %v434 = vshll.u32 %v408, 16
      %v436 = vor.u32 %v433, %v434
      %v438 = vshrl.u32 %v409, 16
      %v440 = vrot.slane %v438, 7
      %v441 = vshll.u32 %v409, 16
      %v443 = vor.u32 %v440, %v441
      %v445 = vshrl.u32 %v410, 16
      %v447 = vrot.slane %v445, 7
      %v448 = vshll.u32 %v410, 16
      %v450 = vor.u32 %v447, %v448
      %v452 = vshrl.u32 %v411, 16
      %v454 = vrot.slane %v452, 7
      %v455 = vshll.u32 %v411, 16
      %v457 = vor.u32 %v454, %v455
      %v459 = vshrl.u32 %v412, 16
      %v461 = vrot.slane %v459, 7
      %v462 = vshll.u32 %v412, 16
      %v464 = vor.u32 %v461, %v462
      %v466 = vshrl.u32 %v413, 16
      %v468 = vrot.slane %v466, 7
      %v469 = vshll.u32 %v413, 16
      %v471 = vor.u32 %v468, %v469
      %v473 = vshrl.u32 %v414, 16
      %v475 = vrot.slane %v473, 7
      %v476 = vshll.u32 %v414, 16
      %v478 = vor.u32 %v475, %v476
      %v480 = vshrl.u32 %v415, 16
      %v482 = vrot.slane %v480, 7
      %v483 = vshll.u32 %v415, 16
      %v485 = vor.u32 %v482, %v483
      %v487 = vshrl.u32 %v416, 16
      %v489 = vrot.slane %v487, 7
      %v490 = vshll.u32 %v416, 16
      %v492 = vor.u32 %v489, %v490
      %v494 = vshrl.u32 %v417, 16
      %v496 = vrot.slane %v494, 7
      %v497 = vshll.u32 %v417, 16
      %v499 = vor.u32 %v496, %v497
      %v501 = vshrl.u32 %v418, 16
      %v503 = vrot.slane %v501, 7
      %v504 = vshll.u32 %v418, 16
      %v506 = vor.u32 %v503, %v504
      %v508 = vshrl.u32 %v419, 16
      %v510 = vrot.slane %v508, 7
      %v511 = vshll.u32 %v419, 16
      %v513 = vor.u32 %v510, %v511
      %v515 = vshrl.u32 %v420, 16
      %v517 = vrot.slane %v515, 7
      %v518 = vshll.u32 %v420, 16
      %v520 = vor.u32 %v517, %v518
      %v522 = vshrl.u32 %v421, 16
      %v524 = vrot.slane %v522, 7
      %v525 = vshll.u32 %v421, 16
      %v527 = vor.u32 %v524, %v525
      %v529 = vshrl.u32 %v422, 16
      %v531 = vrot.slane %v529, 7
      %v532 = vshll.u32 %v422, 16
      %v534 = vor.u32 %v531, %v532
      %v567 = vpack.c.b16 %v391, %v391
      %v568 = vpack.c.b16 %v392, %v392
      %v569 = vpack.c.b16 %v393, %v393
      %v570 = vpack.c.b16 %v394, %v394
      %v571 = vpack.c.b16 %v395, %v395
      %v572 = vpack.c.b16 %v396, %v396
      %v573 = vpack.c.b16 %v397, %v397
      %v574 = vpack.c.b16 %v398, %v398
      %v575 = vpack.c.b16 %v399, %v399
      %v576 = vpack.c.b16 %v400, %v400
      %v577 = vpack.c.b16 %v401, %v401
      %v578 = vpack.c.b16 %v402, %v402
      %v579 = vpack.c.b16 %v403, %v403
      %v580 = vpack.c.b16 %v404, %v404
      %v581 = vpack.c.b16 %v405, %v405
      %v582 = vpack.c.b16 %v406, %v406
      %v584 = vshll.u32 %v567, 16
      %v586 = vrot.slane %v584, 3
      %v588 = vshll.u32 %v568, 16
      %v590 = vrot.slane %v588, 3
      %v592 = vshll.u32 %v569, 16
      %v594 = vrot.slane %v592, 3
      %v596 = vshll.u32 %v570, 16
      %v598 = vrot.slane %v596, 3
      %v600 = vshll.u32 %v571, 16
      %v602 = vrot.slane %v600, 3
      %v604 = vshll.u32 %v572, 16
      %v606 = vrot.slane %v604, 3
      %v608 = vshll.u32 %v573, 16
      %v610 = vrot.slane %v608, 3
      %v612 = vshll.u32 %v574, 16
      %v614 = vrot.slane %v612, 3
      %v616 = vshll.u32 %v575, 16
      %v618 = vrot.slane %v616, 3
      %v620 = vshll.u32 %v576, 16
      %v622 = vrot.slane %v620, 3
      %v624 = vshll.u32 %v577, 16
      %v626 = vrot.slane %v624, 3
      %v628 = vshll.u32 %v578, 16
      %v630 = vrot.slane %v628, 3
      %v632 = vshll.u32 %v579, 16
      %v634 = vrot.slane %v632, 3
      %v636 = vshll.u32 %v580, 16
      %v638 = vrot.slane %v636, 3
      %v640 = vshll.u32 %v581, 16
      %v642 = vrot.slane %v640, 3
      %v644 = vshll.u32 %v582, 16
      %v646 = vrot.slane %v644, 3
      %vm663 = vcmask 1040384
      %vm664 = vsmask.f32 256
      %vm665 = vmand %vm663, %vm664
      %v666 = vsel %vm665, %v312, %v429
      %v667 = vsel %vm665, %v315, %v436
      %v668 = vsel %vm665, %v318, %v443
      %v669 = vsel %vm665, %v321, %v450
      %v670 = vsel %vm665, %v324, %v457
      %v671 = vsel %vm665, %v327, %v464
      %v672 = vsel %vm665, %v330, %v471
      %v673 = vsel %vm665, %v333, %v478
      %v674 = vsel %vm665, %v336, %v485
      %v675 = vsel %vm665, %v339, %v492
      %v676 = vsel %vm665, %v342, %v499
      %v677 = vsel %vm665, %v345, %v506
      %v678 = vsel %vm665, %v348, %v513
      %v679 = vsel %vm665, %v351, %v520
      %v680 = vsel %vm665, %v354, %v527
      %v681 = vsel %vm665, %v357, %v534
      %v682 = vsel %vm665, %v426, %v586
      %v683 = vsel %vm665, %v433, %v590
      %v684 = vsel %vm665, %v440, %v594
      %v685 = vsel %vm665, %v447, %v598
      %v686 = vsel %vm665, %v454, %v602
      %v687 = vsel %vm665, %v461, %v606
      %v688 = vsel %vm665, %v468, %v610
      %v689 = vsel %vm665, %v475, %v614
      %v690 = vsel %vm665, %v482, %v618
      %v691 = vsel %vm665, %v489, %v622
      %v692 = vsel %vm665, %v496, %v626
      %v693 = vsel %vm665, %v503, %v630
      %v694 = vsel %vm665, %v510, %v634
      %v695 = vsel %vm665, %v517, %v638
      %v696 = vsel %vm665, %v524, %v642
      %v697 = vsel %vm665, %v531, %v646
      %vm698 = vsmask.f32 7424
      %v700 = vshrl.u32 %v666, 16
      %v702 = vshll.u32 %v666, 16
      %v704 = vrot.slane %v702, 1
      %v705 = vor.u32 %v700, %v704
      %v707 = vshll.u32 %v682, 16
      %v709 = vrot.slane %v707, 1
      %v710 = vsel %vm698, %v705, %v709
      %v712 = vshrl.u32 %v667, 16
      %v714 = vshll.u32 %v667, 16
      %v716 = vrot.slane %v714, 1
      %v717 = vor.u32 %v712, %v716
      %v719 = vshll.u32 %v683, 16
      %v721 = vrot.slane %v719, 1
      %v722 = vsel %vm698, %v717, %v721
      %v724 = vshrl.u32 %v668, 16
      %v726 = vshll.u32 %v668, 16
      %v728 = vrot.slane %v726, 1
      %v729 = vor.u32 %v724, %v728
      %v731 = vshll.u32 %v684, 16
      %v733 = vrot.slane %v731, 1
      %v734 = vsel %vm698, %v729, %v733
      %v736 = vshrl.u32 %v669, 16
      %v738 = vshll.u32 %v669, 16
      %v740 = vrot.slane %v738, 1
      %v741 = vor.u32 %v736, %v740
      %v743 = vshll.u32 %v685, 16
      %v745 = vrot.slane %v743, 1
      %v746 = vsel %vm698, %v741, %v745
      %v748 = vshrl.u32 %v670, 16
      %v750 = vshll.u32 %v670, 16
      %v752 = vrot.slane %v750, 1
      %v753 = vor.u32 %v748, %v752
      %v755 = vshll.u32 %v686, 16
      %v757 = vrot.slane %v755, 1
      %v758 = vsel %vm698, %v753, %v757
      %v760 = vshrl.u32 %v671, 16
      %v762 = vshll.u32 %v671, 16
      %v764 = vrot.slane %v762, 1
      %v765 = vor.u32 %v760, %v764
      %v767 = vshll.u32 %v687, 16
      %v769 = vrot.slane %v767, 1
      %v770 = vsel %vm698, %v765, %v769
      %v772 = vshrl.u32 %v672, 16
      %v774 = vshll.u32 %v672, 16
      %v776 = vrot.slane %v774, 1
      %v777 = vor.u32 %v772, %v776
      %v779 = vshll.u32 %v688, 16
      %v781 = vrot.slane %v779, 1
      %v782 = vsel %vm698, %v777, %v781
      %v784 = vshrl.u32 %v673, 16
      %v786 = vshll.u32 %v673, 16
      %v788 = vrot.slane %v786, 1
      %v789 = vor.u32 %v784, %v788
      %v791 = vshll.u32 %v689, 16
      %v793 = vrot.slane %v791, 1
      %v794 = vsel %vm698, %v789, %v793
      %v796 = vshrl.u32 %v674, 16
      %v798 = vshll.u32 %v674, 16
      %v800 = vrot.slane %v798, 1
      %v801 = vor.u32 %v796, %v800
      %v803 = vshll.u32 %v690, 16
      %v805 = vrot.slane %v803, 1
      %v806 = vsel %vm698, %v801, %v805
      %v808 = vshrl.u32 %v675, 16
      %v810 = vshll.u32 %v675, 16
      %v812 = vrot.slane %v810, 1
      %v813 = vor.u32 %v808, %v812
      %v815 = vshll.u32 %v691, 16
      %v817 = vrot.slane %v815, 1
      %v818 = vsel %vm698, %v813, %v817
      %v820 = vshrl.u32 %v676, 16
      %v822 = vshll.u32 %v676, 16
      %v824 = vrot.slane %v822, 1
      %v825 = vor.u32 %v820, %v824
      %v827 = vshll.u32 %v692, 16
      %v829 = vrot.slane %v827, 1
      %v830 = vsel %vm698, %v825, %v829
      %v832 = vshrl.u32 %v677, 16
      %v834 = vshll.u32 %v677, 16
      %v836 = vrot.slane %v834, 1
      %v837 = vor.u32 %v832, %v836
      %v839 = vshll.u32 %v693, 16
      %v841 = vrot.slane %v839, 1
      %v842 = vsel %vm698, %v837, %v841
      %v844 = vshrl.u32 %v678, 16
      %v846 = vshll.u32 %v678, 16
      %v848 = vrot.slane %v846, 1
      %v849 = vor.u32 %v844, %v848
      %v851 = vshll.u32 %v694, 16
      %v853 = vrot.slane %v851, 1
      %v854 = vsel %vm698, %v849, %v853
      %v856 = vshrl.u32 %v679, 16
      %v858 = vshll.u32 %v679, 16
      %v860 = vrot.slane %v858, 1
      %v861 = vor.u32 %v856, %v860
      %v863 = vshll.u32 %v695, 16
      %v865 = vrot.slane %v863, 1
      %v866 = vsel %vm698, %v861, %v865
      %v868 = vshrl.u32 %v680, 16
      %v870 = vshll.u32 %v680, 16
      %v872 = vrot.slane %v870, 1
      %v873 = vor.u32 %v868, %v872
      %v875 = vshll.u32 %v696, 16
      %v877 = vrot.slane %v875, 1
      %v878 = vsel %vm698, %v873, %v877
      %879 = vrot.lane.b32.xlu0 %v710, 4
      %v880 = vpop.permute.xlu0 %879
      %881 = vrot.lane.b32.xlu0 %v722, 4
      %v882 = vpop.permute.xlu0 %881
      %883 = vrot.lane.b32.xlu0 %v734, 4
      %v884 = vpop.permute.xlu0 %883
      %885 = vrot.lane.b32.xlu0 %v746, 4
      %v886 = vpop.permute.xlu0 %885
      %887 = vrot.lane.b32.xlu0 %v758, 4
      %v888 = vpop.permute.xlu0 %887
      %889 = vrot.lane.b32.xlu0 %v770, 4
      %v890 = vpop.permute.xlu0 %889
      %891 = vrot.lane.b32.xlu0 %v782, 4
      %v892 = vpop.permute.xlu0 %891
      %893 = vrot.lane.b32.xlu0 %v794, 4
      %v894 = vpop.permute.xlu0 %893
      %895 = vrot.lane.b32.xlu0 %v806, 4
      %v896 = vpop.permute.xlu0 %895
      %897 = vrot.lane.b32.xlu0 %v818, 4
      %v898 = vpop.permute.xlu0 %897
      %899 = vrot.lane.b32.xlu0 %v830, 4
      %v900 = vpop.permute.xlu0 %899
      %901 = vrot.lane.b32.xlu0 %v842, 4
      %v902 = vpop.permute.xlu0 %901
      %903 = vrot.lane.b32.xlu0 %v854, 4
      %v904 = vpop.permute.xlu0 %903
      %905 = vrot.lane.b32.xlu0 %v866, 4
      %v906 = vpop.permute.xlu0 %905
      %907 = vrot.lane.b32.xlu0 %v878, 4
      %v908 = vpop.permute.xlu0 %907
      %vm939 = vcmask 1046528
      %v940 = vrot.slane %v666, 1
      %v941 = vrot.slane %v682, 1
      %v942 = vsel %vm939, %v940, %v941
      %v943 = vrot.slane %v667, 1
      %v944 = vrot.slane %v683, 1
      %v945 = vsel %vm939, %v943, %v944
      %v946 = vrot.slane %v668, 1
      %v947 = vrot.slane %v684, 1
      %v948 = vsel %vm939, %v946, %v947
      %v949 = vrot.slane %v669, 1
      %v950 = vrot.slane %v685, 1
      %v951 = vsel %vm939, %v949, %v950
      %v952 = vrot.slane %v670, 1
      %v953 = vrot.slane %v686, 1
      %v954 = vsel %vm939, %v952, %v953
      %v955 = vrot.slane %v671, 1
      %v956 = vrot.slane %v687, 1
      %v957 = vsel %vm939, %v955, %v956
      %v958 = vrot.slane %v672, 1
      %v959 = vrot.slane %v688, 1
      %v960 = vsel %vm939, %v958, %v959
      %v961 = vrot.slane %v673, 1
      %v962 = vrot.slane %v689, 1
      %v963 = vsel %vm939, %v961, %v962
      %v964 = vrot.slane %v674, 1
      %v965 = vrot.slane %v690, 1
      %v966 = vsel %vm939, %v964, %v965
      %v967 = vrot.slane %v675, 1
      %v968 = vrot.slane %v691, 1
      %v969 = vsel %vm939, %v967, %v968
      %v970 = vrot.slane %v676, 1
      %v971 = vrot.slane %v692, 1
      %v972 = vsel %vm939, %v970, %v971
      %v973 = vrot.slane %v677, 1
      %v974 = vrot.slane %v693, 1
      %v975 = vsel %vm939, %v973, %v974
      %v976 = vrot.slane %v678, 1
      %v977 = vrot.slane %v694, 1
      %v978 = vsel %vm939, %v976, %v977
      %v979 = vrot.slane %v679, 1
      %v980 = vrot.slane %v695, 1
      %v981 = vsel %vm939, %v979, %v980
      %v982 = vrot.slane %v680, 1
      %v983 = vrot.slane %v696, 1
      %v984 = vsel %vm939, %v982, %v983
      %985 = vrot.lane.b32.xlu0 %v942, 8
      %v986 = vpop.permute.xlu0 %985
      %987 = vrot.lane.b32.xlu0 %v945, 8
      %v988 = vpop.permute.xlu0 %987
      %989 = vrot.lane.b32.xlu0 %v948, 8
      %v990 = vpop.permute.xlu0 %989
      %991 = vrot.lane.b32.xlu0 %v951, 8
      %v992 = vpop.permute.xlu0 %991
      %993 = vrot.lane.b32.xlu0 %v954, 8
      %v994 = vpop.permute.xlu0 %993
      %995 = vrot.lane.b32.xlu0 %v957, 8
      %v996 = vpop.permute.xlu0 %995
      %997 = vrot.lane.b32.xlu0 %v960, 8
      %v998 = vpop.permute.xlu0 %997
      %999 = vrot.lane.b32.xlu0 %v963, 8
      %v1000 = vpop.permute.xlu0 %999
      %1001 = vrot.lane.b32.xlu0 %v966, 8
      %v1002 = vpop.permute.xlu0 %1001
      %1003 = vrot.lane.b32.xlu0 %v969, 8
      %v1004 = vpop.permute.xlu0 %1003
      %1005 = vrot.lane.b32.xlu0 %v972, 8
      %v1006 = vpop.permute.xlu0 %1005
      %1007 = vrot.lane.b32.xlu0 %v975, 8
      %v1008 = vpop.permute.xlu0 %1007
      %1009 = vrot.lane.b32.xlu0 %v978, 8
      %v1010 = vpop.permute.xlu0 %1009
      %1011 = vrot.lane.b32.xlu0 %v981, 8
      %v1012 = vpop.permute.xlu0 %1011
      %1013 = vrot.lane.b32.xlu0 %v984, 8
      %v1014 = vpop.permute.xlu0 %1013
      %1016 = vrot.lane.b32.xlu0 %v667, 12
      %v1017 = vpop.permute.xlu0 %1016
      %1018 = vrot.lane.b32.xlu0 %v666, 12
      %v1019 = vpop.permute.xlu0 %1018
      %1020 = vrot.lane.b32.xlu0 %v668, 12
      %v1021 = vpop.permute.xlu0 %1020
      %1022 = vrot.lane.b32.xlu0 %v669, 12
      %v1023 = vpop.permute.xlu0 %1022
      %1024 = vrot.lane.b32.xlu0 %v670, 12
      %v1025 = vpop.permute.xlu0 %1024
      %1026 = vrot.lane.b32.xlu0 %v671, 12
      %v1027 = vpop.permute.xlu0 %1026
      %1028 = vrot.lane.b32.xlu0 %v672, 12
      %v1029 = vpop.permute.xlu0 %1028
      %1030 = vrot.lane.b32.xlu0 %v673, 12
      %v1031 = vpop.permute.xlu0 %1030
      %1032 = vrot.lane.b32.xlu0 %v674, 12
      %v1033 = vpop.permute.xlu0 %1032
      %1034 = vrot.lane.b32.xlu0 %v675, 12
      %v1035 = vpop.permute.xlu0 %1034
      %1036 = vrot.lane.b32.xlu0 %v676, 12
      %v1037 = vpop.permute.xlu0 %1036
      %1038 = vrot.lane.b32.xlu0 %v677, 12
      %v1039 = vpop.permute.xlu0 %1038
      %1040 = vrot.lane.b32.xlu0 %v678, 12
      %v1041 = vpop.permute.xlu0 %1040
      %1042 = vrot.lane.b32.xlu0 %v679, 12
      %v1043 = vpop.permute.xlu0 %1042
      %1044 = vrot.lane.b32.xlu0 %v680, 12
      %v1045 = vpop.permute.xlu0 %1044
      %1046 = vrot.lane.b32.xlu0 %v681, 12
      %v1047 = vpop.permute.xlu0 %1046
      %v1049 = vshrl.u32 %v681, 16
      %v1051 = vshll.u32 %v681, 16
      %v1053 = vrot.slane %v1051, 1
      %v1054 = vor.u32 %v1049, %v1053
      %v1056 = vshll.u32 %v697, 16
      %v1058 = vrot.slane %v1056, 1
      %v1059 = vsel %vm698, %v1054, %v1058
      %1060 = vrot.lane.b32.xlu0 %v722, 16
      %v1061 = vpop.permute.xlu0 %1060
      %1062 = vrot.lane.b32.xlu0 %v710, 16
      %v1063 = vpop.permute.xlu0 %1062
      %1064 = vrot.lane.b32.xlu0 %v734, 16
      %v1065 = vpop.permute.xlu0 %1064
      %1066 = vrot.lane.b32.xlu0 %v746, 16
      %v1067 = vpop.permute.xlu0 %1066
      %1068 = vrot.lane.b32.xlu0 %v758, 16
      %v1069 = vpop.permute.xlu0 %1068
      %1070 = vrot.lane.b32.xlu0 %v770, 16
      %v1071 = vpop.permute.xlu0 %1070
      %1072 = vrot.lane.b32.xlu0 %v782, 16
      %v1073 = vpop.permute.xlu0 %1072
      %1074 = vrot.lane.b32.xlu0 %v794, 16
      %v1075 = vpop.permute.xlu0 %1074
      %1076 = vrot.lane.b32.xlu0 %v806, 16
      %v1077 = vpop.permute.xlu0 %1076
      %1078 = vrot.lane.b32.xlu0 %v818, 16
      %v1079 = vpop.permute.xlu0 %1078
      %1080 = vrot.lane.b32.xlu0 %v830, 16
      %v1081 = vpop.permute.xlu0 %1080
      %1082 = vrot.lane.b32.xlu0 %v842, 16
      %v1083 = vpop.permute.xlu0 %1082
      %1084 = vrot.lane.b32.xlu0 %v854, 16
      %v1085 = vpop.permute.xlu0 %1084
      %1086 = vrot.lane.b32.xlu0 %v866, 16
      %v1087 = vpop.permute.xlu0 %1086
      %1088 = vrot.lane.b32.xlu0 %v878, 16
      %v1089 = vpop.permute.xlu0 %1088
      %1090 = vrot.lane.b32.xlu0 %v1059, 16
      %v1091 = vpop.permute.xlu0 %1090
      %v1093 = vrot.slane %v681, 1
      %v1094 = vrot.slane %v697, 1
      %v1095 = vsel %vm939, %v1093, %v1094
      %1096 = vrot.lane.b32.xlu0 %v945, 20
      %v1097 = vpop.permute.xlu0 %1096
      %1098 = vrot.lane.b32.xlu0 %v942, 20
      %v1099 = vpop.permute.xlu0 %1098
      %1100 = vrot.lane.b32.xlu0 %v948, 20
      %v1101 = vpop.permute.xlu0 %1100
      %1102 = vrot.lane.b32.xlu0 %v951, 20
      %v1103 = vpop.permute.xlu0 %1102
      %1104 = vrot.lane.b32.xlu0 %v954, 20
      %v1105 = vpop.permute.xlu0 %1104
      %1106 = vrot.lane.b32.xlu0 %v957, 20
      %v1107 = vpop.permute.xlu0 %1106
      %1108 = vrot.lane.b32.xlu0 %v960, 20
      %v1109 = vpop.permute.xlu0 %1108
      %1110 = vrot.lane.b32.xlu0 %v963, 20
      %v1111 = vpop.permute.xlu0 %1110
      %1112 = vrot.lane.b32.xlu0 %v966, 20
      %v1113 = vpop.permute.xlu0 %1112
      %1114 = vrot.lane.b32.xlu0 %v969, 20
      %v1115 = vpop.permute.xlu0 %1114
      %1116 = vrot.lane.b32.xlu0 %v972, 20
      %v1117 = vpop.permute.xlu0 %1116
      %1118 = vrot.lane.b32.xlu0 %v975, 20
      %v1119 = vpop.permute.xlu0 %1118
      %1120 = vrot.lane.b32.xlu0 %v978, 20
      %v1121 = vpop.permute.xlu0 %1120
      %1122 = vrot.lane.b32.xlu0 %v981, 20
      %v1123 = vpop.permute.xlu0 %1122
      %1124 = vrot.lane.b32.xlu0 %v984, 20
      %v1125 = vpop.permute.xlu0 %1124
      %1126 = vrot.lane.b32.xlu0 %v1095, 20
      %v1127 = vpop.permute.xlu0 %1126
      %1128 = vrot.lane.b32.xlu0 %v666, 24
      %v1129 = vpop.permute.xlu0 %1128
      %1130 = vrot.lane.b32.xlu0 %v668, 24
      %v1131 = vpop.permute.xlu0 %1130
      %1132 = vrot.lane.b32.xlu0 %v669, 24
      %v1133 = vpop.permute.xlu0 %1132
      %1134 = vrot.lane.b32.xlu0 %v670, 24
      %v1135 = vpop.permute.xlu0 %1134
      %1136 = vrot.lane.b32.xlu0 %v671, 24
      %v1137 = vpop.permute.xlu0 %1136
      %1138 = vrot.lane.b32.xlu0 %v672, 24
      %v1139 = vpop.permute.xlu0 %1138
      %1140 = vrot.lane.b32.xlu0 %v673, 24
      %v1141 = vpop.permute.xlu0 %1140
      %1142 = vrot.lane.b32.xlu0 %v674, 24
      %v1143 = vpop.permute.xlu0 %1142
      %1144 = vrot.lane.b32.xlu0 %v675, 24
      %v1145 = vpop.permute.xlu0 %1144
      %1146 = vrot.lane.b32.xlu0 %v676, 24
      %v1147 = vpop.permute.xlu0 %1146
      %1148 = vrot.lane.b32.xlu0 %v677, 24
      %v1149 = vpop.permute.xlu0 %1148
      %1150 = vrot.lane.b32.xlu0 %v678, 24
      %v1151 = vpop.permute.xlu0 %1150
      %1152 = vrot.lane.b32.xlu0 %v679, 24
      %v1153 = vpop.permute.xlu0 %1152
      %1154 = vrot.lane.b32.xlu0 %v680, 24
      %v1155 = vpop.permute.xlu0 %1154
      %1156 = vrot.lane.b32.xlu0 %v681, 24
      %v1157 = vpop.permute.xlu0 %1156
      %1158 = vrot.lane.b32.xlu0 %v710, 28
      %v1159 = vpop.permute.xlu0 %1158
      %1160 = vrot.lane.b32.xlu0 %v734, 28
      %v1161 = vpop.permute.xlu0 %1160
      %1162 = vrot.lane.b32.xlu0 %v746, 28
      %v1163 = vpop.permute.xlu0 %1162
      %1164 = vrot.lane.b32.xlu0 %v758, 28
      %v1165 = vpop.permute.xlu0 %1164
      %1166 = vrot.lane.b32.xlu0 %v770, 28
      %v1167 = vpop.permute.xlu0 %1166
      %1168 = vrot.lane.b32.xlu0 %v782, 28
      %v1169 = vpop.permute.xlu0 %1168
      %1170 = vrot.lane.b32.xlu0 %v794, 28
      %v1171 = vpop.permute.xlu0 %1170
      %1172 = vrot.lane.b32.xlu0 %v806, 28
      %v1173 = vpop.permute.xlu0 %1172
      %1174 = vrot.lane.b32.xlu0 %v818, 28
      %v1175 = vpop.permute.xlu0 %1174
      %1176 = vrot.lane.b32.xlu0 %v830, 28
      %v1177 = vpop.permute.xlu0 %1176
      %1178 = vrot.lane.b32.xlu0 %v842, 28
      %v1179 = vpop.permute.xlu0 %1178
      %1180 = vrot.lane.b32.xlu0 %v854, 28
      %v1181 = vpop.permute.xlu0 %1180
      %1182 = vrot.lane.b32.xlu0 %v866, 28
      %v1183 = vpop.permute.xlu0 %1182
      %1184 = vrot.lane.b32.xlu0 %v878, 28
      %v1185 = vpop.permute.xlu0 %1184
      %1186 = vrot.lane.b32.xlu0 %v1059, 28
      %v1187 = vpop.permute.xlu0 %1186
      %1188 = vrot.lane.b32.xlu0 %v942, 32
      %v1189 = vpop.permute.xlu0 %1188
      %1190 = vrot.lane.b32.xlu0 %v948, 32
      %v1191 = vpop.permute.xlu0 %1190
      %1192 = vrot.lane.b32.xlu0 %v951, 32
      %v1193 = vpop.permute.xlu0 %1192
      %1194 = vrot.lane.b32.xlu0 %v954, 32
      %v1195 = vpop.permute.xlu0 %1194
      %1196 = vrot.lane.b32.xlu0 %v957, 32
      %v1197 = vpop.permute.xlu0 %1196
      %1198 = vrot.lane.b32.xlu0 %v960, 32
      %v1199 = vpop.permute.xlu0 %1198
      %1200 = vrot.lane.b32.xlu0 %v963, 32
      %v1201 = vpop.permute.xlu0 %1200
      %1202 = vrot.lane.b32.xlu0 %v966, 32
      %v1203 = vpop.permute.xlu0 %1202
      %1204 = vrot.lane.b32.xlu0 %v969, 32
      %v1205 = vpop.permute.xlu0 %1204
      %1206 = vrot.lane.b32.xlu0 %v972, 32
      %v1207 = vpop.permute.xlu0 %1206
      %1208 = vrot.lane.b32.xlu0 %v975, 32
      %v1209 = vpop.permute.xlu0 %1208
      %1210 = vrot.lane.b32.xlu0 %v978, 32
      %v1211 = vpop.permute.xlu0 %1210
      %1212 = vrot.lane.b32.xlu0 %v981, 32
      %v1213 = vpop.permute.xlu0 %1212
      %1214 = vrot.lane.b32.xlu0 %v984, 32
      %v1215 = vpop.permute.xlu0 %1214
      %1216 = vrot.lane.b32.xlu0 %v1095, 32
      %v1217 = vpop.permute.xlu0 %1216
      %vm1218 = vcmask 31744
      %v1220 = vsel %vm1218, %v666, %v880
      %v1222 = vsel %vm1218, %v667, %v882
      %v1224 = vsel %vm1218, %v668, %v884
      %v1226 = vsel %vm1218, %v669, %v886
      %v1228 = vsel %vm1218, %v670, %v888
      %v1230 = vsel %vm1218, %v671, %v890
      %v1232 = vsel %vm1218, %v672, %v892
      %v1234 = vsel %vm1218, %v673, %v894
      %v1236 = vsel %vm1218, %v674, %v896
      %v1238 = vsel %vm1218, %v675, %v898
      %v1240 = vsel %vm1218, %v676, %v900
      %v1242 = vsel %vm1218, %v677, %v902
      %v1244 = vsel %vm1218, %v678, %v904
      %v1246 = vsel %vm1218, %v679, %v906
      %v1248 = vsel %vm1218, %v680, %v908
      %vm1249 = vcmask 64512
      %v1251 = vsel %vm1249, %v1220, %v986
      %v1253 = vsel %vm1249, %v1222, %v988
      %v1255 = vsel %vm1249, %v1224, %v990
      %v1257 = vsel %vm1249, %v1226, %v992
      %v1259 = vsel %vm1249, %v1228, %v994
      %v1261 = vsel %vm1249, %v1230, %v996
      %v1263 = vsel %vm1249, %v1232, %v998
      %v1265 = vsel %vm1249, %v1234, %v1000
      %v1267 = vsel %vm1249, %v1236, %v1002
      %v1269 = vsel %vm1249, %v1238, %v1004
      %v1271 = vsel %vm1249, %v1240, %v1006
      %v1273 = vsel %vm1249, %v1242, %v1008
      %v1275 = vsel %vm1249, %v1244, %v1010
      %v1277 = vsel %vm1249, %v1246, %v1012
      %v1279 = vsel %vm1249, %v1248, %v1014
      %vm1280 = vcmask 97280
      %v1282 = vsel %vm1280, %v1251, %v1017
      %v1284 = vsel %vm1280, %v1253, %v1019
      %v1286 = vsel %vm1280, %v1251, %v1021
      %v1288 = vsel %vm1280, %v1255, %v1023
      %v1290 = vsel %vm1280, %v1257, %v1025
      %v1292 = vsel %vm1280, %v1259, %v1027
      %v1294 = vsel %vm1280, %v1261, %v1029
      %v1296 = vsel %vm1280, %v1263, %v1031
      %v1298 = vsel %vm1280, %v1265, %v1033
      %v1300 = vsel %vm1280, %v1267, %v1035
      %v1302 = vsel %vm1280, %v1269, %v1037
      %v1304 = vsel %vm1280, %v1271, %v1039
      %v1306 = vsel %vm1280, %v1273, %v1041
      %v1308 = vsel %vm1280, %v1275, %v1043
      %v1310 = vsel %vm1280, %v1277, %v1045
      %v1312 = vsel %vm1280, %v1279, %v1047
      %vm1313 = vcmask 130048
      %v1315 = vsel %vm1313, %v1282, %v1061
      %v1317 = vsel %vm1313, %v1284, %v1063
      %v1319 = vsel %vm1313, %v1286, %v1065
      %v1321 = vsel %vm1313, %v1288, %v1067
      %v1323 = vsel %vm1313, %v1290, %v1069
      %v1325 = vsel %vm1313, %v1292, %v1071
      %v1327 = vsel %vm1313, %v1294, %v1073
      %v1329 = vsel %vm1313, %v1296, %v1075
      %v1331 = vsel %vm1313, %v1298, %v1077
      %v1333 = vsel %vm1313, %v1300, %v1079
      %v1335 = vsel %vm1313, %v1302, %v1081
      %v1337 = vsel %vm1313, %v1304, %v1083
      %v1339 = vsel %vm1313, %v1306, %v1085
      %v1341 = vsel %vm1313, %v1308, %v1087
      %v1343 = vsel %vm1313, %v1310, %v1089
      %v1345 = vsel %vm1313, %v1312, %v1091
      %vm1346 = vcmask 162816
      %v1348 = vsel %vm1346, %v1315, %v1097
      %v1350 = vsel %vm1346, %v1317, %v1099
      %v1352 = vsel %vm1346, %v1319, %v1101
      %v1354 = vsel %vm1346, %v1321, %v1103
      %v1356 = vsel %vm1346, %v1323, %v1105
      %v1358 = vsel %vm1346, %v1325, %v1107
      %v1360 = vsel %vm1346, %v1327, %v1109
      %v1362 = vsel %vm1346, %v1329, %v1111
      %v1364 = vsel %vm1346, %v1331, %v1113
      %v1366 = vsel %vm1346, %v1333, %v1115
      %v1368 = vsel %vm1346, %v1335, %v1117
      %v1370 = vsel %vm1346, %v1337, %v1119
      %v1372 = vsel %vm1346, %v1339, %v1121
      %v1374 = vsel %vm1346, %v1341, %v1123
      %v1376 = vsel %vm1346, %v1343, %v1125
      %v1378 = vsel %vm1346, %v1345, %v1127
      %vm1379 = vcmask 195584
      %v1381 = vsel %vm1379, %v1348, %v1129
      %v1383 = vsel %vm1379, %v1350, %v1131
      %v1385 = vsel %vm1379, %v1352, %v1133
      %v1387 = vsel %vm1379, %v1354, %v1135
      %v1389 = vsel %vm1379, %v1356, %v1137
      %v1391 = vsel %vm1379, %v1358, %v1139
      %v1393 = vsel %vm1379, %v1360, %v1141
      %v1395 = vsel %vm1379, %v1362, %v1143
      %v1397 = vsel %vm1379, %v1364, %v1145
      %v1399 = vsel %vm1379, %v1366, %v1147
      %v1401 = vsel %vm1379, %v1368, %v1149
      %v1403 = vsel %vm1379, %v1370, %v1151
      %v1405 = vsel %vm1379, %v1372, %v1153
      %v1407 = vsel %vm1379, %v1374, %v1155
      %v1409 = vsel %vm1379, %v1376, %v1157
      %v1410 = vsel %vm1379, %v1378, %v1155
      %vm1411 = vcmask 228352
      %v1413 = vsel %vm1411, %v1381, %v1159
      %v1415 = vsel %vm1411, %v1383, %v1161
      %v1417 = vsel %vm1411, %v1385, %v1163
      %v1419 = vsel %vm1411, %v1387, %v1165
      %v1421 = vsel %vm1411, %v1389, %v1167
      %v1423 = vsel %vm1411, %v1391, %v1169
      %v1425 = vsel %vm1411, %v1393, %v1171
      %v1427 = vsel %vm1411, %v1395, %v1173
      %v1429 = vsel %vm1411, %v1397, %v1175
      %v1431 = vsel %vm1411, %v1399, %v1177
      %v1433 = vsel %vm1411, %v1401, %v1179
      %v1435 = vsel %vm1411, %v1403, %v1181
      %v1437 = vsel %vm1411, %v1405, %v1183
      %v1439 = vsel %vm1411, %v1407, %v1185
      %v1441 = vsel %vm1411, %v1409, %v1187
      %v1442 = vsel %vm1411, %v1410, %v1185
      %vm1443 = vcmask 261120
      %v1445 = vsel %vm1443, %v1413, %v1189
      %v1447 = vsel %vm1443, %v1415, %v1191
      %v1449 = vsel %vm1443, %v1417, %v1193
      %v1451 = vsel %vm1443, %v1419, %v1195
      %v1453 = vsel %vm1443, %v1421, %v1197
      %v1455 = vsel %vm1443, %v1423, %v1199
      %v1457 = vsel %vm1443, %v1425, %v1201
      %v1459 = vsel %vm1443, %v1427, %v1203
      %v1461 = vsel %vm1443, %v1429, %v1205
      %v1463 = vsel %vm1443, %v1431, %v1207
      %v1465 = vsel %vm1443, %v1433, %v1209
      %v1467 = vsel %vm1443, %v1435, %v1211
      %v1469 = vsel %vm1443, %v1437, %v1213
      %v1471 = vsel %vm1443, %v1439, %v1215
      %v1473 = vsel %vm1443, %v1441, %v1217
      %v1474 = vsel %vm1443, %v1442, %v1215
      %v1475 = vld [vmem:[%s1] sm:$0xff]
      %v1476 = vld [vmem:[%s1 + $0x8] sm:$0xff]
      %v1477 = vld [vmem:[%s1 + $0x10] sm:$0xff]
      %v1478 = vld [vmem:[%s1 + $0x18] sm:$0xff]
      %v1479 = vld [vmem:[%s1 + $0x20] sm:$0x33]
      %v1485 = vunpack.c.l.b16 %v1475
      %v1486 = vunpack.c.h.b16 %v1475
      %v1487 = vunpack.c.l.b16 %v1476
      %v1488 = vunpack.c.h.b16 %v1476
      %v1489 = vunpack.c.l.b16 %v1477
      %v1490 = vunpack.c.h.b16 %v1477
      %v1491 = vunpack.c.l.b16 %v1478
      %v1492 = vunpack.c.h.b16 %v1478
      %v1493 = vunpack.c.l.b16 %v1479
      %v1494 = vunpack.c.h.b16 %v1479
      %v1495 = vpack.c.b16 %v1487, %v1485
      %v1496 = vpack.c.b16 %v1488, %v1486
      %v1497 = vpack.c.b16 %v1491, %v1489
      %v1498 = vpack.c.b16 %v1492, %v1490
      %v1499 = vpack.c.b16 %v1493, %v1493
      %v1500 = vpack.c.b16 %v1494, %v1494
      %vm1505 = vcmask 293888
      %v1506 = vsel %vm1505, %v1445, 0
      %v1508 = vsel %vm1505, %v1447, 0
      %v1510 = vsel %vm1505, %v1449, 0
      %v1512 = vsel %vm1505, %v1451, 0
      %v1514 = vsel %vm1505, %v1453, 0
      %v1516 = vsel %vm1505, %v1455, 0
      %v1518 = vsel %vm1505, %v1457, 0
      %v1520 = vsel %vm1505, %v1459, 0
      %v1522 = vsel %vm1505, %v1461, 0
      %v1524 = vsel %vm1505, %v1463, 0
      %v1526 = vsel %vm1505, %v1465, 0
      %v1528 = vsel %vm1505, %v1467, 0
      %v1530 = vsel %vm1505, %v1469, 0
      %v1532 = vsel %vm1505, %v1471, 0
      %v1534 = vsel %vm1505, %v1473, 0
      %v1536 = vsel %vm1505, %v1474, 0
      %vm1538 = vcmask 1041408
      %v1540 = vsel %vm1538, %v1499, 0
      %v1543 = vsel %vm1538, %v1500, 0
      %1545 = vmatpush.bf16.msra.mxu0 0
      %1546 = vmatpush.bf16.msra.mxu0 0
      %1547 = vmatpush.bf16.msra.mxu0 0
      %1548 = vmatpush.bf16.msra.mxu0 0
      %1549 = vmatpush.bf16.msra.mxu0 0
      %1550 = vmatpush.bf16.msra.mxu0 %v1540
      %1551 = vmatpush.bf16.msra.mxu0 %v1497
      %1552 = vmatpush.bf16.msra.mxu0 %v1495
      %1553 = vmatmul.bf16.gmra.mxu0 %v1506
      %v1554 = vpop.f32.mrf.mxu0
      %v1555 = vadd.f32 0.0, %v1554
      %v1556 = vpop.f32.mrf.mxu0
      %v1557 = vadd.f32 0.0, %v1556
      %1558 = vmatmul.bf16.gmra.mxu0 %v1508
      %v1559 = vpop.f32.mrf.mxu0
      %v1560 = vadd.f32 0.0, %v1559
      %v1561 = vpop.f32.mrf.mxu0
      %v1562 = vadd.f32 0.0, %v1561
      %1563 = vmatmul.bf16.gmra.mxu0 %v1510
      %v1564 = vpop.f32.mrf.mxu0
      %v1565 = vadd.f32 0.0, %v1564
      %v1566 = vpop.f32.mrf.mxu0
      %v1567 = vadd.f32 0.0, %v1566
      %1568 = vmatmul.bf16.gmra.mxu0 %v1512
      %v1569 = vpop.f32.mrf.mxu0
      %v1570 = vadd.f32 0.0, %v1569
      %v1571 = vpop.f32.mrf.mxu0
      %v1572 = vadd.f32 0.0, %v1571
      %1573 = vmatmul.bf16.gmra.mxu0 %v1514
      %v1574 = vpop.f32.mrf.mxu0
      %v1575 = vadd.f32 0.0, %v1574
      %v1576 = vpop.f32.mrf.mxu0
      %v1577 = vadd.f32 0.0, %v1576
      %1578 = vmatmul.bf16.gmra.mxu0 %v1516
      %v1579 = vpop.f32.mrf.mxu0
      %v1580 = vadd.f32 0.0, %v1579
      %v1581 = vpop.f32.mrf.mxu0
      %v1582 = vadd.f32 0.0, %v1581
      %1583 = vmatmul.bf16.gmra.mxu0 %v1518
      %v1584 = vpop.f32.mrf.mxu0
      %v1585 = vadd.f32 0.0, %v1584
      %v1586 = vpop.f32.mrf.mxu0
      %v1587 = vadd.f32 0.0, %v1586
      %1588 = vmatmul.bf16.gmra.mxu0 %v1520
      %v1589 = vpop.f32.mrf.mxu0
      %v1590 = vadd.f32 0.0, %v1589
      %v1591 = vpop.f32.mrf.mxu0
      %v1592 = vadd.f32 0.0, %v1591
      %1593 = vmatmul.bf16.gmra.mxu0 %v1522
      %v1594 = vpop.f32.mrf.mxu0
      %v1595 = vadd.f32 0.0, %v1594
      %v1596 = vpop.f32.mrf.mxu0
      %v1597 = vadd.f32 0.0, %v1596
      %1598 = vmatmul.bf16.gmra.mxu0 %v1524
      %v1599 = vpop.f32.mrf.mxu0
      %v1600 = vadd.f32 0.0, %v1599
      %v1601 = vpop.f32.mrf.mxu0
      %v1602 = vadd.f32 0.0, %v1601
      %1603 = vmatmul.bf16.gmra.mxu0 %v1526
      %v1604 = vpop.f32.mrf.mxu0
      %v1605 = vadd.f32 0.0, %v1604
      %v1606 = vpop.f32.mrf.mxu0
      %v1607 = vadd.f32 0.0, %v1606
      %1608 = vmatmul.bf16.gmra.mxu0 %v1528
      %v1609 = vpop.f32.mrf.mxu0
      %v1610 = vadd.f32 0.0, %v1609
      %v1611 = vpop.f32.mrf.mxu0
      %v1612 = vadd.f32 0.0, %v1611
      %1613 = vmatmul.bf16.gmra.mxu0 %v1530
      %v1614 = vpop.f32.mrf.mxu0
      %v1615 = vadd.f32 0.0, %v1614
      %v1616 = vpop.f32.mrf.mxu0
      %v1617 = vadd.f32 0.0, %v1616
      %1618 = vmatmul.bf16.gmra.mxu0 %v1532
      %v1619 = vpop.f32.mrf.mxu0
      %v1620 = vadd.f32 0.0, %v1619
      %v1621 = vpop.f32.mrf.mxu0
      %v1622 = vadd.f32 0.0, %v1621
      %1623 = vmatmul.bf16.gmra.mxu0 %v1534
      %v1624 = vpop.f32.mrf.mxu0
      %v1625 = vadd.f32 0.0, %v1624
      %v1626 = vpop.f32.mrf.mxu0
      %v1627 = vadd.f32 0.0, %v1626
      %1628 = vmatmul.bf16.gmra.mxu0 %v1536
      %v1629 = vpop.f32.mrf.mxu0
      %v1630 = vadd.f32 0.0, %v1629
      %v1631 = vpop.f32.mrf.mxu0
      %v1632 = vadd.f32 0.0, %v1631
      %1633 = vdwg.mxu0
      %1634 = vmatpush.bf16.msra.mxu0 0
      %1635 = vmatpush.bf16.msra.mxu0 0
      %1636 = vmatpush.bf16.msra.mxu0 0
      %1637 = vmatpush.bf16.msra.mxu0 0
      %1638 = vmatpush.bf16.msra.mxu0 0
      %1639 = vmatpush.bf16.msra.mxu0 %v1543
      %1640 = vmatpush.bf16.msra.mxu0 %v1498
      %1641 = vmatpush.bf16.msra.mxu0 %v1496
      %1642 = vmatmul.bf16.gmra.mxu0 %v1506
      %v1643 = vpop.f32.mrf.mxu0
      %v1644 = vadd.f32 0.0, %v1643
      %v1645 = vpop.f32.mrf.mxu0
      %v1646 = vadd.f32 0.0, %v1645
      %1647 = vmatmul.bf16.gmra.mxu0 %v1508
      %v1648 = vpop.f32.mrf.mxu0
      %v1649 = vadd.f32 0.0, %v1648
      %v1650 = vpop.f32.mrf.mxu0
      %v1651 = vadd.f32 0.0, %v1650
      %1652 = vmatmul.bf16.gmra.mxu0 %v1510
      %v1653 = vpop.f32.mrf.mxu0
      %v1654 = vadd.f32 0.0, %v1653
      %v1655 = vpop.f32.mrf.mxu0
      %v1656 = vadd.f32 0.0, %v1655
      %1657 = vmatmul.bf16.gmra.mxu0 %v1512
      %v1658 = vpop.f32.mrf.mxu0
      %v1659 = vadd.f32 0.0, %v1658
      %v1660 = vpop.f32.mrf.mxu0
      %v1661 = vadd.f32 0.0, %v1660
      %1662 = vmatmul.bf16.gmra.mxu0 %v1514
      %v1663 = vpop.f32.mrf.mxu0
      %v1664 = vadd.f32 0.0, %v1663
      %v1665 = vpop.f32.mrf.mxu0
      %v1666 = vadd.f32 0.0, %v1665
      %1667 = vmatmul.bf16.gmra.mxu0 %v1516
      %v1668 = vpop.f32.mrf.mxu0
      %v1669 = vadd.f32 0.0, %v1668
      %v1670 = vpop.f32.mrf.mxu0
      %v1671 = vadd.f32 0.0, %v1670
      %1672 = vmatmul.bf16.gmra.mxu0 %v1518
      %v1673 = vpop.f32.mrf.mxu0
      %v1674 = vadd.f32 0.0, %v1673
      %v1675 = vpop.f32.mrf.mxu0
      %v1676 = vadd.f32 0.0, %v1675
      %1677 = vmatmul.bf16.gmra.mxu0 %v1520
      %v1678 = vpop.f32.mrf.mxu0
      %v1679 = vadd.f32 0.0, %v1678
      %v1680 = vpop.f32.mrf.mxu0
      %v1681 = vadd.f32 0.0, %v1680
      %1682 = vmatmul.bf16.gmra.mxu0 %v1522
      %v1683 = vpop.f32.mrf.mxu0
      %v1684 = vadd.f32 0.0, %v1683
      %v1685 = vpop.f32.mrf.mxu0
      %v1686 = vadd.f32 0.0, %v1685
      %1687 = vmatmul.bf16.gmra.mxu0 %v1524
      %v1688 = vpop.f32.mrf.mxu0
      %v1689 = vadd.f32 0.0, %v1688
      %v1690 = vpop.f32.mrf.mxu0
      %v1691 = vadd.f32 0.0, %v1690
      %1692 = vmatmul.bf16.gmra.mxu0 %v1526
      %v1693 = vpop.f32.mrf.mxu0
      %v1694 = vadd.f32 0.0, %v1693
      %v1695 = vpop.f32.mrf.mxu0
      %v1696 = vadd.f32 0.0, %v1695
      %1697 = vmatmul.bf16.gmra.mxu0 %v1528
      %v1698 = vpop.f32.mrf.mxu0
      %v1699 = vadd.f32 0.0, %v1698
      %v1700 = vpop.f32.mrf.mxu0
      %v1701 = vadd.f32 0.0, %v1700
      %1702 = vmatmul.bf16.gmra.mxu0 %v1530
      %v1703 = vpop.f32.mrf.mxu0
      %v1704 = vadd.f32 0.0, %v1703
      %v1705 = vpop.f32.mrf.mxu0
      %v1706 = vadd.f32 0.0, %v1705
      %1707 = vmatmul.bf16.gmra.mxu0 %v1532
      %v1708 = vpop.f32.mrf.mxu0
      %v1709 = vadd.f32 0.0, %v1708
      %v1710 = vpop.f32.mrf.mxu0
      %v1711 = vadd.f32 0.0, %v1710
      %1712 = vmatmul.bf16.gmra.mxu0 %v1534
      %v1713 = vpop.f32.mrf.mxu0
      %v1714 = vadd.f32 0.0, %v1713
      %v1715 = vpop.f32.mrf.mxu0
      %v1716 = vadd.f32 0.0, %v1715
      %1717 = vmatmul.bf16.gmra.mxu0 %v1536
      %v1718 = vpop.f32.mrf.mxu0
      %v1719 = vadd.f32 0.0, %v1718
      %v1720 = vpop.f32.mrf.mxu0
      %v1721 = vadd.f32 0.0, %v1720
      %1722 = vdwg.mxu0
      %v1723 = vadd.f32 %v1555, %v1557
      %v1724 = vadd.f32 %v1723, %v1560
      %v1725 = vadd.f32 %v1724, %v1562
      %v1726 = vadd.f32 %v1725, %v1565
      %v1727 = vadd.f32 %v1726, %v1567
      %v1728 = vadd.f32 %v1727, %v1570
      %v1729 = vadd.f32 %v1728, %v1572
      %v1730 = vadd.f32 %v1729, %v1575
      %v1731 = vadd.f32 %v1730, %v1577
      %v1732 = vadd.f32 %v1731, %v1580
      %v1733 = vadd.f32 %v1732, %v1582
      %v1734 = vadd.f32 %v1733, %v1585
      %v1735 = vadd.f32 %v1734, %v1587
      %v1736 = vadd.f32 %v1735, %v1590
      %v1737 = vadd.f32 %v1736, %v1592
      %v1738 = vadd.f32 %v1737, %v1595
      %v1739 = vadd.f32 %v1738, %v1597
      %v1740 = vadd.f32 %v1739, %v1600
      %v1741 = vadd.f32 %v1740, %v1602
      %v1742 = vadd.f32 %v1741, %v1605
      %v1743 = vadd.f32 %v1742, %v1607
      %v1744 = vadd.f32 %v1743, %v1610
      %v1745 = vadd.f32 %v1744, %v1612
      %v1746 = vadd.f32 %v1745, %v1615
      %v1747 = vadd.f32 %v1746, %v1617
      %v1748 = vadd.f32 %v1747, %v1620
      %v1749 = vadd.f32 %v1748, %v1622
      %v1750 = vadd.f32 %v1749, %v1625
      %v1751 = vadd.f32 %v1750, %v1627
      %v1752 = vadd.f32 %v1751, %v1630
      %v1753 = vadd.f32 %v1752, %v1632
      %v1754 = vrot.slane %v1753, 4
      %v1755 = vadd.f32 %v1753, %v1754
      %v1756 = vrot.slane %v1755, 2
      %v1757 = vadd.f32 %v1755, %v1756
      %v1758 = vrot.slane %v1757, 1
      %v1759 = vadd.f32 %v1757, %v1758
      %v1760 = vmul.f32 %v1555, %v1555
      %v1761 = vmul.f32 %v1557, %v1557
      %v1762 = vmul.f32 %v1560, %v1560
      %v1763 = vmul.f32 %v1562, %v1562
      %v1764 = vmul.f32 %v1565, %v1565
      %v1765 = vmul.f32 %v1567, %v1567
      %v1766 = vmul.f32 %v1570, %v1570
      %v1767 = vmul.f32 %v1572, %v1572
      %v1768 = vmul.f32 %v1575, %v1575
      %v1769 = vmul.f32 %v1577, %v1577
      %v1770 = vmul.f32 %v1580, %v1580
      %v1771 = vmul.f32 %v1582, %v1582
      %v1772 = vmul.f32 %v1585, %v1585
      %v1773 = vmul.f32 %v1587, %v1587
      %v1774 = vmul.f32 %v1590, %v1590
      %v1775 = vmul.f32 %v1592, %v1592
      %v1776 = vmul.f32 %v1595, %v1595
      %v1777 = vmul.f32 %v1597, %v1597
      %v1778 = vmul.f32 %v1600, %v1600
      %v1779 = vmul.f32 %v1602, %v1602
      %v1780 = vmul.f32 %v1605, %v1605
      %v1781 = vmul.f32 %v1607, %v1607
      %v1782 = vmul.f32 %v1610, %v1610
      %v1783 = vmul.f32 %v1612, %v1612
      %v1784 = vmul.f32 %v1615, %v1615
      %v1785 = vmul.f32 %v1617, %v1617
      %v1786 = vmul.f32 %v1620, %v1620
      %v1787 = vmul.f32 %v1622, %v1622
      %v1788 = vmul.f32 %v1625, %v1625
      %v1789 = vmul.f32 %v1627, %v1627
      %v1790 = vmul.f32 %v1630, %v1630
      %v1791 = vmul.f32 %v1632, %v1632
      %v1792 = vadd.f32 %v1760, %v1761
      %v1793 = vadd.f32 %v1792, %v1762
      %v1794 = vadd.f32 %v1793, %v1763
      %v1795 = vadd.f32 %v1794, %v1764
      %v1796 = vadd.f32 %v1795, %v1765
      %v1797 = vadd.f32 %v1796, %v1766
      %v1798 = vadd.f32 %v1797, %v1767
      %v1799 = vadd.f32 %v1798, %v1768
      %v1800 = vadd.f32 %v1799, %v1769
      %v1801 = vadd.f32 %v1800, %v1770
      %v1802 = vadd.f32 %v1801, %v1771
      %v1803 = vadd.f32 %v1802, %v1772
      %v1804 = vadd.f32 %v1803, %v1773
      %v1805 = vadd.f32 %v1804, %v1774
      %v1806 = vadd.f32 %v1805, %v1775
      %v1807 = vadd.f32 %v1806, %v1776
      %v1808 = vadd.f32 %v1807, %v1777
      %v1809 = vadd.f32 %v1808, %v1778
      %v1810 = vadd.f32 %v1809, %v1779
      %v1811 = vadd.f32 %v1810, %v1780
      %v1812 = vadd.f32 %v1811, %v1781
      %v1813 = vadd.f32 %v1812, %v1782
      %v1814 = vadd.f32 %v1813, %v1783
      %v1815 = vadd.f32 %v1814, %v1784
      %v1816 = vadd.f32 %v1815, %v1785
      %v1817 = vadd.f32 %v1816, %v1786
      %v1818 = vadd.f32 %v1817, %v1787
      %v1819 = vadd.f32 %v1818, %v1788
      %v1820 = vadd.f32 %v1819, %v1789
      %v1821 = vadd.f32 %v1820, %v1790
      %v1822 = vadd.f32 %v1821, %v1791
      %v1823 = vrot.slane %v1822, 4
      %v1824 = vadd.f32 %v1822, %v1823
      %v1825 = vrot.slane %v1824, 2
      %v1826 = vadd.f32 %v1824, %v1825
      %v1827 = vrot.slane %v1826, 1
      %v1828 = vadd.f32 %v1826, %v1827
      %v1829 = vmul.f32 %v1759, 0.00390625
      %v1830 = vmul.f32 %v1828, 0.00390625
      %v1831 = vmul.f32 %v1829, %v1829
      %v1832 = vsub.f32 %v1830, %v1831
      %v1833 = vmax.f32 %v1832, 0.0
      %v1834 = vadd.f32 %v1833, 1e-05
      %v1835 = vrsqrt.pop %v1834
      %v1836 = vmul.f32 %v1835, %v1834
      %v1837 = vmul.f32 %v1836, %v1835
      %v1838 = vmul.f32 0.5, %v1837
      %v1839 = vsub.f32 1.5, %v1838
      %v1840 = vmul.f32 %v1835, %v1839
      %vm1841 = vweird.f32 %v1834
      %vm1842 = vweird.f32 %v1835
      %vm1843 = vmor %vm1841, %vm1842
      %v1844 = vsel %vm1843, %v1835, %v1840
      %v1845 = vmul.f32 %v1829, %v1844
      %v1846 = vmul.f32 %v1555, %v1844
      %v1847 = vmul.f32 %v1557, %v1844
      %v1848 = vmul.f32 %v1560, %v1844
      %v1849 = vmul.f32 %v1562, %v1844
      %v1850 = vmul.f32 %v1565, %v1844
      %v1851 = vmul.f32 %v1567, %v1844
      %v1852 = vmul.f32 %v1570, %v1844
      %v1853 = vmul.f32 %v1572, %v1844
      %v1854 = vmul.f32 %v1575, %v1844
      %v1855 = vmul.f32 %v1577, %v1844
      %v1856 = vmul.f32 %v1580, %v1844
      %v1857 = vmul.f32 %v1582, %v1844
      %v1858 = vmul.f32 %v1585, %v1844
      %v1859 = vmul.f32 %v1587, %v1844
      %v1860 = vmul.f32 %v1590, %v1844
      %v1861 = vmul.f32 %v1592, %v1844
      %v1862 = vmul.f32 %v1595, %v1844
      %v1863 = vmul.f32 %v1597, %v1844
      %v1864 = vmul.f32 %v1600, %v1844
      %v1865 = vmul.f32 %v1602, %v1844
      %v1866 = vmul.f32 %v1605, %v1844
      %v1867 = vmul.f32 %v1607, %v1844
      %v1868 = vmul.f32 %v1610, %v1844
      %v1869 = vmul.f32 %v1612, %v1844
      %v1870 = vmul.f32 %v1615, %v1844
      %v1871 = vmul.f32 %v1617, %v1844
      %v1872 = vmul.f32 %v1620, %v1844
      %v1873 = vmul.f32 %v1622, %v1844
      %v1874 = vmul.f32 %v1625, %v1844
      %v1875 = vmul.f32 %v1627, %v1844
      %v1876 = vmul.f32 %v1630, %v1844
      %v1877 = vmul.f32 %v1632, %v1844
      %v1878 = vsub.f32 %v1846, %v1845
      %v1879 = vsub.f32 %v1847, %v1845
      %v1880 = vsub.f32 %v1848, %v1845
      %v1881 = vsub.f32 %v1849, %v1845
      %v1882 = vsub.f32 %v1850, %v1845
      %v1883 = vsub.f32 %v1851, %v1845
      %v1884 = vsub.f32 %v1852, %v1845
      %v1885 = vsub.f32 %v1853, %v1845
      %v1886 = vsub.f32 %v1854, %v1845
      %v1887 = vsub.f32 %v1855, %v1845
      %v1888 = vsub.f32 %v1856, %v1845
      %v1889 = vsub.f32 %v1857, %v1845
      %v1890 = vsub.f32 %v1858, %v1845
      %v1891 = vsub.f32 %v1859, %v1845
      %v1892 = vsub.f32 %v1860, %v1845
      %v1893 = vsub.f32 %v1861, %v1845
      %v1894 = vsub.f32 %v1862, %v1845
      %v1895 = vsub.f32 %v1863, %v1845
      %v1896 = vsub.f32 %v1864, %v1845
      %v1897 = vsub.f32 %v1865, %v1845
      %v1898 = vsub.f32 %v1866, %v1845
      %v1899 = vsub.f32 %v1867, %v1845
      %v1900 = vsub.f32 %v1868, %v1845
      %v1901 = vsub.f32 %v1869, %v1845
      %v1902 = vsub.f32 %v1870, %v1845
      %v1903 = vsub.f32 %v1871, %v1845
      %v1904 = vsub.f32 %v1872, %v1845
      %v1905 = vsub.f32 %v1873, %v1845
      %v1906 = vsub.f32 %v1874, %v1845
      %v1907 = vsub.f32 %v1875, %v1845
      %v1908 = vsub.f32 %v1876, %v1845
      %v1909 = vsub.f32 %v1877, %v1845
      %v1910 = vmax.f32 %v1878, 0.0
      %v1911 = vmax.f32 %v1879, 0.0
      %v1912 = vmax.f32 %v1880, 0.0
      %v1913 = vmax.f32 %v1881, 0.0
      %v1914 = vmax.f32 %v1882, 0.0
      %v1915 = vmax.f32 %v1883, 0.0
      %v1916 = vmax.f32 %v1884, 0.0
      %v1917 = vmax.f32 %v1885, 0.0
      %v1918 = vmax.f32 %v1886, 0.0
      %v1919 = vmax.f32 %v1887, 0.0
      %v1920 = vmax.f32 %v1888, 0.0
      %v1921 = vmax.f32 %v1889, 0.0
      %v1922 = vmax.f32 %v1890, 0.0
      %v1923 = vmax.f32 %v1891, 0.0
      %v1924 = vmax.f32 %v1892, 0.0
      %v1925 = vmax.f32 %v1893, 0.0
      %v1926 = vmax.f32 %v1894, 0.0
      %v1927 = vmax.f32 %v1895, 0.0
      %v1928 = vmax.f32 %v1896, 0.0
      %v1929 = vmax.f32 %v1897, 0.0
      %v1930 = vmax.f32 %v1898, 0.0
      %v1931 = vmax.f32 %v1899, 0.0
      %v1932 = vmax.f32 %v1900, 0.0
      %v1933 = vmax.f32 %v1901, 0.0
      %v1934 = vmax.f32 %v1902, 0.0
      %v1935 = vmax.f32 %v1903, 0.0
      %v1936 = vmax.f32 %v1904, 0.0
      %v1937 = vmax.f32 %v1905, 0.0
      %v1938 = vmax.f32 %v1906, 0.0
      %v1939 = vmax.f32 %v1907, 0.0
      %v1940 = vmax.f32 %v1908, 0.0
      %v1941 = vmax.f32 %v1909, 0.0
      %v1942 = vpack.c.bf16 %v1910, %v1910
      %v1943 = vpack.c.bf16 %v1911, %v1911
      %v1944 = vpack.c.bf16 %v1912, %v1912
      %v1945 = vpack.c.bf16 %v1913, %v1913
      %v1946 = vpack.c.bf16 %v1914, %v1914
      %v1947 = vpack.c.bf16 %v1915, %v1915
      %v1948 = vpack.c.bf16 %v1916, %v1916
      %v1949 = vpack.c.bf16 %v1917, %v1917
      %v1950 = vpack.c.bf16 %v1918, %v1918
      %v1951 = vpack.c.bf16 %v1919, %v1919
      %v1952 = vpack.c.bf16 %v1920, %v1920
      %v1953 = vpack.c.bf16 %v1921, %v1921
      %v1954 = vpack.c.bf16 %v1922, %v1922
      %v1955 = vpack.c.bf16 %v1923, %v1923
      %v1956 = vpack.c.bf16 %v1924, %v1924
      %v1957 = vpack.c.bf16 %v1925, %v1925
      %v1958 = vpack.c.bf16 %v1926, %v1926
      %v1959 = vpack.c.bf16 %v1927, %v1927
      %v1960 = vpack.c.bf16 %v1928, %v1928
      %v1961 = vpack.c.bf16 %v1929, %v1929
      %v1962 = vpack.c.bf16 %v1930, %v1930
      %v1963 = vpack.c.bf16 %v1931, %v1931
      %v1964 = vpack.c.bf16 %v1932, %v1932
      %v1965 = vpack.c.bf16 %v1933, %v1933
      %v1966 = vpack.c.bf16 %v1934, %v1934
      %v1967 = vpack.c.bf16 %v1935, %v1935
      %v1968 = vpack.c.bf16 %v1936, %v1936
      %v1969 = vpack.c.bf16 %v1937, %v1937
      %v1970 = vpack.c.bf16 %v1938, %v1938
      %v1971 = vpack.c.bf16 %v1939, %v1939
      %v1972 = vpack.c.bf16 %v1940, %v1940
      %v1973 = vpack.c.bf16 %v1941, %v1941
      %v1990 = vunpack.c.l.b16 %v1944
      %v1991 = vunpack.c.l.b16 %v1942
      %v1992 = vunpack.c.l.b16 %v1946
      %v1993 = vunpack.c.l.b16 %v1948
      %v1994 = vunpack.c.l.b16 %v1950
      %v1995 = vunpack.c.l.b16 %v1952
      %v1996 = vunpack.c.l.b16 %v1954
      %v1997 = vunpack.c.l.b16 %v1956
      %v1998 = vunpack.c.l.b16 %v1958
      %v1999 = vunpack.c.l.b16 %v1960
      %v2000 = vunpack.c.l.b16 %v1962
      %v2001 = vunpack.c.l.b16 %v1964
      %v2002 = vunpack.c.l.b16 %v1966
      %v2003 = vunpack.c.l.b16 %v1968
      %v2004 = vunpack.c.l.b16 %v1970
      %v2005 = vunpack.c.l.b16 %v1972
      %v2006 = vpack.c.b16 %v1990, %v1990
      %v2007 = vpack.c.b16 %v1991, %v1991
      %v2008 = vpack.c.b16 %v1992, %v1992
      %v2009 = vpack.c.b16 %v1993, %v1993
      %v2010 = vpack.c.b16 %v1994, %v1994
      %v2011 = vpack.c.b16 %v1995, %v1995
      %v2012 = vpack.c.b16 %v1996, %v1996
      %v2013 = vpack.c.b16 %v1997, %v1997
      %v2014 = vpack.c.b16 %v1998, %v1998
      %v2015 = vpack.c.b16 %v1999, %v1999
      %v2016 = vpack.c.b16 %v2000, %v2000
      %v2017 = vpack.c.b16 %v2001, %v2001
      %v2018 = vpack.c.b16 %v2002, %v2002
      %v2019 = vpack.c.b16 %v2003, %v2003
      %v2020 = vpack.c.b16 %v2004, %v2004
      %v2021 = vpack.c.b16 %v2005, %v2005
      %v2023 = vshrl.u32 %v2006, 16
      %v2026 = vshrl.u32 %v2007, 16
      %v2029 = vshrl.u32 %v2008, 16
      %v2032 = vshrl.u32 %v2009, 16
      %v2035 = vshrl.u32 %v2010, 16
      %v2038 = vshrl.u32 %v2011, 16
      %v2041 = vshrl.u32 %v2012, 16
      %v2044 = vshrl.u32 %v2013, 16
      %v2047 = vshrl.u32 %v2014, 16
      %v2050 = vshrl.u32 %v2015, 16
      %v2053 = vshrl.u32 %v2016, 16
      %v2056 = vshrl.u32 %v2017, 16
      %v2059 = vshrl.u32 %v2018, 16
      %v2062 = vshrl.u32 %v2019, 16
      %v2065 = vshrl.u32 %v2020, 16
      %v2068 = vshrl.u32 %v2021, 16
      %v2102 = vunpack.c.l.b16 %v1945
      %v2103 = vunpack.c.l.b16 %v1943
      %v2104 = vunpack.c.l.b16 %v1947
      %v2105 = vunpack.c.l.b16 %v1949
      %v2106 = vunpack.c.l.b16 %v1951
      %v2107 = vunpack.c.l.b16 %v1953
      %v2108 = vunpack.c.l.b16 %v1955
      %v2109 = vunpack.c.l.b16 %v1957
      %v2110 = vunpack.c.l.b16 %v1959
      %v2111 = vunpack.c.l.b16 %v1961
      %v2112 = vunpack.c.l.b16 %v1963
      %v2113 = vunpack.c.l.b16 %v1965
      %v2114 = vunpack.c.l.b16 %v1967
      %v2115 = vunpack.c.l.b16 %v1969
      %v2116 = vunpack.c.l.b16 %v1971
      %v2117 = vunpack.c.l.b16 %v1973
      %v2118 = vpack.c.b16 %v2102, %v1990
      %v2119 = vpack.c.b16 %v2103, %v1991
      %v2120 = vpack.c.b16 %v2104, %v1992
      %v2121 = vpack.c.b16 %v2105, %v1993
      %v2122 = vpack.c.b16 %v2106, %v1994
      %v2123 = vpack.c.b16 %v2107, %v1995
      %v2124 = vpack.c.b16 %v2108, %v1996
      %v2125 = vpack.c.b16 %v2109, %v1997
      %v2126 = vpack.c.b16 %v2110, %v1998
      %v2127 = vpack.c.b16 %v2111, %v1999
      %v2128 = vpack.c.b16 %v2112, %v2000
      %v2129 = vpack.c.b16 %v2113, %v2001
      %v2130 = vpack.c.b16 %v2114, %v2002
      %v2131 = vpack.c.b16 %v2115, %v2003
      %v2132 = vpack.c.b16 %v2116, %v2004
      %v2133 = vpack.c.b16 %v2117, %v2005
      %v2135 = vshrl.u32 %v2118, 16
      %v2137 = vrot.slane %v2135, 7
      %v2138 = vshll.u32 %v2118, 16
      %v2140 = vor.u32 %v2137, %v2138
      %v2142 = vshrl.u32 %v2119, 16
      %v2144 = vrot.slane %v2142, 7
      %v2145 = vshll.u32 %v2119, 16
      %v2147 = vor.u32 %v2144, %v2145
      %v2149 = vshrl.u32 %v2120, 16
      %v2151 = vrot.slane %v2149, 7
      %v2152 = vshll.u32 %v2120, 16
      %v2154 = vor.u32 %v2151, %v2152
      %v2156 = vshrl.u32 %v2121, 16
      %v2158 = vrot.slane %v2156, 7
      %v2159 = vshll.u32 %v2121, 16
      %v2161 = vor.u32 %v2158, %v2159
      %v2163 = vshrl.u32 %v2122, 16
      %v2165 = vrot.slane %v2163, 7
      %v2166 = vshll.u32 %v2122, 16
      %v2168 = vor.u32 %v2165, %v2166
      %v2170 = vshrl.u32 %v2123, 16
      %v2172 = vrot.slane %v2170, 7
      %v2173 = vshll.u32 %v2123, 16
      %v2175 = vor.u32 %v2172, %v2173
      %v2177 = vshrl.u32 %v2124, 16
      %v2179 = vrot.slane %v2177, 7
      %v2180 = vshll.u32 %v2124, 16
      %v2182 = vor.u32 %v2179, %v2180
      %v2184 = vshrl.u32 %v2125, 16
      %v2186 = vrot.slane %v2184, 7
      %v2187 = vshll.u32 %v2125, 16
      %v2189 = vor.u32 %v2186, %v2187
      %v2191 = vshrl.u32 %v2126, 16
      %v2193 = vrot.slane %v2191, 7
      %v2194 = vshll.u32 %v2126, 16
      %v2196 = vor.u32 %v2193, %v2194
      %v2198 = vshrl.u32 %v2127, 16
      %v2200 = vrot.slane %v2198, 7
      %v2201 = vshll.u32 %v2127, 16
      %v2203 = vor.u32 %v2200, %v2201
      %v2205 = vshrl.u32 %v2128, 16
      %v2207 = vrot.slane %v2205, 7
      %v2208 = vshll.u32 %v2128, 16
      %v2210 = vor.u32 %v2207, %v2208
      %v2212 = vshrl.u32 %v2129, 16
      %v2214 = vrot.slane %v2212, 7
      %v2215 = vshll.u32 %v2129, 16
      %v2217 = vor.u32 %v2214, %v2215
      %v2219 = vshrl.u32 %v2130, 16
      %v2221 = vrot.slane %v2219, 7
      %v2222 = vshll.u32 %v2130, 16
      %v2224 = vor.u32 %v2221, %v2222
      %v2226 = vshrl.u32 %v2131, 16
      %v2228 = vrot.slane %v2226, 7
      %v2229 = vshll.u32 %v2131, 16
      %v2231 = vor.u32 %v2228, %v2229
      %v2233 = vshrl.u32 %v2132, 16
      %v2235 = vrot.slane %v2233, 7
      %v2236 = vshll.u32 %v2132, 16
      %v2238 = vor.u32 %v2235, %v2236
      %v2240 = vshrl.u32 %v2133, 16
      %v2242 = vrot.slane %v2240, 7
      %v2243 = vshll.u32 %v2133, 16
      %v2245 = vor.u32 %v2242, %v2243
      %v2278 = vpack.c.b16 %v2102, %v2102
      %v2279 = vpack.c.b16 %v2103, %v2103
      %v2280 = vpack.c.b16 %v2104, %v2104
      %v2281 = vpack.c.b16 %v2105, %v2105
      %v2282 = vpack.c.b16 %v2106, %v2106
      %v2283 = vpack.c.b16 %v2107, %v2107
      %v2284 = vpack.c.b16 %v2108, %v2108
      %v2285 = vpack.c.b16 %v2109, %v2109
      %v2286 = vpack.c.b16 %v2110, %v2110
      %v2287 = vpack.c.b16 %v2111, %v2111
      %v2288 = vpack.c.b16 %v2112, %v2112
      %v2289 = vpack.c.b16 %v2113, %v2113
      %v2290 = vpack.c.b16 %v2114, %v2114
      %v2291 = vpack.c.b16 %v2115, %v2115
      %v2292 = vpack.c.b16 %v2116, %v2116
      %v2293 = vpack.c.b16 %v2117, %v2117
      %v2295 = vshll.u32 %v2278, 16
      %v2297 = vrot.slane %v2295, 3
      %v2299 = vshll.u32 %v2279, 16
      %v2301 = vrot.slane %v2299, 3
      %v2303 = vshll.u32 %v2280, 16
      %v2305 = vrot.slane %v2303, 3
      %v2307 = vshll.u32 %v2281, 16
      %v2309 = vrot.slane %v2307, 3
      %v2311 = vshll.u32 %v2282, 16
      %v2313 = vrot.slane %v2311, 3
      %v2315 = vshll.u32 %v2283, 16
      %v2317 = vrot.slane %v2315, 3
      %v2319 = vshll.u32 %v2284, 16
      %v2321 = vrot.slane %v2319, 3
      %v2323 = vshll.u32 %v2285, 16
      %v2325 = vrot.slane %v2323, 3
      %v2327 = vshll.u32 %v2286, 16
      %v2329 = vrot.slane %v2327, 3
      %v2331 = vshll.u32 %v2287, 16
      %v2333 = vrot.slane %v2331, 3
      %v2335 = vshll.u32 %v2288, 16
      %v2337 = vrot.slane %v2335, 3
      %v2339 = vshll.u32 %v2289, 16
      %v2341 = vrot.slane %v2339, 3
      %v2343 = vshll.u32 %v2290, 16
      %v2345 = vrot.slane %v2343, 3
      %v2347 = vshll.u32 %v2291, 16
      %v2349 = vrot.slane %v2347, 3
      %v2351 = vshll.u32 %v2292, 16
      %v2353 = vrot.slane %v2351, 3
      %v2355 = vshll.u32 %v2293, 16
      %v2357 = vrot.slane %v2355, 3
      %v2374 = vsel %vm665, %v2023, %v2140
      %v2375 = vsel %vm665, %v2026, %v2147
      %v2376 = vsel %vm665, %v2029, %v2154
      %v2377 = vsel %vm665, %v2032, %v2161
      %v2378 = vsel %vm665, %v2035, %v2168
      %v2379 = vsel %vm665, %v2038, %v2175
      %v2380 = vsel %vm665, %v2041, %v2182
      %v2381 = vsel %vm665, %v2044, %v2189
      %v2382 = vsel %vm665, %v2047, %v2196
      %v2383 = vsel %vm665, %v2050, %v2203
      %v2384 = vsel %vm665, %v2053, %v2210
      %v2385 = vsel %vm665, %v2056, %v2217
      %v2386 = vsel %vm665, %v2059, %v2224
      %v2387 = vsel %vm665, %v2062, %v2231
      %v2388 = vsel %vm665, %v2065, %v2238
      %v2389 = vsel %vm665, %v2068, %v2245
      %v2390 = vsel %vm665, %v2137, %v2297
      %v2391 = vsel %vm665, %v2144, %v2301
      %v2392 = vsel %vm665, %v2151, %v2305
      %v2393 = vsel %vm665, %v2158, %v2309
      %v2394 = vsel %vm665, %v2165, %v2313
      %v2395 = vsel %vm665, %v2172, %v2317
      %v2396 = vsel %vm665, %v2179, %v2321
      %v2397 = vsel %vm665, %v2186, %v2325
      %v2398 = vsel %vm665, %v2193, %v2329
      %v2399 = vsel %vm665, %v2200, %v2333
      %v2400 = vsel %vm665, %v2207, %v2337
      %v2401 = vsel %vm665, %v2214, %v2341
      %v2402 = vsel %vm665, %v2221, %v2345
      %v2403 = vsel %vm665, %v2228, %v2349
      %v2404 = vsel %vm665, %v2235, %v2353
      %v2405 = vsel %vm665, %v2242, %v2357
      %v2407 = vshrl.u32 %v2374, 16
      %v2409 = vshll.u32 %v2374, 16
      %v2411 = vrot.slane %v2409, 1
      %v2412 = vor.u32 %v2407, %v2411
      %v2414 = vshll.u32 %v2390, 16
      %v2416 = vrot.slane %v2414, 1
      %v2417 = vsel %vm698, %v2412, %v2416
      %v2419 = vshrl.u32 %v2375, 16
      %v2421 = vshll.u32 %v2375, 16
      %v2423 = vrot.slane %v2421, 1
      %v2424 = vor.u32 %v2419, %v2423
      %v2426 = vshll.u32 %v2391, 16
      %v2428 = vrot.slane %v2426, 1
      %v2429 = vsel %vm698, %v2424, %v2428
      %v2431 = vshrl.u32 %v2376, 16
      %v2433 = vshll.u32 %v2376, 16
      %v2435 = vrot.slane %v2433, 1
      %v2436 = vor.u32 %v2431, %v2435
      %v2438 = vshll.u32 %v2392, 16
      %v2440 = vrot.slane %v2438, 1
      %v2441 = vsel %vm698, %v2436, %v2440
      %v2443 = vshrl.u32 %v2377, 16
      %v2445 = vshll.u32 %v2377, 16
      %v2447 = vrot.slane %v2445, 1
      %v2448 = vor.u32 %v2443, %v2447
      %v2450 = vshll.u32 %v2393, 16
      %v2452 = vrot.slane %v2450, 1
      %v2453 = vsel %vm698, %v2448, %v2452
      %v2455 = vshrl.u32 %v2378, 16
      %v2457 = vshll.u32 %v2378, 16
      %v2459 = vrot.slane %v2457, 1
      %v2460 = vor.u32 %v2455, %v2459
      %v2462 = vshll.u32 %v2394, 16
      %v2464 = vrot.slane %v2462, 1
      %v2465 = vsel %vm698, %v2460, %v2464
      %v2467 = vshrl.u32 %v2379, 16
      %v2469 = vshll.u32 %v2379, 16
      %v2471 = vrot.slane %v2469, 1
      %v2472 = vor.u32 %v2467, %v2471
      %v2474 = vshll.u32 %v2395, 16
      %v2476 = vrot.slane %v2474, 1
      %v2477 = vsel %vm698, %v2472, %v2476
      %v2479 = vshrl.u32 %v2380, 16
      %v2481 = vshll.u32 %v2380, 16
      %v2483 = vrot.slane %v2481, 1
      %v2484 = vor.u32 %v2479, %v2483
      %v2486 = vshll.u32 %v2396, 16
      %v2488 = vrot.slane %v2486, 1
      %v2489 = vsel %vm698, %v2484, %v2488
      %v2491 = vshrl.u32 %v2381, 16
      %v2493 = vshll.u32 %v2381, 16
      %v2495 = vrot.slane %v2493, 1
      %v2496 = vor.u32 %v2491, %v2495
      %v2498 = vshll.u32 %v2397, 16
      %v2500 = vrot.slane %v2498, 1
      %v2501 = vsel %vm698, %v2496, %v2500
      %v2503 = vshrl.u32 %v2382, 16
      %v2505 = vshll.u32 %v2382, 16
      %v2507 = vrot.slane %v2505, 1
      %v2508 = vor.u32 %v2503, %v2507
      %v2510 = vshll.u32 %v2398, 16
      %v2512 = vrot.slane %v2510, 1
      %v2513 = vsel %vm698, %v2508, %v2512
      %v2515 = vshrl.u32 %v2383, 16
      %v2517 = vshll.u32 %v2383, 16
      %v2519 = vrot.slane %v2517, 1
      %v2520 = vor.u32 %v2515, %v2519
      %v2522 = vshll.u32 %v2399, 16
      %v2524 = vrot.slane %v2522, 1
      %v2525 = vsel %vm698, %v2520, %v2524
      %v2527 = vshrl.u32 %v2384, 16
      %v2529 = vshll.u32 %v2384, 16
      %v2531 = vrot.slane %v2529, 1
      %v2532 = vor.u32 %v2527, %v2531
      %v2534 = vshll.u32 %v2400, 16
      %v2536 = vrot.slane %v2534, 1
      %v2537 = vsel %vm698, %v2532, %v2536
      %v2539 = vshrl.u32 %v2385, 16
      %v2541 = vshll.u32 %v2385, 16
      %v2543 = vrot.slane %v2541, 1
      %v2544 = vor.u32 %v2539, %v2543
      %v2546 = vshll.u32 %v2401, 16
      %v2548 = vrot.slane %v2546, 1
      %v2549 = vsel %vm698, %v2544, %v2548
      %v2551 = vshrl.u32 %v2386, 16
      %v2553 = vshll.u32 %v2386, 16
      %v2555 = vrot.slane %v2553, 1
      %v2556 = vor.u32 %v2551, %v2555
      %v2558 = vshll.u32 %v2402, 16
      %v2560 = vrot.slane %v2558, 1
      %v2561 = vsel %vm698, %v2556, %v2560
      %v2563 = vshrl.u32 %v2387, 16
      %v2565 = vshll.u32 %v2387, 16
      %v2567 = vrot.slane %v2565, 1
      %v2568 = vor.u32 %v2563, %v2567
      %v2570 = vshll.u32 %v2403, 16
      %v2572 = vrot.slane %v2570, 1
      %v2573 = vsel %vm698, %v2568, %v2572
      %v2575 = vshrl.u32 %v2388, 16
      %v2577 = vshll.u32 %v2388, 16
      %v2579 = vrot.slane %v2577, 1
      %v2580 = vor.u32 %v2575, %v2579
      %v2582 = vshll.u32 %v2404, 16
      %v2584 = vrot.slane %v2582, 1
      %v2585 = vsel %vm698, %v2580, %v2584
      %v2601 = vld [vmem:[%s2] sm:$0xf]
      %v2602 = vld [vmem:[%s2 + $0x4] sm:$0xf]
      %v2603 = vld [vmem:[%s2 + $0x8] sm:$0xf]
      %v2604 = vld [vmem:[%s2 + $0xc] sm:$0xf]
      %v2605 = vld [vmem:[%s2 + $0x10] sm:$0xf]
      %v2606 = vld [vmem:[%s2 + $0x14] sm:$0xf]
      %v2607 = vld [vmem:[%s2 + $0x18] sm:$0xf]
      %v2608 = vld [vmem:[%s2 + $0x1c] sm:$0xf]
      %v2609 = vld [vmem:[%s2 + $0x20] sm:$0xf]
      %v2610 = vld [vmem:[%s2 + $0x24] sm:$0xf]
      %v2611 = vld [vmem:[%s2 + $0x28] sm:$0xf]
      %v2612 = vld [vmem:[%s2 + $0x2c] sm:$0xf]
      %v2613 = vld [vmem:[%s2 + $0x30] sm:$0xf]
      %v2614 = vld [vmem:[%s2 + $0x34] sm:$0xf]
      %v2615 = vld [vmem:[%s2 + $0x38] sm:$0xf]
      %v2616 = vld [vmem:[%s2 + $0x3c] sm:$0xf]
      %v2617 = vld [vmem:[%s2 + $0x40] sm:$0xf]
      %v2618 = vld [vmem:[%s2 + $0x44] sm:$0xf]
      %v2619 = vld [vmem:[%s2 + $0x48] sm:$0xf]
      %v2620 = vld [vmem:[%s2 + $0x4c] sm:$0xf]
      %v2621 = vld [vmem:[%s2 + $0x50] sm:$0xf]
      %v2622 = vld [vmem:[%s2 + $0x54] sm:$0xf]
      %v2623 = vld [vmem:[%s2 + $0x58] sm:$0xf]
      %v2624 = vld [vmem:[%s2 + $0x5c] sm:$0xf]
      %v2625 = vld [vmem:[%s2 + $0x60] sm:$0xf]
      %v2626 = vld [vmem:[%s2 + $0x64] sm:$0xf]
      %v2627 = vld [vmem:[%s2 + $0x68] sm:$0xf]
      %v2628 = vld [vmem:[%s2 + $0x6c] sm:$0xf]
      %v2629 = vld [vmem:[%s2 + $0x70] sm:$0xf]
      %v2630 = vld [vmem:[%s2 + $0x74] sm:$0xf]
      %v2631 = vld [vmem:[%s2 + $0x78] sm:$0xf]
      %v2632 = vld [vmem:[%s2 + $0x7c] sm:$0xf]
      %v2663 = vrot.slane %v2374, 1
      %v2664 = vrot.slane %v2390, 1
      %v2665 = vsel %vm939, %v2663, %v2664
      %v2666 = vrot.slane %v2375, 1
      %v2667 = vrot.slane %v2391, 1
      %v2668 = vsel %vm939, %v2666, %v2667
      %v2669 = vrot.slane %v2376, 1
      %v2670 = vrot.slane %v2392, 1
      %v2671 = vsel %vm939, %v2669, %v2670
      %v2672 = vrot.slane %v2377, 1
      %v2673 = vrot.slane %v2393, 1
      %v2674 = vsel %vm939, %v2672, %v2673
      %v2675 = vrot.slane %v2378, 1
      %v2676 = vrot.slane %v2394, 1
      %v2677 = vsel %vm939, %v2675, %v2676
      %v2678 = vrot.slane %v2379, 1
      %v2679 = vrot.slane %v2395, 1
      %v2680 = vsel %vm939, %v2678, %v2679
      %v2681 = vrot.slane %v2380, 1
      %v2682 = vrot.slane %v2396, 1
      %v2683 = vsel %vm939, %v2681, %v2682
      %v2684 = vrot.slane %v2381, 1
      %v2685 = vrot.slane %v2397, 1
      %v2686 = vsel %vm939, %v2684, %v2685
      %v2687 = vrot.slane %v2382, 1
      %v2688 = vrot.slane %v2398, 1
      %v2689 = vsel %vm939, %v2687, %v2688
      %v2690 = vrot.slane %v2383, 1
      %v2691 = vrot.slane %v2399, 1
      %v2692 = vsel %vm939, %v2690, %v2691
      %v2693 = vrot.slane %v2384, 1
      %v2694 = vrot.slane %v2400, 1
      %v2695 = vsel %vm939, %v2693, %v2694
      %v2696 = vrot.slane %v2385, 1
      %v2697 = vrot.slane %v2401, 1
      %v2698 = vsel %vm939, %v2696, %v2697
      %v2699 = vrot.slane %v2386, 1
      %v2700 = vrot.slane %v2402, 1
      %v2701 = vsel %vm939, %v2699, %v2700
      %v2702 = vrot.slane %v2387, 1
      %v2703 = vrot.slane %v2403, 1
      %v2704 = vsel %vm939, %v2702, %v2703
      %v2705 = vrot.slane %v2388, 1
      %v2706 = vrot.slane %v2404, 1
      %v2707 = vsel %vm939, %v2705, %v2706
      %v2723 = vld [vmem:[%s2 + $0x80] sm:$0xf]
      %v2724 = vld [vmem:[%s2 + $0x84] sm:$0xf]
      %v2725 = vld [vmem:[%s2 + $0x88] sm:$0xf]
      %v2726 = vld [vmem:[%s2 + $0x8c] sm:$0xf]
      %v2727 = vld [vmem:[%s2 + $0x90] sm:$0xf]
      %v2728 = vld [vmem:[%s2 + $0x94] sm:$0xf]
      %v2729 = vld [vmem:[%s2 + $0x98] sm:$0xf]
      %v2730 = vld [vmem:[%s2 + $0x9c] sm:$0xf]
      %v2731 = vld [vmem:[%s2 + $0xa0] sm:$0xf]
      %v2732 = vld [vmem:[%s2 + $0xa4] sm:$0xf]
      %v2733 = vld [vmem:[%s2 + $0xa8] sm:$0xf]
      %v2734 = vld [vmem:[%s2 + $0xac] sm:$0xf]
      %v2735 = vld [vmem:[%s2 + $0xb0] sm:$0xf]
      %v2736 = vld [vmem:[%s2 + $0xb4] sm:$0xf]
      %v2737 = vld [vmem:[%s2 + $0xb8] sm:$0xf]
      %v2738 = vld [vmem:[%s2 + $0xbc] sm:$0xf]
      %v2739 = vld [vmem:[%s2 + $0xc0] sm:$0xf]
      %v2740 = vld [vmem:[%s2 + $0xc4] sm:$0xf]
      %v2741 = vld [vmem:[%s2 + $0xc8] sm:$0xf]
      %v2742 = vld [vmem:[%s2 + $0xcc] sm:$0xf]
      %v2743 = vld [vmem:[%s2 + $0xd0] sm:$0xf]
      %v2744 = vld [vmem:[%s2 + $0xd4] sm:$0xf]
      %v2745 = vld [vmem:[%s2 + $0xd8] sm:$0xf]
      %v2746 = vld [vmem:[%s2 + $0xdc] sm:$0xf]
      %v2747 = vld [vmem:[%s2 + $0xe0] sm:$0xf]
      %v2748 = vld [vmem:[%s2 + $0xe4] sm:$0xf]
      %v2749 = vld [vmem:[%s2 + $0xe8] sm:$0xf]
      %v2750 = vld [vmem:[%s2 + $0xec] sm:$0xf]
      %v2751 = vld [vmem:[%s2 + $0xf0] sm:$0xf]
      %v2752 = vld [vmem:[%s2 + $0xf4] sm:$0xf]
      %v2753 = vld [vmem:[%s2 + $0xf8] sm:$0xf]
      %v2754 = vld [vmem:[%s2 + $0xfc] sm:$0xf]
      %v2787 = vunpack.c.l.b16 %v2723
      %v2788 = vunpack.c.l.b16 %v2724
      %v2789 = vunpack.c.l.b16 %v2725
      %v2790 = vunpack.c.l.b16 %v2726
      %v2791 = vunpack.c.l.b16 %v2727
      %v2792 = vunpack.c.l.b16 %v2728
      %v2793 = vunpack.c.l.b16 %v2729
      %v2794 = vunpack.c.l.b16 %v2730
      %v2795 = vunpack.c.l.b16 %v2731
      %v2796 = vunpack.c.l.b16 %v2732
      %v2797 = vunpack.c.l.b16 %v2733
      %v2798 = vunpack.c.l.b16 %v2734
      %v2799 = vunpack.c.l.b16 %v2735
      %v2800 = vunpack.c.l.b16 %v2736
      %v2801 = vunpack.c.l.b16 %v2737
      %v2802 = vunpack.c.l.b16 %v2738
      %v2803 = vunpack.c.l.b16 %v2739
      %v2804 = vunpack.c.l.b16 %v2740
      %v2805 = vunpack.c.l.b16 %v2741
      %v2806 = vunpack.c.l.b16 %v2742
      %v2807 = vunpack.c.l.b16 %v2743
      %v2808 = vunpack.c.l.b16 %v2744
      %v2809 = vunpack.c.l.b16 %v2745
      %v2810 = vunpack.c.l.b16 %v2746
      %v2811 = vunpack.c.l.b16 %v2747
      %v2812 = vunpack.c.l.b16 %v2748
      %v2813 = vunpack.c.l.b16 %v2749
      %v2814 = vunpack.c.l.b16 %v2750
      %v2815 = vunpack.c.l.b16 %v2751
      %v2816 = vunpack.c.l.b16 %v2752
      %v2817 = vunpack.c.l.b16 %v2753
      %v2818 = vunpack.c.l.b16 %v2754
      %v2819 = vpack.c.b16 %v2788, %v2787
      %v2820 = vpack.c.b16 %v2790, %v2789
      %v2821 = vpack.c.b16 %v2792, %v2791
      %v2822 = vpack.c.b16 %v2794, %v2793
      %v2823 = vpack.c.b16 %v2796, %v2795
      %v2824 = vpack.c.b16 %v2798, %v2797
      %v2825 = vpack.c.b16 %v2800, %v2799
      %v2826 = vpack.c.b16 %v2802, %v2801
      %v2827 = vpack.c.b16 %v2804, %v2803
      %v2828 = vpack.c.b16 %v2806, %v2805
      %v2829 = vpack.c.b16 %v2808, %v2807
      %v2830 = vpack.c.b16 %v2810, %v2809
      %v2831 = vpack.c.b16 %v2812, %v2811
      %v2832 = vpack.c.b16 %v2814, %v2813
      %v2833 = vpack.c.b16 %v2816, %v2815
      %v2834 = vpack.c.b16 %v2818, %v2817
      %2851 = vmatpush.bf16.msra.mxu0 %v2826
      %2852 = vmatpush.bf16.msra.mxu0 %v2825
      %2853 = vmatpush.bf16.msra.mxu0 %v2824
      %2854 = vmatpush.bf16.msra.mxu0 %v2823
      %2855 = vmatpush.bf16.msra.mxu0 %v2822
      %2856 = vmatpush.bf16.msra.mxu0 %v2821
      %2857 = vmatpush.bf16.msra.mxu0 %v2820
      %2858 = vmatpush.bf16.msra.mxu0 %v2819
      %2859 = vmatmul.bf16.gmra.mxu0 %v2665
      %v2860 = vpop.f32.mrf.mxu0
      %v2861 = vadd.f32 0.0, %v2860
      %v2862 = vpop.f32.mrf.mxu0
      %v2863 = vadd.f32 0.0, %v2862
      %2864 = vmatmul.bf16.gmra.mxu0 %v2668
      %v2865 = vpop.f32.mrf.mxu0
      %v2866 = vadd.f32 0.0, %v2865
      %v2867 = vpop.f32.mrf.mxu0
      %v2868 = vadd.f32 0.0, %v2867
      %2869 = vmatmul.bf16.gmra.mxu0 %v2665
      %v2870 = vpop.f32.mrf.mxu0
      %v2871 = vadd.f32 0.0, %v2870
      %v2872 = vpop.f32.mrf.mxu0
      %v2873 = vadd.f32 0.0, %v2872
      %2874 = vmatmul.bf16.gmra.mxu0 %v2671
      %v2875 = vpop.f32.mrf.mxu0
      %v2876 = vadd.f32 0.0, %v2875
      %v2877 = vpop.f32.mrf.mxu0
      %v2878 = vadd.f32 0.0, %v2877
      %2879 = vmatmul.bf16.gmra.mxu0 %v2674
      %v2880 = vpop.f32.mrf.mxu0
      %v2881 = vadd.f32 0.0, %v2880
      %v2882 = vpop.f32.mrf.mxu0
      %v2883 = vadd.f32 0.0, %v2882
      %2884 = vmatmul.bf16.gmra.mxu0 %v2677
      %v2885 = vpop.f32.mrf.mxu0
      %v2886 = vadd.f32 0.0, %v2885
      %v2887 = vpop.f32.mrf.mxu0
      %v2888 = vadd.f32 0.0, %v2887
      %2889 = vmatmul.bf16.gmra.mxu0 %v2680
      %v2890 = vpop.f32.mrf.mxu0
      %v2891 = vadd.f32 0.0, %v2890
      %v2892 = vpop.f32.mrf.mxu0
      %v2893 = vadd.f32 0.0, %v2892
      %2894 = vmatmul.bf16.gmra.mxu0 %v2683
      %v2895 = vpop.f32.mrf.mxu0
      %v2896 = vadd.f32 0.0, %v2895
      %v2897 = vpop.f32.mrf.mxu0
      %v2898 = vadd.f32 0.0, %v2897
      %2899 = vmatmul.bf16.gmra.mxu0 %v2686
      %v2900 = vpop.f32.mrf.mxu0
      %v2901 = vadd.f32 0.0, %v2900
      %v2902 = vpop.f32.mrf.mxu0
      %v2903 = vadd.f32 0.0, %v2902
      %2904 = vmatmul.bf16.gmra.mxu0 %v2689
      %v2905 = vpop.f32.mrf.mxu0
      %v2906 = vadd.f32 0.0, %v2905
      %v2907 = vpop.f32.mrf.mxu0
      %v2908 = vadd.f32 0.0, %v2907
      %2909 = vmatmul.bf16.gmra.mxu0 %v2692
      %v2910 = vpop.f32.mrf.mxu0
      %v2911 = vadd.f32 0.0, %v2910
      %v2912 = vpop.f32.mrf.mxu0
      %v2913 = vadd.f32 0.0, %v2912
      %2914 = vmatmul.bf16.gmra.mxu0 %v2695
      %v2915 = vpop.f32.mrf.mxu0
      %v2916 = vadd.f32 0.0, %v2915
      %v2917 = vpop.f32.mrf.mxu0
      %v2918 = vadd.f32 0.0, %v2917
      %2919 = vmatmul.bf16.gmra.mxu0 %v2698
      %v2920 = vpop.f32.mrf.mxu0
      %v2921 = vadd.f32 0.0, %v2920
      %v2922 = vpop.f32.mrf.mxu0
      %v2923 = vadd.f32 0.0, %v2922
      %2924 = vmatmul.bf16.gmra.mxu0 %v2701
      %v2925 = vpop.f32.mrf.mxu0
      %v2926 = vadd.f32 0.0, %v2925
      %v2927 = vpop.f32.mrf.mxu0
      %v2928 = vadd.f32 0.0, %v2927
      %2929 = vmatmul.bf16.gmra.mxu0 %v2704
      %v2930 = vpop.f32.mrf.mxu0
      %v2931 = vadd.f32 0.0, %v2930
      %v2932 = vpop.f32.mrf.mxu0
      %v2933 = vadd.f32 0.0, %v2932
      %2934 = vmatmul.bf16.gmra.mxu0 %v2707
      %v2935 = vpop.f32.mrf.mxu0
      %v2936 = vadd.f32 0.0, %v2935
      %v2937 = vpop.f32.mrf.mxu0
      %v2938 = vadd.f32 0.0, %v2937
      %2939 = vdwg.mxu0
      %2940 = vmatpush.bf16.msra.mxu0 %v2834
      %2941 = vmatpush.bf16.msra.mxu0 %v2833
      %2942 = vmatpush.bf16.msra.mxu0 %v2832
      %2943 = vmatpush.bf16.msra.mxu0 %v2831
      %2944 = vmatpush.bf16.msra.mxu0 %v2830
      %2945 = vmatpush.bf16.msra.mxu0 %v2829
      %2946 = vmatpush.bf16.msra.mxu0 %v2828
      %2947 = vmatpush.bf16.msra.mxu0 %v2827
      %2948 = vmatmul.bf16.gmra.mxu0 %v2375
      %v2949 = vpop.f32.mrf.mxu0
      %v2950 = vadd.f32 %v2861, %v2949
      %v2951 = vpop.f32.mrf.mxu0
      %v2952 = vadd.f32 %v2863, %v2951
      %2953 = vmatmul.bf16.gmra.mxu0 %v2374
      %v2954 = vpop.f32.mrf.mxu0
      %v2955 = vadd.f32 %v2866, %v2954
      %v2956 = vpop.f32.mrf.mxu0
      %v2957 = vadd.f32 %v2868, %v2956
      %2958 = vmatmul.bf16.gmra.mxu0 %v2376
      %v2959 = vpop.f32.mrf.mxu0
      %v2960 = vadd.f32 %v2871, %v2959
      %v2961 = vpop.f32.mrf.mxu0
      %v2962 = vadd.f32 %v2873, %v2961
      %2963 = vmatmul.bf16.gmra.mxu0 %v2377
      %v2964 = vpop.f32.mrf.mxu0
      %v2965 = vadd.f32 %v2876, %v2964
      %v2966 = vpop.f32.mrf.mxu0
      %v2967 = vadd.f32 %v2878, %v2966
      %2968 = vmatmul.bf16.gmra.mxu0 %v2378
      %v2969 = vpop.f32.mrf.mxu0
      %v2970 = vadd.f32 %v2881, %v2969
      %v2971 = vpop.f32.mrf.mxu0
      %v2972 = vadd.f32 %v2883, %v2971
      %2973 = vmatmul.bf16.gmra.mxu0 %v2379
      %v2974 = vpop.f32.mrf.mxu0
      %v2975 = vadd.f32 %v2886, %v2974
      %v2976 = vpop.f32.mrf.mxu0
      %v2977 = vadd.f32 %v2888, %v2976
      %2978 = vmatmul.bf16.gmra.mxu0 %v2380
      %v2979 = vpop.f32.mrf.mxu0
      %v2980 = vadd.f32 %v2891, %v2979
      %v2981 = vpop.f32.mrf.mxu0
      %v2982 = vadd.f32 %v2893, %v2981
      %2983 = vmatmul.bf16.gmra.mxu0 %v2381
      %v2984 = vpop.f32.mrf.mxu0
      %v2985 = vadd.f32 %v2896, %v2984
      %v2986 = vpop.f32.mrf.mxu0
      %v2987 = vadd.f32 %v2898, %v2986
      %2988 = vmatmul.bf16.gmra.mxu0 %v2382
      %v2989 = vpop.f32.mrf.mxu0
      %v2990 = vadd.f32 %v2901, %v2989
      %v2991 = vpop.f32.mrf.mxu0
      %v2992 = vadd.f32 %v2903, %v2991
      %2993 = vmatmul.bf16.gmra.mxu0 %v2383
      %v2994 = vpop.f32.mrf.mxu0
      %v2995 = vadd.f32 %v2906, %v2994
      %v2996 = vpop.f32.mrf.mxu0
      %v2997 = vadd.f32 %v2908, %v2996
      %2998 = vmatmul.bf16.gmra.mxu0 %v2384
      %v2999 = vpop.f32.mrf.mxu0
      %v3000 = vadd.f32 %v2911, %v2999
      %v3001 = vpop.f32.mrf.mxu0
      %v3002 = vadd.f32 %v2913, %v3001
      %3003 = vmatmul.bf16.gmra.mxu0 %v2385
      %v3004 = vpop.f32.mrf.mxu0
      %v3005 = vadd.f32 %v2916, %v3004
      %v3006 = vpop.f32.mrf.mxu0
      %v3007 = vadd.f32 %v2918, %v3006
      %3008 = vmatmul.bf16.gmra.mxu0 %v2386
      %v3009 = vpop.f32.mrf.mxu0
      %v3010 = vadd.f32 %v2921, %v3009
      %v3011 = vpop.f32.mrf.mxu0
      %v3012 = vadd.f32 %v2923, %v3011
      %3013 = vmatmul.bf16.gmra.mxu0 %v2387
      %v3014 = vpop.f32.mrf.mxu0
      %v3015 = vadd.f32 %v2926, %v3014
      %v3016 = vpop.f32.mrf.mxu0
      %v3017 = vadd.f32 %v2928, %v3016
      %3018 = vmatmul.bf16.gmra.mxu0 %v2388
      %v3019 = vpop.f32.mrf.mxu0
      %v3020 = vadd.f32 %v2931, %v3019
      %v3021 = vpop.f32.mrf.mxu0
      %v3022 = vadd.f32 %v2933, %v3021
      %3023 = vmatmul.bf16.gmra.mxu0 %v2389
      %v3024 = vpop.f32.mrf.mxu0
      %v3025 = vadd.f32 %v2936, %v3024
      %v3026 = vpop.f32.mrf.mxu0
      %v3027 = vadd.f32 %v2938, %v3026
      %3028 = vdwg.mxu0
      %v3061 = vunpack.c.l.b16 %v2601
      %v3062 = vunpack.c.l.b16 %v2602
      %v3063 = vunpack.c.l.b16 %v2603
      %v3064 = vunpack.c.l.b16 %v2604
      %v3065 = vunpack.c.l.b16 %v2605
      %v3066 = vunpack.c.l.b16 %v2606
      %v3067 = vunpack.c.l.b16 %v2607
      %v3068 = vunpack.c.l.b16 %v2608
      %v3069 = vunpack.c.l.b16 %v2609
      %v3070 = vunpack.c.l.b16 %v2610
      %v3071 = vunpack.c.l.b16 %v2611
      %v3072 = vunpack.c.l.b16 %v2612
      %v3073 = vunpack.c.l.b16 %v2613
      %v3074 = vunpack.c.l.b16 %v2614
      %v3075 = vunpack.c.l.b16 %v2615
      %v3076 = vunpack.c.l.b16 %v2616
      %v3077 = vunpack.c.l.b16 %v2617
      %v3078 = vunpack.c.l.b16 %v2618
      %v3079 = vunpack.c.l.b16 %v2619
      %v3080 = vunpack.c.l.b16 %v2620
      %v3081 = vunpack.c.l.b16 %v2621
      %v3082 = vunpack.c.l.b16 %v2622
      %v3083 = vunpack.c.l.b16 %v2623
      %v3084 = vunpack.c.l.b16 %v2624
      %v3085 = vunpack.c.l.b16 %v2625
      %v3086 = vunpack.c.l.b16 %v2626
      %v3087 = vunpack.c.l.b16 %v2627
      %v3088 = vunpack.c.l.b16 %v2628
      %v3089 = vunpack.c.l.b16 %v2629
      %v3090 = vunpack.c.l.b16 %v2630
      %v3091 = vunpack.c.l.b16 %v2631
      %v3092 = vunpack.c.l.b16 %v2632
      %v3093 = vpack.c.b16 %v3062, %v3061
      %v3094 = vpack.c.b16 %v3064, %v3063
      %v3095 = vpack.c.b16 %v3066, %v3065
      %v3096 = vpack.c.b16 %v3068, %v3067
      %v3097 = vpack.c.b16 %v3070, %v3069
      %v3098 = vpack.c.b16 %v3072, %v3071
      %v3099 = vpack.c.b16 %v3074, %v3073
      %v3100 = vpack.c.b16 %v3076, %v3075
      %v3101 = vpack.c.b16 %v3078, %v3077
      %v3102 = vpack.c.b16 %v3080, %v3079
      %v3103 = vpack.c.b16 %v3082, %v3081
      %v3104 = vpack.c.b16 %v3084, %v3083
      %v3105 = vpack.c.b16 %v3086, %v3085
      %v3106 = vpack.c.b16 %v3088, %v3087
      %v3107 = vpack.c.b16 %v3090, %v3089
      %v3108 = vpack.c.b16 %v3092, %v3091
      %3125 = vmatpush.bf16.msra.mxu0 %v3100
      %3126 = vmatpush.bf16.msra.mxu0 %v3099
      %3127 = vmatpush.bf16.msra.mxu0 %v3098
      %3128 = vmatpush.bf16.msra.mxu0 %v3097
      %3129 = vmatpush.bf16.msra.mxu0 %v3096
      %3130 = vmatpush.bf16.msra.mxu0 %v3095
      %3131 = vmatpush.bf16.msra.mxu0 %v3094
      %3132 = vmatpush.bf16.msra.mxu0 %v3093
      %3133 = vmatmul.bf16.gmra.mxu0 %v2374
      %v3134 = vpop.f32.mrf.mxu0
      %v3135 = vadd.f32 %v2950, %v3134
      %v3136 = vpop.f32.mrf.mxu0
      %v3137 = vadd.f32 %v2952, %v3136
      %3138 = vmatmul.bf16.gmra.mxu0 %v2375
      %v3139 = vpop.f32.mrf.mxu0
      %v3140 = vadd.f32 %v2955, %v3139
      %v3141 = vpop.f32.mrf.mxu0
      %v3142 = vadd.f32 %v2957, %v3141
      %3143 = vmatmul.bf16.gmra.mxu0 %v2374
      %v3144 = vpop.f32.mrf.mxu0
      %v3145 = vadd.f32 %v2960, %v3144
      %v3146 = vpop.f32.mrf.mxu0
      %v3147 = vadd.f32 %v2962, %v3146
      %3148 = vmatmul.bf16.gmra.mxu0 %v2376
      %v3149 = vpop.f32.mrf.mxu0
      %v3150 = vadd.f32 %v2965, %v3149
      %v3151 = vpop.f32.mrf.mxu0
      %v3152 = vadd.f32 %v2967, %v3151
      %3153 = vmatmul.bf16.gmra.mxu0 %v2377
      %v3154 = vpop.f32.mrf.mxu0
      %v3155 = vadd.f32 %v2970, %v3154
      %v3156 = vpop.f32.mrf.mxu0
      %v3157 = vadd.f32 %v2972, %v3156
      %3158 = vmatmul.bf16.gmra.mxu0 %v2378
      %v3159 = vpop.f32.mrf.mxu0
      %v3160 = vadd.f32 %v2975, %v3159
      %v3161 = vpop.f32.mrf.mxu0
      %v3162 = vadd.f32 %v2977, %v3161
      %3163 = vmatmul.bf16.gmra.mxu0 %v2379
      %v3164 = vpop.f32.mrf.mxu0
      %v3165 = vadd.f32 %v2980, %v3164
      %v3166 = vpop.f32.mrf.mxu0
      %v3167 = vadd.f32 %v2982, %v3166
      %3168 = vmatmul.bf16.gmra.mxu0 %v2380
      %v3169 = vpop.f32.mrf.mxu0
      %v3170 = vadd.f32 %v2985, %v3169
      %v3171 = vpop.f32.mrf.mxu0
      %v3172 = vadd.f32 %v2987, %v3171
      %3173 = vmatmul.bf16.gmra.mxu0 %v2381
      %v3174 = vpop.f32.mrf.mxu0
      %v3175 = vadd.f32 %v2990, %v3174
      %v3176 = vpop.f32.mrf.mxu0
      %v3177 = vadd.f32 %v2992, %v3176
      %3178 = vmatmul.bf16.gmra.mxu0 %v2382
      %v3179 = vpop.f32.mrf.mxu0
      %v3180 = vadd.f32 %v2995, %v3179
      %v3181 = vpop.f32.mrf.mxu0
      %v3182 = vadd.f32 %v2997, %v3181
      %3183 = vmatmul.bf16.gmra.mxu0 %v2383
      %v3184 = vpop.f32.mrf.mxu0
      %v3185 = vadd.f32 %v3000, %v3184
      %v3186 = vpop.f32.mrf.mxu0
      %v3187 = vadd.f32 %v3002, %v3186
      %3188 = vmatmul.bf16.gmra.mxu0 %v2384
      %v3189 = vpop.f32.mrf.mxu0
      %v3190 = vadd.f32 %v3005, %v3189
      %v3191 = vpop.f32.mrf.mxu0
      %v3192 = vadd.f32 %v3007, %v3191
      %3193 = vmatmul.bf16.gmra.mxu0 %v2385
      %v3194 = vpop.f32.mrf.mxu0
      %v3195 = vadd.f32 %v3010, %v3194
      %v3196 = vpop.f32.mrf.mxu0
      %v3197 = vadd.f32 %v3012, %v3196
      %3198 = vmatmul.bf16.gmra.mxu0 %v2386
      %v3199 = vpop.f32.mrf.mxu0
      %v3200 = vadd.f32 %v3015, %v3199
      %v3201 = vpop.f32.mrf.mxu0
      %v3202 = vadd.f32 %v3017, %v3201
      %3203 = vmatmul.bf16.gmra.mxu0 %v2387
      %v3204 = vpop.f32.mrf.mxu0
      %v3205 = vadd.f32 %v3020, %v3204
      %v3206 = vpop.f32.mrf.mxu0
      %v3207 = vadd.f32 %v3022, %v3206
      %3208 = vmatmul.bf16.gmra.mxu0 %v2388
      %v3209 = vpop.f32.mrf.mxu0
      %v3210 = vadd.f32 %v3025, %v3209
      %v3211 = vpop.f32.mrf.mxu0
      %v3212 = vadd.f32 %v3027, %v3211
      %3213 = vdwg.mxu0
      %3214 = vmatpush.bf16.msra.mxu0 %v3108
      %3215 = vmatpush.bf16.msra.mxu0 %v3107
      %3216 = vmatpush.bf16.msra.mxu0 %v3106
      %3217 = vmatpush.bf16.msra.mxu0 %v3105
      %3218 = vmatpush.bf16.msra.mxu0 %v3104
      %3219 = vmatpush.bf16.msra.mxu0 %v3103
      %3220 = vmatpush.bf16.msra.mxu0 %v3102
      %3221 = vmatpush.bf16.msra.mxu0 %v3101
      %3222 = vmatmul.bf16.gmra.mxu0 %v2417
      %v3223 = vpop.f32.mrf.mxu0
      %v3224 = vadd.f32 %v3135, %v3223
      %v3225 = vpop.f32.mrf.mxu0
      %v3226 = vadd.f32 %v3137, %v3225
      %3227 = vmatmul.bf16.gmra.mxu0 %v2429
      %v3228 = vpop.f32.mrf.mxu0
      %v3229 = vadd.f32 %v3140, %v3228
      %v3230 = vpop.f32.mrf.mxu0
      %v3231 = vadd.f32 %v3142, %v3230
      %3232 = vmatmul.bf16.gmra.mxu0 %v2417
      %v3233 = vpop.f32.mrf.mxu0
      %v3234 = vadd.f32 %v3145, %v3233
      %v3235 = vpop.f32.mrf.mxu0
      %v3236 = vadd.f32 %v3147, %v3235
      %3237 = vmatmul.bf16.gmra.mxu0 %v2441
      %v3238 = vpop.f32.mrf.mxu0
      %v3239 = vadd.f32 %v3150, %v3238
      %v3240 = vpop.f32.mrf.mxu0
      %v3241 = vadd.f32 %v3152, %v3240
      %3242 = vmatmul.bf16.gmra.mxu0 %v2453
      %v3243 = vpop.f32.mrf.mxu0
      %v3244 = vadd.f32 %v3155, %v3243
      %v3245 = vpop.f32.mrf.mxu0
      %v3246 = vadd.f32 %v3157, %v3245
      %3247 = vmatmul.bf16.gmra.mxu0 %v2465
      %v3248 = vpop.f32.mrf.mxu0
      %v3249 = vadd.f32 %v3160, %v3248
      %v3250 = vpop.f32.mrf.mxu0
      %v3251 = vadd.f32 %v3162, %v3250
      %3252 = vmatmul.bf16.gmra.mxu0 %v2477
      %v3253 = vpop.f32.mrf.mxu0
      %v3254 = vadd.f32 %v3165, %v3253
      %v3255 = vpop.f32.mrf.mxu0
      %v3256 = vadd.f32 %v3167, %v3255
      %3257 = vmatmul.bf16.gmra.mxu0 %v2489
      %v3258 = vpop.f32.mrf.mxu0
      %v3259 = vadd.f32 %v3170, %v3258
      %v3260 = vpop.f32.mrf.mxu0
      %v3261 = vadd.f32 %v3172, %v3260
      %3262 = vmatmul.bf16.gmra.mxu0 %v2501
      %v3263 = vpop.f32.mrf.mxu0
      %v3264 = vadd.f32 %v3175, %v3263
      %v3265 = vpop.f32.mrf.mxu0
      %v3266 = vadd.f32 %v3177, %v3265
      %3267 = vmatmul.bf16.gmra.mxu0 %v2513
      %v3268 = vpop.f32.mrf.mxu0
      %v3269 = vadd.f32 %v3180, %v3268
      %v3270 = vpop.f32.mrf.mxu0
      %v3271 = vadd.f32 %v3182, %v3270
      %3272 = vmatmul.bf16.gmra.mxu0 %v2525
      %v3273 = vpop.f32.mrf.mxu0
      %v3274 = vadd.f32 %v3185, %v3273
      %v3275 = vpop.f32.mrf.mxu0
      %v3276 = vadd.f32 %v3187, %v3275
      %3277 = vmatmul.bf16.gmra.mxu0 %v2537
      %v3278 = vpop.f32.mrf.mxu0
      %v3279 = vadd.f32 %v3190, %v3278
      %v3280 = vpop.f32.mrf.mxu0
      %v3281 = vadd.f32 %v3192, %v3280
      %3282 = vmatmul.bf16.gmra.mxu0 %v2549
      %v3283 = vpop.f32.mrf.mxu0
      %v3284 = vadd.f32 %v3195, %v3283
      %v3285 = vpop.f32.mrf.mxu0
      %v3286 = vadd.f32 %v3197, %v3285
      %3287 = vmatmul.bf16.gmra.mxu0 %v2561
      %v3288 = vpop.f32.mrf.mxu0
      %v3289 = vadd.f32 %v3200, %v3288
      %v3290 = vpop.f32.mrf.mxu0
      %v3291 = vadd.f32 %v3202, %v3290
      %3292 = vmatmul.bf16.gmra.mxu0 %v2573
      %v3293 = vpop.f32.mrf.mxu0
      %v3294 = vadd.f32 %v3205, %v3293
      %v3295 = vpop.f32.mrf.mxu0
      %v3296 = vadd.f32 %v3207, %v3295
      %3297 = vmatmul.bf16.gmra.mxu0 %v2585
      %v3298 = vpop.f32.mrf.mxu0
      %v3299 = vadd.f32 %v3210, %v3298
      %v3300 = vpop.f32.mrf.mxu0
      %v3301 = vadd.f32 %v3212, %v3300
      %3302 = vdwg.mxu0
      %v3304 = vshrl.u32 %v2389, 16
      %v3306 = vshll.u32 %v2389, 16
      %v3308 = vrot.slane %v3306, 1
      %v3309 = vor.u32 %v3304, %v3308
      %v3311 = vshll.u32 %v2405, 16
      %v3313 = vrot.slane %v3311, 1
      %v3314 = vsel %vm698, %v3309, %v3313
      %v3318 = vrot.slane %v2389, 1
      %v3319 = vrot.slane %v2405, 1
      %v3320 = vsel %vm939, %v3318, %v3319
      %v3322 = vld [vmem:[%s2 + $0x100] sm:$0xf]
      %v3323 = vld [vmem:[%s2 + $0x104] sm:$0xf]
      %v3324 = vld [vmem:[%s2 + $0x108] sm:$0xf]
      %v3325 = vld [vmem:[%s2 + $0x10c] sm:$0xf]
      %v3326 = vld [vmem:[%s2 + $0x110] sm:$0xf]
      %v3327 = vld [vmem:[%s2 + $0x114] sm:$0xf]
      %v3328 = vld [vmem:[%s2 + $0x118] sm:$0xf]
      %v3329 = vld [vmem:[%s2 + $0x11c] sm:$0xf]
      %v3330 = vld [vmem:[%s2 + $0x120] sm:$0xf]
      %v3331 = vld [vmem:[%s2 + $0x124] sm:$0xf]
      %v3332 = vld [vmem:[%s2 + $0x128] sm:$0xf]
      %v3333 = vld [vmem:[%s2 + $0x12c] sm:$0xf]
      %v3334 = vld [vmem:[%s2 + $0x130] sm:$0xf]
      %v3335 = vld [vmem:[%s2 + $0x134] sm:$0xf]
      %v3336 = vld [vmem:[%s2 + $0x138] sm:$0xf]
      %v3337 = vld [vmem:[%s2 + $0x13c] sm:$0xf]
      %v3338 = vld [vmem:[%s2 + $0x140] sm:$0xf]
      %v3339 = vld [vmem:[%s2 + $0x144] sm:$0xf]
      %v3340 = vld [vmem:[%s2 + $0x148] sm:$0xf]
      %v3341 = vld [vmem:[%s2 + $0x14c] sm:$0xf]
      %v3342 = vld [vmem:[%s2 + $0x150] sm:$0xf]
      %v3343 = vld [vmem:[%s2 + $0x154] sm:$0xf]
      %v3344 = vld [vmem:[%s2 + $0x158] sm:$0xf]
      %v3345 = vld [vmem:[%s2 + $0x15c] sm:$0xf]
      %v3346 = vld [vmem:[%s2 + $0x160] sm:$0xf]
      %v3347 = vld [vmem:[%s2 + $0x164] sm:$0xf]
      %v3348 = vld [vmem:[%s2 + $0x168] sm:$0xf]
      %v3349 = vld [vmem:[%s2 + $0x16c] sm:$0xf]
      %v3350 = vld [vmem:[%s2 + $0x170] sm:$0xf]
      %v3351 = vld [vmem:[%s2 + $0x174] sm:$0xf]
      %v3352 = vld [vmem:[%s2 + $0x178] sm:$0xf]
      %v3353 = vld [vmem:[%s2 + $0x17c] sm:$0xf]
      %v3386 = vunpack.c.l.b16 %v3322
      %v3387 = vunpack.c.l.b16 %v3323
      %v3388 = vunpack.c.l.b16 %v3324
      %v3389 = vunpack.c.l.b16 %v3325
      %v3390 = vunpack.c.l.b16 %v3326
      %v3391 = vunpack.c.l.b16 %v3327
      %v3392 = vunpack.c.l.b16 %v3328
      %v3393 = vunpack.c.l.b16 %v3329
      %v3394 = vunpack.c.l.b16 %v3330
      %v3395 = vunpack.c.l.b16 %v3331
      %v3396 = vunpack.c.l.b16 %v3332
      %v3397 = vunpack.c.l.b16 %v3333
      %v3398 = vunpack.c.l.b16 %v3334
      %v3399 = vunpack.c.l.b16 %v3335
      %v3400 = vunpack.c.l.b16 %v3336
      %v3401 = vunpack.c.l.b16 %v3337
      %v3402 = vunpack.c.l.b16 %v3338
      %v3403 = vunpack.c.l.b16 %v3339
      %v3404 = vunpack.c.l.b16 %v3340
      %v3405 = vunpack.c.l.b16 %v3341
      %v3406 = vunpack.c.l.b16 %v3342
      %v3407 = vunpack.c.l.b16 %v3343
      %v3408 = vunpack.c.l.b16 %v3344
      %v3409 = vunpack.c.l.b16 %v3345
      %v3410 = vunpack.c.l.b16 %v3346
      %v3411 = vunpack.c.l.b16 %v3347
      %v3412 = vunpack.c.l.b16 %v3348
      %v3413 = vunpack.c.l.b16 %v3349
      %v3414 = vunpack.c.l.b16 %v3350
      %v3415 = vunpack.c.l.b16 %v3351
      %v3416 = vunpack.c.l.b16 %v3352
      %v3417 = vunpack.c.l.b16 %v3353
      %v3418 = vpack.c.b16 %v3387, %v3386
      %v3419 = vpack.c.b16 %v3389, %v3388
      %v3420 = vpack.c.b16 %v3391, %v3390
      %v3421 = vpack.c.b16 %v3393, %v3392
      %v3422 = vpack.c.b16 %v3395, %v3394
      %v3423 = vpack.c.b16 %v3397, %v3396
      %v3424 = vpack.c.b16 %v3399, %v3398
      %v3425 = vpack.c.b16 %v3401, %v3400
      %v3426 = vpack.c.b16 %v3403, %v3402
      %v3427 = vpack.c.b16 %v3405, %v3404
      %v3428 = vpack.c.b16 %v3407, %v3406
      %v3429 = vpack.c.b16 %v3409, %v3408
      %v3430 = vpack.c.b16 %v3411, %v3410
      %v3431 = vpack.c.b16 %v3413, %v3412
      %v3432 = vpack.c.b16 %v3415, %v3414
      %v3433 = vpack.c.b16 %v3417, %v3416
      %3450 = vmatpush.bf16.msra.mxu0 %v3425
      %3451 = vmatpush.bf16.msra.mxu0 %v3424
      %3452 = vmatpush.bf16.msra.mxu0 %v3423
      %3453 = vmatpush.bf16.msra.mxu0 %v3422
      %3454 = vmatpush.bf16.msra.mxu0 %v3421
      %3455 = vmatpush.bf16.msra.mxu0 %v3420
      %3456 = vmatpush.bf16.msra.mxu0 %v3419
      %3457 = vmatpush.bf16.msra.mxu0 %v3418
      %3458 = vmatmul.bf16.gmra.mxu0 %v2429
      %v3459 = vpop.f32.mrf.mxu0
      %v3460 = vadd.f32 0.0, %v3459
      %v3461 = vpop.f32.mrf.mxu0
      %v3462 = vadd.f32 0.0, %v3461
      %3463 = vmatmul.bf16.gmra.mxu0 %v2417
      %v3464 = vpop.f32.mrf.mxu0
      %v3465 = vadd.f32 0.0, %v3464
      %v3466 = vpop.f32.mrf.mxu0
      %v3467 = vadd.f32 0.0, %v3466
      %3468 = vmatmul.bf16.gmra.mxu0 %v2441
      %v3469 = vpop.f32.mrf.mxu0
      %v3470 = vadd.f32 0.0, %v3469
      %v3471 = vpop.f32.mrf.mxu0
      %v3472 = vadd.f32 0.0, %v3471
      %3473 = vmatmul.bf16.gmra.mxu0 %v2453
      %v3474 = vpop.f32.mrf.mxu0
      %v3475 = vadd.f32 0.0, %v3474
      %v3476 = vpop.f32.mrf.mxu0
      %v3477 = vadd.f32 0.0, %v3476
      %3478 = vmatmul.bf16.gmra.mxu0 %v2465
      %v3479 = vpop.f32.mrf.mxu0
      %v3480 = vadd.f32 0.0, %v3479
      %v3481 = vpop.f32.mrf.mxu0
      %v3482 = vadd.f32 0.0, %v3481
      %3483 = vmatmul.bf16.gmra.mxu0 %v2477
      %v3484 = vpop.f32.mrf.mxu0
      %v3485 = vadd.f32 0.0, %v3484
      %v3486 = vpop.f32.mrf.mxu0
      %v3487 = vadd.f32 0.0, %v3486
      %3488 = vmatmul.bf16.gmra.mxu0 %v2489
      %v3489 = vpop.f32.mrf.mxu0
      %v3490 = vadd.f32 0.0, %v3489
      %v3491 = vpop.f32.mrf.mxu0
      %v3492 = vadd.f32 0.0, %v3491
      %3493 = vmatmul.bf16.gmra.mxu0 %v2501
      %v3494 = vpop.f32.mrf.mxu0
      %v3495 = vadd.f32 0.0, %v3494
      %v3496 = vpop.f32.mrf.mxu0
      %v3497 = vadd.f32 0.0, %v3496
      %3498 = vmatmul.bf16.gmra.mxu0 %v2513
      %v3499 = vpop.f32.mrf.mxu0
      %v3500 = vadd.f32 0.0, %v3499
      %v3501 = vpop.f32.mrf.mxu0
      %v3502 = vadd.f32 0.0, %v3501
      %3503 = vmatmul.bf16.gmra.mxu0 %v2525
      %v3504 = vpop.f32.mrf.mxu0
      %v3505 = vadd.f32 0.0, %v3504
      %v3506 = vpop.f32.mrf.mxu0
      %v3507 = vadd.f32 0.0, %v3506
      %3508 = vmatmul.bf16.gmra.mxu0 %v2537
      %v3509 = vpop.f32.mrf.mxu0
      %v3510 = vadd.f32 0.0, %v3509
      %v3511 = vpop.f32.mrf.mxu0
      %v3512 = vadd.f32 0.0, %v3511
      %3513 = vmatmul.bf16.gmra.mxu0 %v2549
      %v3514 = vpop.f32.mrf.mxu0
      %v3515 = vadd.f32 0.0, %v3514
      %v3516 = vpop.f32.mrf.mxu0
      %v3517 = vadd.f32 0.0, %v3516
      %3518 = vmatmul.bf16.gmra.mxu0 %v2561
      %v3519 = vpop.f32.mrf.mxu0
      %v3520 = vadd.f32 0.0, %v3519
      %v3521 = vpop.f32.mrf.mxu0
      %v3522 = vadd.f32 0.0, %v3521
      %3523 = vmatmul.bf16.gmra.mxu0 %v2573
      %v3524 = vpop.f32.mrf.mxu0
      %v3525 = vadd.f32 0.0, %v3524
      %v3526 = vpop.f32.mrf.mxu0
      %v3527 = vadd.f32 0.0, %v3526
      %3528 = vmatmul.bf16.gmra.mxu0 %v2585
      %v3529 = vpop.f32.mrf.mxu0
      %v3530 = vadd.f32 0.0, %v3529
      %v3531 = vpop.f32.mrf.mxu0
      %v3532 = vadd.f32 0.0, %v3531
      %3533 = vmatmul.bf16.gmra.mxu0 %v3314
      %v3534 = vpop.f32.mrf.mxu0
      %v3535 = vadd.f32 0.0, %v3534
      %v3536 = vpop.f32.mrf.mxu0
      %v3537 = vadd.f32 0.0, %v3536
      %3538 = vdwg.mxu0
      %3539 = vmatpush.bf16.msra.mxu0 %v3433
      %3540 = vmatpush.bf16.msra.mxu0 %v3432
      %3541 = vmatpush.bf16.msra.mxu0 %v3431
      %3542 = vmatpush.bf16.msra.mxu0 %v3430
      %3543 = vmatpush.bf16.msra.mxu0 %v3429
      %3544 = vmatpush.bf16.msra.mxu0 %v3428
      %3545 = vmatpush.bf16.msra.mxu0 %v3427
      %3546 = vmatpush.bf16.msra.mxu0 %v3426
      %3547 = vmatmul.bf16.gmra.mxu0 %v2668
      %v3548 = vpop.f32.mrf.mxu0
      %v3549 = vadd.f32 %v3460, %v3548
      %v3550 = vpop.f32.mrf.mxu0
      %v3551 = vadd.f32 %v3462, %v3550
      %3552 = vmatmul.bf16.gmra.mxu0 %v2665
      %v3553 = vpop.f32.mrf.mxu0
      %v3554 = vadd.f32 %v3465, %v3553
      %v3555 = vpop.f32.mrf.mxu0
      %v3556 = vadd.f32 %v3467, %v3555
      %3557 = vmatmul.bf16.gmra.mxu0 %v2671
      %v3558 = vpop.f32.mrf.mxu0
      %v3559 = vadd.f32 %v3470, %v3558
      %v3560 = vpop.f32.mrf.mxu0
      %v3561 = vadd.f32 %v3472, %v3560
      %3562 = vmatmul.bf16.gmra.mxu0 %v2674
      %v3563 = vpop.f32.mrf.mxu0
      %v3564 = vadd.f32 %v3475, %v3563
      %v3565 = vpop.f32.mrf.mxu0
      %v3566 = vadd.f32 %v3477, %v3565
      %3567 = vmatmul.bf16.gmra.mxu0 %v2677
      %v3568 = vpop.f32.mrf.mxu0
      %v3569 = vadd.f32 %v3480, %v3568
      %v3570 = vpop.f32.mrf.mxu0
      %v3571 = vadd.f32 %v3482, %v3570
      %3572 = vmatmul.bf16.gmra.mxu0 %v2680
      %v3573 = vpop.f32.mrf.mxu0
      %v3574 = vadd.f32 %v3485, %v3573
      %v3575 = vpop.f32.mrf.mxu0
      %v3576 = vadd.f32 %v3487, %v3575
      %3577 = vmatmul.bf16.gmra.mxu0 %v2683
      %v3578 = vpop.f32.mrf.mxu0
      %v3579 = vadd.f32 %v3490, %v3578
      %v3580 = vpop.f32.mrf.mxu0
      %v3581 = vadd.f32 %v3492, %v3580
      %3582 = vmatmul.bf16.gmra.mxu0 %v2686
      %v3583 = vpop.f32.mrf.mxu0
      %v3584 = vadd.f32 %v3495, %v3583
      %v3585 = vpop.f32.mrf.mxu0
      %v3586 = vadd.f32 %v3497, %v3585
      %3587 = vmatmul.bf16.gmra.mxu0 %v2689
      %v3588 = vpop.f32.mrf.mxu0
      %v3589 = vadd.f32 %v3500, %v3588
      %v3590 = vpop.f32.mrf.mxu0
      %v3591 = vadd.f32 %v3502, %v3590
      %3592 = vmatmul.bf16.gmra.mxu0 %v2692
      %v3593 = vpop.f32.mrf.mxu0
      %v3594 = vadd.f32 %v3505, %v3593
      %v3595 = vpop.f32.mrf.mxu0
      %v3596 = vadd.f32 %v3507, %v3595
      %3597 = vmatmul.bf16.gmra.mxu0 %v2695
      %v3598 = vpop.f32.mrf.mxu0
      %v3599 = vadd.f32 %v3510, %v3598
      %v3600 = vpop.f32.mrf.mxu0
      %v3601 = vadd.f32 %v3512, %v3600
      %3602 = vmatmul.bf16.gmra.mxu0 %v2698
      %v3603 = vpop.f32.mrf.mxu0
      %v3604 = vadd.f32 %v3515, %v3603
      %v3605 = vpop.f32.mrf.mxu0
      %v3606 = vadd.f32 %v3517, %v3605
      %3607 = vmatmul.bf16.gmra.mxu0 %v2701
      %v3608 = vpop.f32.mrf.mxu0
      %v3609 = vadd.f32 %v3520, %v3608
      %v3610 = vpop.f32.mrf.mxu0
      %v3611 = vadd.f32 %v3522, %v3610
      %3612 = vmatmul.bf16.gmra.mxu0 %v2704
      %v3613 = vpop.f32.mrf.mxu0
      %v3614 = vadd.f32 %v3525, %v3613
      %v3615 = vpop.f32.mrf.mxu0
      %v3616 = vadd.f32 %v3527, %v3615
      %3617 = vmatmul.bf16.gmra.mxu0 %v2707
      %v3618 = vpop.f32.mrf.mxu0
      %v3619 = vadd.f32 %v3530, %v3618
      %v3620 = vpop.f32.mrf.mxu0
      %v3621 = vadd.f32 %v3532, %v3620
      %3622 = vmatmul.bf16.gmra.mxu0 %v3320
      %v3623 = vpop.f32.mrf.mxu0
      %v3624 = vadd.f32 %v3535, %v3623
      %v3625 = vpop.f32.mrf.mxu0
      %v3626 = vadd.f32 %v3537, %v3625
      %3627 = vdwg.mxu0
      %v3628 = vadd.f32 %v3224, %v3549
      %v3629 = vadd.f32 %v3226, %v3551
      %v3630 = vadd.f32 %v3229, %v3554
      %v3631 = vadd.f32 %v3231, %v3556
      %v3632 = vadd.f32 %v3234, %v3559
      %v3633 = vadd.f32 %v3236, %v3561
      %v3634 = vadd.f32 %v3239, %v3564
      %v3635 = vadd.f32 %v3241, %v3566
      %v3636 = vadd.f32 %v3244, %v3569
      %v3637 = vadd.f32 %v3246, %v3571
      %v3638 = vadd.f32 %v3249, %v3574
      %v3639 = vadd.f32 %v3251, %v3576
      %v3640 = vadd.f32 %v3254, %v3579
      %v3641 = vadd.f32 %v3256, %v3581
      %v3642 = vadd.f32 %v3259, %v3584
      %v3643 = vadd.f32 %v3261, %v3586
      %v3644 = vadd.f32 %v3264, %v3589
      %v3645 = vadd.f32 %v3266, %v3591
      %v3646 = vadd.f32 %v3269, %v3594
      %v3647 = vadd.f32 %v3271, %v3596
      %v3648 = vadd.f32 %v3274, %v3599
      %v3649 = vadd.f32 %v3276, %v3601
      %v3650 = vadd.f32 %v3279, %v3604
      %v3651 = vadd.f32 %v3281, %v3606
      %v3652 = vadd.f32 %v3284, %v3609
      %v3653 = vadd.f32 %v3286, %v3611
      %v3654 = vadd.f32 %v3289, %v3614
      %v3655 = vadd.f32 %v3291, %v3616
      %v3656 = vadd.f32 %v3294, %v3619
      %v3657 = vadd.f32 %v3296, %v3621
      %v3658 = vadd.f32 %v3299, %v3624
      %v3659 = vadd.f32 %v3301, %v3626
      %v3660 = vld [vmem:[%s2 + $0x180] sm:$0xf]
      %v3661 = vld [vmem:[%s2 + $0x184] sm:$0xf]
      %v3662 = vld [vmem:[%s2 + $0x188] sm:$0xf]
      %v3663 = vld [vmem:[%s2 + $0x18c] sm:$0xf]
      %v3664 = vld [vmem:[%s2 + $0x190] sm:$0xf]
      %v3665 = vld [vmem:[%s2 + $0x194] sm:$0xf]
      %v3666 = vld [vmem:[%s2 + $0x198] sm:$0xf]
      %v3667 = vld [vmem:[%s2 + $0x19c] sm:$0xf]
      %v3668 = vld [vmem:[%s2 + $0x1a0] sm:$0xf]
      %v3669 = vld [vmem:[%s2 + $0x1a4] sm:$0xf]
      %v3670 = vld [vmem:[%s2 + $0x1a8] sm:$0xf]
      %v3671 = vld [vmem:[%s2 + $0x1ac] sm:$0xf]
      %v3672 = vld [vmem:[%s2 + $0x1b0] sm:$0xf]
      %v3673 = vld [vmem:[%s2 + $0x1b4] sm:$0xf]
      %v3674 = vld [vmem:[%s2 + $0x1b8] sm:$0xf]
      %v3675 = vld [vmem:[%s2 + $0x1bc] sm:$0xf]
      %v3676 = vld [vmem:[%s2 + $0x1c0] sm:$0xf]
      %v3677 = vld [vmem:[%s2 + $0x1c4] sm:$0xf]
      %v3678 = vld [vmem:[%s2 + $0x1c8] sm:$0xf]
      %v3679 = vld [vmem:[%s2 + $0x1cc] sm:$0xf]
      %v3680 = vld [vmem:[%s2 + $0x1d0] sm:$0xf]
      %v3681 = vld [vmem:[%s2 + $0x1d4] sm:$0xf]
      %v3682 = vld [vmem:[%s2 + $0x1d8] sm:$0xf]
      %v3683 = vld [vmem:[%s2 + $0x1dc] sm:$0xf]
      %v3684 = vld [vmem:[%s2 + $0x1e0] sm:$0xf]
      %v3685 = vld [vmem:[%s2 + $0x1e4] sm:$0xf]
      %v3686 = vld [vmem:[%s2 + $0x1e8] sm:$0xf]
      %v3687 = vld [vmem:[%s2 + $0x1ec] sm:$0xf]
      %v3688 = vld [vmem:[%s2 + $0x1f0] sm:$0xf]
      %v3689 = vld [vmem:[%s2 + $0x1f4] sm:$0xf]
      %v3690 = vld [vmem:[%s2 + $0x1f8] sm:$0xf]
      %v3691 = vld [vmem:[%s2 + $0x1fc] sm:$0xf]
      %v3724 = vunpack.c.l.b16 %v3660
      %v3725 = vunpack.c.l.b16 %v3661
      %v3726 = vunpack.c.l.b16 %v3662
      %v3727 = vunpack.c.l.b16 %v3663
      %v3728 = vunpack.c.l.b16 %v3664
      %v3729 = vunpack.c.l.b16 %v3665
      %v3730 = vunpack.c.l.b16 %v3666
      %v3731 = vunpack.c.l.b16 %v3667
      %v3732 = vunpack.c.l.b16 %v3668
      %v3733 = vunpack.c.l.b16 %v3669
      %v3734 = vunpack.c.l.b16 %v3670
      %v3735 = vunpack.c.l.b16 %v3671
      %v3736 = vunpack.c.l.b16 %v3672
      %v3737 = vunpack.c.l.b16 %v3673
      %v3738 = vunpack.c.l.b16 %v3674
      %v3739 = vunpack.c.l.b16 %v3675
      %v3740 = vunpack.c.l.b16 %v3676
      %v3741 = vunpack.c.l.b16 %v3677
      %v3742 = vunpack.c.l.b16 %v3678
      %v3743 = vunpack.c.l.b16 %v3679
      %v3744 = vunpack.c.l.b16 %v3680
      %v3745 = vunpack.c.l.b16 %v3681
      %v3746 = vunpack.c.l.b16 %v3682
      %v3747 = vunpack.c.l.b16 %v3683
      %v3748 = vunpack.c.l.b16 %v3684
      %v3749 = vunpack.c.l.b16 %v3685
      %v3750 = vunpack.c.l.b16 %v3686
      %v3751 = vunpack.c.l.b16 %v3687
      %v3752 = vunpack.c.l.b16 %v3688
      %v3753 = vunpack.c.l.b16 %v3689
      %v3754 = vunpack.c.l.b16 %v3690
      %v3755 = vunpack.c.l.b16 %v3691
      %v3756 = vpack.c.b16 %v3725, %v3724
      %v3757 = vpack.c.b16 %v3727, %v3726
      %v3758 = vpack.c.b16 %v3729, %v3728
      %v3759 = vpack.c.b16 %v3731, %v3730
      %v3760 = vpack.c.b16 %v3733, %v3732
      %v3761 = vpack.c.b16 %v3735, %v3734
      %v3762 = vpack.c.b16 %v3737, %v3736
      %v3763 = vpack.c.b16 %v3739, %v3738
      %v3764 = vpack.c.b16 %v3741, %v3740
      %v3765 = vpack.c.b16 %v3743, %v3742
      %v3766 = vpack.c.b16 %v3745, %v3744
      %v3767 = vpack.c.b16 %v3747, %v3746
      %v3768 = vpack.c.b16 %v3749, %v3748
      %v3769 = vpack.c.b16 %v3751, %v3750
      %v3770 = vpack.c.b16 %v3753, %v3752
      %v3771 = vpack.c.b16 %v3755, %v3754
      %3788 = vmatpush.bf16.msra.mxu0 %v3763
      %3789 = vmatpush.bf16.msra.mxu0 %v3762
      %3790 = vmatpush.bf16.msra.mxu0 %v3761
      %3791 = vmatpush.bf16.msra.mxu0 %v3760
      %3792 = vmatpush.bf16.msra.mxu0 %v3759
      %3793 = vmatpush.bf16.msra.mxu0 %v3758
      %3794 = vmatpush.bf16.msra.mxu0 %v3757
      %3795 = vmatpush.bf16.msra.mxu0 %v3756
      %3796 = vmatmul.bf16.gmra.mxu0 %v2374
      %v3797 = vpop.f32.mrf.mxu0
      %v3798 = vadd.f32 0.0, %v3797
      %v3799 = vpop.f32.mrf.mxu0
      %v3800 = vadd.f32 0.0, %v3799
      %3801 = vmatmul.bf16.gmra.mxu0 %v2376
      %v3802 = vpop.f32.mrf.mxu0
      %v3803 = vadd.f32 0.0, %v3802
      %v3804 = vpop.f32.mrf.mxu0
      %v3805 = vadd.f32 0.0, %v3804
      %3806 = vmatmul.bf16.gmra.mxu0 %v2377
      %v3807 = vpop.f32.mrf.mxu0
      %v3808 = vadd.f32 0.0, %v3807
      %v3809 = vpop.f32.mrf.mxu0
      %v3810 = vadd.f32 0.0, %v3809
      %3811 = vmatmul.bf16.gmra.mxu0 %v2378
      %v3812 = vpop.f32.mrf.mxu0
      %v3813 = vadd.f32 0.0, %v3812
      %v3814 = vpop.f32.mrf.mxu0
      %v3815 = vadd.f32 0.0, %v3814
      %3816 = vmatmul.bf16.gmra.mxu0 %v2379
      %v3817 = vpop.f32.mrf.mxu0
      %v3818 = vadd.f32 0.0, %v3817
      %v3819 = vpop.f32.mrf.mxu0
      %v3820 = vadd.f32 0.0, %v3819
      %3821 = vmatmul.bf16.gmra.mxu0 %v2380
      %v3822 = vpop.f32.mrf.mxu0
      %v3823 = vadd.f32 0.0, %v3822
      %v3824 = vpop.f32.mrf.mxu0
      %v3825 = vadd.f32 0.0, %v3824
      %3826 = vmatmul.bf16.gmra.mxu0 %v2381
      %v3827 = vpop.f32.mrf.mxu0
      %v3828 = vadd.f32 0.0, %v3827
      %v3829 = vpop.f32.mrf.mxu0
      %v3830 = vadd.f32 0.0, %v3829
      %3831 = vmatmul.bf16.gmra.mxu0 %v2382
      %v3832 = vpop.f32.mrf.mxu0
      %v3833 = vadd.f32 0.0, %v3832
      %v3834 = vpop.f32.mrf.mxu0
      %v3835 = vadd.f32 0.0, %v3834
      %3836 = vmatmul.bf16.gmra.mxu0 %v2383
      %v3837 = vpop.f32.mrf.mxu0
      %v3838 = vadd.f32 0.0, %v3837
      %v3839 = vpop.f32.mrf.mxu0
      %v3840 = vadd.f32 0.0, %v3839
      %3841 = vmatmul.bf16.gmra.mxu0 %v2384
      %v3842 = vpop.f32.mrf.mxu0
      %v3843 = vadd.f32 0.0, %v3842
      %v3844 = vpop.f32.mrf.mxu0
      %v3845 = vadd.f32 0.0, %v3844
      %3846 = vmatmul.bf16.gmra.mxu0 %v2385
      %v3847 = vpop.f32.mrf.mxu0
      %v3848 = vadd.f32 0.0, %v3847
      %v3849 = vpop.f32.mrf.mxu0
      %v3850 = vadd.f32 0.0, %v3849
      %3851 = vmatmul.bf16.gmra.mxu0 %v2386
      %v3852 = vpop.f32.mrf.mxu0
      %v3853 = vadd.f32 0.0, %v3852
      %v3854 = vpop.f32.mrf.mxu0
      %v3855 = vadd.f32 0.0, %v3854
      %3856 = vmatmul.bf16.gmra.mxu0 %v2387
      %v3857 = vpop.f32.mrf.mxu0
      %v3858 = vadd.f32 0.0, %v3857
      %v3859 = vpop.f32.mrf.mxu0
      %v3860 = vadd.f32 0.0, %v3859
      %3861 = vmatmul.bf16.gmra.mxu0 %v2388
      %v3862 = vpop.f32.mrf.mxu0
      %v3863 = vadd.f32 0.0, %v3862
      %v3864 = vpop.f32.mrf.mxu0
      %v3865 = vadd.f32 0.0, %v3864
      %3866 = vmatmul.bf16.gmra.mxu0 %v2389
      %v3867 = vpop.f32.mrf.mxu0
      %v3868 = vadd.f32 0.0, %v3867
      %v3869 = vpop.f32.mrf.mxu0
      %v3870 = vadd.f32 0.0, %v3869
      %3871 = vmatmul.bf16.gmra.mxu0 %v2388
      %v3872 = vpop.f32.mrf.mxu0
      %v3873 = vadd.f32 0.0, %v3872
      %v3874 = vpop.f32.mrf.mxu0
      %v3875 = vadd.f32 0.0, %v3874
      %3876 = vdwg.mxu0
      %3877 = vmatpush.bf16.msra.mxu0 %v3771
      %3878 = vmatpush.bf16.msra.mxu0 %v3770
      %3879 = vmatpush.bf16.msra.mxu0 %v3769
      %3880 = vmatpush.bf16.msra.mxu0 %v3768
      %3881 = vmatpush.bf16.msra.mxu0 %v3767
      %3882 = vmatpush.bf16.msra.mxu0 %v3766
      %3883 = vmatpush.bf16.msra.mxu0 %v3765
      %3884 = vmatpush.bf16.msra.mxu0 %v3764
      %3885 = vmatmul.bf16.gmra.mxu0 %v2417
      %v3886 = vpop.f32.mrf.mxu0
      %v3887 = vadd.f32 %v3798, %v3886
      %v3888 = vpop.f32.mrf.mxu0
      %v3889 = vadd.f32 %v3800, %v3888
      %3890 = vmatmul.bf16.gmra.mxu0 %v2441
      %v3891 = vpop.f32.mrf.mxu0
      %v3892 = vadd.f32 %v3803, %v3891
      %v3893 = vpop.f32.mrf.mxu0
      %v3894 = vadd.f32 %v3805, %v3893
      %3895 = vmatmul.bf16.gmra.mxu0 %v2453
      %v3896 = vpop.f32.mrf.mxu0
      %v3897 = vadd.f32 %v3808, %v3896
      %v3898 = vpop.f32.mrf.mxu0
      %v3899 = vadd.f32 %v3810, %v3898
      %3900 = vmatmul.bf16.gmra.mxu0 %v2465
      %v3901 = vpop.f32.mrf.mxu0
      %v3902 = vadd.f32 %v3813, %v3901
      %v3903 = vpop.f32.mrf.mxu0
      %v3904 = vadd.f32 %v3815, %v3903
      %3905 = vmatmul.bf16.gmra.mxu0 %v2477
      %v3906 = vpop.f32.mrf.mxu0
      %v3907 = vadd.f32 %v3818, %v3906
      %v3908 = vpop.f32.mrf.mxu0
      %v3909 = vadd.f32 %v3820, %v3908
      %3910 = vmatmul.bf16.gmra.mxu0 %v2489
      %v3911 = vpop.f32.mrf.mxu0
      %v3912 = vadd.f32 %v3823, %v3911
      %v3913 = vpop.f32.mrf.mxu0
      %v3914 = vadd.f32 %v3825, %v3913
      %3915 = vmatmul.bf16.gmra.mxu0 %v2501
      %v3916 = vpop.f32.mrf.mxu0
      %v3917 = vadd.f32 %v3828, %v3916
      %v3918 = vpop.f32.mrf.mxu0
      %v3919 = vadd.f32 %v3830, %v3918
      %3920 = vmatmul.bf16.gmra.mxu0 %v2513
      %v3921 = vpop.f32.mrf.mxu0
      %v3922 = vadd.f32 %v3833, %v3921
      %v3923 = vpop.f32.mrf.mxu0
      %v3924 = vadd.f32 %v3835, %v3923
      %3925 = vmatmul.bf16.gmra.mxu0 %v2525
      %v3926 = vpop.f32.mrf.mxu0
      %v3927 = vadd.f32 %v3838, %v3926
      %v3928 = vpop.f32.mrf.mxu0
      %v3929 = vadd.f32 %v3840, %v3928
      %3930 = vmatmul.bf16.gmra.mxu0 %v2537
      %v3931 = vpop.f32.mrf.mxu0
      %v3932 = vadd.f32 %v3843, %v3931
      %v3933 = vpop.f32.mrf.mxu0
      %v3934 = vadd.f32 %v3845, %v3933
      %3935 = vmatmul.bf16.gmra.mxu0 %v2549
      %v3936 = vpop.f32.mrf.mxu0
      %v3937 = vadd.f32 %v3848, %v3936
      %v3938 = vpop.f32.mrf.mxu0
      %v3939 = vadd.f32 %v3850, %v3938
      %3940 = vmatmul.bf16.gmra.mxu0 %v2561
      %v3941 = vpop.f32.mrf.mxu0
      %v3942 = vadd.f32 %v3853, %v3941
      %v3943 = vpop.f32.mrf.mxu0
      %v3944 = vadd.f32 %v3855, %v3943
      %3945 = vmatmul.bf16.gmra.mxu0 %v2573
      %v3946 = vpop.f32.mrf.mxu0
      %v3947 = vadd.f32 %v3858, %v3946
      %v3948 = vpop.f32.mrf.mxu0
      %v3949 = vadd.f32 %v3860, %v3948
      %3950 = vmatmul.bf16.gmra.mxu0 %v2585
      %v3951 = vpop.f32.mrf.mxu0
      %v3952 = vadd.f32 %v3863, %v3951
      %v3953 = vpop.f32.mrf.mxu0
      %v3954 = vadd.f32 %v3865, %v3953
      %3955 = vmatmul.bf16.gmra.mxu0 %v3314
      %v3956 = vpop.f32.mrf.mxu0
      %v3957 = vadd.f32 %v3868, %v3956
      %v3958 = vpop.f32.mrf.mxu0
      %v3959 = vadd.f32 %v3870, %v3958
      %3960 = vmatmul.bf16.gmra.mxu0 %v2585
      %v3961 = vpop.f32.mrf.mxu0
      %v3962 = vadd.f32 %v3873, %v3961
      %v3963 = vpop.f32.mrf.mxu0
      %v3964 = vadd.f32 %v3875, %v3963
      %3965 = vdwg.mxu0
      %v3966 = vadd.f32 %v3628, %v3887
      %v3967 = vadd.f32 %v3629, %v3889
      %v3968 = vadd.f32 %v3630, %v3892
      %v3969 = vadd.f32 %v3631, %v3894
      %v3970 = vadd.f32 %v3632, %v3897
      %v3971 = vadd.f32 %v3633, %v3899
      %v3972 = vadd.f32 %v3634, %v3902
      %v3973 = vadd.f32 %v3635, %v3904
      %v3974 = vadd.f32 %v3636, %v3907
      %v3975 = vadd.f32 %v3637, %v3909
      %v3976 = vadd.f32 %v3638, %v3912
      %v3977 = vadd.f32 %v3639, %v3914
      %v3978 = vadd.f32 %v3640, %v3917
      %v3979 = vadd.f32 %v3641, %v3919
      %v3980 = vadd.f32 %v3642, %v3922
      %v3981 = vadd.f32 %v3643, %v3924
      %v3982 = vadd.f32 %v3644, %v3927
      %v3983 = vadd.f32 %v3645, %v3929
      %v3984 = vadd.f32 %v3646, %v3932
      %v3985 = vadd.f32 %v3647, %v3934
      %v3986 = vadd.f32 %v3648, %v3937
      %v3987 = vadd.f32 %v3649, %v3939
      %v3988 = vadd.f32 %v3650, %v3942
      %v3989 = vadd.f32 %v3651, %v3944
      %v3990 = vadd.f32 %v3652, %v3947
      %v3991 = vadd.f32 %v3653, %v3949
      %v3992 = vadd.f32 %v3654, %v3952
      %v3993 = vadd.f32 %v3655, %v3954
      %v3994 = vadd.f32 %v3656, %v3957
      %v3995 = vadd.f32 %v3657, %v3959
      %v3996 = vadd.f32 %v3658, %v3962
      %v3997 = vadd.f32 %v3659, %v3964
      %v3998 = vld [vmem:[%s2 + $0x200] sm:$0xf]
      %v3999 = vld [vmem:[%s2 + $0x204] sm:$0xf]
      %v4000 = vld [vmem:[%s2 + $0x208] sm:$0xf]
      %v4001 = vld [vmem:[%s2 + $0x20c] sm:$0xf]
      %v4002 = vld [vmem:[%s2 + $0x210] sm:$0xf]
      %v4003 = vld [vmem:[%s2 + $0x214] sm:$0xf]
      %v4004 = vld [vmem:[%s2 + $0x218] sm:$0xf]
      %v4005 = vld [vmem:[%s2 + $0x21c] sm:$0xf]
      %v4006 = vld [vmem:[%s2 + $0x220] sm:$0xf]
      %v4007 = vld [vmem:[%s2 + $0x224] sm:$0xf]
      %v4008 = vld [vmem:[%s2 + $0x228] sm:$0xf]
      %v4009 = vld [vmem:[%s2 + $0x22c] sm:$0xf]
      %v4010 = vld [vmem:[%s2 + $0x230] sm:$0xf]
      %v4011 = vld [vmem:[%s2 + $0x234] sm:$0xf]
      %v4012 = vld [vmem:[%s2 + $0x238] sm:$0xf]
      %v4013 = vld [vmem:[%s2 + $0x23c] sm:$0xf]
      %v4030 = vunpack.c.l.b16 %v3998
      %v4031 = vunpack.c.l.b16 %v3999
      %v4032 = vunpack.c.l.b16 %v4000
      %v4033 = vunpack.c.l.b16 %v4001
      %v4034 = vunpack.c.l.b16 %v4002
      %v4035 = vunpack.c.l.b16 %v4003
      %v4036 = vunpack.c.l.b16 %v4004
      %v4037 = vunpack.c.l.b16 %v4005
      %v4038 = vunpack.c.l.b16 %v4006
      %v4039 = vunpack.c.l.b16 %v4007
      %v4040 = vunpack.c.l.b16 %v4008
      %v4041 = vunpack.c.l.b16 %v4009
      %v4042 = vunpack.c.l.b16 %v4010
      %v4043 = vunpack.c.l.b16 %v4011
      %v4044 = vunpack.c.l.b16 %v4012
      %v4045 = vunpack.c.l.b16 %v4013
      %v4046 = vpack.c.b16 %v4031, %v4030
      %v4047 = vpack.c.b16 %v4033, %v4032
      %v4048 = vpack.c.b16 %v4035, %v4034
      %v4049 = vpack.c.b16 %v4037, %v4036
      %v4050 = vpack.c.b16 %v4039, %v4038
      %v4051 = vpack.c.b16 %v4041, %v4040
      %v4052 = vpack.c.b16 %v4043, %v4042
      %v4053 = vpack.c.b16 %v4045, %v4044
      %4062 = vmatpush.bf16.msra.mxu0 %v4053
      %4063 = vmatpush.bf16.msra.mxu0 %v4052
      %4064 = vmatpush.bf16.msra.mxu0 %v4051
      %4065 = vmatpush.bf16.msra.mxu0 %v4050
      %4066 = vmatpush.bf16.msra.mxu0 %v4049
      %4067 = vmatpush.bf16.msra.mxu0 %v4048
      %4068 = vmatpush.bf16.msra.mxu0 %v4047
      %4069 = vmatpush.bf16.msra.mxu0 %v4046
      %4070 = vmatmul.bf16.gmra.mxu0 %v2665
      %v4071 = vpop.f32.mrf.mxu0
      %v4072 = vadd.f32 0.0, %v4071
      %v4073 = vpop.f32.mrf.mxu0
      %v4074 = vadd.f32 0.0, %v4073
      %4075 = vmatmul.bf16.gmra.mxu0 %v2671
      %v4076 = vpop.f32.mrf.mxu0
      %v4077 = vadd.f32 0.0, %v4076
      %v4078 = vpop.f32.mrf.mxu0
      %v4079 = vadd.f32 0.0, %v4078
      %4080 = vmatmul.bf16.gmra.mxu0 %v2674
      %v4081 = vpop.f32.mrf.mxu0
      %v4082 = vadd.f32 0.0, %v4081
      %v4083 = vpop.f32.mrf.mxu0
      %v4084 = vadd.f32 0.0, %v4083
      %4085 = vmatmul.bf16.gmra.mxu0 %v2677
      %v4086 = vpop.f32.mrf.mxu0
      %v4087 = vadd.f32 0.0, %v4086
      %v4088 = vpop.f32.mrf.mxu0
      %v4089 = vadd.f32 0.0, %v4088
      %4090 = vmatmul.bf16.gmra.mxu0 %v2680
      %v4091 = vpop.f32.mrf.mxu0
      %v4092 = vadd.f32 0.0, %v4091
      %v4093 = vpop.f32.mrf.mxu0
      %v4094 = vadd.f32 0.0, %v4093
      %4095 = vmatmul.bf16.gmra.mxu0 %v2683
      %v4096 = vpop.f32.mrf.mxu0
      %v4097 = vadd.f32 0.0, %v4096
      %v4098 = vpop.f32.mrf.mxu0
      %v4099 = vadd.f32 0.0, %v4098
      %4100 = vmatmul.bf16.gmra.mxu0 %v2686
      %v4101 = vpop.f32.mrf.mxu0
      %v4102 = vadd.f32 0.0, %v4101
      %v4103 = vpop.f32.mrf.mxu0
      %v4104 = vadd.f32 0.0, %v4103
      %4105 = vmatmul.bf16.gmra.mxu0 %v2689
      %v4106 = vpop.f32.mrf.mxu0
      %v4107 = vadd.f32 0.0, %v4106
      %v4108 = vpop.f32.mrf.mxu0
      %v4109 = vadd.f32 0.0, %v4108
      %4110 = vmatmul.bf16.gmra.mxu0 %v2692
      %v4111 = vpop.f32.mrf.mxu0
      %v4112 = vadd.f32 0.0, %v4111
      %v4113 = vpop.f32.mrf.mxu0
      %v4114 = vadd.f32 0.0, %v4113
      %4115 = vmatmul.bf16.gmra.mxu0 %v2695
      %v4116 = vpop.f32.mrf.mxu0
      %v4117 = vadd.f32 0.0, %v4116
      %v4118 = vpop.f32.mrf.mxu0
      %v4119 = vadd.f32 0.0, %v4118
      %4120 = vmatmul.bf16.gmra.mxu0 %v2698
      %v4121 = vpop.f32.mrf.mxu0
      %v4122 = vadd.f32 0.0, %v4121
      %v4123 = vpop.f32.mrf.mxu0
      %v4124 = vadd.f32 0.0, %v4123
      %4125 = vmatmul.bf16.gmra.mxu0 %v2701
      %v4126 = vpop.f32.mrf.mxu0
      %v4127 = vadd.f32 0.0, %v4126
      %v4128 = vpop.f32.mrf.mxu0
      %v4129 = vadd.f32 0.0, %v4128
      %4130 = vmatmul.bf16.gmra.mxu0 %v2704
      %v4131 = vpop.f32.mrf.mxu0
      %v4132 = vadd.f32 0.0, %v4131
      %v4133 = vpop.f32.mrf.mxu0
      %v4134 = vadd.f32 0.0, %v4133
      %4135 = vmatmul.bf16.gmra.mxu0 %v2707
      %v4136 = vpop.f32.mrf.mxu0
      %v4137 = vadd.f32 0.0, %v4136
      %v4138 = vpop.f32.mrf.mxu0
      %v4139 = vadd.f32 0.0, %v4138
      %4140 = vmatmul.bf16.gmra.mxu0 %v3320
      %v4141 = vpop.f32.mrf.mxu0
      %v4142 = vadd.f32 0.0, %v4141
      %v4143 = vpop.f32.mrf.mxu0
      %v4144 = vadd.f32 0.0, %v4143
      %4145 = vmatmul.bf16.gmra.mxu0 %v2707
      %v4146 = vpop.f32.mrf.mxu0
      %v4147 = vadd.f32 0.0, %v4146
      %v4148 = vpop.f32.mrf.mxu0
      %v4149 = vadd.f32 0.0, %v4148
      %4150 = vdwg.mxu0
      %v4151 = vadd.f32 %v3966, %v4072
      %v4152 = vadd.f32 %v3967, %v4074
      %v4153 = vadd.f32 %v3968, %v4077
      %v4154 = vadd.f32 %v3969, %v4079
      %v4155 = vadd.f32 %v3970, %v4082
      %v4156 = vadd.f32 %v3971, %v4084
      %v4157 = vadd.f32 %v3972, %v4087
      %v4158 = vadd.f32 %v3973, %v4089
      %v4159 = vadd.f32 %v3974, %v4092
      %v4160 = vadd.f32 %v3975, %v4094
      %v4161 = vadd.f32 %v3976, %v4097
      %v4162 = vadd.f32 %v3977, %v4099
      %v4163 = vadd.f32 %v3978, %v4102
      %v4164 = vadd.f32 %v3979, %v4104
      %v4165 = vadd.f32 %v3980, %v4107
      %v4166 = vadd.f32 %v3981, %v4109
      %v4167 = vadd.f32 %v3982, %v4112
      %v4168 = vadd.f32 %v3983, %v4114
      %v4169 = vadd.f32 %v3984, %v4117
      %v4170 = vadd.f32 %v3985, %v4119
      %v4171 = vadd.f32 %v3986, %v4122
      %v4172 = vadd.f32 %v3987, %v4124
      %v4173 = vadd.f32 %v3988, %v4127
      %v4174 = vadd.f32 %v3989, %v4129
      %v4175 = vadd.f32 %v3990, %v4132
      %v4176 = vadd.f32 %v3991, %v4134
      %v4177 = vadd.f32 %v3992, %v4137
      %v4178 = vadd.f32 %v3993, %v4139
      %v4179 = vadd.f32 %v3994, %v4142
      %v4180 = vadd.f32 %v3995, %v4144
      %v4181 = vadd.f32 %v3996, %v4147
      %v4182 = vadd.f32 %v3997, %v4149
      %v4183 = vadd.f32 %v4151, %v4152
      %v4184 = vadd.f32 %v4183, %v4153
      %v4185 = vadd.f32 %v4184, %v4154
      %v4186 = vadd.f32 %v4185, %v4155
      %v4187 = vadd.f32 %v4186, %v4156
      %v4188 = vadd.f32 %v4187, %v4157
      %v4189 = vadd.f32 %v4188, %v4158
      %v4190 = vadd.f32 %v4189, %v4159
      %v4191 = vadd.f32 %v4190, %v4160
      %v4192 = vadd.f32 %v4191, %v4161
      %v4193 = vadd.f32 %v4192, %v4162
      %v4194 = vadd.f32 %v4193, %v4163
      %v4195 = vadd.f32 %v4194, %v4164
      %v4196 = vadd.f32 %v4195, %v4165
      %v4197 = vadd.f32 %v4196, %v4166
      %v4198 = vadd.f32 %v4197, %v4167
      %v4199 = vadd.f32 %v4198, %v4168
      %v4200 = vadd.f32 %v4199, %v4169
      %v4201 = vadd.f32 %v4200, %v4170
      %v4202 = vadd.f32 %v4201, %v4171
      %v4203 = vadd.f32 %v4202, %v4172
      %v4204 = vadd.f32 %v4203, %v4173
      %v4205 = vadd.f32 %v4204, %v4174
      %v4206 = vadd.f32 %v4205, %v4175
      %v4207 = vadd.f32 %v4206, %v4176
      %v4208 = vadd.f32 %v4207, %v4177
      %v4209 = vadd.f32 %v4208, %v4178
      %v4210 = vadd.f32 %v4209, %v4179
      %v4211 = vadd.f32 %v4210, %v4180
      %v4212 = vadd.f32 %v4211, %v4181
      %v4213 = vadd.f32 %v4212, %v4182
      %v4214 = vrot.slane %v4213, 4
      %v4215 = vadd.f32 %v4213, %v4214
      %v4216 = vrot.slane %v4215, 2
      %v4217 = vadd.f32 %v4215, %v4216
      %v4218 = vrot.slane %v4217, 1
      %v4219 = vadd.f32 %v4217, %v4218
      %v4220 = vmul.f32 %v4151, %v4151
      %v4221 = vmul.f32 %v4152, %v4152
      %v4222 = vmul.f32 %v4153, %v4153
      %v4223 = vmul.f32 %v4154, %v4154
      %v4224 = vmul.f32 %v4155, %v4155
      %v4225 = vmul.f32 %v4156, %v4156
      %v4226 = vmul.f32 %v4157, %v4157
      %v4227 = vmul.f32 %v4158, %v4158
      %v4228 = vmul.f32 %v4159, %v4159
      %v4229 = vmul.f32 %v4160, %v4160
      %v4230 = vmul.f32 %v4161, %v4161
      %v4231 = vmul.f32 %v4162, %v4162
      %v4232 = vmul.f32 %v4163, %v4163
      %v4233 = vmul.f32 %v4164, %v4164
      %v4234 = vmul.f32 %v4165, %v4165
      %v4235 = vmul.f32 %v4166, %v4166
      %v4236 = vmul.f32 %v4167, %v4167
      %v4237 = vmul.f32 %v4168, %v4168
      %v4238 = vmul.f32 %v4169, %v4169
      %v4239 = vmul.f32 %v4170, %v4170
      %v4240 = vmul.f32 %v4171, %v4171
      %v4241 = vmul.f32 %v4172, %v4172
      %v4242 = vmul.f32 %v4173, %v4173
      %v4243 = vmul.f32 %v4174, %v4174
      %v4244 = vmul.f32 %v4175, %v4175
      %v4245 = vmul.f32 %v4176, %v4176
      %v4246 = vmul.f32 %v4177, %v4177
      %v4247 = vmul.f32 %v4178, %v4178
      %v4248 = vmul.f32 %v4179, %v4179
      %v4249 = vmul.f32 %v4180, %v4180
      %v4250 = vmul.f32 %v4181, %v4181
      %v4251 = vmul.f32 %v4182, %v4182
      %v4252 = vadd.f32 %v4220, %v4221
      %v4253 = vadd.f32 %v4252, %v4222
      %v4254 = vadd.f32 %v4253, %v4223
      %v4255 = vadd.f32 %v4254, %v4224
      %v4256 = vadd.f32 %v4255, %v4225
      %v4257 = vadd.f32 %v4256, %v4226
      %v4258 = vadd.f32 %v4257, %v4227
      %v4259 = vadd.f32 %v4258, %v4228
      %v4260 = vadd.f32 %v4259, %v4229
      %v4261 = vadd.f32 %v4260, %v4230
      %v4262 = vadd.f32 %v4261, %v4231
      %v4263 = vadd.f32 %v4262, %v4232
      %v4264 = vadd.f32 %v4263, %v4233
      %v4265 = vadd.f32 %v4264, %v4234
      %v4266 = vadd.f32 %v4265, %v4235
      %v4267 = vadd.f32 %v4266, %v4236
      %v4268 = vadd.f32 %v4267, %v4237
      %v4269 = vadd.f32 %v4268, %v4238
      %v4270 = vadd.f32 %v4269, %v4239
      %v4271 = vadd.f32 %v4270, %v4240
      %v4272 = vadd.f32 %v4271, %v4241
      %v4273 = vadd.f32 %v4272, %v4242
      %v4274 = vadd.f32 %v4273, %v4243
      %v4275 = vadd.f32 %v4274, %v4244
      %v4276 = vadd.f32 %v4275, %v4245
      %v4277 = vadd.f32 %v4276, %v4246
      %v4278 = vadd.f32 %v4277, %v4247
      %v4279 = vadd.f32 %v4278, %v4248
      %v4280 = vadd.f32 %v4279, %v4249
      %v4281 = vadd.f32 %v4280, %v4250
      %v4282 = vadd.f32 %v4281, %v4251
      %v4283 = vrot.slane %v4282, 4
      %v4284 = vadd.f32 %v4282, %v4283
      %v4285 = vrot.slane %v4284, 2
      %v4286 = vadd.f32 %v4284, %v4285
      %v4287 = vrot.slane %v4286, 1
      %v4288 = vadd.f32 %v4286, %v4287
      %v4289 = vmul.f32 %v4219, 0.00390625
      %v4290 = vmul.f32 %v4288, 0.00390625
      %v4291 = vmul.f32 %v4289, %v4289
      %v4292 = vsub.f32 %v4290, %v4291
      %v4293 = vmax.f32 %v4292, 0.0
      %v4294 = vadd.f32 %v4293, 1e-05
      %v4295 = vrsqrt.pop %v4294
      %v4296 = vmul.f32 %v4295, %v4294
      %v4297 = vmul.f32 %v4296, %v4295
      %v4298 = vmul.f32 0.5, %v4297
      %v4299 = vsub.f32 1.5, %v4298
      %v4300 = vmul.f32 %v4295, %v4299
      %vm4301 = vweird.f32 %v4294
      %vm4302 = vweird.f32 %v4295
      %vm4303 = vmor %vm4301, %vm4302
      %v4304 = vsel %vm4303, %v4295, %v4300
      %v4305 = vmul.f32 %v4289, %v4304
      %v4306 = vmul.f32 %v4151, %v4304
      %v4307 = vmul.f32 %v4152, %v4304
      %v4308 = vmul.f32 %v4153, %v4304
      %v4309 = vmul.f32 %v4154, %v4304
      %v4310 = vmul.f32 %v4155, %v4304
      %v4311 = vmul.f32 %v4156, %v4304
      %v4312 = vmul.f32 %v4157, %v4304
      %v4313 = vmul.f32 %v4158, %v4304
      %v4314 = vmul.f32 %v4159, %v4304
      %v4315 = vmul.f32 %v4160, %v4304
      %v4316 = vmul.f32 %v4161, %v4304
      %v4317 = vmul.f32 %v4162, %v4304
      %v4318 = vmul.f32 %v4163, %v4304
      %v4319 = vmul.f32 %v4164, %v4304
      %v4320 = vmul.f32 %v4165, %v4304
      %v4321 = vmul.f32 %v4166, %v4304
      %v4322 = vmul.f32 %v4167, %v4304
      %v4323 = vmul.f32 %v4168, %v4304
      %v4324 = vmul.f32 %v4169, %v4304
      %v4325 = vmul.f32 %v4170, %v4304
      %v4326 = vmul.f32 %v4171, %v4304
      %v4327 = vmul.f32 %v4172, %v4304
      %v4328 = vmul.f32 %v4173, %v4304
      %v4329 = vmul.f32 %v4174, %v4304
      %v4330 = vmul.f32 %v4175, %v4304
      %v4331 = vmul.f32 %v4176, %v4304
      %v4332 = vmul.f32 %v4177, %v4304
      %v4333 = vmul.f32 %v4178, %v4304
      %v4334 = vmul.f32 %v4179, %v4304
      %v4335 = vmul.f32 %v4180, %v4304
      %v4336 = vmul.f32 %v4181, %v4304
      %v4337 = vmul.f32 %v4182, %v4304
      %v4338 = vsub.f32 %v4306, %v4305
      %v4339 = vsub.f32 %v4307, %v4305
      %v4340 = vsub.f32 %v4308, %v4305
      %v4341 = vsub.f32 %v4309, %v4305
      %v4342 = vsub.f32 %v4310, %v4305
      %v4343 = vsub.f32 %v4311, %v4305
      %v4344 = vsub.f32 %v4312, %v4305
      %v4345 = vsub.f32 %v4313, %v4305
      %v4346 = vsub.f32 %v4314, %v4305
      %v4347 = vsub.f32 %v4315, %v4305
      %v4348 = vsub.f32 %v4316, %v4305
      %v4349 = vsub.f32 %v4317, %v4305
      %v4350 = vsub.f32 %v4318, %v4305
      %v4351 = vsub.f32 %v4319, %v4305
      %v4352 = vsub.f32 %v4320, %v4305
      %v4353 = vsub.f32 %v4321, %v4305
      %v4354 = vsub.f32 %v4322, %v4305
      %v4355 = vsub.f32 %v4323, %v4305
      %v4356 = vsub.f32 %v4324, %v4305
      %v4357 = vsub.f32 %v4325, %v4305
      %v4358 = vsub.f32 %v4326, %v4305
      %v4359 = vsub.f32 %v4327, %v4305
      %v4360 = vsub.f32 %v4328, %v4305
      %v4361 = vsub.f32 %v4329, %v4305
      %v4362 = vsub.f32 %v4330, %v4305
      %v4363 = vsub.f32 %v4331, %v4305
      %v4364 = vsub.f32 %v4332, %v4305
      %v4365 = vsub.f32 %v4333, %v4305
      %v4366 = vsub.f32 %v4334, %v4305
      %v4367 = vsub.f32 %v4335, %v4305
      %v4368 = vsub.f32 %v4336, %v4305
      %v4369 = vsub.f32 %v4337, %v4305
      %v4370 = vmax.f32 %v4338, 0.0
      %v4371 = vmax.f32 %v4339, 0.0
      %v4372 = vmax.f32 %v4340, 0.0
      %v4373 = vmax.f32 %v4341, 0.0
      %v4374 = vmax.f32 %v4342, 0.0
      %v4375 = vmax.f32 %v4343, 0.0
      %v4376 = vmax.f32 %v4344, 0.0
      %v4377 = vmax.f32 %v4345, 0.0
      %v4378 = vmax.f32 %v4346, 0.0
      %v4379 = vmax.f32 %v4347, 0.0
      %v4380 = vmax.f32 %v4348, 0.0
      %v4381 = vmax.f32 %v4349, 0.0
      %v4382 = vmax.f32 %v4350, 0.0
      %v4383 = vmax.f32 %v4351, 0.0
      %v4384 = vmax.f32 %v4352, 0.0
      %v4385 = vmax.f32 %v4353, 0.0
      %v4386 = vmax.f32 %v4354, 0.0
      %v4387 = vmax.f32 %v4355, 0.0
      %v4388 = vmax.f32 %v4356, 0.0
      %v4389 = vmax.f32 %v4357, 0.0
      %v4390 = vmax.f32 %v4358, 0.0
      %v4391 = vmax.f32 %v4359, 0.0
      %v4392 = vmax.f32 %v4360, 0.0
      %v4393 = vmax.f32 %v4361, 0.0
      %v4394 = vmax.f32 %v4362, 0.0
      %v4395 = vmax.f32 %v4363, 0.0
      %v4396 = vmax.f32 %v4364, 0.0
      %v4397 = vmax.f32 %v4365, 0.0
      %v4398 = vmax.f32 %v4366, 0.0
      %v4399 = vmax.f32 %v4367, 0.0
      %v4400 = vmax.f32 %v4368, 0.0
      %v4401 = vmax.f32 %v4369, 0.0
      %v4402 = vadd.f32 %v4370, %v1644
      %v4403 = vadd.f32 %v4371, %v1646
      %v4404 = vadd.f32 %v4372, %v1649
      %v4405 = vadd.f32 %v4373, %v1651
      %v4406 = vadd.f32 %v4374, %v1654
      %v4407 = vadd.f32 %v4375, %v1656
      %v4408 = vadd.f32 %v4376, %v1659
      %v4409 = vadd.f32 %v4377, %v1661
      %v4410 = vadd.f32 %v4378, %v1664
      %v4411 = vadd.f32 %v4379, %v1666
      %v4412 = vadd.f32 %v4380, %v1669
      %v4413 = vadd.f32 %v4381, %v1671
      %v4414 = vadd.f32 %v4382, %v1674
      %v4415 = vadd.f32 %v4383, %v1676
      %v4416 = vadd.f32 %v4384, %v1679
      %v4417 = vadd.f32 %v4385, %v1681
      %v4418 = vadd.f32 %v4386, %v1684
      %v4419 = vadd.f32 %v4387, %v1686
      %v4420 = vadd.f32 %v4388, %v1689
      %v4421 = vadd.f32 %v4389, %v1691
      %v4422 = vadd.f32 %v4390, %v1694
      %v4423 = vadd.f32 %v4391, %v1696
      %v4424 = vadd.f32 %v4392, %v1699
      %v4425 = vadd.f32 %v4393, %v1701
      %v4426 = vadd.f32 %v4394, %v1704
      %v4427 = vadd.f32 %v4395, %v1706
      %v4428 = vadd.f32 %v4396, %v1709
      %v4429 = vadd.f32 %v4397, %v1711
      %v4430 = vadd.f32 %v4398, %v1714
      %v4431 = vadd.f32 %v4399, %v1716
      %v4432 = vadd.f32 %v4400, %v1719
      %v4433 = vadd.f32 %v4401, %v1721
      %v4434 = vld [vmem:[%s3] sm:$0x1]
      %v4436 = vperm.slane %v4434, 0
      %v4438 = vadd.f32 %v4402, %v4436
      %v4439 = vadd.f32 %v4403, %v4436
      %v4440 = vadd.f32 %v4404, %v4436
      %v4441 = vadd.f32 %v4405, %v4436
      %v4442 = vadd.f32 %v4406, %v4436
      %v4443 = vadd.f32 %v4407, %v4436
      %v4444 = vadd.f32 %v4408, %v4436
      %v4445 = vadd.f32 %v4409, %v4436
      %v4446 = vadd.f32 %v4410, %v4436
      %v4447 = vadd.f32 %v4411, %v4436
      %v4448 = vadd.f32 %v4412, %v4436
      %v4449 = vadd.f32 %v4413, %v4436
      %v4450 = vadd.f32 %v4414, %v4436
      %v4451 = vadd.f32 %v4415, %v4436
      %v4452 = vadd.f32 %v4416, %v4436
      %v4453 = vadd.f32 %v4417, %v4436
      %v4454 = vadd.f32 %v4418, %v4436
      %v4455 = vadd.f32 %v4419, %v4436
      %v4456 = vadd.f32 %v4420, %v4436
      %v4457 = vadd.f32 %v4421, %v4436
      %v4458 = vadd.f32 %v4422, %v4436
      %v4459 = vadd.f32 %v4423, %v4436
      %v4460 = vadd.f32 %v4424, %v4436
      %v4461 = vadd.f32 %v4425, %v4436
      %v4462 = vadd.f32 %v4426, %v4436
      %v4463 = vadd.f32 %v4427, %v4436
      %v4464 = vadd.f32 %v4428, %v4436
      %v4465 = vadd.f32 %v4429, %v4436
      %v4466 = vadd.f32 %v4430, %v4436
      %v4467 = vadd.f32 %v4431, %v4436
      %v4468 = vadd.f32 %v4432, %v4436
      %v4469 = vadd.f32 %v4433, %v4436
      %4470 = vst.msk [vmem:[%s197] sm:$0xff] %vm1249, %v4438
      %4471 = vst.msk [vmem:[%s197 + $0x8] sm:$0xff] %vm1249, %v4439
      %4472 = vst.msk [vmem:[%s197 + $0x10] sm:$0xff] %vm1249, %v4440
      %4473 = vst.msk [vmem:[%s197 + $0x18] sm:$0xff] %vm1249, %v4441
      %4474 = vst.msk [vmem:[%s197 + $0x20] sm:$0xff] %vm1249, %v4442
      %4475 = vst.msk [vmem:[%s197 + $0x28] sm:$0xff] %vm1249, %v4443
      %4476 = vst.msk [vmem:[%s197 + $0x30] sm:$0xff] %vm1249, %v4444
      %4477 = vst.msk [vmem:[%s197 + $0x38] sm:$0xff] %vm1249, %v4445
      %4478 = vst.msk [vmem:[%s197 + $0x40] sm:$0xff] %vm1249, %v4446
      %4479 = vst.msk [vmem:[%s197 + $0x48] sm:$0xff] %vm1249, %v4447
      %4480 = vst.msk [vmem:[%s197 + $0x50] sm:$0xff] %vm1249, %v4448
      %4481 = vst.msk [vmem:[%s197 + $0x58] sm:$0xff] %vm1249, %v4449
      %4482 = vst.msk [vmem:[%s197 + $0x60] sm:$0xff] %vm1249, %v4450
      %4483 = vst.msk [vmem:[%s197 + $0x68] sm:$0xff] %vm1249, %v4451
      %4484 = vst.msk [vmem:[%s197 + $0x70] sm:$0xff] %vm1249, %v4452
      %4485 = vst.msk [vmem:[%s197 + $0x78] sm:$0xff] %vm1249, %v4453
      %4486 = vst.msk [vmem:[%s197 + $0x80] sm:$0xff] %vm1249, %v4454
      %4487 = vst.msk [vmem:[%s197 + $0x88] sm:$0xff] %vm1249, %v4455
      %4488 = vst.msk [vmem:[%s197 + $0x90] sm:$0xff] %vm1249, %v4456
      %4489 = vst.msk [vmem:[%s197 + $0x98] sm:$0xff] %vm1249, %v4457
      %4490 = vst.msk [vmem:[%s197 + $0xa0] sm:$0xff] %vm1249, %v4458
      %4491 = vst.msk [vmem:[%s197 + $0xa8] sm:$0xff] %vm1249, %v4459
      %4492 = vst.msk [vmem:[%s197 + $0xb0] sm:$0xff] %vm1249, %v4460
      %4493 = vst.msk [vmem:[%s197 + $0xb8] sm:$0xff] %vm1249, %v4461
      %4494 = vst.msk [vmem:[%s197 + $0xc0] sm:$0xff] %vm1249, %v4462
      %4495 = vst.msk [vmem:[%s197 + $0xc8] sm:$0xff] %vm1249, %v4463
      %4496 = vst.msk [vmem:[%s197 + $0xd0] sm:$0xff] %vm1249, %v4464
      %4497 = vst.msk [vmem:[%s197 + $0xd8] sm:$0xff] %vm1249, %v4465
      %4498 = vst.msk [vmem:[%s197 + $0xe0] sm:$0xff] %vm1249, %v4466
      %4499 = vst.msk [vmem:[%s197 + $0xe8] sm:$0xff] %vm1249, %v4467
      %4500 = vst.msk [vmem:[%s197 + $0xf0] sm:$0xff] %vm1249, %v4468
      %4501 = vst.msk [vmem:[%s197 + $0xf8] sm:$0xff] %vm1249, %v4469
      %p4502 = scmp.lt.s32.totalorder %s15, 1
      %s4503 = scalar_select %p4502, %s15, 1
      %s4504 = smul.addr %s4503, 32
      %s4505 = smul.addr %s4504, 8
      %s4506 = scalar_lea.vmem %s4, %s4505
      // Predicated region
      $region37: #{tpu_custom_call.1} parent=35 // pred_check
        %p4507 = pneg %p122
      $region38: #{tpu_custom_call.1} parent=35 // pred_check_branch
        %4509 = sbr.rel (%p4507) target = $region40
      $region39: #{tpu_custom_call.1} parent=35 // pred_region
        _
      $region40: #{tpu_custom_call.1} parent=35 // pred_fallthru
        _
    $region36: #{tpu_custom_call.1} parent=5 // pred_fallthru
      _
    %p4510 = scmp.le.s32.totalorder 2, %s10
    // Predicated region
    $region41: #{tpu_custom_call.1} parent=5 // pred_check
      %p4511 = pneg %p4510
    $region42: #{tpu_custom_call.1} parent=5 // pred_check_branch
      %4513 = sbr.rel (%p4511) target = $region44
    $region43: #{tpu_custom_call.1} parent=5 // pred_region
      %s4514 = ssub.s32 %s10, 2
      // Predicated region
      $region45: #{tpu_custom_call.1} parent=43 // pred_check
        %p4515 = pneg %p128
      $region46: #{tpu_custom_call.1} parent=43 // pred_check_branch
        %4517 = sbr.rel (%p4515) target = $region48
      $region47: #{tpu_custom_call.1} parent=43 // pred_region
        %p4518 = scmp.lt.s32.totalorder %s16, 1
        %s4519 = scalar_select %p4518, %s16, 1
        %s4520 = smul.addr %s4519, 32
        %s4521 = smul.addr %s4520, 8
        %s4522 = scalar_lea.vmem %s4, %s4521
      $region48: #{tpu_custom_call.1} parent=43 // pred_fallthru
        _
    $region44: #{tpu_custom_call.1} parent=5 // pred_fallthru
      _
  $region6: #{tpu_custom_call.1} parent=0 // loop_footer
    %s14 = sadd.s32 1, %s10
  $region7: #{tpu_custom_call.1} parent=0 // loop_footer_branch
    %9 = sbr.rel target = $region3
  $region8: #{tpu_custom_call.1} parent=0 // loop_exit
    _

</llo_original>
